<compile_context>
chip_gen: v5e
topology: v5e:2x2
jax: 0.10.0
libtpu: 0.0.40
codegen_flags: <defaults>
</compile_context>

<pallas_src>
import functools

import jax
import jax.numpy as jnp
from jax import lax
from jax.experimental import pallas as pl
from jax.experimental.pallas import tpu as pltpu

LANES = 128                     # lane-dense channel padding
C1, C2, F1, NCLS = 32, 64, 20, 10

# conv1 geometry: 28x28 -> conv3x3 -> 26x26 -> pool2x2 -> 13x13
H1 = W1 = 28
HO1 = WO1 = 26
HP1 = WP1 = 13
S1 = HO1 * W1                   # 728 flat conv rows (cols w>=26 of each row are garbage)
SCR1 = (2 * HP1 + 1) * W1       # 756 scratch rows covering the 4 strided pool phases
XROWS1 = 800                    # >= S1 + 2*W1 + 2 = 786 (zero-padded input rows)
OROWS1 = 176                    # >= 13*13 + 2*13 + 2 = 171 (zero-padded rows for conv2 shifts)

# conv2 geometry: 13x13 -> conv3x3 -> 11x11 -> pool2x2 -> 5x5
W2 = 13
HO2 = WO2 = 11
HP2 = WP2 = 5
S2 = HO2 * W2                   # 143
SCR2 = (2 * HP2 + 1) * W2       # 143
OROWS2 = HP2 * WP2              # 25

_VMEM_LIMIT = 32 * 1024 * 1024  # safe on v5e/v6e (128 MiB) and v7x (64 MiB)


# ----------------------------- Pallas kernels ------------------------------

def _conv_relu_pool_kernel(x_ref, w_ref, b_ref, o_ref, y_scr,
                           *, W, Ho, Hp, Wp, vpu_cin1):
    """Fused valid 3x3 conv + bias + ReLU + 2x2 stride-2 max-pool for one image.

    x_ref : (1, rows_in, Cin)     flat spatial rows n = h*W + w, channels-last,
                                  zero-padded tail rows
    w_ref : (9, 128) if vpu_cin1 else (9, 128, 128)   [tap, (cin,) cout] zero-padded
    b_ref : (1, 128) f32
    o_ref : (1, rows_out, 128)    pooled rows i*Wp + j, zero-padded tail rows
    y_scr : (scr_rows, 128) f32   VMEM scratch for the pre-pool conv map
    """
    S = Ho * W
    acc = jnp.zeros((S, LANES), jnp.float32)
    for t in range(9):
        dh, dw = divmod(t, 3)
        off = dh * W + dw
        xs = x_ref[0, pl.ds(off, S), :]
        if vpu_cin1:
            # Cin == 1: K=1 would waste the MXU -> 9 VPU multiply-accumulates.
            acc = acc + xs.astype(jnp.float32) * w_ref[pl.ds(t, 1), :]
        else:
            # Cin padded to 128: full-K bf16 MXU matmul per tap, f32 accumulation.
            acc = acc + jnp.dot(xs, w_ref[t], preferred_element_type=jnp.float32)
    y = jnp.maximum(acc + b_ref[...], 0.0)

    # Park the pre-pool map in VMEM scratch; zero the tail rows that the strided
    # pool reads may touch (they only land in discarded garbage columns).
    y_scr[pl.ds(0, S), :] = y
    pad = y_scr.shape[0] - S
    if pad > 0:
        y_scr[pl.ds(S, pad), :] = jnp.zeros((pad, LANES), jnp.float32)

    # 2x2 stride-2 max pool == elementwise max of 4 strided phase reads.
    n = Hp * W
    p00 = y_scr[pl.ds(0, n, 2), :]
    p01 = y_scr[pl.ds(1, n, 2), :]
    p10 = y_scr[pl.ds(W, n, 2), :]
    p11 = y_scr[pl.ds(W + 1, n, 2), :]
    pooled = jnp.maximum(jnp.maximum(p00, p01), jnp.maximum(p10, p11))

    # Keep only the Wp valid columns of each pooled row group (drops garbage cols).
    for i in range(Hp):
        o_ref[0, pl.ds(i * Wp, Wp), :] = (
            pooled[i * W:i * W + Wp, :].astype(o_ref.dtype))
    tail = o_ref.shape[1] - Hp * Wp
    if tail > 0:
        o_ref[0, pl.ds(Hp * Wp, tail), :] = jnp.zeros((tail, LANES), o_ref.dtype)


def _head_kernel(x_ref, w1_ref, b1_ref, w2_ref, b2_ref, o_ref):
    # o = relu(x @ W1 + b1) @ W2 + b2, all widths padded to 128 lanes, f32 accumulation.
    h = jnp.dot(x_ref[...], w1_ref[...],
                preferred_element_type=jnp.float32) + b1_ref[...]
    h = jnp.maximum(h, 0.0).astype(w2_ref.dtype)
    o_ref[...] = jnp.dot(h, w2_ref[...],
                         preferred_element_type=jnp.float32) + b2_ref[...]


# ------------------------------- wrappers -----------------------------------

def _conv_relu_pool(x, w, b, *, W, Ho, Hp, Wp, out_rows, scr_rows, out_dtype,
                    flops, bytes_accessed):
    B, in_rows, cin = x.shape
    kernel = functools.partial(
        _conv_relu_pool_kernel, W=W, Ho=Ho, Hp=Hp, Wp=Wp, vpu_cin1=(cin == 1))
    w_idx_map = (lambda bi: (0, 0)) if w.ndim == 2 else (lambda bi: (0, 0, 0))
    return pl.pallas_call(
        kernel,
        out_shape=jax.ShapeDtypeStruct((B, out_rows, LANES), out_dtype),
        grid_spec=pltpu.PrefetchScalarGridSpec(
            num_scalar_prefetch=0,
            grid=(B,),
            in_specs=[
                pl.BlockSpec((1, in_rows, cin), lambda bi: (bi, 0, 0)),
                pl.BlockSpec(w.shape, w_idx_map),
                pl.BlockSpec(b.shape, lambda bi: (0, 0)),
            ],
            out_specs=pl.BlockSpec((1, out_rows, LANES), lambda bi: (bi, 0, 0)),
            scratch_shapes=[pltpu.VMEM((scr_rows, LANES), jnp.float32)],
        ),
        compiler_params=pltpu.CompilerParams(
            dimension_semantics=("parallel",),
            vmem_limit_bytes=_VMEM_LIMIT),
        cost_estimate=pl.CostEstimate(
            flops=flops, transcendentals=0, bytes_accessed=bytes_accessed),
    )(x, w, b)


def _classification_head(feat, w1, b1, w2, b2):
    B, K = feat.shape
    vm = pl.BlockSpec(memory_space=pltpu.MemorySpace.VMEM)
    flops = 2 * B * (K * LANES + LANES * LANES)
    bytes_accessed = int(B * K * 2 + K * LANES * 2 + LANES * LANES * 2
                         + 2 * LANES * 4 + B * LANES * 4)
    return pl.pallas_call(
        _head_kernel,
        out_shape=jax.ShapeDtypeStruct((B, LANES), jnp.float32),
        in_specs=[vm, vm, vm, vm, vm],
        out_specs=vm,
        compiler_params=pltpu.CompilerParams(vmem_limit_bytes=_VMEM_LIMIT),
        cost_estimate=pl.CostEstimate(flops=flops, transcendentals=0,
                                      bytes_accessed=bytes_accessed),
    )(feat, w1, b1, w2, b2)


def cnn_classifier_forward(x, pp):
    B = x.shape[0]
    # conv1 input: flat rows n = h*28 + w, channels-last (Cin=1), zero-padded tail rows.
    x1 = x.reshape(B, H1 * W1, 1).astype(jnp.float32)
    x1 = jnp.pad(x1, ((0, 0), (0, XROWS1 - H1 * W1), (0, 0)))
    a1 = _conv_relu_pool(
        x1, pp["w1"], pp["b1"], W=W1, Ho=HO1, Hp=HP1, Wp=WP1,
        out_rows=OROWS1, scr_rows=SCR1, out_dtype=jnp.bfloat16,
        flops=2 * B * 9 * S1 * LANES,
        bytes_accessed=int(B * (XROWS1 * 4 + OROWS1 * LANES * 2)
                           + 9 * LANES * 4 + LANES * 4))
    a2 = _conv_relu_pool(
        a1, pp["w2"], pp["b2"], W=W2, Ho=HO2, Hp=HP2, Wp=WP2,
        out_rows=OROWS2, scr_rows=SCR2, out_dtype=jnp.bfloat16,
        flops=2 * B * 9 * S2 * LANES * LANES,
        bytes_accessed=int(B * (OROWS1 + OROWS2) * LANES * 2
                           + 9 * LANES * LANES * 2 + LANES * 4))
    # (B, 25, 128) -> (B, 3200): contiguous, free reshape; flatten order is baked into wf1.
    feat = a2.reshape(B, OROWS2 * LANES)
    logits = _classification_head(feat, pp["wf1"], pp["bf1"], pp["wf2"], pp["bf2"])
    return logits[:, :NCLS]


# --------------------------- parameter handling ------------------------------

def init_params(key):
    ks = jax.random.split(key, 8)

    def u(k, shape, fan_in):
        bound = 1.0 / jnp.sqrt(fan_in)
        return jax.random.uniform(k, shape, jnp.float32, -bound, bound)

    return {
        "conv1_w": u(ks[0], (C1, 1, 3, 3), 1 * 9),
        "conv1_b": u(ks[1], (C1,), 1 * 9),
        "conv2_w": u(ks[2], (C2, C1, 3, 3), C1 * 9),
        "conv2_b": u(ks[3], (C2,), C1 * 9),
        "fc1_w":   u(ks[4], (F1, C2 * 5 * 5), C2 * 5 * 5),
        "fc1_b":   u(ks[5], (F1,), C2 * 5 * 5),
        "fc2_w":   u(ks[6], (NCLS, F1), F1),
        "fc2_b":   u(ks[7], (NCLS,), F1),
    }


def prepare_params(p):
    """One-time prep: transpose to kernel layouts, zero-pad to 128 lanes, bf16 MXU weights."""
    f32, bf16 = jnp.float32, jnp.bfloat16
    # conv1: (C1,1,3,3) -> (9, 128)  [tap = dh*3+dw, cout]   (f32: used on the VPU)
    w1 = jnp.transpose(p["conv1_w"][:, 0], (1, 2, 0)).reshape(9, C1)
    w1p = jnp.zeros((9, LANES), f32).at[:, :C1].set(w1)
    b1p = jnp.zeros((1, LANES), f32).at[0, :C1].set(p["conv1_b"])
    # conv2: (C2,C1,3,3) -> (9, 128, 128)  [tap, cin, cout]  (bf16 MXU inputs)
    w2 = jnp.transpose(p["conv2_w"], (2, 3, 1, 0)).reshape(9, C1, C2)
    w2p = jnp.zeros((9, LANES, LANES), f32).at[:, :C1, :C2].set(w2).astype(bf16)
    b2p = jnp.zeros((1, LANES), f32).at[0, :C2].set(p["conv2_b"])
    # fc1: (F1, C2*25) -> (25*128, 128); row index p*128 + c matches feat = (B,25,128) flatten.
    wf1 = jnp.transpose(p["fc1_w"].reshape(F1, C2, 25), (2, 1, 0))          # [p, c, f]
    wf1p = jnp.zeros((25, LANES, LANES), f32).at[:, :C2, :F1].set(wf1)
    wf1p = wf1p.reshape(25 * LANES, LANES).astype(bf16)
    bf1p = jnp.zeros((1, LANES), f32).at[0, :F1].set(p["fc1_b"])
    # fc2: (10, F1) -> (128, 128)
    wf2p = jnp.zeros((LANES, LANES), f32).at[:F1, :NCLS].set(p["fc2_w"].T).astype(bf16)
    bf2p = jnp.zeros((1, LANES), f32).at[0, :NCLS].set(p["fc2_b"])
    return {"w1": w1p, "b1": b1p, "w2": w2p, "b2": b2p,
            "wf1": wf1p, "bf1": bf1p, "wf2": wf2p, "bf2": bf2p}


# ---------------------------- pure-JAX reference ------------------------------

def reference_forward(x, p):
    def conv(x, w, b):
        y = lax.conv_general_dilated(x, w, (1, 1), "VALID",
                                     dimension_numbers=("NCHW", "OIHW", "NCHW"))
        return jnp.maximum(y + b[None, :, None, None], 0.0)

    def pool(y):
        return lax.reduce_window(y, -jnp.inf, lax.max,
                                 (1, 1, 2, 2), (1, 1, 2, 2), "VALID")

    y = pool(conv(x, p["conv1_w"], p["conv1_b"]))
    y = pool(conv(y, p["conv2_w"], p["conv2_b"]))
    feat = y.reshape(y.shape[0], -1)
    h = jnp.maximum(feat @ p["fc1_w"].T + p["fc1_b"], 0.0)
    return h @ p["fc2_w"].T + p["fc2_b"]


# ------------------------------------ main ------------------------------------

if __name__ == "__main__":
    key = jax.random.PRNGKey(0)
    kx, kp = jax.random.split(key)

    # 28x28 single-channel input is required by the module (64*5*5 flatten).
    x = jax.random.normal(kx, (2, 1, 28, 28), dtype=jnp.float32)
    params = init_params(kp)
    prepped = prepare_params(params)          # one-time weight prep, outside the jitted forward

    fwd = jax.jit(cnn_classifier_forward)
    out = jax.block_until_ready(fwd(x, prepped))

    ref = reference_forward(x, params)
    assert out.shape == (2, 10)
    max_err = float(jnp.max(jnp.abs(out - ref)))
    # bf16 MXU inputs with f32 accumulation -> ~1e-3 abs error at these magnitudes.
    assert jnp.allclose(out, ref, atol=1e-2, rtol=1e-2), max_err

    print("KERNEL_OK")
</pallas_src>

<mosaic_0001>
module attributes {stable_mosaic.version = 11 : i64} {
  func.func @_conv_relu_pool_kernel(%arg0: i32, %arg1: memref<1x800x1xf32, #tpu.memory_space<vmem>>, %arg2: memref<9x128xf32, #tpu.memory_space<vmem>>, %arg3: memref<1x128xf32, #tpu.memory_space<vmem>>, %arg4: memref<1x176x128xbf16, #tpu.memory_space<vmem>>, %arg5: memref<756x128xf32, #tpu.memory_space<vmem>>) attributes {dimension_semantics = [#tpu.dimension_semantics<parallel>], iteration_bounds = array<i64: 2>, scalar_prefetch = 0 : i64, scratch_operands = 1 : i64, tpu.core_type = #tpu.core_type<tc>, window_params = [{transform_indices = @transform_0, window_bounds = array<i64: 1, 800, 1>}, {pipeline_mode = #tpu.pipeline_mode<synchronous>, transform_indices = @transform_1, window_bounds = array<i64: 9, 128>}, {pipeline_mode = #tpu.pipeline_mode<synchronous>, transform_indices = @transform_2, window_bounds = array<i64: 1, 128>}, {transform_indices = @transform_3, window_bounds = array<i64: 1, 176, 128>}]} {
    %cst = arith.constant 0.000000e+00 : f32
    %0 = vector.broadcast %cst : f32 to vector<728x128xf32>
    %c0 = arith.constant 0 : index
    %c0_0 = arith.constant 0 : index
    %c0_1 = arith.constant 0 : index
    %1 = vector.load %arg1[%c0, %c0_0, %c0_1] : memref<1x800x1xf32, #tpu.memory_space<vmem>>, vector<1x728x1xf32>
    %2 = vector.shape_cast %1 : vector<1x728x1xf32> to vector<728x1xf32>
    %c0_2 = arith.constant 0 : index
    %c0_3 = arith.constant 0 : index
    %3 = vector.load %arg2[%c0_2, %c0_3] : memref<9x128xf32, #tpu.memory_space<vmem>>, vector<1x128xf32>
    %4 = vector.broadcast %2 : vector<728x1xf32> to vector<728x128xf32>
    %5 = vector.broadcast %3 : vector<1x128xf32> to vector<728x128xf32>
    %6 = arith.mulf %4, %5 : vector<728x128xf32>
    %7 = arith.addf %0, %6 : vector<728x128xf32>
    %c0_4 = arith.constant 0 : index
    %c1 = arith.constant 1 : index
    %c0_5 = arith.constant 0 : index
    %8 = vector.load %arg1[%c0_4, %c1, %c0_5] : memref<1x800x1xf32, #tpu.memory_space<vmem>>, vector<1x728x1xf32>
    %9 = vector.shape_cast %8 : vector<1x728x1xf32> to vector<728x1xf32>
    %c1_6 = arith.constant 1 : index
    %c0_7 = arith.constant 0 : index
    %10 = vector.load %arg2[%c1_6, %c0_7] : memref<9x128xf32, #tpu.memory_space<vmem>>, vector<1x128xf32>
    %11 = vector.broadcast %9 : vector<728x1xf32> to vector<728x128xf32>
    %12 = vector.broadcast %10 : vector<1x128xf32> to vector<728x128xf32>
    %13 = arith.mulf %11, %12 : vector<728x128xf32>
    %14 = arith.addf %7, %13 : vector<728x128xf32>
    %c0_8 = arith.constant 0 : index
    %c2 = arith.constant 2 : index
    %c0_9 = arith.constant 0 : index
    %15 = vector.load %arg1[%c0_8, %c2, %c0_9] : memref<1x800x1xf32, #tpu.memory_space<vmem>>, vector<1x728x1xf32>
    %16 = vector.shape_cast %15 : vector<1x728x1xf32> to vector<728x1xf32>
    %c2_10 = arith.constant 2 : index
    %c0_11 = arith.constant 0 : index
    %17 = vector.load %arg2[%c2_10, %c0_11] : memref<9x128xf32, #tpu.memory_space<vmem>>, vector<1x128xf32>
    %18 = vector.broadcast %16 : vector<728x1xf32> to vector<728x128xf32>
    %19 = vector.broadcast %17 : vector<1x128xf32> to vector<728x128xf32>
    %20 = arith.mulf %18, %19 : vector<728x128xf32>
    %21 = arith.addf %14, %20 : vector<728x128xf32>
    %c0_12 = arith.constant 0 : index
    %c28 = arith.constant 28 : index
    %c0_13 = arith.constant 0 : index
    %22 = vector.load %arg1[%c0_12, %c28, %c0_13] : memref<1x800x1xf32, #tpu.memory_space<vmem>>, vector<1x728x1xf32>
    %23 = vector.shape_cast %22 : vector<1x728x1xf32> to vector<728x1xf32>
    %c3 = arith.constant 3 : index
    %c0_14 = arith.constant 0 : index
    %24 = vector.load %arg2[%c3, %c0_14] : memref<9x128xf32, #tpu.memory_space<vmem>>, vector<1x128xf32>
    %25 = vector.broadcast %23 : vector<728x1xf32> to vector<728x128xf32>
    %26 = vector.broadcast %24 : vector<1x128xf32> to vector<728x128xf32>
    %27 = arith.mulf %25, %26 : vector<728x128xf32>
    %28 = arith.addf %21, %27 : vector<728x128xf32>
    %c0_15 = arith.constant 0 : index
    %c29 = arith.constant 29 : index
    %c0_16 = arith.constant 0 : index
    %29 = vector.load %arg1[%c0_15, %c29, %c0_16] : memref<1x800x1xf32, #tpu.memory_space<vmem>>, vector<1x728x1xf32>
    %30 = vector.shape_cast %29 : vector<1x728x1xf32> to vector<728x1xf32>
    %c4 = arith.constant 4 : index
    %c0_17 = arith.constant 0 : index
    %31 = vector.load %arg2[%c4, %c0_17] : memref<9x128xf32, #tpu.memory_space<vmem>>, vector<1x128xf32>
    %32 = vector.broadcast %30 : vector<728x1xf32> to vector<728x128xf32>
    %33 = vector.broadcast %31 : vector<1x128xf32> to vector<728x128xf32>
    %34 = arith.mulf %32, %33 : vector<728x128xf32>
    %35 = arith.addf %28, %34 : vector<728x128xf32>
    %c0_18 = arith.constant 0 : index
    %c30 = arith.constant 30 : index
    %c0_19 = arith.constant 0 : index
    %36 = vector.load %arg1[%c0_18, %c30, %c0_19] : memref<1x800x1xf32, #tpu.memory_space<vmem>>, vector<1x728x1xf32>
    %37 = vector.shape_cast %36 : vector<1x728x1xf32> to vector<728x1xf32>
    %c5 = arith.constant 5 : index
    %c0_20 = arith.constant 0 : index
    %38 = vector.load %arg2[%c5, %c0_20] : memref<9x128xf32, #tpu.memory_space<vmem>>, vector<1x128xf32>
    %39 = vector.broadcast %37 : vector<728x1xf32> to vector<728x128xf32>
    %40 = vector.broadcast %38 : vector<1x128xf32> to vector<728x128xf32>
    %41 = arith.mulf %39, %40 : vector<728x128xf32>
    %42 = arith.addf %35, %41 : vector<728x128xf32>
    %c0_21 = arith.constant 0 : index
    %c56 = arith.constant 56 : index
    %c0_22 = arith.constant 0 : index
    %43 = vector.load %arg1[%c0_21, %c56, %c0_22] : memref<1x800x1xf32, #tpu.memory_space<vmem>>, vector<1x728x1xf32>
    %44 = vector.shape_cast %43 : vector<1x728x1xf32> to vector<728x1xf32>
    %c6 = arith.constant 6 : index
    %c0_23 = arith.constant 0 : index
    %45 = vector.load %arg2[%c6, %c0_23] : memref<9x128xf32, #tpu.memory_space<vmem>>, vector<1x128xf32>
    %46 = vector.broadcast %44 : vector<728x1xf32> to vector<728x128xf32>
    %47 = vector.broadcast %45 : vector<1x128xf32> to vector<728x128xf32>
    %48 = arith.mulf %46, %47 : vector<728x128xf32>
    %49 = arith.addf %42, %48 : vector<728x128xf32>
    %c0_24 = arith.constant 0 : index
    %c57 = arith.constant 57 : index
    %c0_25 = arith.constant 0 : index
    %50 = vector.load %arg1[%c0_24, %c57, %c0_25] : memref<1x800x1xf32, #tpu.memory_space<vmem>>, vector<1x728x1xf32>
    %51 = vector.shape_cast %50 : vector<1x728x1xf32> to vector<728x1xf32>
    %c7 = arith.constant 7 : index
    %c0_26 = arith.constant 0 : index
    %52 = vector.load %arg2[%c7, %c0_26] : memref<9x128xf32, #tpu.memory_space<vmem>>, vector<1x128xf32>
    %53 = vector.broadcast %51 : vector<728x1xf32> to vector<728x128xf32>
    %54 = vector.broadcast %52 : vector<1x128xf32> to vector<728x128xf32>
    %55 = arith.mulf %53, %54 : vector<728x128xf32>
    %56 = arith.addf %49, %55 : vector<728x128xf32>
    %c0_27 = arith.constant 0 : index
    %c58 = arith.constant 58 : index
    %c0_28 = arith.constant 0 : index
    %57 = vector.load %arg1[%c0_27, %c58, %c0_28] : memref<1x800x1xf32, #tpu.memory_space<vmem>>, vector<1x728x1xf32>
    %58 = vector.shape_cast %57 : vector<1x728x1xf32> to vector<728x1xf32>
    %c8 = arith.constant 8 : index
    %c0_29 = arith.constant 0 : index
    %59 = vector.load %arg2[%c8, %c0_29] : memref<9x128xf32, #tpu.memory_space<vmem>>, vector<1x128xf32>
    %60 = vector.broadcast %58 : vector<728x1xf32> to vector<728x128xf32>
    %61 = vector.broadcast %59 : vector<1x128xf32> to vector<728x128xf32>
    %62 = arith.mulf %60, %61 : vector<728x128xf32>
    %63 = arith.addf %56, %62 : vector<728x128xf32>
    %c0_30 = arith.constant 0 : index
    %c0_31 = arith.constant 0 : index
    %64 = vector.load %arg3[%c0_30, %c0_31] : memref<1x128xf32, #tpu.memory_space<vmem>>, vector<1x128xf32>
    %65 = vector.broadcast %64 : vector<1x128xf32> to vector<728x128xf32>
    %66 = arith.addf %63, %65 : vector<728x128xf32>
    %cst_32 = arith.constant 0.000000e+00 : f32
    %67 = vector.broadcast %cst_32 : f32 to vector<728x128xf32>
    %68 = arith.maximumf %66, %67 : vector<728x128xf32>
    %c0_33 = arith.constant 0 : index
    %c0_34 = arith.constant 0 : index
    %69 = vector.load %arg5[%c0_33, %c0_34] : memref<756x128xf32, #tpu.memory_space<vmem>>, vector<728x128xf32>
    tpu.vector_store %arg5[%c0_33, %c0_34], %68 {strides = array<i32>} : memref<756x128xf32, #tpu.memory_space<vmem>>, vector<728x128xf32>,
    %cst_35 = arith.constant 0.000000e+00 : f32
    %70 = vector.broadcast %cst_35 : f32 to vector<28x128xf32>
    %c728 = arith.constant 728 : index
    %c0_36 = arith.constant 0 : index
    %71 = vector.load %arg5[%c728, %c0_36] : memref<756x128xf32, #tpu.memory_space<vmem>>, vector<28x128xf32>
    tpu.vector_store %arg5[%c728, %c0_36], %70 {strides = array<i32>} : memref<756x128xf32, #tpu.memory_space<vmem>>, vector<28x128xf32>,
    %c0_37 = arith.constant 0 : index
    %c0_38 = arith.constant 0 : index
    %72 = tpu.strided_load %arg5[%c0_37, %c0_38] {strides = array<i32: 2, 1>} : memref<756x128xf32, #tpu.memory_space<vmem>>, vector<364x128xf32>
    %c1_39 = arith.constant 1 : index
    %c0_40 = arith.constant 0 : index
    %73 = tpu.strided_load %arg5[%c1_39, %c0_40] {strides = array<i32: 2, 1>} : memref<756x128xf32, #tpu.memory_space<vmem>>, vector<364x128xf32>
    %c28_41 = arith.constant 28 : index
    %c0_42 = arith.constant 0 : index
    %74 = tpu.strided_load %arg5[%c28_41, %c0_42] {strides = array<i32: 2, 1>} : memref<756x128xf32, #tpu.memory_space<vmem>>, vector<364x128xf32>
    %c29_43 = arith.constant 29 : index
    %c0_44 = arith.constant 0 : index
    %75 = tpu.strided_load %arg5[%c29_43, %c0_44] {strides = array<i32: 2, 1>} : memref<756x128xf32, #tpu.memory_space<vmem>>, vector<364x128xf32>
    %76 = arith.maximumf %72, %73 : vector<364x128xf32>
    %77 = arith.maximumf %74, %75 : vector<364x128xf32>
    %78 = arith.maximumf %76, %77 : vector<364x128xf32>
    %79 = vector.extract_strided_slice %78 {offsets = [0, 0], sizes = [13, 128], strides = [1, 1]} : vector<364x128xf32> to vector<13x128xf32>
    %80 = arith.truncf %79 : vector<13x128xf32> to vector<13x128xbf16>
    %c0_45 = arith.constant 0 : index
    %c0_46 = arith.constant 0 : index
    %c0_47 = arith.constant 0 : index
    %81 = vector.load %arg4[%c0_45, %c0_46, %c0_47] : memref<1x176x128xbf16, #tpu.memory_space<vmem>>, vector<1x13x128xbf16>
    %82 = vector.shape_cast %81 : vector<1x13x128xbf16> to vector<13x128xbf16>
    %83 = vector.shape_cast %80 : vector<13x128xbf16> to vector<1x13x128xbf16>
    tpu.vector_store %arg4[%c0_45, %c0_46, %c0_47], %83 {strides = array<i32>} : memref<1x176x128xbf16, #tpu.memory_space<vmem>>, vector<1x13x128xbf16>,
    %84 = vector.extract_strided_slice %78 {offsets = [28, 0], sizes = [13, 128], strides = [1, 1]} : vector<364x128xf32> to vector<13x128xf32>
    %85 = arith.truncf %84 : vector<13x128xf32> to vector<13x128xbf16>
    %c0_48 = arith.constant 0 : index
    %c13 = arith.constant 13 : index
    %c0_49 = arith.constant 0 : index
    %86 = vector.load %arg4[%c0_48, %c13, %c0_49] : memref<1x176x128xbf16, #tpu.memory_space<vmem>>, vector<1x13x128xbf16>
    %87 = vector.shape_cast %86 : vector<1x13x128xbf16> to vector<13x128xbf16>
    %88 = vector.shape_cast %85 : vector<13x128xbf16> to vector<1x13x128xbf16>
    tpu.vector_store %arg4[%c0_48, %c13, %c0_49], %88 {strides = array<i32>} : memref<1x176x128xbf16, #tpu.memory_space<vmem>>, vector<1x13x128xbf16>,
    %89 = vector.extract_strided_slice %78 {offsets = [56, 0], sizes = [13, 128], strides = [1, 1]} : vector<364x128xf32> to vector<13x128xf32>
    %90 = arith.truncf %89 : vector<13x128xf32> to vector<13x128xbf16>
    %c0_50 = arith.constant 0 : index
    %c26 = arith.constant 26 : index
    %c0_51 = arith.constant 0 : index
    %91 = vector.load %arg4[%c0_50, %c26, %c0_51] : memref<1x176x128xbf16, #tpu.memory_space<vmem>>, vector<1x13x128xbf16>
    %92 = vector.shape_cast %91 : vector<1x13x128xbf16> to vector<13x128xbf16>
    %93 = vector.shape_cast %90 : vector<13x128xbf16> to vector<1x13x128xbf16>
    tpu.vector_store %arg4[%c0_50, %c26, %c0_51], %93 {strides = array<i32>} : memref<1x176x128xbf16, #tpu.memory_space<vmem>>, vector<1x13x128xbf16>,
    %94 = vector.extract_strided_slice %78 {offsets = [84, 0], sizes = [13, 128], strides = [1, 1]} : vector<364x128xf32> to vector<13x128xf32>
    %95 = arith.truncf %94 : vector<13x128xf32> to vector<13x128xbf16>
    %c0_52 = arith.constant 0 : index
    %c39 = arith.constant 39 : index
    %c0_53 = arith.constant 0 : index
    %96 = vector.load %arg4[%c0_52, %c39, %c0_53] : memref<1x176x128xbf16, #tpu.memory_space<vmem>>, vector<1x13x128xbf16>
    %97 = vector.shape_cast %96 : vector<1x13x128xbf16> to vector<13x128xbf16>
    %98 = vector.shape_cast %95 : vector<13x128xbf16> to vector<1x13x128xbf16>
    tpu.vector_store %arg4[%c0_52, %c39, %c0_53], %98 {strides = array<i32>} : memref<1x176x128xbf16, #tpu.memory_space<vmem>>, vector<1x13x128xbf16>,
    %99 = vector.extract_strided_slice %78 {offsets = [112, 0], sizes = [13, 128], strides = [1, 1]} : vector<364x128xf32> to vector<13x128xf32>
    %100 = arith.truncf %99 : vector<13x128xf32> to vector<13x128xbf16>
    %c0_54 = arith.constant 0 : index
    %c52 = arith.constant 52 : index
    %c0_55 = arith.constant 0 : index
    %101 = vector.load %arg4[%c0_54, %c52, %c0_55] : memref<1x176x128xbf16, #tpu.memory_space<vmem>>, vector<1x13x128xbf16>
    %102 = vector.shape_cast %101 : vector<1x13x128xbf16> to vector<13x128xbf16>
    %103 = vector.shape_cast %100 : vector<13x128xbf16> to vector<1x13x128xbf16>
    tpu.vector_store %arg4[%c0_54, %c52, %c0_55], %103 {strides = array<i32>} : memref<1x176x128xbf16, #tpu.memory_space<vmem>>, vector<1x13x128xbf16>,
    %104 = vector.extract_strided_slice %78 {offsets = [140, 0], sizes = [13, 128], strides = [1, 1]} : vector<364x128xf32> to vector<13x128xf32>
    %105 = arith.truncf %104 : vector<13x128xf32> to vector<13x128xbf16>
    %c0_56 = arith.constant 0 : index
    %c65 = arith.constant 65 : index
    %c0_57 = arith.constant 0 : index
    %106 = vector.load %arg4[%c0_56, %c65, %c0_57] : memref<1x176x128xbf16, #tpu.memory_space<vmem>>, vector<1x13x128xbf16>
    %107 = vector.shape_cast %106 : vector<1x13x128xbf16> to vector<13x128xbf16>
    %108 = vector.shape_cast %105 : vector<13x128xbf16> to vector<1x13x128xbf16>
    tpu.vector_store %arg4[%c0_56, %c65, %c0_57], %108 {strides = array<i32>} : memref<1x176x128xbf16, #tpu.memory_space<vmem>>, vector<1x13x128xbf16>,
    %109 = vector.extract_strided_slice %78 {offsets = [168, 0], sizes = [13, 128], strides = [1, 1]} : vector<364x128xf32> to vector<13x128xf32>
    %110 = arith.truncf %109 : vector<13x128xf32> to vector<13x128xbf16>
    %c0_58 = arith.constant 0 : index
    %c78 = arith.constant 78 : index
    %c0_59 = arith.constant 0 : index
    %111 = vector.load %arg4[%c0_58, %c78, %c0_59] : memref<1x176x128xbf16, #tpu.memory_space<vmem>>, vector<1x13x128xbf16>
    %112 = vector.shape_cast %111 : vector<1x13x128xbf16> to vector<13x128xbf16>
    %113 = vector.shape_cast %110 : vector<13x128xbf16> to vector<1x13x128xbf16>
    tpu.vector_store %arg4[%c0_58, %c78, %c0_59], %113 {strides = array<i32>} : memref<1x176x128xbf16, #tpu.memory_space<vmem>>, vector<1x13x128xbf16>,
    %114 = vector.extract_strided_slice %78 {offsets = [196, 0], sizes = [13, 128], strides = [1, 1]} : vector<364x128xf32> to vector<13x128xf32>
    %115 = arith.truncf %114 : vector<13x128xf32> to vector<13x128xbf16>
    %c0_60 = arith.constant 0 : index
    %c91 = arith.constant 91 : index
    %c0_61 = arith.constant 0 : index
    %116 = vector.load %arg4[%c0_60, %c91, %c0_61] : memref<1x176x128xbf16, #tpu.memory_space<vmem>>, vector<1x13x128xbf16>
    %117 = vector.shape_cast %116 : vector<1x13x128xbf16> to vector<13x128xbf16>
    %118 = vector.shape_cast %115 : vector<13x128xbf16> to vector<1x13x128xbf16>
    tpu.vector_store %arg4[%c0_60, %c91, %c0_61], %118 {strides = array<i32>} : memref<1x176x128xbf16, #tpu.memory_space<vmem>>, vector<1x13x128xbf16>,
    %119 = vector.extract_strided_slice %78 {offsets = [224, 0], sizes = [13, 128], strides = [1, 1]} : vector<364x128xf32> to vector<13x128xf32>
    %120 = arith.truncf %119 : vector<13x128xf32> to vector<13x128xbf16>
    %c0_62 = arith.constant 0 : index
    %c104 = arith.constant 104 : index
    %c0_63 = arith.constant 0 : index
    %121 = vector.load %arg4[%c0_62, %c104, %c0_63] : memref<1x176x128xbf16, #tpu.memory_space<vmem>>, vector<1x13x128xbf16>
    %122 = vector.shape_cast %121 : vector<1x13x128xbf16> to vector<13x128xbf16>
    %123 = vector.shape_cast %120 : vector<13x128xbf16> to vector<1x13x128xbf16>
    tpu.vector_store %arg4[%c0_62, %c104, %c0_63], %123 {strides = array<i32>} : memref<1x176x128xbf16, #tpu.memory_space<vmem>>, vector<1x13x128xbf16>,
    %124 = vector.extract_strided_slice %78 {offsets = [252, 0], sizes = [13, 128], strides = [1, 1]} : vector<364x128xf32> to vector<13x128xf32>
    %125 = arith.truncf %124 : vector<13x128xf32> to vector<13x128xbf16>
    %c0_64 = arith.constant 0 : index
    %c117 = arith.constant 117 : index
    %c0_65 = arith.constant 0 : index
    %126 = vector.load %arg4[%c0_64, %c117, %c0_65] : memref<1x176x128xbf16, #tpu.memory_space<vmem>>, vector<1x13x128xbf16>
    %127 = vector.shape_cast %126 : vector<1x13x128xbf16> to vector<13x128xbf16>
    %128 = vector.shape_cast %125 : vector<13x128xbf16> to vector<1x13x128xbf16>
    tpu.vector_store %arg4[%c0_64, %c117, %c0_65], %128 {strides = array<i32>} : memref<1x176x128xbf16, #tpu.memory_space<vmem>>, vector<1x13x128xbf16>,
    %129 = vector.extract_strided_slice %78 {offsets = [280, 0], sizes = [13, 128], strides = [1, 1]} : vector<364x128xf32> to vector<13x128xf32>
    %130 = arith.truncf %129 : vector<13x128xf32> to vector<13x128xbf16>
    %c0_66 = arith.constant 0 : index
    %c130 = arith.constant 130 : index
    %c0_67 = arith.constant 0 : index
    %131 = vector.load %arg4[%c0_66, %c130, %c0_67] : memref<1x176x128xbf16, #tpu.memory_space<vmem>>, vector<1x13x128xbf16>
    %132 = vector.shape_cast %131 : vector<1x13x128xbf16> to vector<13x128xbf16>
    %133 = vector.shape_cast %130 : vector<13x128xbf16> to vector<1x13x128xbf16>
    tpu.vector_store %arg4[%c0_66, %c130, %c0_67], %133 {strides = array<i32>} : memref<1x176x128xbf16, #tpu.memory_space<vmem>>, vector<1x13x128xbf16>,
    %134 = vector.extract_strided_slice %78 {offsets = [308, 0], sizes = [13, 128], strides = [1, 1]} : vector<364x128xf32> to vector<13x128xf32>
    %135 = arith.truncf %134 : vector<13x128xf32> to vector<13x128xbf16>
    %c0_68 = arith.constant 0 : index
    %c143 = arith.constant 143 : index
    %c0_69 = arith.constant 0 : index
    %136 = vector.load %arg4[%c0_68, %c143, %c0_69] : memref<1x176x128xbf16, #tpu.memory_space<vmem>>, vector<1x13x128xbf16>
    %137 = vector.shape_cast %136 : vector<1x13x128xbf16> to vector<13x128xbf16>
    %138 = vector.shape_cast %135 : vector<13x128xbf16> to vector<1x13x128xbf16>
    tpu.vector_store %arg4[%c0_68, %c143, %c0_69], %138 {strides = array<i32>} : memref<1x176x128xbf16, #tpu.memory_space<vmem>>, vector<1x13x128xbf16>,
    %139 = vector.extract_strided_slice %78 {offsets = [336, 0], sizes = [13, 128], strides = [1, 1]} : vector<364x128xf32> to vector<13x128xf32>
    %140 = arith.truncf %139 : vector<13x128xf32> to vector<13x128xbf16>
    %c0_70 = arith.constant 0 : index
    %c156 = arith.constant 156 : index
    %c0_71 = arith.constant 0 : index
    %141 = vector.load %arg4[%c0_70, %c156, %c0_71] : memref<1x176x128xbf16, #tpu.memory_space<vmem>>, vector<1x13x128xbf16>
    %142 = vector.shape_cast %141 : vector<1x13x128xbf16> to vector<13x128xbf16>
    %143 = vector.shape_cast %140 : vector<13x128xbf16> to vector<1x13x128xbf16>
    tpu.vector_store %arg4[%c0_70, %c156, %c0_71], %143 {strides = array<i32>} : memref<1x176x128xbf16, #tpu.memory_space<vmem>>, vector<1x13x128xbf16>,
    %cst_72 = arith.constant 0.000000e+00 : bf16
    %144 = vector.broadcast %cst_72 : bf16 to vector<7x128xbf16>
    %c0_73 = arith.constant 0 : index
    %c169 = arith.constant 169 : index
    %c0_74 = arith.constant 0 : index
    %145 = vector.load %arg4[%c0_73, %c169, %c0_74] : memref<1x176x128xbf16, #tpu.memory_space<vmem>>, vector<1x7x128xbf16>
    %146 = vector.shape_cast %145 : vector<1x7x128xbf16> to vector<7x128xbf16>
    %147 = vector.shape_cast %144 : vector<7x128xbf16> to vector<1x7x128xbf16>
    tpu.vector_store %arg4[%c0_73, %c169, %c0_74], %147 {strides = array<i32>} : memref<1x176x128xbf16, #tpu.memory_space<vmem>>, vector<1x7x128xbf16>,
    return
  }
  func.func @transform_0(%arg0: i32) -> (i32, i32, i32) {
    %c0_i32 = arith.constant 0 : i32
    %c0_i32_0 = arith.constant 0 : i32
    %c0_i32_1 = arith.constant 0 : i32
    return %arg0, %c0_i32, %c0_i32_0 : i32, i32, i32
  }
  func.func @transform_1(%arg0: i32) -> (i32, i32) {
    %c0_i32 = arith.constant 0 : i32
    %c0_i32_0 = arith.constant 0 : i32
    %c0_i32_1 = arith.constant 0 : i32
    return %c0_i32, %c0_i32_0 : i32, i32
  }
  func.func @transform_2(%arg0: i32) -> (i32, i32) {
    %c0_i32 = arith.constant 0 : i32
    %c0_i32_0 = arith.constant 0 : i32
    %c0_i32_1 = arith.constant 0 : i32
    return %c0_i32, %c0_i32_0 : i32, i32
  }
  func.func @transform_3(%arg0: i32) -> (i32, i32, i32) {
    %c0_i32 = arith.constant 0 : i32
    %c0_i32_0 = arith.constant 0 : i32
    %c0_i32_1 = arith.constant 0 : i32
    return %arg0, %c0_i32, %c0_i32_0 : i32, i32, i32
  }
}

module attributes {stable_mosaic.version = 11 : i64} {
  func.func @_conv_relu_pool_kernel(%arg0: i32, %arg1: memref<1x176x128xbf16, #tpu.memory_space<vmem>>, %arg2: memref<9x128x128xbf16, #tpu.memory_space<vmem>>, %arg3: memref<1x128xf32, #tpu.memory_space<vmem>>, %arg4: memref<1x25x128xbf16, #tpu.memory_space<vmem>>, %arg5: memref<143x128xf32, #tpu.memory_space<vmem>>) attributes {dimension_semantics = [#tpu.dimension_semantics<parallel>], iteration_bounds = array<i64: 2>, scalar_prefetch = 0 : i64, scratch_operands = 1 : i64, tpu.core_type = #tpu.core_type<tc>, window_params = [{transform_indices = @transform_0, window_bounds = array<i64: 1, 176, 128>}, {pipeline_mode = #tpu.pipeline_mode<synchronous>, transform_indices = @transform_1, window_bounds = array<i64: 9, 128, 128>}, {pipeline_mode = #tpu.pipeline_mode<synchronous>, transform_indices = @transform_2, window_bounds = array<i64: 1, 128>}, {transform_indices = @transform_3, window_bounds = array<i64: 1, 25, 128>}]} {
    %cst = arith.constant 0.000000e+00 : f32
    %0 = vector.broadcast %cst : f32 to vector<143x128xf32>
    %c0 = arith.constant 0 : index
    %c0_0 = arith.constant 0 : index
    %c0_1 = arith.constant 0 : index
    %1 = vector.load %arg1[%c0, %c0_0, %c0_1] : memref<1x176x128xbf16, #tpu.memory_space<vmem>>, vector<1x143x128xbf16>
    %2 = vector.shape_cast %1 : vector<1x143x128xbf16> to vector<143x128xbf16>
    %c0_2 = arith.constant 0 : index
    %c0_3 = arith.constant 0 : index
    %c0_4 = arith.constant 0 : index
    %3 = vector.load %arg2[%c0_2, %c0_3, %c0_4] : memref<9x128x128xbf16, #tpu.memory_space<vmem>>, vector<1x128x128xbf16>
    %4 = vector.shape_cast %3 : vector<1x128x128xbf16> to vector<128x128xbf16>
    %cst_5 = arith.constant dense<0.000000e+00> : vector<143x128xf32>
    %5 = tpu.matmul %2, %4, %cst_5 {dimension_numbers = #tpu.dot_dimension_numbers<[1], [0], [0], [1], [0, 0, 1, 1], [], []>} : vector<143x128xbf16>, vector<128x128xbf16>, vector<143x128xf32> -> vector<143x128xf32>
    %6 = arith.addf %0, %5 : vector<143x128xf32>
    %c0_6 = arith.constant 0 : index
    %c1 = arith.constant 1 : index
    %c0_7 = arith.constant 0 : index
    %7 = vector.load %arg1[%c0_6, %c1, %c0_7] : memref<1x176x128xbf16, #tpu.memory_space<vmem>>, vector<1x143x128xbf16>
    %8 = vector.shape_cast %7 : vector<1x143x128xbf16> to vector<143x128xbf16>
    %c1_8 = arith.constant 1 : index
    %c0_9 = arith.constant 0 : index
    %c0_10 = arith.constant 0 : index
    %9 = vector.load %arg2[%c1_8, %c0_9, %c0_10] : memref<9x128x128xbf16, #tpu.memory_space<vmem>>, vector<1x128x128xbf16>
    %10 = vector.shape_cast %9 : vector<1x128x128xbf16> to vector<128x128xbf16>
    %cst_11 = arith.constant dense<0.000000e+00> : vector<143x128xf32>
    %11 = tpu.matmul %8, %10, %cst_11 {dimension_numbers = #tpu.dot_dimension_numbers<[1], [0], [0], [1], [0, 0, 1, 1], [], []>} : vector<143x128xbf16>, vector<128x128xbf16>, vector<143x128xf32> -> vector<143x128xf32>
    %12 = arith.addf %6, %11 : vector<143x128xf32>
    %c0_12 = arith.constant 0 : index
    %c2 = arith.constant 2 : index
    %c0_13 = arith.constant 0 : index
    %13 = vector.load %arg1[%c0_12, %c2, %c0_13] : memref<1x176x128xbf16, #tpu.memory_space<vmem>>, vector<1x143x128xbf16>
    %14 = vector.shape_cast %13 : vector<1x143x128xbf16> to vector<143x128xbf16>
    %c2_14 = arith.constant 2 : index
    %c0_15 = arith.constant 0 : index
    %c0_16 = arith.constant 0 : index
    %15 = vector.load %arg2[%c2_14, %c0_15, %c0_16] : memref<9x128x128xbf16, #tpu.memory_space<vmem>>, vector<1x128x128xbf16>
    %16 = vector.shape_cast %15 : vector<1x128x128xbf16> to vector<128x128xbf16>
    %cst_17 = arith.constant dense<0.000000e+00> : vector<143x128xf32>
    %17 = tpu.matmul %14, %16, %cst_17 {dimension_numbers = #tpu.dot_dimension_numbers<[1], [0], [0], [1], [0, 0, 1, 1], [], []>} : vector<143x128xbf16>, vector<128x128xbf16>, vector<143x128xf32> -> vector<143x128xf32>
    %18 = arith.addf %12, %17 : vector<143x128xf32>
    %c0_18 = arith.constant 0 : index
    %c13 = arith.constant 13 : index
    %c0_19 = arith.constant 0 : index
    %19 = vector.load %arg1[%c0_18, %c13, %c0_19] : memref<1x176x128xbf16, #tpu.memory_space<vmem>>, vector<1x143x128xbf16>
    %20 = vector.shape_cast %19 : vector<1x143x128xbf16> to vector<143x128xbf16>
    %c3 = arith.constant 3 : index
    %c0_20 = arith.constant 0 : index
    %c0_21 = arith.constant 0 : index
    %21 = vector.load %arg2[%c3, %c0_20, %c0_21] : memref<9x128x128xbf16, #tpu.memory_space<vmem>>, vector<1x128x128xbf16>
    %22 = vector.shape_cast %21 : vector<1x128x128xbf16> to vector<128x128xbf16>
    %cst_22 = arith.constant dense<0.000000e+00> : vector<143x128xf32>
    %23 = tpu.matmul %20, %22, %cst_22 {dimension_numbers = #tpu.dot_dimension_numbers<[1], [0], [0], [1], [0, 0, 1, 1], [], []>} : vector<143x128xbf16>, vector<128x128xbf16>, vector<143x128xf32> -> vector<143x128xf32>
    %24 = arith.addf %18, %23 : vector<143x128xf32>
    %c0_23 = arith.constant 0 : index
    %c14 = arith.constant 14 : index
    %c0_24 = arith.constant 0 : index
    %25 = vector.load %arg1[%c0_23, %c14, %c0_24] : memref<1x176x128xbf16, #tpu.memory_space<vmem>>, vector<1x143x128xbf16>
    %26 = vector.shape_cast %25 : vector<1x143x128xbf16> to vector<143x128xbf16>
    %c4 = arith.constant 4 : index
    %c0_25 = arith.constant 0 : index
    %c0_26 = arith.constant 0 : index
    %27 = vector.load %arg2[%c4, %c0_25, %c0_26] : memref<9x128x128xbf16, #tpu.memory_space<vmem>>, vector<1x128x128xbf16>
    %28 = vector.shape_cast %27 : vector<1x128x128xbf16> to vector<128x128xbf16>
    %cst_27 = arith.constant dense<0.000000e+00> : vector<143x128xf32>
    %29 = tpu.matmul %26, %28, %cst_27 {dimension_numbers = #tpu.dot_dimension_numbers<[1], [0], [0], [1], [0, 0, 1, 1], [], []>} : vector<143x128xbf16>, vector<128x128xbf16>, vector<143x128xf32> -> vector<143x128xf32>
    %30 = arith.addf %24, %29 : vector<143x128xf32>
    %c0_28 = arith.constant 0 : index
    %c15 = arith.constant 15 : index
    %c0_29 = arith.constant 0 : index
    %31 = vector.load %arg1[%c0_28, %c15, %c0_29] : memref<1x176x128xbf16, #tpu.memory_space<vmem>>, vector<1x143x128xbf16>
    %32 = vector.shape_cast %31 : vector<1x143x128xbf16> to vector<143x128xbf16>
    %c5 = arith.constant 5 : index
    %c0_30 = arith.constant 0 : index
    %c0_31 = arith.constant 0 : index
    %33 = vector.load %arg2[%c5, %c0_30, %c0_31] : memref<9x128x128xbf16, #tpu.memory_space<vmem>>, vector<1x128x128xbf16>
    %34 = vector.shape_cast %33 : vector<1x128x128xbf16> to vector<128x128xbf16>
    %cst_32 = arith.constant dense<0.000000e+00> : vector<143x128xf32>
    %35 = tpu.matmul %32, %34, %cst_32 {dimension_numbers = #tpu.dot_dimension_numbers<[1], [0], [0], [1], [0, 0, 1, 1], [], []>} : vector<143x128xbf16>, vector<128x128xbf16>, vector<143x128xf32> -> vector<143x128xf32>
    %36 = arith.addf %30, %35 : vector<143x128xf32>
    %c0_33 = arith.constant 0 : index
    %c26 = arith.constant 26 : index
    %c0_34 = arith.constant 0 : index
    %37 = vector.load %arg1[%c0_33, %c26, %c0_34] : memref<1x176x128xbf16, #tpu.memory_space<vmem>>, vector<1x143x128xbf16>
    %38 = vector.shape_cast %37 : vector<1x143x128xbf16> to vector<143x128xbf16>
    %c6 = arith.constant 6 : index
    %c0_35 = arith.constant 0 : index
    %c0_36 = arith.constant 0 : index
    %39 = vector.load %arg2[%c6, %c0_35, %c0_36] : memref<9x128x128xbf16, #tpu.memory_space<vmem>>, vector<1x128x128xbf16>
    %40 = vector.shape_cast %39 : vector<1x128x128xbf16> to vector<128x128xbf16>
    %cst_37 = arith.constant dense<0.000000e+00> : vector<143x128xf32>
    %41 = tpu.matmul %38, %40, %cst_37 {dimension_numbers = #tpu.dot_dimension_numbers<[1], [0], [0], [1], [0, 0, 1, 1], [], []>} : vector<143x128xbf16>, vector<128x128xbf16>, vector<143x128xf32> -> vector<143x128xf32>
    %42 = arith.addf %36, %41 : vector<143x128xf32>
    %c0_38 = arith.constant 0 : index
    %c27 = arith.constant 27 : index
    %c0_39 = arith.constant 0 : index
    %43 = vector.load %arg1[%c0_38, %c27, %c0_39] : memref<1x176x128xbf16, #tpu.memory_space<vmem>>, vector<1x143x128xbf16>
    %44 = vector.shape_cast %43 : vector<1x143x128xbf16> to vector<143x128xbf16>
    %c7 = arith.constant 7 : index
    %c0_40 = arith.constant 0 : index
    %c0_41 = arith.constant 0 : index
    %45 = vector.load %arg2[%c7, %c0_40, %c0_41] : memref<9x128x128xbf16, #tpu.memory_space<vmem>>, vector<1x128x128xbf16>
    %46 = vector.shape_cast %45 : vector<1x128x128xbf16> to vector<128x128xbf16>
    %cst_42 = arith.constant dense<0.000000e+00> : vector<143x128xf32>
    %47 = tpu.matmul %44, %46, %cst_42 {dimension_numbers = #tpu.dot_dimension_numbers<[1], [0], [0], [1], [0, 0, 1, 1], [], []>} : vector<143x128xbf16>, vector<128x128xbf16>, vector<143x128xf32> -> vector<143x128xf32>
    %48 = arith.addf %42, %47 : vector<143x128xf32>
    %c0_43 = arith.constant 0 : index
    %c28 = arith.constant 28 : index
    %c0_44 = arith.constant 0 : index
    %49 = vector.load %arg1[%c0_43, %c28, %c0_44] : memref<1x176x128xbf16, #tpu.memory_space<vmem>>, vector<1x143x128xbf16>
    %50 = vector.shape_cast %49 : vector<1x143x128xbf16> to vector<143x128xbf16>
    %c8 = arith.constant 8 : index
    %c0_45 = arith.constant 0 : index
    %c0_46 = arith.constant 0 : index
    %51 = vector.load %arg2[%c8, %c0_45, %c0_46] : memref<9x128x128xbf16, #tpu.memory_space<vmem>>, vector<1x128x128xbf16>
    %52 = vector.shape_cast %51 : vector<1x128x128xbf16> to vector<128x128xbf16>
    %cst_47 = arith.constant dense<0.000000e+00> : vector<143x128xf32>
    %53 = tpu.matmul %50, %52, %cst_47 {dimension_numbers = #tpu.dot_dimension_numbers<[1], [0], [0], [1], [0, 0, 1, 1], [], []>} : vector<143x128xbf16>, vector<128x128xbf16>, vector<143x128xf32> -> vector<143x128xf32>
    %54 = arith.addf %48, %53 : vector<143x128xf32>
    %c0_48 = arith.constant 0 : index
    %c0_49 = arith.constant 0 : index
    %55 = vector.load %arg3[%c0_48, %c0_49] : memref<1x128xf32, #tpu.memory_space<vmem>>, vector<1x128xf32>
    %56 = vector.broadcast %55 : vector<1x128xf32> to vector<143x128xf32>
    %57 = arith.addf %54, %56 : vector<143x128xf32>
    %cst_50 = arith.constant 0.000000e+00 : f32
    %58 = vector.broadcast %cst_50 : f32 to vector<143x128xf32>
    %59 = arith.maximumf %57, %58 : vector<143x128xf32>
    %c0_51 = arith.constant 0 : index
    %c0_52 = arith.constant 0 : index
    %60 = vector.load %arg5[%c0_51, %c0_52] : memref<143x128xf32, #tpu.memory_space<vmem>>, vector<143x128xf32>
    tpu.vector_store %arg5[%c0_51, %c0_52], %59 {strides = array<i32>} : memref<143x128xf32, #tpu.memory_space<vmem>>, vector<143x128xf32>,
    %c0_53 = arith.constant 0 : index
    %c0_54 = arith.constant 0 : index
    %61 = tpu.strided_load %arg5[%c0_53, %c0_54] {strides = array<i32: 2, 1>} : memref<143x128xf32, #tpu.memory_space<vmem>>, vector<65x128xf32>
    %c1_55 = arith.constant 1 : index
    %c0_56 = arith.constant 0 : index
    %62 = tpu.strided_load %arg5[%c1_55, %c0_56] {strides = array<i32: 2, 1>} : memref<143x128xf32, #tpu.memory_space<vmem>>, vector<65x128xf32>
    %c13_57 = arith.constant 13 : index
    %c0_58 = arith.constant 0 : index
    %63 = tpu.strided_load %arg5[%c13_57, %c0_58] {strides = array<i32: 2, 1>} : memref<143x128xf32, #tpu.memory_space<vmem>>, vector<65x128xf32>
    %c14_59 = arith.constant 14 : index
    %c0_60 = arith.constant 0 : index
    %64 = tpu.strided_load %arg5[%c14_59, %c0_60] {strides = array<i32: 2, 1>} : memref<143x128xf32, #tpu.memory_space<vmem>>, vector<65x128xf32>
    %65 = arith.maximumf %61, %62 : vector<65x128xf32>
    %66 = arith.maximumf %63, %64 : vector<65x128xf32>
    %67 = arith.maximumf %65, %66 : vector<65x128xf32>
    %68 = vector.extract_strided_slice %67 {offsets = [0, 0], sizes = [5, 128], strides = [1, 1]} : vector<65x128xf32> to vector<5x128xf32>
    %69 = arith.truncf %68 : vector<5x128xf32> to vector<5x128xbf16>
    %c0_61 = arith.constant 0 : index
    %c0_62 = arith.constant 0 : index
    %c0_63 = arith.constant 0 : index
    %70 = vector.load %arg4[%c0_61, %c0_62, %c0_63] : memref<1x25x128xbf16, #tpu.memory_space<vmem>>, vector<1x5x128xbf16>
    %71 = vector.shape_cast %70 : vector<1x5x128xbf16> to vector<5x128xbf16>
    %72 = vector.shape_cast %69 : vector<5x128xbf16> to vector<1x5x128xbf16>
    tpu.vector_store %arg4[%c0_61, %c0_62, %c0_63], %72 {strides = array<i32>} : memref<1x25x128xbf16, #tpu.memory_space<vmem>>, vector<1x5x128xbf16>,
    %73 = vector.extract_strided_slice %67 {offsets = [13, 0], sizes = [5, 128], strides = [1, 1]} : vector<65x128xf32> to vector<5x128xf32>
    %74 = arith.truncf %73 : vector<5x128xf32> to vector<5x128xbf16>
    %c0_64 = arith.constant 0 : index
    %c5_65 = arith.constant 5 : index
    %c0_66 = arith.constant 0 : index
    %75 = vector.load %arg4[%c0_64, %c5_65, %c0_66] : memref<1x25x128xbf16, #tpu.memory_space<vmem>>, vector<1x5x128xbf16>
    %76 = vector.shape_cast %75 : vector<1x5x128xbf16> to vector<5x128xbf16>
    %77 = vector.shape_cast %74 : vector<5x128xbf16> to vector<1x5x128xbf16>
    tpu.vector_store %arg4[%c0_64, %c5_65, %c0_66], %77 {strides = array<i32>} : memref<1x25x128xbf16, #tpu.memory_space<vmem>>, vector<1x5x128xbf16>,
    %78 = vector.extract_strided_slice %67 {offsets = [26, 0], sizes = [5, 128], strides = [1, 1]} : vector<65x128xf32> to vector<5x128xf32>
    %79 = arith.truncf %78 : vector<5x128xf32> to vector<5x128xbf16>
    %c0_67 = arith.constant 0 : index
    %c10 = arith.constant 10 : index
    %c0_68 = arith.constant 0 : index
    %80 = vector.load %arg4[%c0_67, %c10, %c0_68] : memref<1x25x128xbf16, #tpu.memory_space<vmem>>, vector<1x5x128xbf16>
    %81 = vector.shape_cast %80 : vector<1x5x128xbf16> to vector<5x128xbf16>
    %82 = vector.shape_cast %79 : vector<5x128xbf16> to vector<1x5x128xbf16>
    tpu.vector_store %arg4[%c0_67, %c10, %c0_68], %82 {strides = array<i32>} : memref<1x25x128xbf16, #tpu.memory_space<vmem>>, vector<1x5x128xbf16>,
    %83 = vector.extract_strided_slice %67 {offsets = [39, 0], sizes = [5, 128], strides = [1, 1]} : vector<65x128xf32> to vector<5x128xf32>
    %84 = arith.truncf %83 : vector<5x128xf32> to vector<5x128xbf16>
    %c0_69 = arith.constant 0 : index
    %c15_70 = arith.constant 15 : index
    %c0_71 = arith.constant 0 : index
    %85 = vector.load %arg4[%c0_69, %c15_70, %c0_71] : memref<1x25x128xbf16, #tpu.memory_space<vmem>>, vector<1x5x128xbf16>
    %86 = vector.shape_cast %85 : vector<1x5x128xbf16> to vector<5x128xbf16>
    %87 = vector.shape_cast %84 : vector<5x128xbf16> to vector<1x5x128xbf16>
    tpu.vector_store %arg4[%c0_69, %c15_70, %c0_71], %87 {strides = array<i32>} : memref<1x25x128xbf16, #tpu.memory_space<vmem>>, vector<1x5x128xbf16>,
    %88 = vector.extract_strided_slice %67 {offsets = [52, 0], sizes = [5, 128], strides = [1, 1]} : vector<65x128xf32> to vector<5x128xf32>
    %89 = arith.truncf %88 : vector<5x128xf32> to vector<5x128xbf16>
    %c0_72 = arith.constant 0 : index
    %c20 = arith.constant 20 : index
    %c0_73 = arith.constant 0 : index
    %90 = vector.load %arg4[%c0_72, %c20, %c0_73] : memref<1x25x128xbf16, #tpu.memory_space<vmem>>, vector<1x5x128xbf16>
    %91 = vector.shape_cast %90 : vector<1x5x128xbf16> to vector<5x128xbf16>
    %92 = vector.shape_cast %89 : vector<5x128xbf16> to vector<1x5x128xbf16>
    tpu.vector_store %arg4[%c0_72, %c20, %c0_73], %92 {strides = array<i32>} : memref<1x25x128xbf16, #tpu.memory_space<vmem>>, vector<1x5x128xbf16>,
    return
  }
  func.func @transform_0(%arg0: i32) -> (i32, i32, i32) {
    %c0_i32 = arith.constant 0 : i32
    %c0_i32_0 = arith.constant 0 : i32
    %c0_i32_1 = arith.constant 0 : i32
    return %arg0, %c0_i32, %c0_i32_0 : i32, i32, i32
  }
  func.func @transform_1(%arg0: i32) -> (i32, i32, i32) {
    %c0_i32 = arith.constant 0 : i32
    %c0_i32_0 = arith.constant 0 : i32
    %c0_i32_1 = arith.constant 0 : i32
    %c0_i32_2 = arith.constant 0 : i32
    return %c0_i32, %c0_i32_0, %c0_i32_1 : i32, i32, i32
  }
  func.func @transform_2(%arg0: i32) -> (i32, i32) {
    %c0_i32 = arith.constant 0 : i32
    %c0_i32_0 = arith.constant 0 : i32
    %c0_i32_1 = arith.constant 0 : i32
    return %c0_i32, %c0_i32_0 : i32, i32
  }
  func.func @transform_3(%arg0: i32) -> (i32, i32, i32) {
    %c0_i32 = arith.constant 0 : i32
    %c0_i32_0 = arith.constant 0 : i32
    %c0_i32_1 = arith.constant 0 : i32
    return %arg0, %c0_i32, %c0_i32_0 : i32, i32, i32
  }
}

module attributes {stable_mosaic.version = 11 : i64} {
  func.func @_head_kernel(%arg0: memref<2x3200xbf16, #tpu.memory_space<vmem>>, %arg1: memref<3200x128xbf16, #tpu.memory_space<vmem>>, %arg2: memref<1x128xf32, #tpu.memory_space<vmem>>, %arg3: memref<128x128xbf16, #tpu.memory_space<vmem>>, %arg4: memref<1x128xf32, #tpu.memory_space<vmem>>, %arg5: memref<2x128xf32, #tpu.memory_space<vmem>>) attributes {dimension_semantics = [], scalar_prefetch = 0 : i64, scratch_operands = 0 : i64, tpu.core_type = #tpu.core_type<tc>} {
    %c0 = arith.constant 0 : index
    %c0_0 = arith.constant 0 : index
    %0 = vector.load %arg0[%c0, %c0_0] : memref<2x3200xbf16, #tpu.memory_space<vmem>>, vector<2x3200xbf16>
    %c0_1 = arith.constant 0 : index
    %c0_2 = arith.constant 0 : index
    %1 = vector.load %arg1[%c0_1, %c0_2] : memref<3200x128xbf16, #tpu.memory_space<vmem>>, vector<3200x128xbf16>
    %cst = arith.constant dense<0.000000e+00> : vector<2x128xf32>
    %2 = tpu.matmul %0, %1, %cst {dimension_numbers = #tpu.dot_dimension_numbers<[1], [0], [0], [1], [0, 0, 1, 1], [], []>} : vector<2x3200xbf16>, vector<3200x128xbf16>, vector<2x128xf32> -> vector<2x128xf32>
    %c0_3 = arith.constant 0 : index
    %c0_4 = arith.constant 0 : index
    %3 = vector.load %arg2[%c0_3, %c0_4] : memref<1x128xf32, #tpu.memory_space<vmem>>, vector<1x128xf32>
    %4 = vector.broadcast %3 : vector<1x128xf32> to vector<2x128xf32>
    %5 = arith.addf %2, %4 : vector<2x128xf32>
    %cst_5 = arith.constant 0.000000e+00 : f32
    %6 = vector.broadcast %cst_5 : f32 to vector<2x128xf32>
    %7 = arith.maximumf %5, %6 : vector<2x128xf32>
    %8 = arith.truncf %7 : vector<2x128xf32> to vector<2x128xbf16>
    %c0_6 = arith.constant 0 : index
    %c0_7 = arith.constant 0 : index
    %9 = vector.load %arg3[%c0_6, %c0_7] : memref<128x128xbf16, #tpu.memory_space<vmem>>, vector<128x128xbf16>
    %cst_8 = arith.constant dense<0.000000e+00> : vector<2x128xf32>
    %10 = tpu.matmul %8, %9, %cst_8 {dimension_numbers = #tpu.dot_dimension_numbers<[1], [0], [0], [1], [0, 0, 1, 1], [], []>} : vector<2x128xbf16>, vector<128x128xbf16>, vector<2x128xf32> -> vector<2x128xf32>
    %c0_9 = arith.constant 0 : index
    %c0_10 = arith.constant 0 : index
    %11 = vector.load %arg4[%c0_9, %c0_10] : memref<1x128xf32, #tpu.memory_space<vmem>>, vector<1x128xf32>
    %12 = vector.broadcast %11 : vector<1x128xf32> to vector<2x128xf32>
    %13 = arith.addf %10, %12 : vector<2x128xf32>
    %c0_11 = arith.constant 0 : index
    %c0_12 = arith.constant 0 : index
    %14 = vector.load %arg5[%c0_11, %c0_12] : memref<2x128xf32, #tpu.memory_space<vmem>>, vector<2x128xf32>
    tpu.vector_store %arg5[%c0_11, %c0_12], %13 {strides = array<i32>} : memref<2x128xf32, #tpu.memory_space<vmem>>, vector<2x128xf32>,
    return
  }
}

</mosaic_0001>

<llo_original>
// kernel: cnn_classifier_forward.4
$region0: #{cnn_classifier_forward.4}
  #allocation0 [shape = 'u32[]', space=smem, size = 0x4, offset = 0x4, fixed_abs, tag = 'smem constant byte address 0x4 - core index']
  #allocation1 [shape = 'u32[72,128]{1,0:T(1,128)}', space=vmem, size = 0x9000, scoped, tag = 'internal scratch']
  #allocation2 [shape = 'f32[143,128]{1,0:T(8,128)}', space=vmem, size = 0x12000, scoped, tag = 'scratch operand']
  %s0 = inlined_call_operand.vmem [shape: bf16[2,176,128], index: 0, kind: input, shape index: {}]
  %s1 = inlined_call_operand.vmem [shape: bf16[9,128,128], index: 1, kind: input, shape index: {}]
  %s2 = inlined_call_operand.vmem [shape: f32[1,128], index: 2, kind: input, shape index: {}]
  %s3 = inlined_call_operand.vmem [shape: bf16[2,25,128], index: 3, kind: output, shape index: {}]
  %s4 = sld [smem:[#allocation0]]
  $region45: #{cnn_classifier_forward.4} parent=0
    _
  %s6 = ssub.s32 1, %s4
  %s7 = scalar_select 0, %s6, %s4
  loop: start=0, step=1, limit=4
  $region2: #{cnn_classifier_forward.4} parent=0 // loop_pre_header
    _
  $region3: #{cnn_classifier_forward.4} parent=0 // loop_header
    %s9 = sphi 0, %s13
    %p10 = scmp.ge.s32.totalorder %s9, 4
    %s19 = sphi 0, %s21
    %s22 = sphi 0, %s19
    %s23 = sphi 0, %s22
    %s39 = sphi 0, %s23
    %s43 = sphi 0, %s43
    %s45 = sphi 0, %s43
    %s46 = sphi 0, %s45
    %s60 = sphi 0, %s46
    %s64 = sphi 0, %s64
    %s66 = sphi 0, %s64
    %s67 = sphi 0, %s66
    %s81 = sphi 0, %s67
    %s87 = sphi 0, %s89
    %s90 = sphi 0, %s87
    %s91 = sphi 0, %s90
    %s107 = sphi 0, %s91
  $region4: #{cnn_classifier_forward.4} parent=0 // loop_header_branch
    %12 = sbr.rel (%p10) target = $region8
  $region5: #{cnn_classifier_forward.4} parent=0 // loop_body
    %s14 = ssub.s32 %s9, 1
    %s15 = ssub.s32 %s9, 2
    %s16 = sadd.s32 %s9, 1
    %s17 = ssub.s32 %s9, %s16
    %p18 = scmp.eq.s32.totalorder %s17, 0
    %s20 = sadd.s32 %s19, 1
    %s21 = scalar_select %p18, %s19, %s20
    %p24 = pneg %p18
    %p25 = scmp.eq.s32.totalorder %s9, 1
    %p26 = por %p24, %p25
    %p27 = scmp.ne.s32.totalorder %s19, %s22
    %p28 = scmp.eq.s32.totalorder %s9, 0
    %p29 = por %p27, %p28
    %p30 = scmp.ne.s32.totalorder %s19, %s22
    %p31 = scmp.eq.s32.totalorder %s14, 1
    %p32 = por %p30, %p31
    %p33 = scmp.ne.s32.totalorder %s22, %s23
    %p34 = scmp.eq.s32.totalorder %s14, 0
    %p35 = por %p33, %p34
    %p36 = scmp.ne.s32.totalorder %s22, %s23
    %p37 = scmp.eq.s32.totalorder %s15, 1
    %p38 = por %p36, %p37
    %p40 = scmp.ne.s32.totalorder %s23, %s39
    %p41 = scmp.eq.s32.totalorder %s15, 0
    %p42 = por %p40, %p41
    %s44 = sadd.s32 %s43, 1
    %p47 = scmp.eq.s32.totalorder %s9, 1
    %p48 = scmp.ne.s32.totalorder %s43, %s45
    %p49 = scmp.eq.s32.totalorder %s9, 0
    %p50 = por %p48, %p49
    %p51 = scmp.ne.s32.totalorder %s43, %s45
    %p52 = scmp.eq.s32.totalorder %s14, 1
    %p53 = por %p51, %p52
    %p54 = scmp.ne.s32.totalorder %s45, %s46
    %p55 = scmp.eq.s32.totalorder %s14, 0
    %p56 = por %p54, %p55
    %p57 = scmp.ne.s32.totalorder %s45, %s46
    %p58 = scmp.eq.s32.totalorder %s15, 1
    %p59 = por %p57, %p58
    %p61 = scmp.ne.s32.totalorder %s46, %s60
    %p62 = scmp.eq.s32.totalorder %s15, 0
    %p63 = por %p61, %p62
    %s65 = sadd.s32 %s64, 1
    %p68 = scmp.eq.s32.totalorder %s9, 1
    %p69 = scmp.ne.s32.totalorder %s64, %s66
    %p70 = scmp.eq.s32.totalorder %s9, 0
    %p71 = por %p69, %p70
    %p72 = scmp.ne.s32.totalorder %s64, %s66
    %p73 = scmp.eq.s32.totalorder %s14, 1
    %p74 = por %p72, %p73
    %p75 = scmp.ne.s32.totalorder %s66, %s67
    %p76 = scmp.eq.s32.totalorder %s14, 0
    %p77 = por %p75, %p76
    %p78 = scmp.ne.s32.totalorder %s66, %s67
    %p79 = scmp.eq.s32.totalorder %s15, 1
    %p80 = por %p78, %p79
    %p82 = scmp.ne.s32.totalorder %s67, %s81
    %p83 = scmp.eq.s32.totalorder %s15, 0
    %p84 = por %p82, %p83
    %s85 = ssub.s32 %s9, %s16
    %p86 = scmp.eq.s32.totalorder %s85, 0
    %s88 = sadd.s32 %s87, 1
    %s89 = scalar_select %p86, %s87, %s88
    %p92 = pneg %p86
    %p93 = scmp.eq.s32.totalorder %s9, 1
    %p94 = por %p92, %p93
    %p95 = scmp.ne.s32.totalorder %s87, %s90
    %p96 = scmp.eq.s32.totalorder %s9, 0
    %p97 = por %p95, %p96
    %p98 = scmp.ne.s32.totalorder %s87, %s90
    %p99 = scmp.eq.s32.totalorder %s14, 1
    %p100 = por %p98, %p99
    %p101 = scmp.ne.s32.totalorder %s90, %s91
    %p102 = scmp.eq.s32.totalorder %s14, 0
    %p103 = por %p101, %p102
    %p104 = scmp.ne.s32.totalorder %s90, %s91
    %p105 = scmp.eq.s32.totalorder %s15, 1
    %p106 = por %p104, %p105
    %p108 = scmp.ne.s32.totalorder %s91, %s107
    %p109 = scmp.eq.s32.totalorder %s15, 0
    %p110 = por %p108, %p109
    %p111 = scmp.le.s32.totalorder 1, %s9
    %p112 = scmp.lt.s32.totalorder %s9, 3
    %p113 = pnand %p111, %p112
    %p114 = pneg %p113
    // Predicated region
    $region9: #{cnn_classifier_forward.4} parent=5 // pred_check
      _
    $region10: #{cnn_classifier_forward.4} parent=5 // pred_check_branch
      %116 = sbr.rel (%p113) target = $region12
    $region11: #{cnn_classifier_forward.4} parent=5 // pred_region
      %s117 = ssub.s32 %s9, 1
      // Predicated region
      $region13: #{cnn_classifier_forward.4} parent=11 // pred_check
        %p118 = pneg %p56
      $region14: #{cnn_classifier_forward.4} parent=11 // pred_check_branch
        %120 = sbr.rel (%p118) target = $region16
      $region15: #{cnn_classifier_forward.4} parent=11 // pred_region
        _
      $region16: #{cnn_classifier_forward.4} parent=11 // pred_fallthru
        _
      // Predicated region
      $region17: #{cnn_classifier_forward.4} parent=11 // pred_check
        %p121 = pneg %p77
      $region18: #{cnn_classifier_forward.4} parent=11 // pred_check_branch
        %123 = sbr.rel (%p121) target = $region20
      $region19: #{cnn_classifier_forward.4} parent=11 // pred_region
        _
      $region20: #{cnn_classifier_forward.4} parent=11 // pred_fallthru
        _
    $region12: #{cnn_classifier_forward.4} parent=5 // pred_fallthru
      _
    %p124 = scmp.lt.s32.totalorder %s9, 2
    // Predicated region
    $region21: #{cnn_classifier_forward.4} parent=5 // pred_check
      %p125 = pneg %p124
    $region22: #{cnn_classifier_forward.4} parent=5 // pred_check_branch
      %127 = sbr.rel (%p125) target = $region24
    $region23: #{cnn_classifier_forward.4} parent=5 // pred_region
      // Predicated region
      $region25: #{cnn_classifier_forward.4} parent=23 // pred_check
        %p128 = pneg %p29
      $region26: #{cnn_classifier_forward.4} parent=23 // pred_check_branch
        %130 = sbr.rel (%p128) target = $region28
      $region27: #{cnn_classifier_forward.4} parent=23 // pred_region
        %p131 = scmp.lt.s32.totalorder %s9, 1
        %s132 = scalar_select %p131, %s9, 1
        %s133 = smul.addr %s132, 22
        %s134 = smul.addr %s133, 4
        %s135 = scalar_lea.vmem %s0, %s134
      $region28: #{cnn_classifier_forward.4} parent=23 // pred_fallthru
        _
    $region24: #{cnn_classifier_forward.4} parent=5 // pred_fallthru
      _
    %p136 = scmp.le.s32.totalorder 1, %s9
    %p137 = scmp.lt.s32.totalorder %s9, 3
    %p138 = pnand %p136, %p137
    %p139 = pneg %p138
    // Predicated region
    $region29: #{cnn_classifier_forward.4} parent=5 // pred_check
      _
    $region30: #{cnn_classifier_forward.4} parent=5 // pred_check_branch
      %141 = sbr.rel (%p138) target = $region32
    $region31: #{cnn_classifier_forward.4} parent=5 // pred_region
      %s142 = ssub.s32 %s9, 1
      %p143 = scmp.lt.s32.totalorder %s14, 1
      %s144 = scalar_select %p143, %s14, 1
      %s145 = smul.addr %s144, 22
      %s146 = smul.addr %s145, 4
      %s147 = scalar_lea.vmem %s0, %s146
      %p148 = pneg %p35
      %p149 = pneg %p32
      %p150 = pneg %p56
      %p151 = pneg %p53
      %p152 = pneg %p77
      %p153 = pneg %p74
      %p154 = pneg %p103
      %p155 = pneg %p100
      %p156 = scmp.lt.s32.totalorder %s14, 1
      %s157 = scalar_select %p156, %s14, 1
      %s158 = smul.addr %s157, 4
      %s159 = smul.addr %s158, 4
      %s160 = scalar_lea.vmem %s3, %s159
      %p161 = scmp.lt.s32.totalorder %s14, 1
      %s162 = scalar_select %p161, %s14, 1
      %s163 = smul.addr %s162, 22
      %s164 = smul.addr %s163, 4
      %s165 = scalar_lea.vmem %s0, %s164
      %p166 = scmp.lt.s32.totalorder %s14, 1
      %s167 = scalar_select %p166, %s14, 1
      %s168 = smul.addr %s167, 4
      %s169 = smul.addr %s168, 4
      %s170 = scalar_lea.vmem %s3, %s169
      %v171 = vld [vmem:[%s165] sm:$0xf]
      %v172 = vld [vmem:[%s165 + $0x4] sm:$0xf]
      %v173 = vld [vmem:[%s165 + $0x8] sm:$0xf]
      %v174 = vld [vmem:[%s165 + $0xc] sm:$0xf]
      %v175 = vld [vmem:[%s165 + $0x10] sm:$0xf]
      %v176 = vld [vmem:[%s165 + $0x14] sm:$0xf]
      %v177 = vld [vmem:[%s165 + $0x18] sm:$0xf]
      %v178 = vld [vmem:[%s165 + $0x1c] sm:$0xf]
      %v179 = vld [vmem:[%s165 + $0x20] sm:$0xf]
      %v180 = vld [vmem:[%s165 + $0x24] sm:$0xf]
      %v181 = vld [vmem:[%s165 + $0x28] sm:$0xf]
      %v182 = vld [vmem:[%s165 + $0x2c] sm:$0xf]
      %v183 = vld [vmem:[%s165 + $0x30] sm:$0xf]
      %v184 = vld [vmem:[%s165 + $0x34] sm:$0xf]
      %v185 = vld [vmem:[%s165 + $0x38] sm:$0xf]
      %v186 = vld [vmem:[%s165 + $0x3c] sm:$0xf]
      %v187 = vld [vmem:[%s165 + $0x40] sm:$0xf]
      %v188 = vld [vmem:[%s165 + $0x44] sm:$0xf]
      %v189 = vld [vmem:[%s1] sm:$0xf]
      %v190 = vld [vmem:[%s1 + $0x4] sm:$0xf]
      %v191 = vld [vmem:[%s1 + $0x8] sm:$0xf]
      %v192 = vld [vmem:[%s1 + $0xc] sm:$0xf]
      %v193 = vld [vmem:[%s1 + $0x10] sm:$0xf]
      %v194 = vld [vmem:[%s1 + $0x14] sm:$0xf]
      %v195 = vld [vmem:[%s1 + $0x18] sm:$0xf]
      %v196 = vld [vmem:[%s1 + $0x1c] sm:$0xf]
      %v197 = vld [vmem:[%s1 + $0x20] sm:$0xf]
      %v198 = vld [vmem:[%s1 + $0x24] sm:$0xf]
      %v199 = vld [vmem:[%s1 + $0x28] sm:$0xf]
      %v200 = vld [vmem:[%s1 + $0x2c] sm:$0xf]
      %v201 = vld [vmem:[%s1 + $0x30] sm:$0xf]
      %v202 = vld [vmem:[%s1 + $0x34] sm:$0xf]
      %v203 = vld [vmem:[%s1 + $0x38] sm:$0xf]
      %v204 = vld [vmem:[%s1 + $0x3c] sm:$0xf]
      %s205 = scalar_lea.vmem %s1, 64
      %v206 = vld [vmem:[%s205] sm:$0xf]
      %v207 = vld [vmem:[%s205 + $0x4] sm:$0xf]
      %v208 = vld [vmem:[%s205 + $0x8] sm:$0xf]
      %v209 = vld [vmem:[%s205 + $0xc] sm:$0xf]
      %v210 = vld [vmem:[%s205 + $0x10] sm:$0xf]
      %v211 = vld [vmem:[%s205 + $0x14] sm:$0xf]
      %v212 = vld [vmem:[%s205 + $0x18] sm:$0xf]
      %v213 = vld [vmem:[%s205 + $0x1c] sm:$0xf]
      %v214 = vld [vmem:[%s205 + $0x20] sm:$0xf]
      %v215 = vld [vmem:[%s205 + $0x24] sm:$0xf]
      %v216 = vld [vmem:[%s205 + $0x28] sm:$0xf]
      %v217 = vld [vmem:[%s205 + $0x2c] sm:$0xf]
      %v218 = vld [vmem:[%s205 + $0x30] sm:$0xf]
      %v219 = vld [vmem:[%s205 + $0x34] sm:$0xf]
      %v220 = vld [vmem:[%s205 + $0x38] sm:$0xf]
      %v221 = vld [vmem:[%s205 + $0x3c] sm:$0xf]
      %v240 = vunpack.c.l.b16 %v171
      %v241 = vunpack.c.l.b16 %v172
      %v242 = vunpack.c.l.b16 %v173
      %v243 = vunpack.c.l.b16 %v174
      %v244 = vunpack.c.l.b16 %v175
      %v245 = vunpack.c.l.b16 %v176
      %v246 = vunpack.c.l.b16 %v177
      %v247 = vunpack.c.l.b16 %v178
      %v248 = vunpack.c.l.b16 %v179
      %v249 = vunpack.c.l.b16 %v180
      %v250 = vunpack.c.l.b16 %v181
      %v251 = vunpack.c.l.b16 %v182
      %v252 = vunpack.c.l.b16 %v183
      %v253 = vunpack.c.l.b16 %v184
      %v254 = vunpack.c.l.b16 %v185
      %v255 = vunpack.c.l.b16 %v186
      %v256 = vunpack.c.l.b16 %v187
      %v257 = vunpack.c.l.b16 %v188
      %v258 = vpack.c.b16 %v241, %v240
      %v259 = vpack.c.b16 %v243, %v242
      %v260 = vpack.c.b16 %v245, %v244
      %v261 = vpack.c.b16 %v247, %v246
      %v262 = vpack.c.b16 %v249, %v248
      %v263 = vpack.c.b16 %v251, %v250
      %v264 = vpack.c.b16 %v253, %v252
      %v265 = vpack.c.b16 %v255, %v254
      %v266 = vpack.c.b16 %v257, %v256
      %vm267 = vsmask.f32 7424
      %v269 = vshrl.u32 %v258, 16
      %v271 = vshll.u32 %v258, 16
      %v273 = vrot.slane %v271, 1
      %v274 = vor.u32 %v269, %v273
      %v276 = vshll.u32 %v259, 16
      %v278 = vrot.slane %v276, 1
      %v279 = vsel %vm267, %v274, %v278
      %v280 = vshrl.u32 %v259, 16
      %v282 = vor.u32 %v280, %v278
      %v284 = vshll.u32 %v260, 16
      %v286 = vrot.slane %v284, 1
      %v287 = vsel %vm267, %v282, %v286
      %v288 = vshrl.u32 %v260, 16
      %v290 = vor.u32 %v288, %v286
      %v292 = vshll.u32 %v261, 16
      %v294 = vrot.slane %v292, 1
      %v295 = vsel %vm267, %v290, %v294
      %v296 = vshrl.u32 %v261, 16
      %v298 = vor.u32 %v296, %v294
      %v300 = vshll.u32 %v262, 16
      %v302 = vrot.slane %v300, 1
      %v303 = vsel %vm267, %v298, %v302
      %v304 = vshrl.u32 %v262, 16
      %v306 = vor.u32 %v304, %v302
      %v308 = vshll.u32 %v263, 16
      %v310 = vrot.slane %v308, 1
      %v311 = vsel %vm267, %v306, %v310
      %v312 = vshrl.u32 %v263, 16
      %v314 = vor.u32 %v312, %v310
      %v316 = vshll.u32 %v264, 16
      %v318 = vrot.slane %v316, 1
      %v319 = vsel %vm267, %v314, %v318
      %v320 = vshrl.u32 %v264, 16
      %v322 = vor.u32 %v320, %v318
      %v324 = vshll.u32 %v265, 16
      %v326 = vrot.slane %v324, 1
      %v327 = vsel %vm267, %v322, %v326
      %v328 = vshrl.u32 %v265, 16
      %v330 = vor.u32 %v328, %v326
      %v332 = vshll.u32 %v266, 16
      %v334 = vrot.slane %v332, 1
      %v335 = vsel %vm267, %v330, %v334
      %v336 = vshrl.u32 %v266, 16
      %v338 = vor.u32 %v336, %v334
      %v364 = vunpack.c.l.b16 %v206
      %v365 = vunpack.c.l.b16 %v207
      %v366 = vunpack.c.l.b16 %v208
      %v367 = vunpack.c.l.b16 %v209
      %v368 = vunpack.c.l.b16 %v210
      %v369 = vunpack.c.l.b16 %v211
      %v370 = vunpack.c.l.b16 %v212
      %v371 = vunpack.c.l.b16 %v213
      %v372 = vunpack.c.l.b16 %v214
      %v373 = vunpack.c.l.b16 %v215
      %v374 = vunpack.c.l.b16 %v216
      %v375 = vunpack.c.l.b16 %v217
      %v376 = vunpack.c.l.b16 %v218
      %v377 = vunpack.c.l.b16 %v219
      %v378 = vunpack.c.l.b16 %v220
      %v379 = vunpack.c.l.b16 %v221
      %v380 = vpack.c.b16 %v365, %v364
      %v381 = vpack.c.b16 %v367, %v366
      %v382 = vpack.c.b16 %v369, %v368
      %v383 = vpack.c.b16 %v371, %v370
      %v384 = vpack.c.b16 %v373, %v372
      %v385 = vpack.c.b16 %v375, %v374
      %v386 = vpack.c.b16 %v377, %v376
      %v387 = vpack.c.b16 %v379, %v378
      %396 = vmatpush.bf16.msra.mxu0 %v387
      %397 = vmatpush.bf16.msra.mxu0 %v386
      %398 = vmatpush.bf16.msra.mxu0 %v385
      %399 = vmatpush.bf16.msra.mxu0 %v384
      %400 = vmatpush.bf16.msra.mxu0 %v383
      %401 = vmatpush.bf16.msra.mxu0 %v382
      %402 = vmatpush.bf16.msra.mxu0 %v381
      %403 = vmatpush.bf16.msra.mxu0 %v380
      %404 = vmatmul.bf16.gmra.mxu0 %v279
      %v405 = vpop.f32.mrf.mxu0
      %v406 = vadd.f32 0.0, %v405
      %v407 = vpop.f32.mrf.mxu0
      %v408 = vadd.f32 0.0, %v407
      %409 = vmatmul.bf16.gmra.mxu0 %v287
      %v410 = vpop.f32.mrf.mxu0
      %v411 = vadd.f32 0.0, %v410
      %v412 = vpop.f32.mrf.mxu0
      %v413 = vadd.f32 0.0, %v412
      %414 = vmatmul.bf16.gmra.mxu0 %v295
      %v415 = vpop.f32.mrf.mxu0
      %v416 = vadd.f32 0.0, %v415
      %v417 = vpop.f32.mrf.mxu0
      %v418 = vadd.f32 0.0, %v417
      %419 = vmatmul.bf16.gmra.mxu0 %v303
      %v420 = vpop.f32.mrf.mxu0
      %v421 = vadd.f32 0.0, %v420
      %v422 = vpop.f32.mrf.mxu0
      %v423 = vadd.f32 0.0, %v422
      %424 = vmatmul.bf16.gmra.mxu0 %v311
      %v425 = vpop.f32.mrf.mxu0
      %v426 = vadd.f32 0.0, %v425
      %v427 = vpop.f32.mrf.mxu0
      %v428 = vadd.f32 0.0, %v427
      %429 = vmatmul.bf16.gmra.mxu0 %v319
      %v430 = vpop.f32.mrf.mxu0
      %v431 = vadd.f32 0.0, %v430
      %v432 = vpop.f32.mrf.mxu0
      %v433 = vadd.f32 0.0, %v432
      %434 = vmatmul.bf16.gmra.mxu0 %v327
      %v435 = vpop.f32.mrf.mxu0
      %v436 = vadd.f32 0.0, %v435
      %v437 = vpop.f32.mrf.mxu0
      %v438 = vadd.f32 0.0, %v437
      %439 = vmatmul.bf16.gmra.mxu0 %v335
      %v440 = vpop.f32.mrf.mxu0
      %v441 = vadd.f32 0.0, %v440
      %v442 = vpop.f32.mrf.mxu0
      %v443 = vadd.f32 0.0, %v442
      %444 = vmatmul.bf16.gmra.mxu0 %v338
      %v445 = vpop.f32.mrf.mxu0
      %v446 = vadd.f32 0.0, %v445
      %v447 = vpop.f32.mrf.mxu0
      %v448 = vadd.f32 0.0, %v447
      %449 = vdwg.mxu0
      %v475 = vunpack.c.l.b16 %v189
      %v476 = vunpack.c.l.b16 %v190
      %v477 = vunpack.c.l.b16 %v191
      %v478 = vunpack.c.l.b16 %v192
      %v479 = vunpack.c.l.b16 %v193
      %v480 = vunpack.c.l.b16 %v194
      %v481 = vunpack.c.l.b16 %v195
      %v482 = vunpack.c.l.b16 %v196
      %v483 = vunpack.c.l.b16 %v197
      %v484 = vunpack.c.l.b16 %v198
      %v485 = vunpack.c.l.b16 %v199
      %v486 = vunpack.c.l.b16 %v200
      %v487 = vunpack.c.l.b16 %v201
      %v488 = vunpack.c.l.b16 %v202
      %v489 = vunpack.c.l.b16 %v203
      %v490 = vunpack.c.l.b16 %v204
      %v491 = vpack.c.b16 %v476, %v475
      %v492 = vpack.c.b16 %v478, %v477
      %v493 = vpack.c.b16 %v480, %v479
      %v494 = vpack.c.b16 %v482, %v481
      %v495 = vpack.c.b16 %v484, %v483
      %v496 = vpack.c.b16 %v486, %v485
      %v497 = vpack.c.b16 %v488, %v487
      %v498 = vpack.c.b16 %v490, %v489
      %507 = vmatpush.bf16.msra.mxu0 %v498
      %508 = vmatpush.bf16.msra.mxu0 %v497
      %509 = vmatpush.bf16.msra.mxu0 %v496
      %510 = vmatpush.bf16.msra.mxu0 %v495
      %511 = vmatpush.bf16.msra.mxu0 %v494
      %512 = vmatpush.bf16.msra.mxu0 %v493
      %513 = vmatpush.bf16.msra.mxu0 %v492
      %514 = vmatpush.bf16.msra.mxu0 %v491
      %515 = vmatmul.bf16.gmra.mxu0 %v258
      %v516 = vpop.f32.mrf.mxu0
      %v517 = vadd.f32 %v406, %v516
      %v518 = vpop.f32.mrf.mxu0
      %v519 = vadd.f32 %v408, %v518
      %520 = vmatmul.bf16.gmra.mxu0 %v259
      %v521 = vpop.f32.mrf.mxu0
      %v522 = vadd.f32 %v411, %v521
      %v523 = vpop.f32.mrf.mxu0
      %v524 = vadd.f32 %v413, %v523
      %525 = vmatmul.bf16.gmra.mxu0 %v260
      %v526 = vpop.f32.mrf.mxu0
      %v527 = vadd.f32 %v416, %v526
      %v528 = vpop.f32.mrf.mxu0
      %v529 = vadd.f32 %v418, %v528
      %530 = vmatmul.bf16.gmra.mxu0 %v261
      %v531 = vpop.f32.mrf.mxu0
      %v532 = vadd.f32 %v421, %v531
      %v533 = vpop.f32.mrf.mxu0
      %v534 = vadd.f32 %v423, %v533
      %535 = vmatmul.bf16.gmra.mxu0 %v262
      %v536 = vpop.f32.mrf.mxu0
      %v537 = vadd.f32 %v426, %v536
      %v538 = vpop.f32.mrf.mxu0
      %v539 = vadd.f32 %v428, %v538
      %540 = vmatmul.bf16.gmra.mxu0 %v263
      %v541 = vpop.f32.mrf.mxu0
      %v542 = vadd.f32 %v431, %v541
      %v543 = vpop.f32.mrf.mxu0
      %v544 = vadd.f32 %v433, %v543
      %545 = vmatmul.bf16.gmra.mxu0 %v264
      %v546 = vpop.f32.mrf.mxu0
      %v547 = vadd.f32 %v436, %v546
      %v548 = vpop.f32.mrf.mxu0
      %v549 = vadd.f32 %v438, %v548
      %550 = vmatmul.bf16.gmra.mxu0 %v265
      %v551 = vpop.f32.mrf.mxu0
      %v552 = vadd.f32 %v441, %v551
      %v553 = vpop.f32.mrf.mxu0
      %v554 = vadd.f32 %v443, %v553
      %555 = vmatmul.bf16.gmra.mxu0 %v266
      %v556 = vpop.f32.mrf.mxu0
      %v557 = vadd.f32 %v446, %v556
      %v558 = vpop.f32.mrf.mxu0
      %v559 = vadd.f32 %v448, %v558
      %560 = vdwg.mxu0
      %v561 = vld [vmem:[%s165] sm:$0xe]
      %v562 = vld [vmem:[%s165 + $0x4] sm:$0xf]
      %v563 = vld [vmem:[%s165 + $0x8] sm:$0xf]
      %v564 = vld [vmem:[%s165 + $0xc] sm:$0xf]
      %v565 = vld [vmem:[%s165 + $0x10] sm:$0xf]
      %v566 = vld [vmem:[%s165 + $0x14] sm:$0xf]
      %v567 = vld [vmem:[%s165 + $0x18] sm:$0xf]
      %v568 = vld [vmem:[%s165 + $0x1c] sm:$0xf]
      %v569 = vld [vmem:[%s165 + $0x20] sm:$0xf]
      %v570 = vld [vmem:[%s165 + $0x24] sm:$0xf]
      %v571 = vld [vmem:[%s165 + $0x28] sm:$0xf]
      %v572 = vld [vmem:[%s165 + $0x2c] sm:$0xf]
      %v573 = vld [vmem:[%s165 + $0x30] sm:$0xf]
      %v574 = vld [vmem:[%s165 + $0x34] sm:$0xf]
      %v575 = vld [vmem:[%s165 + $0x38] sm:$0xf]
      %v576 = vld [vmem:[%s165 + $0x3c] sm:$0xf]
      %v577 = vld [vmem:[%s165 + $0x40] sm:$0xf]
      %v578 = vld [vmem:[%s165 + $0x44] sm:$0xf]
      %v579 = vld [vmem:[%s165 + $0x48] sm:$0x1]
      %s580 = scalar_lea.vmem %s1, 128
      %v581 = vld [vmem:[%s580] sm:$0xf]
      %v582 = vld [vmem:[%s580 + $0x4] sm:$0xf]
      %v583 = vld [vmem:[%s580 + $0x8] sm:$0xf]
      %v584 = vld [vmem:[%s580 + $0xc] sm:$0xf]
      %v585 = vld [vmem:[%s580 + $0x10] sm:$0xf]
      %v586 = vld [vmem:[%s580 + $0x14] sm:$0xf]
      %v587 = vld [vmem:[%s580 + $0x18] sm:$0xf]
      %v588 = vld [vmem:[%s580 + $0x1c] sm:$0xf]
      %v589 = vld [vmem:[%s580 + $0x20] sm:$0xf]
      %v590 = vld [vmem:[%s580 + $0x24] sm:$0xf]
      %v591 = vld [vmem:[%s580 + $0x28] sm:$0xf]
      %v592 = vld [vmem:[%s580 + $0x2c] sm:$0xf]
      %v593 = vld [vmem:[%s580 + $0x30] sm:$0xf]
      %v594 = vld [vmem:[%s580 + $0x34] sm:$0xf]
      %v595 = vld [vmem:[%s580 + $0x38] sm:$0xf]
      %v596 = vld [vmem:[%s580 + $0x3c] sm:$0xf]
      %v616 = vunpack.c.l.b16 %v561
      %v617 = vunpack.c.l.b16 %v562
      %v618 = vunpack.c.l.b16 %v563
      %v619 = vunpack.c.l.b16 %v564
      %v620 = vunpack.c.l.b16 %v565
      %v621 = vunpack.c.l.b16 %v566
      %v622 = vunpack.c.l.b16 %v567
      %v623 = vunpack.c.l.b16 %v568
      %v624 = vunpack.c.l.b16 %v569
      %v625 = vunpack.c.l.b16 %v570
      %v626 = vunpack.c.l.b16 %v571
      %v627 = vunpack.c.l.b16 %v572
      %v628 = vunpack.c.l.b16 %v573
      %v629 = vunpack.c.l.b16 %v574
      %v630 = vunpack.c.l.b16 %v575
      %v631 = vunpack.c.l.b16 %v576
      %v632 = vunpack.c.l.b16 %v577
      %v633 = vunpack.c.l.b16 %v578
      %v634 = vunpack.c.l.b16 %v579
      %v635 = vpack.c.b16 %v617, %v616
      %v636 = vpack.c.b16 %v619, %v618
      %v637 = vpack.c.b16 %v621, %v620
      %v638 = vpack.c.b16 %v623, %v622
      %v639 = vpack.c.b16 %v625, %v624
      %v640 = vpack.c.b16 %v627, %v626
      %v641 = vpack.c.b16 %v629, %v628
      %v642 = vpack.c.b16 %v631, %v630
      %v643 = vpack.c.b16 %v633, %v632
      %v644 = vpack.c.b16 %v634, %v634
      %vm645 = vcmask 1046528
      %v646 = vrot.slane %v635, 1
      %v647 = vrot.slane %v636, 1
      %v648 = vsel %vm645, %v646, %v647
      %v649 = vrot.slane %v637, 1
      %v650 = vsel %vm645, %v647, %v649
      %v651 = vrot.slane %v638, 1
      %v652 = vsel %vm645, %v649, %v651
      %v653 = vrot.slane %v639, 1
      %v654 = vsel %vm645, %v651, %v653
      %v655 = vrot.slane %v640, 1
      %v656 = vsel %vm645, %v653, %v655
      %v657 = vrot.slane %v641, 1
      %v658 = vsel %vm645, %v655, %v657
      %v659 = vrot.slane %v642, 1
      %v660 = vsel %vm645, %v657, %v659
      %v661 = vrot.slane %v643, 1
      %v662 = vsel %vm645, %v659, %v661
      %v663 = vrot.slane %v644, 1
      %v664 = vsel %vm645, %v661, %v663
      %v690 = vunpack.c.l.b16 %v581
      %v691 = vunpack.c.l.b16 %v582
      %v692 = vunpack.c.l.b16 %v583
      %v693 = vunpack.c.l.b16 %v584
      %v694 = vunpack.c.l.b16 %v585
      %v695 = vunpack.c.l.b16 %v586
      %v696 = vunpack.c.l.b16 %v587
      %v697 = vunpack.c.l.b16 %v588
      %v698 = vunpack.c.l.b16 %v589
      %v699 = vunpack.c.l.b16 %v590
      %v700 = vunpack.c.l.b16 %v591
      %v701 = vunpack.c.l.b16 %v592
      %v702 = vunpack.c.l.b16 %v593
      %v703 = vunpack.c.l.b16 %v594
      %v704 = vunpack.c.l.b16 %v595
      %v705 = vunpack.c.l.b16 %v596
      %v706 = vpack.c.b16 %v691, %v690
      %v707 = vpack.c.b16 %v693, %v692
      %v708 = vpack.c.b16 %v695, %v694
      %v709 = vpack.c.b16 %v697, %v696
      %v710 = vpack.c.b16 %v699, %v698
      %v711 = vpack.c.b16 %v701, %v700
      %v712 = vpack.c.b16 %v703, %v702
      %v713 = vpack.c.b16 %v705, %v704
      %722 = vmatpush.bf16.msra.mxu0 %v713
      %723 = vmatpush.bf16.msra.mxu0 %v712
      %724 = vmatpush.bf16.msra.mxu0 %v711
      %725 = vmatpush.bf16.msra.mxu0 %v710
      %726 = vmatpush.bf16.msra.mxu0 %v709
      %727 = vmatpush.bf16.msra.mxu0 %v708
      %728 = vmatpush.bf16.msra.mxu0 %v707
      %729 = vmatpush.bf16.msra.mxu0 %v706
      %730 = vmatmul.bf16.gmra.mxu0 %v648
      %v731 = vpop.f32.mrf.mxu0
      %v732 = vadd.f32 0.0, %v731
      %v733 = vpop.f32.mrf.mxu0
      %v734 = vadd.f32 0.0, %v733
      %735 = vmatmul.bf16.gmra.mxu0 %v650
      %v736 = vpop.f32.mrf.mxu0
      %v737 = vadd.f32 0.0, %v736
      %v738 = vpop.f32.mrf.mxu0
      %v739 = vadd.f32 0.0, %v738
      %740 = vmatmul.bf16.gmra.mxu0 %v652
      %v741 = vpop.f32.mrf.mxu0
      %v742 = vadd.f32 0.0, %v741
      %v743 = vpop.f32.mrf.mxu0
      %v744 = vadd.f32 0.0, %v743
      %745 = vmatmul.bf16.gmra.mxu0 %v654
      %v746 = vpop.f32.mrf.mxu0
      %v747 = vadd.f32 0.0, %v746
      %v748 = vpop.f32.mrf.mxu0
      %v749 = vadd.f32 0.0, %v748
      %750 = vmatmul.bf16.gmra.mxu0 %v656
      %v751 = vpop.f32.mrf.mxu0
      %v752 = vadd.f32 0.0, %v751
      %v753 = vpop.f32.mrf.mxu0
      %v754 = vadd.f32 0.0, %v753
      %755 = vmatmul.bf16.gmra.mxu0 %v658
      %v756 = vpop.f32.mrf.mxu0
      %v757 = vadd.f32 0.0, %v756
      %v758 = vpop.f32.mrf.mxu0
      %v759 = vadd.f32 0.0, %v758
      %760 = vmatmul.bf16.gmra.mxu0 %v660
      %v761 = vpop.f32.mrf.mxu0
      %v762 = vadd.f32 0.0, %v761
      %v763 = vpop.f32.mrf.mxu0
      %v764 = vadd.f32 0.0, %v763
      %765 = vmatmul.bf16.gmra.mxu0 %v662
      %v766 = vpop.f32.mrf.mxu0
      %v767 = vadd.f32 0.0, %v766
      %v768 = vpop.f32.mrf.mxu0
      %v769 = vadd.f32 0.0, %v768
      %770 = vmatmul.bf16.gmra.mxu0 %v664
      %v771 = vpop.f32.mrf.mxu0
      %v772 = vadd.f32 0.0, %v771
      %v773 = vpop.f32.mrf.mxu0
      %v774 = vadd.f32 0.0, %v773
      %775 = vdwg.mxu0
      %v776 = vadd.f32 %v517, %v732
      %v777 = vadd.f32 %v519, %v734
      %v778 = vadd.f32 %v522, %v737
      %v779 = vadd.f32 %v524, %v739
      %v780 = vadd.f32 %v527, %v742
      %v781 = vadd.f32 %v529, %v744
      %v782 = vadd.f32 %v532, %v747
      %v783 = vadd.f32 %v534, %v749
      %v784 = vadd.f32 %v537, %v752
      %v785 = vadd.f32 %v539, %v754
      %v786 = vadd.f32 %v542, %v757
      %v787 = vadd.f32 %v544, %v759
      %v788 = vadd.f32 %v547, %v762
      %v789 = vadd.f32 %v549, %v764
      %v790 = vadd.f32 %v552, %v767
      %v791 = vadd.f32 %v554, %v769
      %v792 = vadd.f32 %v557, %v772
      %v793 = vadd.f32 %v559, %v774
      %v794 = vld [vmem:[%s165 + $0x4] sm:$0xc]
      %v795 = vld [vmem:[%s165 + $0x8] sm:$0xf]
      %v796 = vld [vmem:[%s165 + $0xc] sm:$0xf]
      %v797 = vld [vmem:[%s165 + $0x10] sm:$0xf]
      %v798 = vld [vmem:[%s165 + $0x14] sm:$0xf]
      %v799 = vld [vmem:[%s165 + $0x18] sm:$0xf]
      %v800 = vld [vmem:[%s165 + $0x1c] sm:$0xf]
      %v801 = vld [vmem:[%s165 + $0x20] sm:$0xf]
      %v802 = vld [vmem:[%s165 + $0x24] sm:$0xf]
      %v803 = vld [vmem:[%s165 + $0x28] sm:$0xf]
      %v804 = vld [vmem:[%s165 + $0x2c] sm:$0xf]
      %v805 = vld [vmem:[%s165 + $0x30] sm:$0xf]
      %v806 = vld [vmem:[%s165 + $0x34] sm:$0xf]
      %v807 = vld [vmem:[%s165 + $0x38] sm:$0xf]
      %v808 = vld [vmem:[%s165 + $0x3c] sm:$0xf]
      %v809 = vld [vmem:[%s165 + $0x40] sm:$0xf]
      %v810 = vld [vmem:[%s165 + $0x44] sm:$0xf]
      %v811 = vld [vmem:[%s165 + $0x48] sm:$0xf]
      %v812 = vld [vmem:[%s165 + $0x4c] sm:$0x3]
      %s813 = scalar_lea.vmem %s1, 192
      %v814 = vld [vmem:[%s813] sm:$0xf]
      %v815 = vld [vmem:[%s813 + $0x4] sm:$0xf]
      %v816 = vld [vmem:[%s813 + $0x8] sm:$0xf]
      %v817 = vld [vmem:[%s813 + $0xc] sm:$0xf]
      %v818 = vld [vmem:[%s813 + $0x10] sm:$0xf]
      %v819 = vld [vmem:[%s813 + $0x14] sm:$0xf]
      %v820 = vld [vmem:[%s813 + $0x18] sm:$0xf]
      %v821 = vld [vmem:[%s813 + $0x1c] sm:$0xf]
      %v822 = vld [vmem:[%s813 + $0x20] sm:$0xf]
      %v823 = vld [vmem:[%s813 + $0x24] sm:$0xf]
      %v824 = vld [vmem:[%s813 + $0x28] sm:$0xf]
      %v825 = vld [vmem:[%s813 + $0x2c] sm:$0xf]
      %v826 = vld [vmem:[%s813 + $0x30] sm:$0xf]
      %v827 = vld [vmem:[%s813 + $0x34] sm:$0xf]
      %v828 = vld [vmem:[%s813 + $0x38] sm:$0xf]
      %v829 = vld [vmem:[%s813 + $0x3c] sm:$0xf]
      %v849 = vunpack.c.l.b16 %v794
      %v850 = vunpack.c.l.b16 %v795
      %v851 = vunpack.c.l.b16 %v796
      %v852 = vunpack.c.l.b16 %v797
      %v853 = vunpack.c.l.b16 %v798
      %v854 = vunpack.c.l.b16 %v799
      %v855 = vunpack.c.l.b16 %v800
      %v856 = vunpack.c.l.b16 %v801
      %v857 = vunpack.c.l.b16 %v802
      %v858 = vunpack.c.l.b16 %v803
      %v859 = vunpack.c.l.b16 %v804
      %v860 = vunpack.c.l.b16 %v805
      %v861 = vunpack.c.l.b16 %v806
      %v862 = vunpack.c.l.b16 %v807
      %v863 = vunpack.c.l.b16 %v808
      %v864 = vunpack.c.l.b16 %v809
      %v865 = vunpack.c.l.b16 %v810
      %v866 = vunpack.c.l.b16 %v811
      %v867 = vunpack.c.l.b16 %v812
      %v868 = vpack.c.b16 %v850, %v849
      %v869 = vpack.c.b16 %v852, %v851
      %v870 = vpack.c.b16 %v854, %v853
      %v871 = vpack.c.b16 %v856, %v855
      %v872 = vpack.c.b16 %v858, %v857
      %v873 = vpack.c.b16 %v860, %v859
      %v874 = vpack.c.b16 %v862, %v861
      %v875 = vpack.c.b16 %v864, %v863
      %v876 = vpack.c.b16 %v866, %v865
      %v877 = vpack.c.b16 %v867, %v867
      %vm878 = vsmask.f32 5376
      %v880 = vshrl.u32 %v868, 16
      %v882 = vrot.slane %v880, 2
      %v883 = vshll.u32 %v868, 16
      %v885 = vrot.slane %v883, 3
      %v886 = vor.u32 %v882, %v885
      %v888 = vshrl.u32 %v869, 16
      %v890 = vrot.slane %v888, 2
      %v891 = vshll.u32 %v869, 16
      %v893 = vrot.slane %v891, 3
      %v894 = vor.u32 %v890, %v893
      %v895 = vsel %vm878, %v886, %v894
      %v897 = vshrl.u32 %v870, 16
      %v899 = vrot.slane %v897, 2
      %v900 = vshll.u32 %v870, 16
      %v902 = vrot.slane %v900, 3
      %v903 = vor.u32 %v899, %v902
      %v904 = vsel %vm878, %v894, %v903
      %v906 = vshrl.u32 %v871, 16
      %v908 = vrot.slane %v906, 2
      %v909 = vshll.u32 %v871, 16
      %v911 = vrot.slane %v909, 3
      %v912 = vor.u32 %v908, %v911
      %v913 = vsel %vm878, %v903, %v912
      %v915 = vshrl.u32 %v872, 16
      %v917 = vrot.slane %v915, 2
      %v918 = vshll.u32 %v872, 16
      %v920 = vrot.slane %v918, 3
      %v921 = vor.u32 %v917, %v920
      %v922 = vsel %vm878, %v912, %v921
      %v924 = vshrl.u32 %v873, 16
      %v926 = vrot.slane %v924, 2
      %v927 = vshll.u32 %v873, 16
      %v929 = vrot.slane %v927, 3
      %v930 = vor.u32 %v926, %v929
      %v931 = vsel %vm878, %v921, %v930
      %v933 = vshrl.u32 %v874, 16
      %v935 = vrot.slane %v933, 2
      %v936 = vshll.u32 %v874, 16
      %v938 = vrot.slane %v936, 3
      %v939 = vor.u32 %v935, %v938
      %v940 = vsel %vm878, %v930, %v939
      %v942 = vshrl.u32 %v875, 16
      %v944 = vrot.slane %v942, 2
      %v945 = vshll.u32 %v875, 16
      %v947 = vrot.slane %v945, 3
      %v948 = vor.u32 %v944, %v947
      %v949 = vsel %vm878, %v939, %v948
      %v951 = vshrl.u32 %v876, 16
      %v953 = vrot.slane %v951, 2
      %v954 = vshll.u32 %v876, 16
      %v956 = vrot.slane %v954, 3
      %v957 = vor.u32 %v953, %v956
      %v958 = vsel %vm878, %v948, %v957
      %v960 = vshrl.u32 %v877, 16
      %v962 = vrot.slane %v960, 2
      %v963 = vshll.u32 %v877, 16
      %v965 = vrot.slane %v963, 3
      %v966 = vor.u32 %v962, %v965
      %v967 = vsel %vm878, %v957, %v966
      %v993 = vunpack.c.l.b16 %v814
      %v994 = vunpack.c.l.b16 %v815
      %v995 = vunpack.c.l.b16 %v816
      %v996 = vunpack.c.l.b16 %v817
      %v997 = vunpack.c.l.b16 %v818
      %v998 = vunpack.c.l.b16 %v819
      %v999 = vunpack.c.l.b16 %v820
      %v1000 = vunpack.c.l.b16 %v821
      %v1001 = vunpack.c.l.b16 %v822
      %v1002 = vunpack.c.l.b16 %v823
      %v1003 = vunpack.c.l.b16 %v824
      %v1004 = vunpack.c.l.b16 %v825
      %v1005 = vunpack.c.l.b16 %v826
      %v1006 = vunpack.c.l.b16 %v827
      %v1007 = vunpack.c.l.b16 %v828
      %v1008 = vunpack.c.l.b16 %v829
      %v1009 = vpack.c.b16 %v994, %v993
      %v1010 = vpack.c.b16 %v996, %v995
      %v1011 = vpack.c.b16 %v998, %v997
      %v1012 = vpack.c.b16 %v1000, %v999
      %v1013 = vpack.c.b16 %v1002, %v1001
      %v1014 = vpack.c.b16 %v1004, %v1003
      %v1015 = vpack.c.b16 %v1006, %v1005
      %v1016 = vpack.c.b16 %v1008, %v1007
      %1025 = vmatpush.bf16.msra.mxu0 %v1016
      %1026 = vmatpush.bf16.msra.mxu0 %v1015
      %1027 = vmatpush.bf16.msra.mxu0 %v1014
      %1028 = vmatpush.bf16.msra.mxu0 %v1013
      %1029 = vmatpush.bf16.msra.mxu0 %v1012
      %1030 = vmatpush.bf16.msra.mxu0 %v1011
      %1031 = vmatpush.bf16.msra.mxu0 %v1010
      %1032 = vmatpush.bf16.msra.mxu0 %v1009
      %1033 = vmatmul.bf16.gmra.mxu0 %v895
      %v1034 = vpop.f32.mrf.mxu0
      %v1035 = vadd.f32 0.0, %v1034
      %v1036 = vpop.f32.mrf.mxu0
      %v1037 = vadd.f32 0.0, %v1036
      %1038 = vmatmul.bf16.gmra.mxu0 %v904
      %v1039 = vpop.f32.mrf.mxu0
      %v1040 = vadd.f32 0.0, %v1039
      %v1041 = vpop.f32.mrf.mxu0
      %v1042 = vadd.f32 0.0, %v1041
      %1043 = vmatmul.bf16.gmra.mxu0 %v913
      %v1044 = vpop.f32.mrf.mxu0
      %v1045 = vadd.f32 0.0, %v1044
      %v1046 = vpop.f32.mrf.mxu0
      %v1047 = vadd.f32 0.0, %v1046
      %1048 = vmatmul.bf16.gmra.mxu0 %v922
      %v1049 = vpop.f32.mrf.mxu0
      %v1050 = vadd.f32 0.0, %v1049
      %v1051 = vpop.f32.mrf.mxu0
      %v1052 = vadd.f32 0.0, %v1051
      %1053 = vmatmul.bf16.gmra.mxu0 %v931
      %v1054 = vpop.f32.mrf.mxu0
      %v1055 = vadd.f32 0.0, %v1054
      %v1056 = vpop.f32.mrf.mxu0
      %v1057 = vadd.f32 0.0, %v1056
      %1058 = vmatmul.bf16.gmra.mxu0 %v940
      %v1059 = vpop.f32.mrf.mxu0
      %v1060 = vadd.f32 0.0, %v1059
      %v1061 = vpop.f32.mrf.mxu0
      %v1062 = vadd.f32 0.0, %v1061
      %1063 = vmatmul.bf16.gmra.mxu0 %v949
      %v1064 = vpop.f32.mrf.mxu0
      %v1065 = vadd.f32 0.0, %v1064
      %v1066 = vpop.f32.mrf.mxu0
      %v1067 = vadd.f32 0.0, %v1066
      %1068 = vmatmul.bf16.gmra.mxu0 %v958
      %v1069 = vpop.f32.mrf.mxu0
      %v1070 = vadd.f32 0.0, %v1069
      %v1071 = vpop.f32.mrf.mxu0
      %v1072 = vadd.f32 0.0, %v1071
      %1073 = vmatmul.bf16.gmra.mxu0 %v967
      %v1074 = vpop.f32.mrf.mxu0
      %v1075 = vadd.f32 0.0, %v1074
      %v1076 = vpop.f32.mrf.mxu0
      %v1077 = vadd.f32 0.0, %v1076
      %1078 = vdwg.mxu0
      %v1079 = vadd.f32 %v776, %v1035
      %v1080 = vadd.f32 %v777, %v1037
      %v1081 = vadd.f32 %v778, %v1040
      %v1082 = vadd.f32 %v779, %v1042
      %v1083 = vadd.f32 %v780, %v1045
      %v1084 = vadd.f32 %v781, %v1047
      %v1085 = vadd.f32 %v782, %v1050
      %v1086 = vadd.f32 %v783, %v1052
      %v1087 = vadd.f32 %v784, %v1055
      %v1088 = vadd.f32 %v785, %v1057
      %v1089 = vadd.f32 %v786, %v1060
      %v1090 = vadd.f32 %v787, %v1062
      %v1091 = vadd.f32 %v788, %v1065
      %v1092 = vadd.f32 %v789, %v1067
      %v1093 = vadd.f32 %v790, %v1070
      %v1094 = vadd.f32 %v791, %v1072
      %v1095 = vadd.f32 %v792, %v1075
      %v1096 = vadd.f32 %v793, %v1077
      %v1097 = vld [vmem:[%s165 + $0x4] sm:$0x8]
      %v1098 = vld [vmem:[%s165 + $0x4c] sm:$0x7]
      %s1099 = scalar_lea.vmem %s1, 256
      %v1100 = vld [vmem:[%s1099] sm:$0xf]
      %v1101 = vld [vmem:[%s1099 + $0x4] sm:$0xf]
      %v1102 = vld [vmem:[%s1099 + $0x8] sm:$0xf]
      %v1103 = vld [vmem:[%s1099 + $0xc] sm:$0xf]
      %v1104 = vld [vmem:[%s1099 + $0x10] sm:$0xf]
      %v1105 = vld [vmem:[%s1099 + $0x14] sm:$0xf]
      %v1106 = vld [vmem:[%s1099 + $0x18] sm:$0xf]
      %v1107 = vld [vmem:[%s1099 + $0x1c] sm:$0xf]
      %v1108 = vld [vmem:[%s1099 + $0x20] sm:$0xf]
      %v1109 = vld [vmem:[%s1099 + $0x24] sm:$0xf]
      %v1110 = vld [vmem:[%s1099 + $0x28] sm:$0xf]
      %v1111 = vld [vmem:[%s1099 + $0x2c] sm:$0xf]
      %v1112 = vld [vmem:[%s1099 + $0x30] sm:$0xf]
      %v1113 = vld [vmem:[%s1099 + $0x34] sm:$0xf]
      %v1114 = vld [vmem:[%s1099 + $0x38] sm:$0xf]
      %v1115 = vld [vmem:[%s1099 + $0x3c] sm:$0xf]
      %v1118 = vunpack.c.l.b16 %v1097
      %v1119 = vunpack.c.l.b16 %v1098
      %v1120 = vpack.c.b16 %v850, %v1118
      %v1121 = vpack.c.b16 %v1119, %v1119
      %vm1122 = vcmask 1044480
      %v1123 = vrot.slane %v1120, 3
      %v1124 = vrot.slane %v869, 3
      %v1125 = vsel %vm1122, %v1123, %v1124
      %v1126 = vrot.slane %v870, 3
      %v1127 = vsel %vm1122, %v1124, %v1126
      %v1128 = vrot.slane %v871, 3
      %v1129 = vsel %vm1122, %v1126, %v1128
      %v1130 = vrot.slane %v872, 3
      %v1131 = vsel %vm1122, %v1128, %v1130
      %v1132 = vrot.slane %v873, 3
      %v1133 = vsel %vm1122, %v1130, %v1132
      %v1134 = vrot.slane %v874, 3
      %v1135 = vsel %vm1122, %v1132, %v1134
      %v1136 = vrot.slane %v875, 3
      %v1137 = vsel %vm1122, %v1134, %v1136
      %v1138 = vrot.slane %v876, 3
      %v1139 = vsel %vm1122, %v1136, %v1138
      %v1140 = vrot.slane %v1121, 3
      %v1141 = vsel %vm1122, %v1138, %v1140
      %v1167 = vunpack.c.l.b16 %v1100
      %v1168 = vunpack.c.l.b16 %v1101
      %v1169 = vunpack.c.l.b16 %v1102
      %v1170 = vunpack.c.l.b16 %v1103
      %v1171 = vunpack.c.l.b16 %v1104
      %v1172 = vunpack.c.l.b16 %v1105
      %v1173 = vunpack.c.l.b16 %v1106
      %v1174 = vunpack.c.l.b16 %v1107
      %v1175 = vunpack.c.l.b16 %v1108
      %v1176 = vunpack.c.l.b16 %v1109
      %v1177 = vunpack.c.l.b16 %v1110
      %v1178 = vunpack.c.l.b16 %v1111
      %v1179 = vunpack.c.l.b16 %v1112
      %v1180 = vunpack.c.l.b16 %v1113
      %v1181 = vunpack.c.l.b16 %v1114
      %v1182 = vunpack.c.l.b16 %v1115
      %v1183 = vpack.c.b16 %v1168, %v1167
      %v1184 = vpack.c.b16 %v1170, %v1169
      %v1185 = vpack.c.b16 %v1172, %v1171
      %v1186 = vpack.c.b16 %v1174, %v1173
      %v1187 = vpack.c.b16 %v1176, %v1175
      %v1188 = vpack.c.b16 %v1178, %v1177
      %v1189 = vpack.c.b16 %v1180, %v1179
      %v1190 = vpack.c.b16 %v1182, %v1181
      %1199 = vmatpush.bf16.msra.mxu0 %v1190
      %1200 = vmatpush.bf16.msra.mxu0 %v1189
      %1201 = vmatpush.bf16.msra.mxu0 %v1188
      %1202 = vmatpush.bf16.msra.mxu0 %v1187
      %1203 = vmatpush.bf16.msra.mxu0 %v1186
      %1204 = vmatpush.bf16.msra.mxu0 %v1185
      %1205 = vmatpush.bf16.msra.mxu0 %v1184
      %1206 = vmatpush.bf16.msra.mxu0 %v1183
      %1207 = vmatmul.bf16.gmra.mxu0 %v1125
      %v1208 = vpop.f32.mrf.mxu0
      %v1209 = vadd.f32 0.0, %v1208
      %v1210 = vpop.f32.mrf.mxu0
      %v1211 = vadd.f32 0.0, %v1210
      %1212 = vmatmul.bf16.gmra.mxu0 %v1127
      %v1213 = vpop.f32.mrf.mxu0
      %v1214 = vadd.f32 0.0, %v1213
      %v1215 = vpop.f32.mrf.mxu0
      %v1216 = vadd.f32 0.0, %v1215
      %1217 = vmatmul.bf16.gmra.mxu0 %v1129
      %v1218 = vpop.f32.mrf.mxu0
      %v1219 = vadd.f32 0.0, %v1218
      %v1220 = vpop.f32.mrf.mxu0
      %v1221 = vadd.f32 0.0, %v1220
      %1222 = vmatmul.bf16.gmra.mxu0 %v1131
      %v1223 = vpop.f32.mrf.mxu0
      %v1224 = vadd.f32 0.0, %v1223
      %v1225 = vpop.f32.mrf.mxu0
      %v1226 = vadd.f32 0.0, %v1225
      %1227 = vmatmul.bf16.gmra.mxu0 %v1133
      %v1228 = vpop.f32.mrf.mxu0
      %v1229 = vadd.f32 0.0, %v1228
      %v1230 = vpop.f32.mrf.mxu0
      %v1231 = vadd.f32 0.0, %v1230
      %1232 = vmatmul.bf16.gmra.mxu0 %v1135
      %v1233 = vpop.f32.mrf.mxu0
      %v1234 = vadd.f32 0.0, %v1233
      %v1235 = vpop.f32.mrf.mxu0
      %v1236 = vadd.f32 0.0, %v1235
      %1237 = vmatmul.bf16.gmra.mxu0 %v1137
      %v1238 = vpop.f32.mrf.mxu0
      %v1239 = vadd.f32 0.0, %v1238
      %v1240 = vpop.f32.mrf.mxu0
      %v1241 = vadd.f32 0.0, %v1240
      %1242 = vmatmul.bf16.gmra.mxu0 %v1139
      %v1243 = vpop.f32.mrf.mxu0
      %v1244 = vadd.f32 0.0, %v1243
      %v1245 = vpop.f32.mrf.mxu0
      %v1246 = vadd.f32 0.0, %v1245
      %1247 = vmatmul.bf16.gmra.mxu0 %v1141
      %v1248 = vpop.f32.mrf.mxu0
      %v1249 = vadd.f32 0.0, %v1248
      %v1250 = vpop.f32.mrf.mxu0
      %v1251 = vadd.f32 0.0, %v1250
      %1252 = vdwg.mxu0
      %v1253 = vadd.f32 %v1079, %v1209
      %v1254 = vadd.f32 %v1080, %v1211
      %v1255 = vadd.f32 %v1081, %v1214
      %v1256 = vadd.f32 %v1082, %v1216
      %v1257 = vadd.f32 %v1083, %v1219
      %v1258 = vadd.f32 %v1084, %v1221
      %v1259 = vadd.f32 %v1085, %v1224
      %v1260 = vadd.f32 %v1086, %v1226
      %v1261 = vadd.f32 %v1087, %v1229
      %v1262 = vadd.f32 %v1088, %v1231
      %v1263 = vadd.f32 %v1089, %v1234
      %v1264 = vadd.f32 %v1090, %v1236
      %v1265 = vadd.f32 %v1091, %v1239
      %v1266 = vadd.f32 %v1092, %v1241
      %v1267 = vadd.f32 %v1093, %v1244
      %v1268 = vadd.f32 %v1094, %v1246
      %v1269 = vadd.f32 %v1095, %v1249
      %v1270 = vadd.f32 %v1096, %v1251
      %s1271 = scalar_lea.vmem %s1, 320
      %v1272 = vld [vmem:[%s1271] sm:$0xf]
      %v1273 = vld [vmem:[%s1271 + $0x4] sm:$0xf]
      %v1274 = vld [vmem:[%s1271 + $0x8] sm:$0xf]
      %v1275 = vld [vmem:[%s1271 + $0xc] sm:$0xf]
      %v1276 = vld [vmem:[%s1271 + $0x10] sm:$0xf]
      %v1277 = vld [vmem:[%s1271 + $0x14] sm:$0xf]
      %v1278 = vld [vmem:[%s1271 + $0x18] sm:$0xf]
      %v1279 = vld [vmem:[%s1271 + $0x1c] sm:$0xf]
      %v1280 = vld [vmem:[%s1271 + $0x20] sm:$0xf]
      %v1281 = vld [vmem:[%s1271 + $0x24] sm:$0xf]
      %v1282 = vld [vmem:[%s1271 + $0x28] sm:$0xf]
      %v1283 = vld [vmem:[%s1271 + $0x2c] sm:$0xf]
      %v1284 = vld [vmem:[%s1271 + $0x30] sm:$0xf]
      %v1285 = vld [vmem:[%s1271 + $0x34] sm:$0xf]
      %v1286 = vld [vmem:[%s1271 + $0x38] sm:$0xf]
      %v1287 = vld [vmem:[%s1271 + $0x3c] sm:$0xf]
      %vm1288 = vsmask.f32 4352
      %v1290 = vshrl.u32 %v1120, 16
      %v1292 = vrot.slane %v1290, 3
      %v1293 = vshll.u32 %v1120, 16
      %v1295 = vrot.slane %v1293, 4
      %v1296 = vor.u32 %v1292, %v1295
      %v1297 = vrot.slane %v888, 3
      %v1298 = vrot.slane %v891, 4
      %v1299 = vor.u32 %v1297, %v1298
      %v1300 = vsel %vm1288, %v1296, %v1299
      %v1301 = vrot.slane %v897, 3
      %v1302 = vrot.slane %v900, 4
      %v1303 = vor.u32 %v1301, %v1302
      %v1304 = vsel %vm1288, %v1299, %v1303
      %v1305 = vrot.slane %v906, 3
      %v1306 = vrot.slane %v909, 4
      %v1307 = vor.u32 %v1305, %v1306
      %v1308 = vsel %vm1288, %v1303, %v1307
      %v1309 = vrot.slane %v915, 3
      %v1310 = vrot.slane %v918, 4
      %v1311 = vor.u32 %v1309, %v1310
      %v1312 = vsel %vm1288, %v1307, %v1311
      %v1313 = vrot.slane %v924, 3
      %v1314 = vrot.slane %v927, 4
      %v1315 = vor.u32 %v1313, %v1314
      %v1316 = vsel %vm1288, %v1311, %v1315
      %v1317 = vrot.slane %v933, 3
      %v1318 = vrot.slane %v936, 4
      %v1319 = vor.u32 %v1317, %v1318
      %v1320 = vsel %vm1288, %v1315, %v1319
      %v1321 = vrot.slane %v942, 3
      %v1322 = vrot.slane %v945, 4
      %v1323 = vor.u32 %v1321, %v1322
      %v1324 = vsel %vm1288, %v1319, %v1323
      %v1325 = vrot.slane %v951, 3
      %v1326 = vrot.slane %v954, 4
      %v1327 = vor.u32 %v1325, %v1326
      %v1328 = vsel %vm1288, %v1323, %v1327
      %v1330 = vshrl.u32 %v1121, 16
      %v1332 = vrot.slane %v1330, 3
      %v1333 = vshll.u32 %v1121, 16
      %v1335 = vrot.slane %v1333, 4
      %v1336 = vor.u32 %v1332, %v1335
      %v1337 = vsel %vm1288, %v1327, %v1336
      %v1363 = vunpack.c.l.b16 %v1272
      %v1364 = vunpack.c.l.b16 %v1273
      %v1365 = vunpack.c.l.b16 %v1274
      %v1366 = vunpack.c.l.b16 %v1275
      %v1367 = vunpack.c.l.b16 %v1276
      %v1368 = vunpack.c.l.b16 %v1277
      %v1369 = vunpack.c.l.b16 %v1278
      %v1370 = vunpack.c.l.b16 %v1279
      %v1371 = vunpack.c.l.b16 %v1280
      %v1372 = vunpack.c.l.b16 %v1281
      %v1373 = vunpack.c.l.b16 %v1282
      %v1374 = vunpack.c.l.b16 %v1283
      %v1375 = vunpack.c.l.b16 %v1284
      %v1376 = vunpack.c.l.b16 %v1285
      %v1377 = vunpack.c.l.b16 %v1286
      %v1378 = vunpack.c.l.b16 %v1287
      %v1379 = vpack.c.b16 %v1364, %v1363
      %v1380 = vpack.c.b16 %v1366, %v1365
      %v1381 = vpack.c.b16 %v1368, %v1367
      %v1382 = vpack.c.b16 %v1370, %v1369
      %v1383 = vpack.c.b16 %v1372, %v1371
      %v1384 = vpack.c.b16 %v1374, %v1373
      %v1385 = vpack.c.b16 %v1376, %v1375
      %v1386 = vpack.c.b16 %v1378, %v1377
      %1395 = vmatpush.bf16.msra.mxu0 %v1386
      %1396 = vmatpush.bf16.msra.mxu0 %v1385
      %1397 = vmatpush.bf16.msra.mxu0 %v1384
      %1398 = vmatpush.bf16.msra.mxu0 %v1383
      %1399 = vmatpush.bf16.msra.mxu0 %v1382
      %1400 = vmatpush.bf16.msra.mxu0 %v1381
      %1401 = vmatpush.bf16.msra.mxu0 %v1380
      %1402 = vmatpush.bf16.msra.mxu0 %v1379
      %1403 = vmatmul.bf16.gmra.mxu0 %v1300
      %v1404 = vpop.f32.mrf.mxu0
      %v1405 = vadd.f32 0.0, %v1404
      %v1406 = vpop.f32.mrf.mxu0
      %v1407 = vadd.f32 0.0, %v1406
      %1408 = vmatmul.bf16.gmra.mxu0 %v1304
      %v1409 = vpop.f32.mrf.mxu0
      %v1410 = vadd.f32 0.0, %v1409
      %v1411 = vpop.f32.mrf.mxu0
      %v1412 = vadd.f32 0.0, %v1411
      %1413 = vmatmul.bf16.gmra.mxu0 %v1308
      %v1414 = vpop.f32.mrf.mxu0
      %v1415 = vadd.f32 0.0, %v1414
      %v1416 = vpop.f32.mrf.mxu0
      %v1417 = vadd.f32 0.0, %v1416
      %1418 = vmatmul.bf16.gmra.mxu0 %v1312
      %v1419 = vpop.f32.mrf.mxu0
      %v1420 = vadd.f32 0.0, %v1419
      %v1421 = vpop.f32.mrf.mxu0
      %v1422 = vadd.f32 0.0, %v1421
      %1423 = vmatmul.bf16.gmra.mxu0 %v1316
      %v1424 = vpop.f32.mrf.mxu0
      %v1425 = vadd.f32 0.0, %v1424
      %v1426 = vpop.f32.mrf.mxu0
      %v1427 = vadd.f32 0.0, %v1426
      %1428 = vmatmul.bf16.gmra.mxu0 %v1320
      %v1429 = vpop.f32.mrf.mxu0
      %v1430 = vadd.f32 0.0, %v1429
      %v1431 = vpop.f32.mrf.mxu0
      %v1432 = vadd.f32 0.0, %v1431
      %1433 = vmatmul.bf16.gmra.mxu0 %v1324
      %v1434 = vpop.f32.mrf.mxu0
      %v1435 = vadd.f32 0.0, %v1434
      %v1436 = vpop.f32.mrf.mxu0
      %v1437 = vadd.f32 0.0, %v1436
      %1438 = vmatmul.bf16.gmra.mxu0 %v1328
      %v1439 = vpop.f32.mrf.mxu0
      %v1440 = vadd.f32 0.0, %v1439
      %v1441 = vpop.f32.mrf.mxu0
      %v1442 = vadd.f32 0.0, %v1441
      %1443 = vmatmul.bf16.gmra.mxu0 %v1337
      %v1444 = vpop.f32.mrf.mxu0
      %v1445 = vadd.f32 0.0, %v1444
      %v1446 = vpop.f32.mrf.mxu0
      %v1447 = vadd.f32 0.0, %v1446
      %1448 = vdwg.mxu0
      %v1449 = vadd.f32 %v1253, %v1405
      %v1450 = vadd.f32 %v1254, %v1407
      %v1451 = vadd.f32 %v1255, %v1410
      %v1452 = vadd.f32 %v1256, %v1412
      %v1453 = vadd.f32 %v1257, %v1415
      %v1454 = vadd.f32 %v1258, %v1417
      %v1455 = vadd.f32 %v1259, %v1420
      %v1456 = vadd.f32 %v1260, %v1422
      %v1457 = vadd.f32 %v1261, %v1425
      %v1458 = vadd.f32 %v1262, %v1427
      %v1459 = vadd.f32 %v1263, %v1430
      %v1460 = vadd.f32 %v1264, %v1432
      %v1461 = vadd.f32 %v1265, %v1435
      %v1462 = vadd.f32 %v1266, %v1437
      %v1463 = vadd.f32 %v1267, %v1440
      %v1464 = vadd.f32 %v1268, %v1442
      %v1465 = vadd.f32 %v1269, %v1445
      %v1466 = vadd.f32 %v1270, %v1447
      %v1467 = vld [vmem:[%s165 + $0xc] sm:$0xe]
      %v1468 = vld [vmem:[%s165 + $0x10] sm:$0xf]
      %v1469 = vld [vmem:[%s165 + $0x14] sm:$0xf]
      %v1470 = vld [vmem:[%s165 + $0x18] sm:$0xf]
      %v1471 = vld [vmem:[%s165 + $0x1c] sm:$0xf]
      %v1472 = vld [vmem:[%s165 + $0x20] sm:$0xf]
      %v1473 = vld [vmem:[%s165 + $0x24] sm:$0xf]
      %v1474 = vld [vmem:[%s165 + $0x28] sm:$0xf]
      %v1475 = vld [vmem:[%s165 + $0x2c] sm:$0xf]
      %v1476 = vld [vmem:[%s165 + $0x30] sm:$0xf]
      %v1477 = vld [vmem:[%s165 + $0x34] sm:$0xf]
      %v1478 = vld [vmem:[%s165 + $0x38] sm:$0xf]
      %v1479 = vld [vmem:[%s165 + $0x3c] sm:$0xf]
      %v1480 = vld [vmem:[%s165 + $0x40] sm:$0xf]
      %v1481 = vld [vmem:[%s165 + $0x44] sm:$0xf]
      %v1482 = vld [vmem:[%s165 + $0x48] sm:$0xf]
      %v1483 = vld [vmem:[%s165 + $0x4c] sm:$0xf]
      %v1484 = vld [vmem:[%s165 + $0x50] sm:$0xf]
      %v1485 = vld [vmem:[%s165 + $0x54] sm:$0x1]
      %s1486 = scalar_lea.vmem %s1, 384
      %v1487 = vld [vmem:[%s1486] sm:$0xf]
      %v1488 = vld [vmem:[%s1486 + $0x4] sm:$0xf]
      %v1489 = vld [vmem:[%s1486 + $0x8] sm:$0xf]
      %v1490 = vld [vmem:[%s1486 + $0xc] sm:$0xf]
      %v1491 = vld [vmem:[%s1486 + $0x10] sm:$0xf]
      %v1492 = vld [vmem:[%s1486 + $0x14] sm:$0xf]
      %v1493 = vld [vmem:[%s1486 + $0x18] sm:$0xf]
      %v1494 = vld [vmem:[%s1486 + $0x1c] sm:$0xf]
      %v1495 = vld [vmem:[%s1486 + $0x20] sm:$0xf]
      %v1496 = vld [vmem:[%s1486 + $0x24] sm:$0xf]
      %v1497 = vld [vmem:[%s1486 + $0x28] sm:$0xf]
      %v1498 = vld [vmem:[%s1486 + $0x2c] sm:$0xf]
      %v1499 = vld [vmem:[%s1486 + $0x30] sm:$0xf]
      %v1500 = vld [vmem:[%s1486 + $0x34] sm:$0xf]
      %v1501 = vld [vmem:[%s1486 + $0x38] sm:$0xf]
      %v1502 = vld [vmem:[%s1486 + $0x3c] sm:$0xf]
      %v1522 = vunpack.c.l.b16 %v1467
      %v1523 = vunpack.c.l.b16 %v1468
      %v1524 = vunpack.c.l.b16 %v1469
      %v1525 = vunpack.c.l.b16 %v1470
      %v1526 = vunpack.c.l.b16 %v1471
      %v1527 = vunpack.c.l.b16 %v1472
      %v1528 = vunpack.c.l.b16 %v1473
      %v1529 = vunpack.c.l.b16 %v1474
      %v1530 = vunpack.c.l.b16 %v1475
      %v1531 = vunpack.c.l.b16 %v1476
      %v1532 = vunpack.c.l.b16 %v1477
      %v1533 = vunpack.c.l.b16 %v1478
      %v1534 = vunpack.c.l.b16 %v1479
      %v1535 = vunpack.c.l.b16 %v1480
      %v1536 = vunpack.c.l.b16 %v1481
      %v1537 = vunpack.c.l.b16 %v1482
      %v1538 = vunpack.c.l.b16 %v1483
      %v1539 = vunpack.c.l.b16 %v1484
      %v1540 = vunpack.c.l.b16 %v1485
      %v1541 = vpack.c.b16 %v1523, %v1522
      %v1542 = vpack.c.b16 %v1525, %v1524
      %v1543 = vpack.c.b16 %v1527, %v1526
      %v1544 = vpack.c.b16 %v1529, %v1528
      %v1545 = vpack.c.b16 %v1531, %v1530
      %v1546 = vpack.c.b16 %v1533, %v1532
      %v1547 = vpack.c.b16 %v1535, %v1534
      %v1548 = vpack.c.b16 %v1537, %v1536
      %v1549 = vpack.c.b16 %v1539, %v1538
      %v1550 = vpack.c.b16 %v1540, %v1540
      %v1551 = vrot.slane %v1541, 1
      %v1552 = vrot.slane %v1542, 1
      %v1553 = vsel %vm645, %v1551, %v1552
      %v1554 = vrot.slane %v1543, 1
      %v1555 = vsel %vm645, %v1552, %v1554
      %v1556 = vrot.slane %v1544, 1
      %v1557 = vsel %vm645, %v1554, %v1556
      %v1558 = vrot.slane %v1545, 1
      %v1559 = vsel %vm645, %v1556, %v1558
      %v1560 = vrot.slane %v1546, 1
      %v1561 = vsel %vm645, %v1558, %v1560
      %v1562 = vrot.slane %v1547, 1
      %v1563 = vsel %vm645, %v1560, %v1562
      %v1564 = vrot.slane %v1548, 1
      %v1565 = vsel %vm645, %v1562, %v1564
      %v1566 = vrot.slane %v1549, 1
      %v1567 = vsel %vm645, %v1564, %v1566
      %v1568 = vrot.slane %v1550, 1
      %v1569 = vsel %vm645, %v1566, %v1568
      %v1595 = vunpack.c.l.b16 %v1487
      %v1596 = vunpack.c.l.b16 %v1488
      %v1597 = vunpack.c.l.b16 %v1489
      %v1598 = vunpack.c.l.b16 %v1490
      %v1599 = vunpack.c.l.b16 %v1491
      %v1600 = vunpack.c.l.b16 %v1492
      %v1601 = vunpack.c.l.b16 %v1493
      %v1602 = vunpack.c.l.b16 %v1494
      %v1603 = vunpack.c.l.b16 %v1495
      %v1604 = vunpack.c.l.b16 %v1496
      %v1605 = vunpack.c.l.b16 %v1497
      %v1606 = vunpack.c.l.b16 %v1498
      %v1607 = vunpack.c.l.b16 %v1499
      %v1608 = vunpack.c.l.b16 %v1500
      %v1609 = vunpack.c.l.b16 %v1501
      %v1610 = vunpack.c.l.b16 %v1502
      %v1611 = vpack.c.b16 %v1596, %v1595
      %v1612 = vpack.c.b16 %v1598, %v1597
      %v1613 = vpack.c.b16 %v1600, %v1599
      %v1614 = vpack.c.b16 %v1602, %v1601
      %v1615 = vpack.c.b16 %v1604, %v1603
      %v1616 = vpack.c.b16 %v1606, %v1605
      %v1617 = vpack.c.b16 %v1608, %v1607
      %v1618 = vpack.c.b16 %v1610, %v1609
      %1627 = vmatpush.bf16.msra.mxu0 %v1618
      %1628 = vmatpush.bf16.msra.mxu0 %v1617
      %1629 = vmatpush.bf16.msra.mxu0 %v1616
      %1630 = vmatpush.bf16.msra.mxu0 %v1615
      %1631 = vmatpush.bf16.msra.mxu0 %v1614
      %1632 = vmatpush.bf16.msra.mxu0 %v1613
      %1633 = vmatpush.bf16.msra.mxu0 %v1612
      %1634 = vmatpush.bf16.msra.mxu0 %v1611
      %1635 = vmatmul.bf16.gmra.mxu0 %v1553
      %v1636 = vpop.f32.mrf.mxu0
      %v1637 = vadd.f32 0.0, %v1636
      %v1638 = vpop.f32.mrf.mxu0
      %v1639 = vadd.f32 0.0, %v1638
      %1640 = vmatmul.bf16.gmra.mxu0 %v1555
      %v1641 = vpop.f32.mrf.mxu0
      %v1642 = vadd.f32 0.0, %v1641
      %v1643 = vpop.f32.mrf.mxu0
      %v1644 = vadd.f32 0.0, %v1643
      %1645 = vmatmul.bf16.gmra.mxu0 %v1557
      %v1646 = vpop.f32.mrf.mxu0
      %v1647 = vadd.f32 0.0, %v1646
      %v1648 = vpop.f32.mrf.mxu0
      %v1649 = vadd.f32 0.0, %v1648
      %1650 = vmatmul.bf16.gmra.mxu0 %v1559
      %v1651 = vpop.f32.mrf.mxu0
      %v1652 = vadd.f32 0.0, %v1651
      %v1653 = vpop.f32.mrf.mxu0
      %v1654 = vadd.f32 0.0, %v1653
      %1655 = vmatmul.bf16.gmra.mxu0 %v1561
      %v1656 = vpop.f32.mrf.mxu0
      %v1657 = vadd.f32 0.0, %v1656
      %v1658 = vpop.f32.mrf.mxu0
      %v1659 = vadd.f32 0.0, %v1658
      %1660 = vmatmul.bf16.gmra.mxu0 %v1563
      %v1661 = vpop.f32.mrf.mxu0
      %v1662 = vadd.f32 0.0, %v1661
      %v1663 = vpop.f32.mrf.mxu0
      %v1664 = vadd.f32 0.0, %v1663
      %1665 = vmatmul.bf16.gmra.mxu0 %v1565
      %v1666 = vpop.f32.mrf.mxu0
      %v1667 = vadd.f32 0.0, %v1666
      %v1668 = vpop.f32.mrf.mxu0
      %v1669 = vadd.f32 0.0, %v1668
      %1670 = vmatmul.bf16.gmra.mxu0 %v1567
      %v1671 = vpop.f32.mrf.mxu0
      %v1672 = vadd.f32 0.0, %v1671
      %v1673 = vpop.f32.mrf.mxu0
      %v1674 = vadd.f32 0.0, %v1673
      %1675 = vmatmul.bf16.gmra.mxu0 %v1569
      %v1676 = vpop.f32.mrf.mxu0
      %v1677 = vadd.f32 0.0, %v1676
      %v1678 = vpop.f32.mrf.mxu0
      %v1679 = vadd.f32 0.0, %v1678
      %1680 = vdwg.mxu0
      %v1681 = vadd.f32 %v1449, %v1637
      %v1682 = vadd.f32 %v1450, %v1639
      %v1683 = vadd.f32 %v1451, %v1642
      %v1684 = vadd.f32 %v1452, %v1644
      %v1685 = vadd.f32 %v1453, %v1647
      %v1686 = vadd.f32 %v1454, %v1649
      %v1687 = vadd.f32 %v1455, %v1652
      %v1688 = vadd.f32 %v1456, %v1654
      %v1689 = vadd.f32 %v1457, %v1657
      %v1690 = vadd.f32 %v1458, %v1659
      %v1691 = vadd.f32 %v1459, %v1662
      %v1692 = vadd.f32 %v1460, %v1664
      %v1693 = vadd.f32 %v1461, %v1667
      %v1694 = vadd.f32 %v1462, %v1669
      %v1695 = vadd.f32 %v1463, %v1672
      %v1696 = vadd.f32 %v1464, %v1674
      %v1697 = vadd.f32 %v1465, %v1677
      %v1698 = vadd.f32 %v1466, %v1679
      %s1699 = scalar_lea.vmem %s1, 448
      %v1700 = vld [vmem:[%s1699] sm:$0xf]
      %v1701 = vld [vmem:[%s1699 + $0x4] sm:$0xf]
      %v1702 = vld [vmem:[%s1699 + $0x8] sm:$0xf]
      %v1703 = vld [vmem:[%s1699 + $0xc] sm:$0xf]
      %v1704 = vld [vmem:[%s1699 + $0x10] sm:$0xf]
      %v1705 = vld [vmem:[%s1699 + $0x14] sm:$0xf]
      %v1706 = vld [vmem:[%s1699 + $0x18] sm:$0xf]
      %v1707 = vld [vmem:[%s1699 + $0x1c] sm:$0xf]
      %v1708 = vld [vmem:[%s1699 + $0x20] sm:$0xf]
      %v1709 = vld [vmem:[%s1699 + $0x24] sm:$0xf]
      %v1710 = vld [vmem:[%s1699 + $0x28] sm:$0xf]
      %v1711 = vld [vmem:[%s1699 + $0x2c] sm:$0xf]
      %v1712 = vld [vmem:[%s1699 + $0x30] sm:$0xf]
      %v1713 = vld [vmem:[%s1699 + $0x34] sm:$0xf]
      %v1714 = vld [vmem:[%s1699 + $0x38] sm:$0xf]
      %v1715 = vld [vmem:[%s1699 + $0x3c] sm:$0xf]
      %vm1716 = vsmask.f32 6400
      %v1718 = vshrl.u32 %v1541, 16
      %v1720 = vrot.slane %v1718, 1
      %v1721 = vshll.u32 %v1541, 16
      %v1723 = vrot.slane %v1721, 2
      %v1724 = vor.u32 %v1720, %v1723
      %v1726 = vshrl.u32 %v1542, 16
      %v1728 = vrot.slane %v1726, 1
      %v1729 = vshll.u32 %v1542, 16
      %v1731 = vrot.slane %v1729, 2
      %v1732 = vor.u32 %v1728, %v1731
      %v1733 = vsel %vm1716, %v1724, %v1732
      %v1735 = vshrl.u32 %v1543, 16
      %v1737 = vrot.slane %v1735, 1
      %v1738 = vshll.u32 %v1543, 16
      %v1740 = vrot.slane %v1738, 2
      %v1741 = vor.u32 %v1737, %v1740
      %v1742 = vsel %vm1716, %v1732, %v1741
      %v1744 = vshrl.u32 %v1544, 16
      %v1746 = vrot.slane %v1744, 1
      %v1747 = vshll.u32 %v1544, 16
      %v1749 = vrot.slane %v1747, 2
      %v1750 = vor.u32 %v1746, %v1749
      %v1751 = vsel %vm1716, %v1741, %v1750
      %v1753 = vshrl.u32 %v1545, 16
      %v1755 = vrot.slane %v1753, 1
      %v1756 = vshll.u32 %v1545, 16
      %v1758 = vrot.slane %v1756, 2
      %v1759 = vor.u32 %v1755, %v1758
      %v1760 = vsel %vm1716, %v1750, %v1759
      %v1762 = vshrl.u32 %v1546, 16
      %v1764 = vrot.slane %v1762, 1
      %v1765 = vshll.u32 %v1546, 16
      %v1767 = vrot.slane %v1765, 2
      %v1768 = vor.u32 %v1764, %v1767
      %v1769 = vsel %vm1716, %v1759, %v1768
      %v1771 = vshrl.u32 %v1547, 16
      %v1773 = vrot.slane %v1771, 1
      %v1774 = vshll.u32 %v1547, 16
      %v1776 = vrot.slane %v1774, 2
      %v1777 = vor.u32 %v1773, %v1776
      %v1778 = vsel %vm1716, %v1768, %v1777
      %v1780 = vshrl.u32 %v1548, 16
      %v1782 = vrot.slane %v1780, 1
      %v1783 = vshll.u32 %v1548, 16
      %v1785 = vrot.slane %v1783, 2
      %v1786 = vor.u32 %v1782, %v1785
      %v1787 = vsel %vm1716, %v1777, %v1786
      %v1789 = vshrl.u32 %v1549, 16
      %v1791 = vrot.slane %v1789, 1
      %v1792 = vshll.u32 %v1549, 16
      %v1794 = vrot.slane %v1792, 2
      %v1795 = vor.u32 %v1791, %v1794
      %v1796 = vsel %vm1716, %v1786, %v1795
      %v1798 = vshrl.u32 %v1550, 16
      %v1800 = vrot.slane %v1798, 1
      %v1801 = vshll.u32 %v1550, 16
      %v1803 = vrot.slane %v1801, 2
      %v1804 = vor.u32 %v1800, %v1803
      %v1805 = vsel %vm1716, %v1795, %v1804
      %v1831 = vunpack.c.l.b16 %v1700
      %v1832 = vunpack.c.l.b16 %v1701
      %v1833 = vunpack.c.l.b16 %v1702
      %v1834 = vunpack.c.l.b16 %v1703
      %v1835 = vunpack.c.l.b16 %v1704
      %v1836 = vunpack.c.l.b16 %v1705
      %v1837 = vunpack.c.l.b16 %v1706
      %v1838 = vunpack.c.l.b16 %v1707
      %v1839 = vunpack.c.l.b16 %v1708
      %v1840 = vunpack.c.l.b16 %v1709
      %v1841 = vunpack.c.l.b16 %v1710
      %v1842 = vunpack.c.l.b16 %v1711
      %v1843 = vunpack.c.l.b16 %v1712
      %v1844 = vunpack.c.l.b16 %v1713
      %v1845 = vunpack.c.l.b16 %v1714
      %v1846 = vunpack.c.l.b16 %v1715
      %v1847 = vpack.c.b16 %v1832, %v1831
      %v1848 = vpack.c.b16 %v1834, %v1833
      %v1849 = vpack.c.b16 %v1836, %v1835
      %v1850 = vpack.c.b16 %v1838, %v1837
      %v1851 = vpack.c.b16 %v1840, %v1839
      %v1852 = vpack.c.b16 %v1842, %v1841
      %v1853 = vpack.c.b16 %v1844, %v1843
      %v1854 = vpack.c.b16 %v1846, %v1845
      %1863 = vmatpush.bf16.msra.mxu0 %v1854
      %1864 = vmatpush.bf16.msra.mxu0 %v1853
      %1865 = vmatpush.bf16.msra.mxu0 %v1852
      %1866 = vmatpush.bf16.msra.mxu0 %v1851
      %1867 = vmatpush.bf16.msra.mxu0 %v1850
      %1868 = vmatpush.bf16.msra.mxu0 %v1849
      %1869 = vmatpush.bf16.msra.mxu0 %v1848
      %1870 = vmatpush.bf16.msra.mxu0 %v1847
      %1871 = vmatmul.bf16.gmra.mxu0 %v1733
      %v1872 = vpop.f32.mrf.mxu0
      %v1873 = vadd.f32 0.0, %v1872
      %v1874 = vpop.f32.mrf.mxu0
      %v1875 = vadd.f32 0.0, %v1874
      %1876 = vmatmul.bf16.gmra.mxu0 %v1742
      %v1877 = vpop.f32.mrf.mxu0
      %v1878 = vadd.f32 0.0, %v1877
      %v1879 = vpop.f32.mrf.mxu0
      %v1880 = vadd.f32 0.0, %v1879
      %1881 = vmatmul.bf16.gmra.mxu0 %v1751
      %v1882 = vpop.f32.mrf.mxu0
      %v1883 = vadd.f32 0.0, %v1882
      %v1884 = vpop.f32.mrf.mxu0
      %v1885 = vadd.f32 0.0, %v1884
      %1886 = vmatmul.bf16.gmra.mxu0 %v1760
      %v1887 = vpop.f32.mrf.mxu0
      %v1888 = vadd.f32 0.0, %v1887
      %v1889 = vpop.f32.mrf.mxu0
      %v1890 = vadd.f32 0.0, %v1889
      %1891 = vmatmul.bf16.gmra.mxu0 %v1769
      %v1892 = vpop.f32.mrf.mxu0
      %v1893 = vadd.f32 0.0, %v1892
      %v1894 = vpop.f32.mrf.mxu0
      %v1895 = vadd.f32 0.0, %v1894
      %1896 = vmatmul.bf16.gmra.mxu0 %v1778
      %v1897 = vpop.f32.mrf.mxu0
      %v1898 = vadd.f32 0.0, %v1897
      %v1899 = vpop.f32.mrf.mxu0
      %v1900 = vadd.f32 0.0, %v1899
      %1901 = vmatmul.bf16.gmra.mxu0 %v1787
      %v1902 = vpop.f32.mrf.mxu0
      %v1903 = vadd.f32 0.0, %v1902
      %v1904 = vpop.f32.mrf.mxu0
      %v1905 = vadd.f32 0.0, %v1904
      %1906 = vmatmul.bf16.gmra.mxu0 %v1796
      %v1907 = vpop.f32.mrf.mxu0
      %v1908 = vadd.f32 0.0, %v1907
      %v1909 = vpop.f32.mrf.mxu0
      %v1910 = vadd.f32 0.0, %v1909
      %1911 = vmatmul.bf16.gmra.mxu0 %v1805
      %v1912 = vpop.f32.mrf.mxu0
      %v1913 = vadd.f32 0.0, %v1912
      %v1914 = vpop.f32.mrf.mxu0
      %v1915 = vadd.f32 0.0, %v1914
      %1916 = vdwg.mxu0
      %v1917 = vadd.f32 %v1681, %v1873
      %v1918 = vadd.f32 %v1682, %v1875
      %v1919 = vadd.f32 %v1683, %v1878
      %v1920 = vadd.f32 %v1684, %v1880
      %v1921 = vadd.f32 %v1685, %v1883
      %v1922 = vadd.f32 %v1686, %v1885
      %v1923 = vadd.f32 %v1687, %v1888
      %v1924 = vadd.f32 %v1688, %v1890
      %v1925 = vadd.f32 %v1689, %v1893
      %v1926 = vadd.f32 %v1690, %v1895
      %v1927 = vadd.f32 %v1691, %v1898
      %v1928 = vadd.f32 %v1692, %v1900
      %v1929 = vadd.f32 %v1693, %v1903
      %v1930 = vadd.f32 %v1694, %v1905
      %v1931 = vadd.f32 %v1695, %v1908
      %v1932 = vadd.f32 %v1696, %v1910
      %v1933 = vadd.f32 %v1697, %v1913
      %v1934 = vadd.f32 %v1698, %v1915
      %v1935 = vld [vmem:[%s165 + $0xc] sm:$0xc]
      %v1936 = vld [vmem:[%s165 + $0x54] sm:$0x3]
      %s1937 = scalar_lea.vmem %s1, 512
      %v1938 = vld [vmem:[%s1937] sm:$0xf]
      %v1939 = vld [vmem:[%s1937 + $0x4] sm:$0xf]
      %v1940 = vld [vmem:[%s1937 + $0x8] sm:$0xf]
      %v1941 = vld [vmem:[%s1937 + $0xc] sm:$0xf]
      %v1942 = vld [vmem:[%s1937 + $0x10] sm:$0xf]
      %v1943 = vld [vmem:[%s1937 + $0x14] sm:$0xf]
      %v1944 = vld [vmem:[%s1937 + $0x18] sm:$0xf]
      %v1945 = vld [vmem:[%s1937 + $0x1c] sm:$0xf]
      %v1946 = vld [vmem:[%s1937 + $0x20] sm:$0xf]
      %v1947 = vld [vmem:[%s1937 + $0x24] sm:$0xf]
      %v1948 = vld [vmem:[%s1937 + $0x28] sm:$0xf]
      %v1949 = vld [vmem:[%s1937 + $0x2c] sm:$0xf]
      %v1950 = vld [vmem:[%s1937 + $0x30] sm:$0xf]
      %v1951 = vld [vmem:[%s1937 + $0x34] sm:$0xf]
      %v1952 = vld [vmem:[%s1937 + $0x38] sm:$0xf]
      %v1953 = vld [vmem:[%s1937 + $0x3c] sm:$0xf]
      %v1956 = vunpack.c.l.b16 %v1935
      %v1957 = vunpack.c.l.b16 %v1936
      %v1958 = vpack.c.b16 %v1523, %v1956
      %v1959 = vpack.c.b16 %v1957, %v1957
      %vm1960 = vcmask 1045504
      %v1961 = vrot.slane %v1958, 2
      %v1962 = vrot.slane %v1542, 2
      %v1963 = vsel %vm1960, %v1961, %v1962
      %v1964 = vrot.slane %v1543, 2
      %v1965 = vsel %vm1960, %v1962, %v1964
      %v1966 = vrot.slane %v1544, 2
      %v1967 = vsel %vm1960, %v1964, %v1966
      %v1968 = vrot.slane %v1545, 2
      %v1969 = vsel %vm1960, %v1966, %v1968
      %v1970 = vrot.slane %v1546, 2
      %v1971 = vsel %vm1960, %v1968, %v1970
      %v1972 = vrot.slane %v1547, 2
      %v1973 = vsel %vm1960, %v1970, %v1972
      %v1974 = vrot.slane %v1548, 2
      %v1975 = vsel %vm1960, %v1972, %v1974
      %v1976 = vrot.slane %v1549, 2
      %v1977 = vsel %vm1960, %v1974, %v1976
      %v1978 = vrot.slane %v1959, 2
      %v1979 = vsel %vm1960, %v1976, %v1978
      %v2005 = vunpack.c.l.b16 %v1938
      %v2006 = vunpack.c.l.b16 %v1939
      %v2007 = vunpack.c.l.b16 %v1940
      %v2008 = vunpack.c.l.b16 %v1941
      %v2009 = vunpack.c.l.b16 %v1942
      %v2010 = vunpack.c.l.b16 %v1943
      %v2011 = vunpack.c.l.b16 %v1944
      %v2012 = vunpack.c.l.b16 %v1945
      %v2013 = vunpack.c.l.b16 %v1946
      %v2014 = vunpack.c.l.b16 %v1947
      %v2015 = vunpack.c.l.b16 %v1948
      %v2016 = vunpack.c.l.b16 %v1949
      %v2017 = vunpack.c.l.b16 %v1950
      %v2018 = vunpack.c.l.b16 %v1951
      %v2019 = vunpack.c.l.b16 %v1952
      %v2020 = vunpack.c.l.b16 %v1953
      %v2021 = vpack.c.b16 %v2006, %v2005
      %v2022 = vpack.c.b16 %v2008, %v2007
      %v2023 = vpack.c.b16 %v2010, %v2009
      %v2024 = vpack.c.b16 %v2012, %v2011
      %v2025 = vpack.c.b16 %v2014, %v2013
      %v2026 = vpack.c.b16 %v2016, %v2015
      %v2027 = vpack.c.b16 %v2018, %v2017
      %v2028 = vpack.c.b16 %v2020, %v2019
      %2037 = vmatpush.bf16.msra.mxu0 %v2028
      %2038 = vmatpush.bf16.msra.mxu0 %v2027
      %2039 = vmatpush.bf16.msra.mxu0 %v2026
      %2040 = vmatpush.bf16.msra.mxu0 %v2025
      %2041 = vmatpush.bf16.msra.mxu0 %v2024
      %2042 = vmatpush.bf16.msra.mxu0 %v2023
      %2043 = vmatpush.bf16.msra.mxu0 %v2022
      %2044 = vmatpush.bf16.msra.mxu0 %v2021
      %2045 = vmatmul.bf16.gmra.mxu0 %v1963
      %v2046 = vpop.f32.mrf.mxu0
      %v2047 = vadd.f32 0.0, %v2046
      %v2048 = vpop.f32.mrf.mxu0
      %v2049 = vadd.f32 0.0, %v2048
      %2050 = vmatmul.bf16.gmra.mxu0 %v1965
      %v2051 = vpop.f32.mrf.mxu0
      %v2052 = vadd.f32 0.0, %v2051
      %v2053 = vpop.f32.mrf.mxu0
      %v2054 = vadd.f32 0.0, %v2053
      %2055 = vmatmul.bf16.gmra.mxu0 %v1967
      %v2056 = vpop.f32.mrf.mxu0
      %v2057 = vadd.f32 0.0, %v2056
      %v2058 = vpop.f32.mrf.mxu0
      %v2059 = vadd.f32 0.0, %v2058
      %2060 = vmatmul.bf16.gmra.mxu0 %v1969
      %v2061 = vpop.f32.mrf.mxu0
      %v2062 = vadd.f32 0.0, %v2061
      %v2063 = vpop.f32.mrf.mxu0
      %v2064 = vadd.f32 0.0, %v2063
      %2065 = vmatmul.bf16.gmra.mxu0 %v1971
      %v2066 = vpop.f32.mrf.mxu0
      %v2067 = vadd.f32 0.0, %v2066
      %v2068 = vpop.f32.mrf.mxu0
      %v2069 = vadd.f32 0.0, %v2068
      %2070 = vmatmul.bf16.gmra.mxu0 %v1973
      %v2071 = vpop.f32.mrf.mxu0
      %v2072 = vadd.f32 0.0, %v2071
      %v2073 = vpop.f32.mrf.mxu0
      %v2074 = vadd.f32 0.0, %v2073
      %2075 = vmatmul.bf16.gmra.mxu0 %v1975
      %v2076 = vpop.f32.mrf.mxu0
      %v2077 = vadd.f32 0.0, %v2076
      %v2078 = vpop.f32.mrf.mxu0
      %v2079 = vadd.f32 0.0, %v2078
      %2080 = vmatmul.bf16.gmra.mxu0 %v1977
      %v2081 = vpop.f32.mrf.mxu0
      %v2082 = vadd.f32 0.0, %v2081
      %v2083 = vpop.f32.mrf.mxu0
      %v2084 = vadd.f32 0.0, %v2083
      %2085 = vmatmul.bf16.gmra.mxu0 %v1979
      %v2086 = vpop.f32.mrf.mxu0
      %v2087 = vadd.f32 0.0, %v2086
      %v2088 = vpop.f32.mrf.mxu0
      %v2089 = vadd.f32 0.0, %v2088
      %2090 = vdwg.mxu0
      %v2091 = vadd.f32 %v1917, %v2047
      %v2092 = vadd.f32 %v1918, %v2049
      %v2093 = vadd.f32 %v1919, %v2052
      %v2094 = vadd.f32 %v1920, %v2054
      %v2095 = vadd.f32 %v1921, %v2057
      %v2096 = vadd.f32 %v1922, %v2059
      %v2097 = vadd.f32 %v1923, %v2062
      %v2098 = vadd.f32 %v1924, %v2064
      %v2099 = vadd.f32 %v1925, %v2067
      %v2100 = vadd.f32 %v1926, %v2069
      %v2101 = vadd.f32 %v1927, %v2072
      %v2102 = vadd.f32 %v1928, %v2074
      %v2103 = vadd.f32 %v1929, %v2077
      %v2104 = vadd.f32 %v1930, %v2079
      %v2105 = vadd.f32 %v1931, %v2082
      %v2106 = vadd.f32 %v1932, %v2084
      %v2107 = vadd.f32 %v1933, %v2087
      %v2108 = vadd.f32 %v1934, %v2089
      %v2109 = vld [vmem:[%s2] sm:$0x1]
      %v2111 = vperm.slane %v2109, 0
      %v2113 = vadd.f32 %v2091, %v2111
      %v2114 = vadd.f32 %v2092, %v2111
      %v2115 = vadd.f32 %v2093, %v2111
      %v2116 = vadd.f32 %v2094, %v2111
      %v2117 = vadd.f32 %v2095, %v2111
      %v2118 = vadd.f32 %v2096, %v2111
      %v2119 = vadd.f32 %v2097, %v2111
      %v2120 = vadd.f32 %v2098, %v2111
      %v2121 = vadd.f32 %v2099, %v2111
      %v2122 = vadd.f32 %v2100, %v2111
      %v2123 = vadd.f32 %v2101, %v2111
      %v2124 = vadd.f32 %v2102, %v2111
      %v2125 = vadd.f32 %v2103, %v2111
      %v2126 = vadd.f32 %v2104, %v2111
      %v2127 = vadd.f32 %v2105, %v2111
      %v2128 = vadd.f32 %v2106, %v2111
      %v2129 = vadd.f32 %v2107, %v2111
      %v2130 = vadd.f32 %v2108, %v2111
      %v2131 = vmax.f32 %v2113, 0.0
      %v2132 = vmax.f32 %v2114, 0.0
      %v2133 = vmax.f32 %v2115, 0.0
      %v2134 = vmax.f32 %v2116, 0.0
      %v2135 = vmax.f32 %v2117, 0.0
      %v2136 = vmax.f32 %v2118, 0.0
      %v2137 = vmax.f32 %v2119, 0.0
      %v2138 = vmax.f32 %v2120, 0.0
      %v2139 = vmax.f32 %v2121, 0.0
      %v2140 = vmax.f32 %v2122, 0.0
      %v2141 = vmax.f32 %v2123, 0.0
      %v2142 = vmax.f32 %v2124, 0.0
      %v2143 = vmax.f32 %v2125, 0.0
      %v2144 = vmax.f32 %v2126, 0.0
      %v2145 = vmax.f32 %v2127, 0.0
      %v2146 = vmax.f32 %v2128, 0.0
      %v2147 = vmax.f32 %v2129, 0.0
      %v2148 = vmax.f32 %v2130, 0.0
      %2149 = vst [vmem:[#allocation2] sm:$0xff] %v2131
      %2150 = vst [vmem:[#allocation2 + $0x8] sm:$0xff] %v2132
      %2151 = vst [vmem:[#allocation2 + $0x10] sm:$0xff] %v2133
      %2152 = vst [vmem:[#allocation2 + $0x18] sm:$0xff] %v2134
      %2153 = vst [vmem:[#allocation2 + $0x20] sm:$0xff] %v2135
      %2154 = vst [vmem:[#allocation2 + $0x28] sm:$0xff] %v2136
      %2155 = vst [vmem:[#allocation2 + $0x30] sm:$0xff] %v2137
      %2156 = vst [vmem:[#allocation2 + $0x38] sm:$0xff] %v2138
      %2157 = vst [vmem:[#allocation2 + $0x40] sm:$0xff] %v2139
      %2158 = vst [vmem:[#allocation2 + $0x48] sm:$0xff] %v2140
      %2159 = vst [vmem:[#allocation2 + $0x50] sm:$0xff] %v2141
      %2160 = vst [vmem:[#allocation2 + $0x58] sm:$0xff] %v2142
      %2161 = vst [vmem:[#allocation2 + $0x60] sm:$0xff] %v2143
      %2162 = vst [vmem:[#allocation2 + $0x68] sm:$0xff] %v2144
      %2163 = vst [vmem:[#allocation2 + $0x70] sm:$0xff] %v2145
      %2164 = vst [vmem:[#allocation2 + $0x78] sm:$0xff] %v2146
      %2165 = vst [vmem:[#allocation2 + $0x80] sm:$0xff] %v2147
      %2166 = vst [vmem:[#allocation2 + $0x88] sm:$0x7f] %v2148
      %v2167 = vld [vmem:[#allocation2] ss:$2 sm:$0xff]
      %s2168 = scalar_lea.vmem [#allocation2], 16
      %v2169 = vld [vmem:[%s2168] ss:$2 sm:$0xff]
      %s2170 = scalar_lea.vmem [#allocation2], 32
      %v2171 = vld [vmem:[%s2170] ss:$2 sm:$0xff]
      %s2172 = scalar_lea.vmem [#allocation2], 48
      %v2173 = vld [vmem:[%s2172] ss:$2 sm:$0xff]
      %s2174 = scalar_lea.vmem [#allocation2], 64
      %v2175 = vld [vmem:[%s2174] ss:$2 sm:$0xff]
      %s2176 = scalar_lea.vmem [#allocation2], 80
      %v2177 = vld [vmem:[%s2176] ss:$2 sm:$0xff]
      %s2178 = scalar_lea.vmem [#allocation2], 96
      %v2179 = vld [vmem:[%s2178] ss:$2 sm:$0xff]
      %s2180 = scalar_lea.vmem [#allocation2], 112
      %v2181 = vld [vmem:[%s2180] ss:$2 sm:$0xff]
      %s2182 = scalar_lea.vmem [#allocation2], 1
      %v2183 = vld [vmem:[%s2182] ss:$2 sm:$0xff]
      %s2184 = scalar_lea.vmem [#allocation2], 17
      %v2185 = vld [vmem:[%s2184] ss:$2 sm:$0xff]
      %s2186 = scalar_lea.vmem [#allocation2], 33
      %v2187 = vld [vmem:[%s2186] ss:$2 sm:$0xff]
      %s2188 = scalar_lea.vmem [#allocation2], 49
      %v2189 = vld [vmem:[%s2188] ss:$2 sm:$0xff]
      %s2190 = scalar_lea.vmem [#allocation2], 65
      %v2191 = vld [vmem:[%s2190] ss:$2 sm:$0xff]
      %s2192 = scalar_lea.vmem [#allocation2], 81
      %v2193 = vld [vmem:[%s2192] ss:$2 sm:$0xff]
      %s2194 = scalar_lea.vmem [#allocation2], 97
      %v2195 = vld [vmem:[%s2194] ss:$2 sm:$0xff]
      %s2196 = scalar_lea.vmem [#allocation2], 113
      %v2197 = vld [vmem:[%s2196] ss:$2 sm:$0xff]
      %s2198 = scalar_lea.vmem [#allocation2], 13
      %v2199 = vld [vmem:[%s2198] ss:$2 sm:$0xff]
      %s2200 = scalar_lea.vmem [#allocation2], 29
      %v2201 = vld [vmem:[%s2200] ss:$2 sm:$0xff]
      %s2202 = scalar_lea.vmem [#allocation2], 45
      %v2203 = vld [vmem:[%s2202] ss:$2 sm:$0xff]
      %s2204 = scalar_lea.vmem [#allocation2], 61
      %v2205 = vld [vmem:[%s2204] ss:$2 sm:$0xff]
      %s2206 = scalar_lea.vmem [#allocation2], 77
      %v2207 = vld [vmem:[%s2206] ss:$2 sm:$0xff]
      %s2208 = scalar_lea.vmem [#allocation2], 93
      %v2209 = vld [vmem:[%s2208] ss:$2 sm:$0xff]
      %s2210 = scalar_lea.vmem [#allocation2], 109
      %v2211 = vld [vmem:[%s2210] ss:$2 sm:$0xff]
      %s2212 = scalar_lea.vmem [#allocation2], 125
      %v2213 = vld [vmem:[%s2212] ss:$2 sm:$0xff]
      %s2214 = scalar_lea.vmem [#allocation2], 14
      %v2215 = vld [vmem:[%s2214] ss:$2 sm:$0xff]
      %s2216 = scalar_lea.vmem [#allocation2], 30
      %v2217 = vld [vmem:[%s2216] ss:$2 sm:$0xff]
      %s2218 = scalar_lea.vmem [#allocation2], 46
      %v2219 = vld [vmem:[%s2218] ss:$2 sm:$0xff]
      %s2220 = scalar_lea.vmem [#allocation2], 62
      %v2221 = vld [vmem:[%s2220] ss:$2 sm:$0xff]
      %s2222 = scalar_lea.vmem [#allocation2], 78
      %v2223 = vld [vmem:[%s2222] ss:$2 sm:$0xff]
      %s2224 = scalar_lea.vmem [#allocation2], 94
      %v2225 = vld [vmem:[%s2224] ss:$2 sm:$0xff]
      %s2226 = scalar_lea.vmem [#allocation2], 110
      %v2227 = vld [vmem:[%s2226] ss:$2 sm:$0xff]
      %s2228 = scalar_lea.vmem [#allocation2], 126
      %v2229 = vld [vmem:[%s2228] ss:$2 sm:$0xff]
      %v2230 = vmax.f32 %v2167, %v2183
      %v2231 = vmax.f32 %v2169, %v2185
      %v2232 = vmax.f32 %v2171, %v2187
      %v2233 = vmax.f32 %v2173, %v2189
      %v2234 = vmax.f32 %v2175, %v2191
      %v2235 = vmax.f32 %v2177, %v2193
      %v2236 = vmax.f32 %v2179, %v2195
      %v2237 = vmax.f32 %v2181, %v2197
      %v2238 = vmax.f32 %v2199, %v2215
      %v2239 = vmax.f32 %v2201, %v2217
      %v2240 = vmax.f32 %v2203, %v2219
      %v2241 = vmax.f32 %v2205, %v2221
      %v2242 = vmax.f32 %v2207, %v2223
      %v2243 = vmax.f32 %v2209, %v2225
      %v2244 = vmax.f32 %v2211, %v2227
      %v2245 = vmax.f32 %v2213, %v2229
      %v2246 = vmax.f32 %v2230, %v2238
      %v2247 = vmax.f32 %v2231, %v2239
      %v2248 = vmax.f32 %v2232, %v2240
      %v2249 = vmax.f32 %v2233, %v2241
      %v2250 = vmax.f32 %v2234, %v2242
      %v2251 = vmax.f32 %v2235, %v2243
      %v2252 = vmax.f32 %v2236, %v2244
      %v2253 = vmax.f32 %v2237, %v2245
      %v2254 = vpack.c.bf16 %v2246, %v2246
      %vm2255 = vcmask 1042432
      %vm2256 = vsmask.f32 2304
      %vm2257 = vmand %vm2255, %vm2256
      %v2258 = vld [vmem:[%s170] sm:$0x7]
      %v2259 = vsel %vm2257, %v2254, %v2258
      %2260 = vst [vmem:[%s170] sm:$0x7] %v2259
      %v2261 = vpack.c.bf16 %v2247, %v2247
      %v2262 = vpack.c.bf16 %v2248, %v2248
      %vm2263 = vcmask 1043458
      %vm2264 = vsmask.f32 7946
      %vm2265 = vmand %vm2263, %vm2264
      %v2266 = vld [vmem:[%s170] sm:$0xc]
      %v2267 = vsel %vm2265, %v2261, %v2266
      %2268 = vst [vmem:[%s170] sm:$0xc] %v2267
      %2269 = vst [vmem:[%s170 + $0x4] sm:$0x1] %v2262
      %v2270 = vpack.c.bf16 %v2249, %v2249
      %vm2271 = vcmask 1043457
      %vm2272 = vsmask.f32 3328
      %vm2273 = vmand %vm2271, %vm2272
      %v2274 = vld [vmem:[%s170 + $0x4] sm:$0xe]
      %v2275 = vsel %vm2273, %v2270, %v2274
      %2276 = vst [vmem:[%s170 + $0x4] sm:$0xe] %v2275
      %v2277 = vpack.c.bf16 %v2250, %v2250
      %v2278 = vpack.c.bf16 %v2251, %v2251
      %vm2279 = vcmask 1043459
      %vm2280 = vsmask.f32 7950
      %vm2281 = vmand %vm2279, %vm2280
      %v2282 = vld [vmem:[%s170 + $0x4] sm:$0x8]
      %v2283 = vsel %vm2281, %v2277, %v2282
      %2284 = vst [vmem:[%s170 + $0x4] sm:$0x8] %v2283
      %2285 = vst [vmem:[%s170 + $0x8] sm:$0x3] %v2278
      %v2286 = vpack.c.bf16 %v2252, %v2252
      %v2287 = vpack.c.bf16 %v2253, %v2253
      %2288 = vst [vmem:[%s170 + $0x8] sm:$0xc] %v2286
      %vm2289 = vcmask 1040384
      %vm2290 = vsmask.f32 256
      %vm2291 = vmand %vm2289, %vm2290
      %v2292 = vld [vmem:[%s170 + $0xc] sm:$0x1]
      %v2293 = vsel %vm2291, %v2287, %v2292
      %2294 = vst [vmem:[%s170 + $0xc] sm:$0x1] %v2293
      %p2295 = scmp.lt.s32.totalorder %s14, 1
      %s2296 = scalar_select %p2295, %s14, 1
      %s2297 = smul.addr %s2296, 4
      %s2298 = smul.addr %s2297, 4
      %s2299 = scalar_lea.vmem %s3, %s2298
      // Predicated region
      $region33: #{cnn_classifier_forward.4} parent=31 // pred_check
        %p2300 = pneg %p100
      $region34: #{cnn_classifier_forward.4} parent=31 // pred_check_branch
        %2302 = sbr.rel (%p2300) target = $region36
      $region35: #{cnn_classifier_forward.4} parent=31 // pred_region
        _
      $region36: #{cnn_classifier_forward.4} parent=31 // pred_fallthru
        _
    $region32: #{cnn_classifier_forward.4} parent=5 // pred_fallthru
      _
    %p2303 = scmp.le.s32.totalorder 2, %s9
    // Predicated region
    $region37: #{cnn_classifier_forward.4} parent=5 // pred_check
      %p2304 = pneg %p2303
    $region38: #{cnn_classifier_forward.4} parent=5 // pred_check_branch
      %2306 = sbr.rel (%p2304) target = $region40
    $region39: #{cnn_classifier_forward.4} parent=5 // pred_region
      %s2307 = ssub.s32 %s9, 2
      // Predicated region
      $region41: #{cnn_classifier_forward.4} parent=39 // pred_check
        %p2308 = pneg %p106
      $region42: #{cnn_classifier_forward.4} parent=39 // pred_check_branch
        %2310 = sbr.rel (%p2308) target = $region44
      $region43: #{cnn_classifier_forward.4} parent=39 // pred_region
        %p2311 = scmp.lt.s32.totalorder %s15, 1
        %s2312 = scalar_select %p2311, %s15, 1
        %s2313 = smul.addr %s2312, 4
        %s2314 = smul.addr %s2313, 4
        %s2315 = scalar_lea.vmem %s3, %s2314
      $region44: #{cnn_classifier_forward.4} parent=39 // pred_fallthru
        _
    $region40: #{cnn_classifier_forward.4} parent=5 // pred_fallthru
      _
  $region6: #{cnn_classifier_forward.4} parent=0 // loop_footer
    %s13 = sadd.s32 1, %s9
  $region7: #{cnn_classifier_forward.4} parent=0 // loop_footer_branch
    %8 = sbr.rel target = $region3
  $region8: #{cnn_classifier_forward.4} parent=0 // loop_exit
    _

// kernel: cnn_classifier_forward.5
$region0: #{cnn_classifier_forward.5}
  #allocation0 [shape = 'u32[]', space=smem, size = 0x4, offset = 0x4, fixed_abs, tag = 'smem constant byte address 0x4 - core index']
  #allocation1 [shape = 'u32[72,128]{1,0:T(1,128)}', space=vmem, size = 0x9000, scoped, tag = 'internal scratch']
  %s0 = inlined_call_operand.vmem [shape: bf16[2,3200], index: 0, kind: input, shape index: {}]
  %s1 = inlined_call_operand.vmem [shape: bf16[3200,128], index: 1, kind: input, shape index: {}]
  %s2 = inlined_call_operand.vmem [shape: f32[1,128], index: 2, kind: input, shape index: {}]
  %s3 = inlined_call_operand.vmem [shape: bf16[128,128], index: 3, kind: input, shape index: {}]
  %s4 = inlined_call_operand.vmem [shape: f32[1,128], index: 4, kind: input, shape index: {}]
  %s5 = inlined_call_operand.hbm [shape: f32[2,128], index: 5, kind: output, shape index: {}]
  %s6 = sld [smem:[#allocation0]]
  $region30: #{cnn_classifier_forward.5} parent=0
    _
  %s8 = ssub.s32 1, %s6
  %s9 = scalar_select 0, %s8, %s6
  $region1: #{cnn_classifier_forward.5} parent=0
    #allocation2 [shape = 'u8[1024]{0}', space=vmem, size = 0x400, scoped, tag = 'output window, operand 0, single buffered']
    #allocation3 [shape = 's32[1]{0}', space=sflag, size = 0x4, scoped, tag = 'scoped memory for cnn_classifier_forward.5']
    %10 = vsyncpa [#allocation3], 0
    // Predicated region
    $region2: #{cnn_classifier_forward.5} parent=1 // pred_check
      _
    $region3: #{cnn_classifier_forward.5} parent=1 // pred_check_branch
      %12 = sbr.rel (0) target = $region5
    $region4: #{cnn_classifier_forward.5} parent=1 // pred_region
      _
    $region5: #{cnn_classifier_forward.5} parent=1 // pred_fallthru
      _
    // Predicated region
    $region6: #{cnn_classifier_forward.5} parent=1 // pred_check
      _
    $region7: #{cnn_classifier_forward.5} parent=1 // pred_check_branch
      %14 = sbr.rel (0) target = $region9
    $region8: #{cnn_classifier_forward.5} parent=1 // pred_region
      _
    $region9: #{cnn_classifier_forward.5} parent=1 // pred_fallthru
      _
    // Predicated region
    $region10: #{cnn_classifier_forward.5} parent=1 // pred_check
      _
    $region11: #{cnn_classifier_forward.5} parent=1 // pred_check_branch
      %16 = sbr.rel (0) target = $region13
    $region12: #{cnn_classifier_forward.5} parent=1 // pred_region
      _
    $region13: #{cnn_classifier_forward.5} parent=1 // pred_fallthru
      _
    // Predicated region
    $region14: #{cnn_classifier_forward.5} parent=1 // pred_check
      _
    $region15: #{cnn_classifier_forward.5} parent=1 // pred_check_branch
      %18 = sbr.rel (0) target = $region17
    $region16: #{cnn_classifier_forward.5} parent=1 // pred_region
      _
    $region17: #{cnn_classifier_forward.5} parent=1 // pred_fallthru
      _
    // Predicated region
    $region18: #{cnn_classifier_forward.5} parent=1 // pred_check
      _
    $region19: #{cnn_classifier_forward.5} parent=1 // pred_check_branch
      %20 = sbr.rel (0) target = $region21
    $region20: #{cnn_classifier_forward.5} parent=1 // pred_region
      _
    $region21: #{cnn_classifier_forward.5} parent=1 // pred_fallthru
      _
    %v21 = vld [vmem:[%s0] sm:$0xff]
    %v22 = vld [vmem:[%s0 + $0x8] sm:$0xff]
    %v23 = vld [vmem:[%s0 + $0x10] sm:$0xff]
    %v24 = vld [vmem:[%s0 + $0x18] sm:$0x1]
    %v25 = vld [vmem:[%s1] sm:$0xf]
    %v26 = vld [vmem:[%s1 + $0x4] sm:$0xf]
    %v27 = vld [vmem:[%s1 + $0x8] sm:$0xf]
    %v28 = vld [vmem:[%s1 + $0xc] sm:$0xf]
    %v29 = vld [vmem:[%s1 + $0x10] sm:$0xf]
    %v30 = vld [vmem:[%s1 + $0x14] sm:$0xf]
    %v31 = vld [vmem:[%s1 + $0x18] sm:$0xf]
    %v32 = vld [vmem:[%s1 + $0x1c] sm:$0xf]
    %v33 = vld [vmem:[%s1 + $0x20] sm:$0xf]
    %v34 = vld [vmem:[%s1 + $0x24] sm:$0xf]
    %v35 = vld [vmem:[%s1 + $0x28] sm:$0xf]
    %v36 = vld [vmem:[%s1 + $0x2c] sm:$0xf]
    %v37 = vld [vmem:[%s1 + $0x30] sm:$0xf]
    %v38 = vld [vmem:[%s1 + $0x34] sm:$0xf]
    %v39 = vld [vmem:[%s1 + $0x38] sm:$0xf]
    %v40 = vld [vmem:[%s1 + $0x3c] sm:$0xf]
    %v41 = vld [vmem:[%s1 + $0x40] sm:$0xf]
    %v42 = vld [vmem:[%s1 + $0x44] sm:$0xf]
    %v43 = vld [vmem:[%s1 + $0x48] sm:$0xf]
    %v44 = vld [vmem:[%s1 + $0x4c] sm:$0xf]
    %v45 = vld [vmem:[%s1 + $0x50] sm:$0xf]
    %v46 = vld [vmem:[%s1 + $0x54] sm:$0xf]
    %v47 = vld [vmem:[%s1 + $0x58] sm:$0xf]
    %v48 = vld [vmem:[%s1 + $0x5c] sm:$0xf]
    %v49 = vld [vmem:[%s1 + $0x60] sm:$0xf]
    %v50 = vld [vmem:[%s1 + $0x64] sm:$0xf]
    %v51 = vld [vmem:[%s1 + $0x68] sm:$0xf]
    %v52 = vld [vmem:[%s1 + $0x6c] sm:$0xf]
    %v53 = vld [vmem:[%s1 + $0x70] sm:$0xf]
    %v54 = vld [vmem:[%s1 + $0x74] sm:$0xf]
    %v55 = vld [vmem:[%s1 + $0x78] sm:$0xf]
    %v56 = vld [vmem:[%s1 + $0x7c] sm:$0xf]
    %v57 = vld [vmem:[%s1 + $0x80] sm:$0xf]
    %v58 = vld [vmem:[%s1 + $0x84] sm:$0xf]
    %v59 = vld [vmem:[%s1 + $0x88] sm:$0xf]
    %v60 = vld [vmem:[%s1 + $0x8c] sm:$0xf]
    %v61 = vld [vmem:[%s1 + $0x90] sm:$0xf]
    %v62 = vld [vmem:[%s1 + $0x94] sm:$0xf]
    %v63 = vld [vmem:[%s1 + $0x98] sm:$0xf]
    %v64 = vld [vmem:[%s1 + $0x9c] sm:$0xf]
    %v65 = vld [vmem:[%s1 + $0xa0] sm:$0xf]
    %v66 = vld [vmem:[%s1 + $0xa4] sm:$0xf]
    %v67 = vld [vmem:[%s1 + $0xa8] sm:$0xf]
    %v68 = vld [vmem:[%s1 + $0xac] sm:$0xf]
    %v69 = vld [vmem:[%s1 + $0xb0] sm:$0xf]
    %v70 = vld [vmem:[%s1 + $0xb4] sm:$0xf]
    %v71 = vld [vmem:[%s1 + $0xb8] sm:$0xf]
    %v72 = vld [vmem:[%s1 + $0xbc] sm:$0xf]
    %v73 = vld [vmem:[%s1 + $0xc0] sm:$0xf]
    %v74 = vld [vmem:[%s1 + $0xc4] sm:$0xf]
    %v75 = vld [vmem:[%s1 + $0xc8] sm:$0xf]
    %v76 = vld [vmem:[%s1 + $0xcc] sm:$0xf]
    %v77 = vld [vmem:[%s1 + $0xd0] sm:$0xf]
    %v78 = vld [vmem:[%s1 + $0xd4] sm:$0xf]
    %v79 = vld [vmem:[%s1 + $0xd8] sm:$0xf]
    %v80 = vld [vmem:[%s1 + $0xdc] sm:$0xf]
    %v81 = vld [vmem:[%s1 + $0xe0] sm:$0xf]
    %v82 = vld [vmem:[%s1 + $0xe4] sm:$0xf]
    %v83 = vld [vmem:[%s1 + $0xe8] sm:$0xf]
    %v84 = vld [vmem:[%s1 + $0xec] sm:$0xf]
    %v85 = vld [vmem:[%s1 + $0xf0] sm:$0xf]
    %v86 = vld [vmem:[%s1 + $0xf4] sm:$0xf]
    %v87 = vld [vmem:[%s1 + $0xf8] sm:$0xf]
    %v88 = vld [vmem:[%s1 + $0xfc] sm:$0xf]
    %v89 = vld [vmem:[%s1 + $0x100] sm:$0xf]
    %v90 = vld [vmem:[%s1 + $0x104] sm:$0xf]
    %v91 = vld [vmem:[%s1 + $0x108] sm:$0xf]
    %v92 = vld [vmem:[%s1 + $0x10c] sm:$0xf]
    %v93 = vld [vmem:[%s1 + $0x110] sm:$0xf]
    %v94 = vld [vmem:[%s1 + $0x114] sm:$0xf]
    %v95 = vld [vmem:[%s1 + $0x118] sm:$0xf]
    %v96 = vld [vmem:[%s1 + $0x11c] sm:$0xf]
    %v97 = vld [vmem:[%s1 + $0x120] sm:$0xf]
    %v98 = vld [vmem:[%s1 + $0x124] sm:$0xf]
    %v99 = vld [vmem:[%s1 + $0x128] sm:$0xf]
    %v100 = vld [vmem:[%s1 + $0x12c] sm:$0xf]
    %v101 = vld [vmem:[%s1 + $0x130] sm:$0xf]
    %v102 = vld [vmem:[%s1 + $0x134] sm:$0xf]
    %v103 = vld [vmem:[%s1 + $0x138] sm:$0xf]
    %v104 = vld [vmem:[%s1 + $0x13c] sm:$0xf]
    %v105 = vld [vmem:[%s1 + $0x140] sm:$0xf]
    %v106 = vld [vmem:[%s1 + $0x144] sm:$0xf]
    %v107 = vld [vmem:[%s1 + $0x148] sm:$0xf]
    %v108 = vld [vmem:[%s1 + $0x14c] sm:$0xf]
    %v109 = vld [vmem:[%s1 + $0x150] sm:$0xf]
    %v110 = vld [vmem:[%s1 + $0x154] sm:$0xf]
    %v111 = vld [vmem:[%s1 + $0x158] sm:$0xf]
    %v112 = vld [vmem:[%s1 + $0x15c] sm:$0xf]
    %v113 = vld [vmem:[%s1 + $0x160] sm:$0xf]
    %v114 = vld [vmem:[%s1 + $0x164] sm:$0xf]
    %v115 = vld [vmem:[%s1 + $0x168] sm:$0xf]
    %v116 = vld [vmem:[%s1 + $0x16c] sm:$0xf]
    %v117 = vld [vmem:[%s1 + $0x170] sm:$0xf]
    %v118 = vld [vmem:[%s1 + $0x174] sm:$0xf]
    %v119 = vld [vmem:[%s1 + $0x178] sm:$0xf]
    %v120 = vld [vmem:[%s1 + $0x17c] sm:$0xf]
    %v121 = vld [vmem:[%s1 + $0x180] sm:$0xf]
    %v122 = vld [vmem:[%s1 + $0x184] sm:$0xf]
    %v123 = vld [vmem:[%s1 + $0x188] sm:$0xf]
    %v124 = vld [vmem:[%s1 + $0x18c] sm:$0xf]
    %v125 = vld [vmem:[%s1 + $0x190] sm:$0xf]
    %v126 = vld [vmem:[%s1 + $0x194] sm:$0xf]
    %v127 = vld [vmem:[%s1 + $0x198] sm:$0xf]
    %v128 = vld [vmem:[%s1 + $0x19c] sm:$0xf]
    %v129 = vld [vmem:[%s1 + $0x1a0] sm:$0xf]
    %v130 = vld [vmem:[%s1 + $0x1a4] sm:$0xf]
    %v131 = vld [vmem:[%s1 + $0x1a8] sm:$0xf]
    %v132 = vld [vmem:[%s1 + $0x1ac] sm:$0xf]
    %v133 = vld [vmem:[%s1 + $0x1b0] sm:$0xf]
    %v134 = vld [vmem:[%s1 + $0x1b4] sm:$0xf]
    %v135 = vld [vmem:[%s1 + $0x1b8] sm:$0xf]
    %v136 = vld [vmem:[%s1 + $0x1bc] sm:$0xf]
    %v137 = vld [vmem:[%s1 + $0x1c0] sm:$0xf]
    %v138 = vld [vmem:[%s1 + $0x1c4] sm:$0xf]
    %v139 = vld [vmem:[%s1 + $0x1c8] sm:$0xf]
    %v140 = vld [vmem:[%s1 + $0x1cc] sm:$0xf]
    %v141 = vld [vmem:[%s1 + $0x1d0] sm:$0xf]
    %v142 = vld [vmem:[%s1 + $0x1d4] sm:$0xf]
    %v143 = vld [vmem:[%s1 + $0x1d8] sm:$0xf]
    %v144 = vld [vmem:[%s1 + $0x1dc] sm:$0xf]
    %v145 = vld [vmem:[%s1 + $0x1e0] sm:$0xf]
    %v146 = vld [vmem:[%s1 + $0x1e4] sm:$0xf]
    %v147 = vld [vmem:[%s1 + $0x1e8] sm:$0xf]
    %v148 = vld [vmem:[%s1 + $0x1ec] sm:$0xf]
    %v149 = vld [vmem:[%s1 + $0x1f0] sm:$0xf]
    %v150 = vld [vmem:[%s1 + $0x1f4] sm:$0xf]
    %v151 = vld [vmem:[%s1 + $0x1f8] sm:$0xf]
    %v152 = vld [vmem:[%s1 + $0x1fc] sm:$0xf]
    %v153 = vld [vmem:[%s1 + $0x200] sm:$0xf]
    %v154 = vld [vmem:[%s1 + $0x204] sm:$0xf]
    %v155 = vld [vmem:[%s1 + $0x208] sm:$0xf]
    %v156 = vld [vmem:[%s1 + $0x20c] sm:$0xf]
    %v157 = vld [vmem:[%s1 + $0x210] sm:$0xf]
    %v158 = vld [vmem:[%s1 + $0x214] sm:$0xf]
    %v159 = vld [vmem:[%s1 + $0x218] sm:$0xf]
    %v160 = vld [vmem:[%s1 + $0x21c] sm:$0xf]
    %v161 = vld [vmem:[%s1 + $0x220] sm:$0xf]
    %v162 = vld [vmem:[%s1 + $0x224] sm:$0xf]
    %v163 = vld [vmem:[%s1 + $0x228] sm:$0xf]
    %v164 = vld [vmem:[%s1 + $0x22c] sm:$0xf]
    %v165 = vld [vmem:[%s1 + $0x230] sm:$0xf]
    %v166 = vld [vmem:[%s1 + $0x234] sm:$0xf]
    %v167 = vld [vmem:[%s1 + $0x238] sm:$0xf]
    %v168 = vld [vmem:[%s1 + $0x23c] sm:$0xf]
    %v169 = vld [vmem:[%s1 + $0x240] sm:$0xf]
    %v170 = vld [vmem:[%s1 + $0x244] sm:$0xf]
    %v171 = vld [vmem:[%s1 + $0x248] sm:$0xf]
    %v172 = vld [vmem:[%s1 + $0x24c] sm:$0xf]
    %v173 = vld [vmem:[%s1 + $0x250] sm:$0xf]
    %v174 = vld [vmem:[%s1 + $0x254] sm:$0xf]
    %v175 = vld [vmem:[%s1 + $0x258] sm:$0xf]
    %v176 = vld [vmem:[%s1 + $0x25c] sm:$0xf]
    %v177 = vld [vmem:[%s1 + $0x260] sm:$0xf]
    %v178 = vld [vmem:[%s1 + $0x264] sm:$0xf]
    %v179 = vld [vmem:[%s1 + $0x268] sm:$0xf]
    %v180 = vld [vmem:[%s1 + $0x26c] sm:$0xf]
    %v181 = vld [vmem:[%s1 + $0x270] sm:$0xf]
    %v182 = vld [vmem:[%s1 + $0x274] sm:$0xf]
    %v183 = vld [vmem:[%s1 + $0x278] sm:$0xf]
    %v184 = vld [vmem:[%s1 + $0x27c] sm:$0xf]
    %v185 = vld [vmem:[%s1 + $0x280] sm:$0xf]
    %v186 = vld [vmem:[%s1 + $0x284] sm:$0xf]
    %v187 = vld [vmem:[%s1 + $0x288] sm:$0xf]
    %v188 = vld [vmem:[%s1 + $0x28c] sm:$0xf]
    %v189 = vld [vmem:[%s1 + $0x290] sm:$0xf]
    %v190 = vld [vmem:[%s1 + $0x294] sm:$0xf]
    %v191 = vld [vmem:[%s1 + $0x298] sm:$0xf]
    %v192 = vld [vmem:[%s1 + $0x29c] sm:$0xf]
    %v193 = vld [vmem:[%s1 + $0x2a0] sm:$0xf]
    %v194 = vld [vmem:[%s1 + $0x2a4] sm:$0xf]
    %v195 = vld [vmem:[%s1 + $0x2a8] sm:$0xf]
    %v196 = vld [vmem:[%s1 + $0x2ac] sm:$0xf]
    %v197 = vld [vmem:[%s1 + $0x2b0] sm:$0xf]
    %v198 = vld [vmem:[%s1 + $0x2b4] sm:$0xf]
    %v199 = vld [vmem:[%s1 + $0x2b8] sm:$0xf]
    %v200 = vld [vmem:[%s1 + $0x2bc] sm:$0xf]
    %v201 = vld [vmem:[%s1 + $0x2c0] sm:$0xf]
    %v202 = vld [vmem:[%s1 + $0x2c4] sm:$0xf]
    %v203 = vld [vmem:[%s1 + $0x2c8] sm:$0xf]
    %v204 = vld [vmem:[%s1 + $0x2cc] sm:$0xf]
    %v205 = vld [vmem:[%s1 + $0x2d0] sm:$0xf]
    %v206 = vld [vmem:[%s1 + $0x2d4] sm:$0xf]
    %v207 = vld [vmem:[%s1 + $0x2d8] sm:$0xf]
    %v208 = vld [vmem:[%s1 + $0x2dc] sm:$0xf]
    %v209 = vld [vmem:[%s1 + $0x2e0] sm:$0xf]
    %v210 = vld [vmem:[%s1 + $0x2e4] sm:$0xf]
    %v211 = vld [vmem:[%s1 + $0x2e8] sm:$0xf]
    %v212 = vld [vmem:[%s1 + $0x2ec] sm:$0xf]
    %v213 = vld [vmem:[%s1 + $0x2f0] sm:$0xf]
    %v214 = vld [vmem:[%s1 + $0x2f4] sm:$0xf]
    %v215 = vld [vmem:[%s1 + $0x2f8] sm:$0xf]
    %v216 = vld [vmem:[%s1 + $0x2fc] sm:$0xf]
    %v217 = vld [vmem:[%s1 + $0x300] sm:$0xf]
    %v218 = vld [vmem:[%s1 + $0x304] sm:$0xf]
    %v219 = vld [vmem:[%s1 + $0x308] sm:$0xf]
    %v220 = vld [vmem:[%s1 + $0x30c] sm:$0xf]
    %v221 = vld [vmem:[%s1 + $0x310] sm:$0xf]
    %v222 = vld [vmem:[%s1 + $0x314] sm:$0xf]
    %v223 = vld [vmem:[%s1 + $0x318] sm:$0xf]
    %v224 = vld [vmem:[%s1 + $0x31c] sm:$0xf]
    %v225 = vld [vmem:[%s1 + $0x320] sm:$0xf]
    %v226 = vld [vmem:[%s1 + $0x324] sm:$0xf]
    %v227 = vld [vmem:[%s1 + $0x328] sm:$0xf]
    %v228 = vld [vmem:[%s1 + $0x32c] sm:$0xf]
    %v229 = vld [vmem:[%s1 + $0x330] sm:$0xf]
    %v230 = vld [vmem:[%s1 + $0x334] sm:$0xf]
    %v231 = vld [vmem:[%s1 + $0x338] sm:$0xf]
    %v232 = vld [vmem:[%s1 + $0x33c] sm:$0xf]
    %v233 = vld [vmem:[%s1 + $0x340] sm:$0xf]
    %v234 = vld [vmem:[%s1 + $0x344] sm:$0xf]
    %v235 = vld [vmem:[%s1 + $0x348] sm:$0xf]
    %v236 = vld [vmem:[%s1 + $0x34c] sm:$0xf]
    %v237 = vld [vmem:[%s1 + $0x350] sm:$0xf]
    %v238 = vld [vmem:[%s1 + $0x354] sm:$0xf]
    %v239 = vld [vmem:[%s1 + $0x358] sm:$0xf]
    %v240 = vld [vmem:[%s1 + $0x35c] sm:$0xf]
    %v241 = vld [vmem:[%s1 + $0x360] sm:$0xf]
    %v242 = vld [vmem:[%s1 + $0x364] sm:$0xf]
    %v243 = vld [vmem:[%s1 + $0x368] sm:$0xf]
    %v244 = vld [vmem:[%s1 + $0x36c] sm:$0xf]
    %v245 = vld [vmem:[%s1 + $0x370] sm:$0xf]
    %v246 = vld [vmem:[%s1 + $0x374] sm:$0xf]
    %v247 = vld [vmem:[%s1 + $0x378] sm:$0xf]
    %v248 = vld [vmem:[%s1 + $0x37c] sm:$0xf]
    %v249 = vld [vmem:[%s1 + $0x380] sm:$0xf]
    %v250 = vld [vmem:[%s1 + $0x384] sm:$0xf]
    %v251 = vld [vmem:[%s1 + $0x388] sm:$0xf]
    %v252 = vld [vmem:[%s1 + $0x38c] sm:$0xf]
    %v253 = vld [vmem:[%s1 + $0x390] sm:$0xf]
    %v254 = vld [vmem:[%s1 + $0x394] sm:$0xf]
    %v255 = vld [vmem:[%s1 + $0x398] sm:$0xf]
    %v256 = vld [vmem:[%s1 + $0x39c] sm:$0xf]
    %v257 = vld [vmem:[%s1 + $0x3a0] sm:$0xf]
    %v258 = vld [vmem:[%s1 + $0x3a4] sm:$0xf]
    %v259 = vld [vmem:[%s1 + $0x3a8] sm:$0xf]
    %v260 = vld [vmem:[%s1 + $0x3ac] sm:$0xf]
    %v261 = vld [vmem:[%s1 + $0x3b0] sm:$0xf]
    %v262 = vld [vmem:[%s1 + $0x3b4] sm:$0xf]
    %v263 = vld [vmem:[%s1 + $0x3b8] sm:$0xf]
    %v264 = vld [vmem:[%s1 + $0x3bc] sm:$0xf]
    %v265 = vld [vmem:[%s1 + $0x3c0] sm:$0xf]
    %v266 = vld [vmem:[%s1 + $0x3c4] sm:$0xf]
    %v267 = vld [vmem:[%s1 + $0x3c8] sm:$0xf]
    %v268 = vld [vmem:[%s1 + $0x3cc] sm:$0xf]
    %v269 = vld [vmem:[%s1 + $0x3d0] sm:$0xf]
    %v270 = vld [vmem:[%s1 + $0x3d4] sm:$0xf]
    %v271 = vld [vmem:[%s1 + $0x3d8] sm:$0xf]
    %v272 = vld [vmem:[%s1 + $0x3dc] sm:$0xf]
    %v273 = vld [vmem:[%s1 + $0x3e0] sm:$0xf]
    %v274 = vld [vmem:[%s1 + $0x3e4] sm:$0xf]
    %v275 = vld [vmem:[%s1 + $0x3e8] sm:$0xf]
    %v276 = vld [vmem:[%s1 + $0x3ec] sm:$0xf]
    %v277 = vld [vmem:[%s1 + $0x3f0] sm:$0xf]
    %v278 = vld [vmem:[%s1 + $0x3f4] sm:$0xf]
    %v279 = vld [vmem:[%s1 + $0x3f8] sm:$0xf]
    %v280 = vld [vmem:[%s1 + $0x3fc] sm:$0xf]
    %v281 = vld [vmem:[%s1 + $0x400] sm:$0xf]
    %v282 = vld [vmem:[%s1 + $0x404] sm:$0xf]
    %v283 = vld [vmem:[%s1 + $0x408] sm:$0xf]
    %v284 = vld [vmem:[%s1 + $0x40c] sm:$0xf]
    %v285 = vld [vmem:[%s1 + $0x410] sm:$0xf]
    %v286 = vld [vmem:[%s1 + $0x414] sm:$0xf]
    %v287 = vld [vmem:[%s1 + $0x418] sm:$0xf]
    %v288 = vld [vmem:[%s1 + $0x41c] sm:$0xf]
    %v289 = vld [vmem:[%s1 + $0x420] sm:$0xf]
    %v290 = vld [vmem:[%s1 + $0x424] sm:$0xf]
    %v291 = vld [vmem:[%s1 + $0x428] sm:$0xf]
    %v292 = vld [vmem:[%s1 + $0x42c] sm:$0xf]
    %v293 = vld [vmem:[%s1 + $0x430] sm:$0xf]
    %v294 = vld [vmem:[%s1 + $0x434] sm:$0xf]
    %v295 = vld [vmem:[%s1 + $0x438] sm:$0xf]
    %v296 = vld [vmem:[%s1 + $0x43c] sm:$0xf]
    %v297 = vld [vmem:[%s1 + $0x440] sm:$0xf]
    %v298 = vld [vmem:[%s1 + $0x444] sm:$0xf]
    %v299 = vld [vmem:[%s1 + $0x448] sm:$0xf]
    %v300 = vld [vmem:[%s1 + $0x44c] sm:$0xf]
    %v301 = vld [vmem:[%s1 + $0x450] sm:$0xf]
    %v302 = vld [vmem:[%s1 + $0x454] sm:$0xf]
    %v303 = vld [vmem:[%s1 + $0x458] sm:$0xf]
    %v304 = vld [vmem:[%s1 + $0x45c] sm:$0xf]
    %v305 = vld [vmem:[%s1 + $0x460] sm:$0xf]
    %v306 = vld [vmem:[%s1 + $0x464] sm:$0xf]
    %v307 = vld [vmem:[%s1 + $0x468] sm:$0xf]
    %v308 = vld [vmem:[%s1 + $0x46c] sm:$0xf]
    %v309 = vld [vmem:[%s1 + $0x470] sm:$0xf]
    %v310 = vld [vmem:[%s1 + $0x474] sm:$0xf]
    %v311 = vld [vmem:[%s1 + $0x478] sm:$0xf]
    %v312 = vld [vmem:[%s1 + $0x47c] sm:$0xf]
    %v313 = vld [vmem:[%s1 + $0x480] sm:$0xf]
    %v314 = vld [vmem:[%s1 + $0x484] sm:$0xf]
    %v315 = vld [vmem:[%s1 + $0x488] sm:$0xf]
    %v316 = vld [vmem:[%s1 + $0x48c] sm:$0xf]
    %v317 = vld [vmem:[%s1 + $0x490] sm:$0xf]
    %v318 = vld [vmem:[%s1 + $0x494] sm:$0xf]
    %v319 = vld [vmem:[%s1 + $0x498] sm:$0xf]
    %v320 = vld [vmem:[%s1 + $0x49c] sm:$0xf]
    %v321 = vld [vmem:[%s1 + $0x4a0] sm:$0xf]
    %v322 = vld [vmem:[%s1 + $0x4a4] sm:$0xf]
    %v323 = vld [vmem:[%s1 + $0x4a8] sm:$0xf]
    %v324 = vld [vmem:[%s1 + $0x4ac] sm:$0xf]
    %v325 = vld [vmem:[%s1 + $0x4b0] sm:$0xf]
    %v326 = vld [vmem:[%s1 + $0x4b4] sm:$0xf]
    %v327 = vld [vmem:[%s1 + $0x4b8] sm:$0xf]
    %v328 = vld [vmem:[%s1 + $0x4bc] sm:$0xf]
    %v329 = vld [vmem:[%s1 + $0x4c0] sm:$0xf]
    %v330 = vld [vmem:[%s1 + $0x4c4] sm:$0xf]
    %v331 = vld [vmem:[%s1 + $0x4c8] sm:$0xf]
    %v332 = vld [vmem:[%s1 + $0x4cc] sm:$0xf]
    %v333 = vld [vmem:[%s1 + $0x4d0] sm:$0xf]
    %v334 = vld [vmem:[%s1 + $0x4d4] sm:$0xf]
    %v335 = vld [vmem:[%s1 + $0x4d8] sm:$0xf]
    %v336 = vld [vmem:[%s1 + $0x4dc] sm:$0xf]
    %v337 = vld [vmem:[%s1 + $0x4e0] sm:$0xf]
    %v338 = vld [vmem:[%s1 + $0x4e4] sm:$0xf]
    %v339 = vld [vmem:[%s1 + $0x4e8] sm:$0xf]
    %v340 = vld [vmem:[%s1 + $0x4ec] sm:$0xf]
    %v341 = vld [vmem:[%s1 + $0x4f0] sm:$0xf]
    %v342 = vld [vmem:[%s1 + $0x4f4] sm:$0xf]
    %v343 = vld [vmem:[%s1 + $0x4f8] sm:$0xf]
    %v344 = vld [vmem:[%s1 + $0x4fc] sm:$0xf]
    %v345 = vld [vmem:[%s1 + $0x500] sm:$0xf]
    %v346 = vld [vmem:[%s1 + $0x504] sm:$0xf]
    %v347 = vld [vmem:[%s1 + $0x508] sm:$0xf]
    %v348 = vld [vmem:[%s1 + $0x50c] sm:$0xf]
    %v349 = vld [vmem:[%s1 + $0x510] sm:$0xf]
    %v350 = vld [vmem:[%s1 + $0x514] sm:$0xf]
    %v351 = vld [vmem:[%s1 + $0x518] sm:$0xf]
    %v352 = vld [vmem:[%s1 + $0x51c] sm:$0xf]
    %v353 = vld [vmem:[%s1 + $0x520] sm:$0xf]
    %v354 = vld [vmem:[%s1 + $0x524] sm:$0xf]
    %v355 = vld [vmem:[%s1 + $0x528] sm:$0xf]
    %v356 = vld [vmem:[%s1 + $0x52c] sm:$0xf]
    %v357 = vld [vmem:[%s1 + $0x530] sm:$0xf]
    %v358 = vld [vmem:[%s1 + $0x534] sm:$0xf]
    %v359 = vld [vmem:[%s1 + $0x538] sm:$0xf]
    %v360 = vld [vmem:[%s1 + $0x53c] sm:$0xf]
    %v361 = vld [vmem:[%s1 + $0x540] sm:$0xf]
    %v362 = vld [vmem:[%s1 + $0x544] sm:$0xf]
    %v363 = vld [vmem:[%s1 + $0x548] sm:$0xf]
    %v364 = vld [vmem:[%s1 + $0x54c] sm:$0xf]
    %v365 = vld [vmem:[%s1 + $0x550] sm:$0xf]
    %v366 = vld [vmem:[%s1 + $0x554] sm:$0xf]
    %v367 = vld [vmem:[%s1 + $0x558] sm:$0xf]
    %v368 = vld [vmem:[%s1 + $0x55c] sm:$0xf]
    %v369 = vld [vmem:[%s1 + $0x560] sm:$0xf]
    %v370 = vld [vmem:[%s1 + $0x564] sm:$0xf]
    %v371 = vld [vmem:[%s1 + $0x568] sm:$0xf]
    %v372 = vld [vmem:[%s1 + $0x56c] sm:$0xf]
    %v373 = vld [vmem:[%s1 + $0x570] sm:$0xf]
    %v374 = vld [vmem:[%s1 + $0x574] sm:$0xf]
    %v375 = vld [vmem:[%s1 + $0x578] sm:$0xf]
    %v376 = vld [vmem:[%s1 + $0x57c] sm:$0xf]
    %v377 = vld [vmem:[%s1 + $0x580] sm:$0xf]
    %v378 = vld [vmem:[%s1 + $0x584] sm:$0xf]
    %v379 = vld [vmem:[%s1 + $0x588] sm:$0xf]
    %v380 = vld [vmem:[%s1 + $0x58c] sm:$0xf]
    %v381 = vld [vmem:[%s1 + $0x590] sm:$0xf]
    %v382 = vld [vmem:[%s1 + $0x594] sm:$0xf]
    %v383 = vld [vmem:[%s1 + $0x598] sm:$0xf]
    %v384 = vld [vmem:[%s1 + $0x59c] sm:$0xf]
    %v385 = vld [vmem:[%s1 + $0x5a0] sm:$0xf]
    %v386 = vld [vmem:[%s1 + $0x5a4] sm:$0xf]
    %v387 = vld [vmem:[%s1 + $0x5a8] sm:$0xf]
    %v388 = vld [vmem:[%s1 + $0x5ac] sm:$0xf]
    %v389 = vld [vmem:[%s1 + $0x5b0] sm:$0xf]
    %v390 = vld [vmem:[%s1 + $0x5b4] sm:$0xf]
    %v391 = vld [vmem:[%s1 + $0x5b8] sm:$0xf]
    %v392 = vld [vmem:[%s1 + $0x5bc] sm:$0xf]
    %v393 = vld [vmem:[%s1 + $0x5c0] sm:$0xf]
    %v394 = vld [vmem:[%s1 + $0x5c4] sm:$0xf]
    %v395 = vld [vmem:[%s1 + $0x5c8] sm:$0xf]
    %v396 = vld [vmem:[%s1 + $0x5cc] sm:$0xf]
    %v397 = vld [vmem:[%s1 + $0x5d0] sm:$0xf]
    %v398 = vld [vmem:[%s1 + $0x5d4] sm:$0xf]
    %v399 = vld [vmem:[%s1 + $0x5d8] sm:$0xf]
    %v400 = vld [vmem:[%s1 + $0x5dc] sm:$0xf]
    %v401 = vld [vmem:[%s1 + $0x5e0] sm:$0xf]
    %v402 = vld [vmem:[%s1 + $0x5e4] sm:$0xf]
    %v403 = vld [vmem:[%s1 + $0x5e8] sm:$0xf]
    %v404 = vld [vmem:[%s1 + $0x5ec] sm:$0xf]
    %v405 = vld [vmem:[%s1 + $0x5f0] sm:$0xf]
    %v406 = vld [vmem:[%s1 + $0x5f4] sm:$0xf]
    %v407 = vld [vmem:[%s1 + $0x5f8] sm:$0xf]
    %v408 = vld [vmem:[%s1 + $0x5fc] sm:$0xf]
    %v409 = vld [vmem:[%s1 + $0x600] sm:$0xf]
    %v410 = vld [vmem:[%s1 + $0x604] sm:$0xf]
    %v411 = vld [vmem:[%s1 + $0x608] sm:$0xf]
    %v412 = vld [vmem:[%s1 + $0x60c] sm:$0xf]
    %v413 = vld [vmem:[%s1 + $0x610] sm:$0xf]
    %v414 = vld [vmem:[%s1 + $0x614] sm:$0xf]
    %v415 = vld [vmem:[%s1 + $0x618] sm:$0xf]
    %v416 = vld [vmem:[%s1 + $0x61c] sm:$0xf]
    %v417 = vld [vmem:[%s1 + $0x620] sm:$0xf]
    %v418 = vld [vmem:[%s1 + $0x624] sm:$0xf]
    %v419 = vld [vmem:[%s1 + $0x628] sm:$0xf]
    %v420 = vld [vmem:[%s1 + $0x62c] sm:$0xf]
    %v421 = vld [vmem:[%s1 + $0x630] sm:$0xf]
    %v422 = vld [vmem:[%s1 + $0x634] sm:$0xf]
    %v423 = vld [vmem:[%s1 + $0x638] sm:$0xf]
    %v424 = vld [vmem:[%s1 + $0x63c] sm:$0xf]
    %v425 = vld [vmem:[%s2] sm:$0x1]
    %v427 = vperm.slane %v425, 0
    %430 = vst [vmem:[#allocation1] ss:$9 sm:$0xff] %v21
    %v431 = vld [vmem:[#allocation1] sm:$0xff]
    %v432 = vld [vmem:[#allocation1 + $0x9] sm:$0xff]
    %v433 = vld [vmem:[#allocation1 + $0x12] sm:$0xff]
    %v434 = vld [vmem:[#allocation1 + $0x1b] sm:$0xff]
    %v435 = vld [vmem:[#allocation1 + $0x24] sm:$0xff]
    %v436 = vld [vmem:[#allocation1 + $0x2d] sm:$0xff]
    %v437 = vld [vmem:[#allocation1 + $0x36] sm:$0xff]
    %v438 = vld [vmem:[#allocation1 + $0x3f] sm:$0xff]
    %440 = vst [vmem:[#allocation1] ss:$9 sm:$0xff] %v22
    %v441 = vld [vmem:[#allocation1] sm:$0xff]
    %v442 = vld [vmem:[#allocation1 + $0x9] sm:$0xff]
    %v443 = vld [vmem:[#allocation1 + $0x12] sm:$0xff]
    %v444 = vld [vmem:[#allocation1 + $0x1b] sm:$0xff]
    %v445 = vld [vmem:[#allocation1 + $0x24] sm:$0xff]
    %v446 = vld [vmem:[#allocation1 + $0x2d] sm:$0xff]
    %v447 = vld [vmem:[#allocation1 + $0x36] sm:$0xff]
    %v448 = vld [vmem:[#allocation1 + $0x3f] sm:$0xff]
    %450 = vst [vmem:[#allocation1] ss:$9 sm:$0xff] %v23
    %v451 = vld [vmem:[#allocation1] sm:$0xff]
    %v452 = vld [vmem:[#allocation1 + $0x9] sm:$0xff]
    %v453 = vld [vmem:[#allocation1 + $0x12] sm:$0xff]
    %v454 = vld [vmem:[#allocation1 + $0x1b] sm:$0xff]
    %v455 = vld [vmem:[#allocation1 + $0x24] sm:$0xff]
    %v456 = vld [vmem:[#allocation1 + $0x2d] sm:$0xff]
    %v457 = vld [vmem:[#allocation1 + $0x36] sm:$0xff]
    %v458 = vld [vmem:[#allocation1 + $0x3f] sm:$0xff]
    %460 = vst [vmem:[#allocation1] ss:$9 sm:$0xff] %v24
    %v461 = vld [vmem:[#allocation1] sm:$0xff]
    %v887 = vunpack.c.l.b16 %v25
    %v888 = vunpack.c.l.b16 %v26
    %v889 = vunpack.c.l.b16 %v27
    %v890 = vunpack.c.l.b16 %v28
    %v891 = vunpack.c.l.b16 %v29
    %v892 = vunpack.c.l.b16 %v30
    %v893 = vunpack.c.l.b16 %v31
    %v894 = vunpack.c.l.b16 %v32
    %v895 = vunpack.c.l.b16 %v33
    %v896 = vunpack.c.l.b16 %v34
    %v897 = vunpack.c.l.b16 %v35
    %v898 = vunpack.c.l.b16 %v36
    %v899 = vunpack.c.l.b16 %v37
    %v900 = vunpack.c.l.b16 %v38
    %v901 = vunpack.c.l.b16 %v39
    %v902 = vunpack.c.l.b16 %v40
    %v903 = vunpack.c.l.b16 %v41
    %v904 = vunpack.c.l.b16 %v42
    %v905 = vunpack.c.l.b16 %v43
    %v906 = vunpack.c.l.b16 %v44
    %v907 = vunpack.c.l.b16 %v45
    %v908 = vunpack.c.l.b16 %v46
    %v909 = vunpack.c.l.b16 %v47
    %v910 = vunpack.c.l.b16 %v48
    %v911 = vunpack.c.l.b16 %v49
    %v912 = vunpack.c.l.b16 %v50
    %v913 = vunpack.c.l.b16 %v51
    %v914 = vunpack.c.l.b16 %v52
    %v915 = vunpack.c.l.b16 %v53
    %v916 = vunpack.c.l.b16 %v54
    %v917 = vunpack.c.l.b16 %v55
    %v918 = vunpack.c.l.b16 %v56
    %v919 = vunpack.c.l.b16 %v57
    %v920 = vunpack.c.l.b16 %v58
    %v921 = vunpack.c.l.b16 %v59
    %v922 = vunpack.c.l.b16 %v60
    %v923 = vunpack.c.l.b16 %v61
    %v924 = vunpack.c.l.b16 %v62
    %v925 = vunpack.c.l.b16 %v63
    %v926 = vunpack.c.l.b16 %v64
    %v927 = vunpack.c.l.b16 %v65
    %v928 = vunpack.c.l.b16 %v66
    %v929 = vunpack.c.l.b16 %v67
    %v930 = vunpack.c.l.b16 %v68
    %v931 = vunpack.c.l.b16 %v69
    %v932 = vunpack.c.l.b16 %v70
    %v933 = vunpack.c.l.b16 %v71
    %v934 = vunpack.c.l.b16 %v72
    %v935 = vunpack.c.l.b16 %v73
    %v936 = vunpack.c.l.b16 %v74
    %v937 = vunpack.c.l.b16 %v75
    %v938 = vunpack.c.l.b16 %v76
    %v939 = vunpack.c.l.b16 %v77
    %v940 = vunpack.c.l.b16 %v78
    %v941 = vunpack.c.l.b16 %v79
    %v942 = vunpack.c.l.b16 %v80
    %v943 = vunpack.c.l.b16 %v81
    %v944 = vunpack.c.l.b16 %v82
    %v945 = vunpack.c.l.b16 %v83
    %v946 = vunpack.c.l.b16 %v84
    %v947 = vunpack.c.l.b16 %v85
    %v948 = vunpack.c.l.b16 %v86
    %v949 = vunpack.c.l.b16 %v87
    %v950 = vunpack.c.l.b16 %v88
    %v951 = vunpack.c.l.b16 %v89
    %v952 = vunpack.c.l.b16 %v90
    %v953 = vunpack.c.l.b16 %v91
    %v954 = vunpack.c.l.b16 %v92
    %v955 = vunpack.c.l.b16 %v93
    %v956 = vunpack.c.l.b16 %v94
    %v957 = vunpack.c.l.b16 %v95
    %v958 = vunpack.c.l.b16 %v96
    %v959 = vunpack.c.l.b16 %v97
    %v960 = vunpack.c.l.b16 %v98
    %v961 = vunpack.c.l.b16 %v99
    %v962 = vunpack.c.l.b16 %v100
    %v963 = vunpack.c.l.b16 %v101
    %v964 = vunpack.c.l.b16 %v102
    %v965 = vunpack.c.l.b16 %v103
    %v966 = vunpack.c.l.b16 %v104
    %v967 = vunpack.c.l.b16 %v105
    %v968 = vunpack.c.l.b16 %v106
    %v969 = vunpack.c.l.b16 %v107
    %v970 = vunpack.c.l.b16 %v108
    %v971 = vunpack.c.l.b16 %v109
    %v972 = vunpack.c.l.b16 %v110
    %v973 = vunpack.c.l.b16 %v111
    %v974 = vunpack.c.l.b16 %v112
    %v975 = vunpack.c.l.b16 %v113
    %v976 = vunpack.c.l.b16 %v114
    %v977 = vunpack.c.l.b16 %v115
    %v978 = vunpack.c.l.b16 %v116
    %v979 = vunpack.c.l.b16 %v117
    %v980 = vunpack.c.l.b16 %v118
    %v981 = vunpack.c.l.b16 %v119
    %v982 = vunpack.c.l.b16 %v120
    %v983 = vunpack.c.l.b16 %v121
    %v984 = vunpack.c.l.b16 %v122
    %v985 = vunpack.c.l.b16 %v123
    %v986 = vunpack.c.l.b16 %v124
    %v987 = vunpack.c.l.b16 %v125
    %v988 = vunpack.c.l.b16 %v126
    %v989 = vunpack.c.l.b16 %v127
    %v990 = vunpack.c.l.b16 %v128
    %v991 = vunpack.c.l.b16 %v129
    %v992 = vunpack.c.l.b16 %v130
    %v993 = vunpack.c.l.b16 %v131
    %v994 = vunpack.c.l.b16 %v132
    %v995 = vunpack.c.l.b16 %v133
    %v996 = vunpack.c.l.b16 %v134
    %v997 = vunpack.c.l.b16 %v135
    %v998 = vunpack.c.l.b16 %v136
    %v999 = vunpack.c.l.b16 %v137
    %v1000 = vunpack.c.l.b16 %v138
    %v1001 = vunpack.c.l.b16 %v139
    %v1002 = vunpack.c.l.b16 %v140
    %v1003 = vunpack.c.l.b16 %v141
    %v1004 = vunpack.c.l.b16 %v142
    %v1005 = vunpack.c.l.b16 %v143
    %v1006 = vunpack.c.l.b16 %v144
    %v1007 = vunpack.c.l.b16 %v145
    %v1008 = vunpack.c.l.b16 %v146
    %v1009 = vunpack.c.l.b16 %v147
    %v1010 = vunpack.c.l.b16 %v148
    %v1011 = vunpack.c.l.b16 %v149
    %v1012 = vunpack.c.l.b16 %v150
    %v1013 = vunpack.c.l.b16 %v151
    %v1014 = vunpack.c.l.b16 %v152
    %v1015 = vunpack.c.l.b16 %v153
    %v1016 = vunpack.c.l.b16 %v154
    %v1017 = vunpack.c.l.b16 %v155
    %v1018 = vunpack.c.l.b16 %v156
    %v1019 = vunpack.c.l.b16 %v157
    %v1020 = vunpack.c.l.b16 %v158
    %v1021 = vunpack.c.l.b16 %v159
    %v1022 = vunpack.c.l.b16 %v160
    %v1023 = vunpack.c.l.b16 %v161
    %v1024 = vunpack.c.l.b16 %v162
    %v1025 = vunpack.c.l.b16 %v163
    %v1026 = vunpack.c.l.b16 %v164
    %v1027 = vunpack.c.l.b16 %v165
    %v1028 = vunpack.c.l.b16 %v166
    %v1029 = vunpack.c.l.b16 %v167
    %v1030 = vunpack.c.l.b16 %v168
    %v1031 = vunpack.c.l.b16 %v169
    %v1032 = vunpack.c.l.b16 %v170
    %v1033 = vunpack.c.l.b16 %v171
    %v1034 = vunpack.c.l.b16 %v172
    %v1035 = vunpack.c.l.b16 %v173
    %v1036 = vunpack.c.l.b16 %v174
    %v1037 = vunpack.c.l.b16 %v175
    %v1038 = vunpack.c.l.b16 %v176
    %v1039 = vunpack.c.l.b16 %v177
    %v1040 = vunpack.c.l.b16 %v178
    %v1041 = vunpack.c.l.b16 %v179
    %v1042 = vunpack.c.l.b16 %v180
    %v1043 = vunpack.c.l.b16 %v181
    %v1044 = vunpack.c.l.b16 %v182
    %v1045 = vunpack.c.l.b16 %v183
    %v1046 = vunpack.c.l.b16 %v184
    %v1047 = vunpack.c.l.b16 %v185
    %v1048 = vunpack.c.l.b16 %v186
    %v1049 = vunpack.c.l.b16 %v187
    %v1050 = vunpack.c.l.b16 %v188
    %v1051 = vunpack.c.l.b16 %v189
    %v1052 = vunpack.c.l.b16 %v190
    %v1053 = vunpack.c.l.b16 %v191
    %v1054 = vunpack.c.l.b16 %v192
    %v1055 = vunpack.c.l.b16 %v193
    %v1056 = vunpack.c.l.b16 %v194
    %v1057 = vunpack.c.l.b16 %v195
    %v1058 = vunpack.c.l.b16 %v196
    %v1059 = vunpack.c.l.b16 %v197
    %v1060 = vunpack.c.l.b16 %v198
    %v1061 = vunpack.c.l.b16 %v199
    %v1062 = vunpack.c.l.b16 %v200
    %v1063 = vunpack.c.l.b16 %v201
    %v1064 = vunpack.c.l.b16 %v202
    %v1065 = vunpack.c.l.b16 %v203
    %v1066 = vunpack.c.l.b16 %v204
    %v1067 = vunpack.c.l.b16 %v205
    %v1068 = vunpack.c.l.b16 %v206
    %v1069 = vunpack.c.l.b16 %v207
    %v1070 = vunpack.c.l.b16 %v208
    %v1071 = vunpack.c.l.b16 %v209
    %v1072 = vunpack.c.l.b16 %v210
    %v1073 = vunpack.c.l.b16 %v211
    %v1074 = vunpack.c.l.b16 %v212
    %v1075 = vunpack.c.l.b16 %v213
    %v1076 = vunpack.c.l.b16 %v214
    %v1077 = vunpack.c.l.b16 %v215
    %v1078 = vunpack.c.l.b16 %v216
    %v1079 = vunpack.c.l.b16 %v217
    %v1080 = vunpack.c.l.b16 %v218
    %v1081 = vunpack.c.l.b16 %v219
    %v1082 = vunpack.c.l.b16 %v220
    %v1083 = vunpack.c.l.b16 %v221
    %v1084 = vunpack.c.l.b16 %v222
    %v1085 = vunpack.c.l.b16 %v223
    %v1086 = vunpack.c.l.b16 %v224
    %v1087 = vunpack.c.l.b16 %v225
    %v1088 = vunpack.c.l.b16 %v226
    %v1089 = vunpack.c.l.b16 %v227
    %v1090 = vunpack.c.l.b16 %v228
    %v1091 = vunpack.c.l.b16 %v229
    %v1092 = vunpack.c.l.b16 %v230
    %v1093 = vunpack.c.l.b16 %v231
    %v1094 = vunpack.c.l.b16 %v232
    %v1095 = vunpack.c.l.b16 %v233
    %v1096 = vunpack.c.l.b16 %v234
    %v1097 = vunpack.c.l.b16 %v235
    %v1098 = vunpack.c.l.b16 %v236
    %v1099 = vunpack.c.l.b16 %v237
    %v1100 = vunpack.c.l.b16 %v238
    %v1101 = vunpack.c.l.b16 %v239
    %v1102 = vunpack.c.l.b16 %v240
    %v1103 = vunpack.c.l.b16 %v241
    %v1104 = vunpack.c.l.b16 %v242
    %v1105 = vunpack.c.l.b16 %v243
    %v1106 = vunpack.c.l.b16 %v244
    %v1107 = vunpack.c.l.b16 %v245
    %v1108 = vunpack.c.l.b16 %v246
    %v1109 = vunpack.c.l.b16 %v247
    %v1110 = vunpack.c.l.b16 %v248
    %v1111 = vunpack.c.l.b16 %v249
    %v1112 = vunpack.c.l.b16 %v250
    %v1113 = vunpack.c.l.b16 %v251
    %v1114 = vunpack.c.l.b16 %v252
    %v1115 = vunpack.c.l.b16 %v253
    %v1116 = vunpack.c.l.b16 %v254
    %v1117 = vunpack.c.l.b16 %v255
    %v1118 = vunpack.c.l.b16 %v256
    %v1119 = vunpack.c.l.b16 %v257
    %v1120 = vunpack.c.l.b16 %v258
    %v1121 = vunpack.c.l.b16 %v259
    %v1122 = vunpack.c.l.b16 %v260
    %v1123 = vunpack.c.l.b16 %v261
    %v1124 = vunpack.c.l.b16 %v262
    %v1125 = vunpack.c.l.b16 %v263
    %v1126 = vunpack.c.l.b16 %v264
    %v1127 = vunpack.c.l.b16 %v265
    %v1128 = vunpack.c.l.b16 %v266
    %v1129 = vunpack.c.l.b16 %v267
    %v1130 = vunpack.c.l.b16 %v268
    %v1131 = vunpack.c.l.b16 %v269
    %v1132 = vunpack.c.l.b16 %v270
    %v1133 = vunpack.c.l.b16 %v271
    %v1134 = vunpack.c.l.b16 %v272
    %v1135 = vunpack.c.l.b16 %v273
    %v1136 = vunpack.c.l.b16 %v274
    %v1137 = vunpack.c.l.b16 %v275
    %v1138 = vunpack.c.l.b16 %v276
    %v1139 = vunpack.c.l.b16 %v277
    %v1140 = vunpack.c.l.b16 %v278
    %v1141 = vunpack.c.l.b16 %v279
    %v1142 = vunpack.c.l.b16 %v280
    %v1143 = vunpack.c.l.b16 %v281
    %v1144 = vunpack.c.l.b16 %v282
    %v1145 = vunpack.c.l.b16 %v283
    %v1146 = vunpack.c.l.b16 %v284
    %v1147 = vunpack.c.l.b16 %v285
    %v1148 = vunpack.c.l.b16 %v286
    %v1149 = vunpack.c.l.b16 %v287
    %v1150 = vunpack.c.l.b16 %v288
    %v1151 = vunpack.c.l.b16 %v289
    %v1152 = vunpack.c.l.b16 %v290
    %v1153 = vunpack.c.l.b16 %v291
    %v1154 = vunpack.c.l.b16 %v292
    %v1155 = vunpack.c.l.b16 %v293
    %v1156 = vunpack.c.l.b16 %v294
    %v1157 = vunpack.c.l.b16 %v295
    %v1158 = vunpack.c.l.b16 %v296
    %v1159 = vunpack.c.l.b16 %v297
    %v1160 = vunpack.c.l.b16 %v298
    %v1161 = vunpack.c.l.b16 %v299
    %v1162 = vunpack.c.l.b16 %v300
    %v1163 = vunpack.c.l.b16 %v301
    %v1164 = vunpack.c.l.b16 %v302
    %v1165 = vunpack.c.l.b16 %v303
    %v1166 = vunpack.c.l.b16 %v304
    %v1167 = vunpack.c.l.b16 %v305
    %v1168 = vunpack.c.l.b16 %v306
    %v1169 = vunpack.c.l.b16 %v307
    %v1170 = vunpack.c.l.b16 %v308
    %v1171 = vunpack.c.l.b16 %v309
    %v1172 = vunpack.c.l.b16 %v310
    %v1173 = vunpack.c.l.b16 %v311
    %v1174 = vunpack.c.l.b16 %v312
    %v1175 = vunpack.c.l.b16 %v313
    %v1176 = vunpack.c.l.b16 %v314
    %v1177 = vunpack.c.l.b16 %v315
    %v1178 = vunpack.c.l.b16 %v316
    %v1179 = vunpack.c.l.b16 %v317
    %v1180 = vunpack.c.l.b16 %v318
    %v1181 = vunpack.c.l.b16 %v319
    %v1182 = vunpack.c.l.b16 %v320
    %v1183 = vunpack.c.l.b16 %v321
    %v1184 = vunpack.c.l.b16 %v322
    %v1185 = vunpack.c.l.b16 %v323
    %v1186 = vunpack.c.l.b16 %v324
    %v1187 = vunpack.c.l.b16 %v325
    %v1188 = vunpack.c.l.b16 %v326
    %v1189 = vunpack.c.l.b16 %v327
    %v1190 = vunpack.c.l.b16 %v328
    %v1191 = vunpack.c.l.b16 %v329
    %v1192 = vunpack.c.l.b16 %v330
    %v1193 = vunpack.c.l.b16 %v331
    %v1194 = vunpack.c.l.b16 %v332
    %v1195 = vunpack.c.l.b16 %v333
    %v1196 = vunpack.c.l.b16 %v334
    %v1197 = vunpack.c.l.b16 %v335
    %v1198 = vunpack.c.l.b16 %v336
    %v1199 = vunpack.c.l.b16 %v337
    %v1200 = vunpack.c.l.b16 %v338
    %v1201 = vunpack.c.l.b16 %v339
    %v1202 = vunpack.c.l.b16 %v340
    %v1203 = vunpack.c.l.b16 %v341
    %v1204 = vunpack.c.l.b16 %v342
    %v1205 = vunpack.c.l.b16 %v343
    %v1206 = vunpack.c.l.b16 %v344
    %v1207 = vunpack.c.l.b16 %v345
    %v1208 = vunpack.c.l.b16 %v346
    %v1209 = vunpack.c.l.b16 %v347
    %v1210 = vunpack.c.l.b16 %v348
    %v1211 = vunpack.c.l.b16 %v349
    %v1212 = vunpack.c.l.b16 %v350
    %v1213 = vunpack.c.l.b16 %v351
    %v1214 = vunpack.c.l.b16 %v352
    %v1215 = vunpack.c.l.b16 %v353
    %v1216 = vunpack.c.l.b16 %v354
    %v1217 = vunpack.c.l.b16 %v355
    %v1218 = vunpack.c.l.b16 %v356
    %v1219 = vunpack.c.l.b16 %v357
    %v1220 = vunpack.c.l.b16 %v358
    %v1221 = vunpack.c.l.b16 %v359
    %v1222 = vunpack.c.l.b16 %v360
    %v1223 = vunpack.c.l.b16 %v361
    %v1224 = vunpack.c.l.b16 %v362
    %v1225 = vunpack.c.l.b16 %v363
    %v1226 = vunpack.c.l.b16 %v364
    %v1227 = vunpack.c.l.b16 %v365
    %v1228 = vunpack.c.l.b16 %v366
    %v1229 = vunpack.c.l.b16 %v367
    %v1230 = vunpack.c.l.b16 %v368
    %v1231 = vunpack.c.l.b16 %v369
    %v1232 = vunpack.c.l.b16 %v370
    %v1233 = vunpack.c.l.b16 %v371
    %v1234 = vunpack.c.l.b16 %v372
    %v1235 = vunpack.c.l.b16 %v373
    %v1236 = vunpack.c.l.b16 %v374
    %v1237 = vunpack.c.l.b16 %v375
    %v1238 = vunpack.c.l.b16 %v376
    %v1239 = vunpack.c.l.b16 %v377
    %v1240 = vunpack.c.l.b16 %v378
    %v1241 = vunpack.c.l.b16 %v379
    %v1242 = vunpack.c.l.b16 %v380
    %v1243 = vunpack.c.l.b16 %v381
    %v1244 = vunpack.c.l.b16 %v382
    %v1245 = vunpack.c.l.b16 %v383
    %v1246 = vunpack.c.l.b16 %v384
    %v1247 = vunpack.c.l.b16 %v385
    %v1248 = vunpack.c.l.b16 %v386
    %v1249 = vunpack.c.l.b16 %v387
    %v1250 = vunpack.c.l.b16 %v388
    %v1251 = vunpack.c.l.b16 %v389
    %v1252 = vunpack.c.l.b16 %v390
    %v1253 = vunpack.c.l.b16 %v391
    %v1254 = vunpack.c.l.b16 %v392
    %v1255 = vunpack.c.l.b16 %v393
    %v1256 = vunpack.c.l.b16 %v394
    %v1257 = vunpack.c.l.b16 %v395
    %v1258 = vunpack.c.l.b16 %v396
    %v1259 = vunpack.c.l.b16 %v397
    %v1260 = vunpack.c.l.b16 %v398
    %v1261 = vunpack.c.l.b16 %v399
    %v1262 = vunpack.c.l.b16 %v400
    %v1263 = vunpack.c.l.b16 %v401
    %v1264 = vunpack.c.l.b16 %v402
    %v1265 = vunpack.c.l.b16 %v403
    %v1266 = vunpack.c.l.b16 %v404
    %v1267 = vunpack.c.l.b16 %v405
    %v1268 = vunpack.c.l.b16 %v406
    %v1269 = vunpack.c.l.b16 %v407
    %v1270 = vunpack.c.l.b16 %v408
    %v1271 = vunpack.c.l.b16 %v409
    %v1272 = vunpack.c.l.b16 %v410
    %v1273 = vunpack.c.l.b16 %v411
    %v1274 = vunpack.c.l.b16 %v412
    %v1275 = vunpack.c.l.b16 %v413
    %v1276 = vunpack.c.l.b16 %v414
    %v1277 = vunpack.c.l.b16 %v415
    %v1278 = vunpack.c.l.b16 %v416
    %v1279 = vunpack.c.l.b16 %v417
    %v1280 = vunpack.c.l.b16 %v418
    %v1281 = vunpack.c.l.b16 %v419
    %v1282 = vunpack.c.l.b16 %v420
    %v1283 = vunpack.c.l.b16 %v421
    %v1284 = vunpack.c.l.b16 %v422
    %v1285 = vunpack.c.l.b16 %v423
    %v1286 = vunpack.c.l.b16 %v424
    %v1287 = vpack.c.b16 %v888, %v887
    %v1288 = vpack.c.b16 %v890, %v889
    %v1289 = vpack.c.b16 %v892, %v891
    %v1290 = vpack.c.b16 %v894, %v893
    %v1291 = vpack.c.b16 %v896, %v895
    %v1292 = vpack.c.b16 %v898, %v897
    %v1293 = vpack.c.b16 %v900, %v899
    %v1294 = vpack.c.b16 %v902, %v901
    %v1295 = vpack.c.b16 %v904, %v903
    %v1296 = vpack.c.b16 %v906, %v905
    %v1297 = vpack.c.b16 %v908, %v907
    %v1298 = vpack.c.b16 %v910, %v909
    %v1299 = vpack.c.b16 %v912, %v911
    %v1300 = vpack.c.b16 %v914, %v913
    %v1301 = vpack.c.b16 %v916, %v915
    %v1302 = vpack.c.b16 %v918, %v917
    %v1303 = vpack.c.b16 %v920, %v919
    %v1304 = vpack.c.b16 %v922, %v921
    %v1305 = vpack.c.b16 %v924, %v923
    %v1306 = vpack.c.b16 %v926, %v925
    %v1307 = vpack.c.b16 %v928, %v927
    %v1308 = vpack.c.b16 %v930, %v929
    %v1309 = vpack.c.b16 %v932, %v931
    %v1310 = vpack.c.b16 %v934, %v933
    %v1311 = vpack.c.b16 %v936, %v935
    %v1312 = vpack.c.b16 %v938, %v937
    %v1313 = vpack.c.b16 %v940, %v939
    %v1314 = vpack.c.b16 %v942, %v941
    %v1315 = vpack.c.b16 %v944, %v943
    %v1316 = vpack.c.b16 %v946, %v945
    %v1317 = vpack.c.b16 %v948, %v947
    %v1318 = vpack.c.b16 %v950, %v949
    %v1319 = vpack.c.b16 %v952, %v951
    %v1320 = vpack.c.b16 %v954, %v953
    %v1321 = vpack.c.b16 %v956, %v955
    %v1322 = vpack.c.b16 %v958, %v957
    %v1323 = vpack.c.b16 %v960, %v959
    %v1324 = vpack.c.b16 %v962, %v961
    %v1325 = vpack.c.b16 %v964, %v963
    %v1326 = vpack.c.b16 %v966, %v965
    %v1327 = vpack.c.b16 %v968, %v967
    %v1328 = vpack.c.b16 %v970, %v969
    %v1329 = vpack.c.b16 %v972, %v971
    %v1330 = vpack.c.b16 %v974, %v973
    %v1331 = vpack.c.b16 %v976, %v975
    %v1332 = vpack.c.b16 %v978, %v977
    %v1333 = vpack.c.b16 %v980, %v979
    %v1334 = vpack.c.b16 %v982, %v981
    %v1335 = vpack.c.b16 %v984, %v983
    %v1336 = vpack.c.b16 %v986, %v985
    %v1337 = vpack.c.b16 %v988, %v987
    %v1338 = vpack.c.b16 %v990, %v989
    %v1339 = vpack.c.b16 %v992, %v991
    %v1340 = vpack.c.b16 %v994, %v993
    %v1341 = vpack.c.b16 %v996, %v995
    %v1342 = vpack.c.b16 %v998, %v997
    %v1343 = vpack.c.b16 %v1000, %v999
    %v1344 = vpack.c.b16 %v1002, %v1001
    %v1345 = vpack.c.b16 %v1004, %v1003
    %v1346 = vpack.c.b16 %v1006, %v1005
    %v1347 = vpack.c.b16 %v1008, %v1007
    %v1348 = vpack.c.b16 %v1010, %v1009
    %v1349 = vpack.c.b16 %v1012, %v1011
    %v1350 = vpack.c.b16 %v1014, %v1013
    %v1351 = vpack.c.b16 %v1016, %v1015
    %v1352 = vpack.c.b16 %v1018, %v1017
    %v1353 = vpack.c.b16 %v1020, %v1019
    %v1354 = vpack.c.b16 %v1022, %v1021
    %v1355 = vpack.c.b16 %v1024, %v1023
    %v1356 = vpack.c.b16 %v1026, %v1025
    %v1357 = vpack.c.b16 %v1028, %v1027
    %v1358 = vpack.c.b16 %v1030, %v1029
    %v1359 = vpack.c.b16 %v1032, %v1031
    %v1360 = vpack.c.b16 %v1034, %v1033
    %v1361 = vpack.c.b16 %v1036, %v1035
    %v1362 = vpack.c.b16 %v1038, %v1037
    %v1363 = vpack.c.b16 %v1040, %v1039
    %v1364 = vpack.c.b16 %v1042, %v1041
    %v1365 = vpack.c.b16 %v1044, %v1043
    %v1366 = vpack.c.b16 %v1046, %v1045
    %v1367 = vpack.c.b16 %v1048, %v1047
    %v1368 = vpack.c.b16 %v1050, %v1049
    %v1369 = vpack.c.b16 %v1052, %v1051
    %v1370 = vpack.c.b16 %v1054, %v1053
    %v1371 = vpack.c.b16 %v1056, %v1055
    %v1372 = vpack.c.b16 %v1058, %v1057
    %v1373 = vpack.c.b16 %v1060, %v1059
    %v1374 = vpack.c.b16 %v1062, %v1061
    %v1375 = vpack.c.b16 %v1064, %v1063
    %v1376 = vpack.c.b16 %v1066, %v1065
    %v1377 = vpack.c.b16 %v1068, %v1067
    %v1378 = vpack.c.b16 %v1070, %v1069
    %v1379 = vpack.c.b16 %v1072, %v1071
    %v1380 = vpack.c.b16 %v1074, %v1073
    %v1381 = vpack.c.b16 %v1076, %v1075
    %v1382 = vpack.c.b16 %v1078, %v1077
    %v1383 = vpack.c.b16 %v1080, %v1079
    %v1384 = vpack.c.b16 %v1082, %v1081
    %v1385 = vpack.c.b16 %v1084, %v1083
    %v1386 = vpack.c.b16 %v1086, %v1085
    %v1387 = vpack.c.b16 %v1088, %v1087
    %v1388 = vpack.c.b16 %v1090, %v1089
    %v1389 = vpack.c.b16 %v1092, %v1091
    %v1390 = vpack.c.b16 %v1094, %v1093
    %v1391 = vpack.c.b16 %v1096, %v1095
    %v1392 = vpack.c.b16 %v1098, %v1097
    %v1393 = vpack.c.b16 %v1100, %v1099
    %v1394 = vpack.c.b16 %v1102, %v1101
    %v1395 = vpack.c.b16 %v1104, %v1103
    %v1396 = vpack.c.b16 %v1106, %v1105
    %v1397 = vpack.c.b16 %v1108, %v1107
    %v1398 = vpack.c.b16 %v1110, %v1109
    %v1399 = vpack.c.b16 %v1112, %v1111
    %v1400 = vpack.c.b16 %v1114, %v1113
    %v1401 = vpack.c.b16 %v1116, %v1115
    %v1402 = vpack.c.b16 %v1118, %v1117
    %v1403 = vpack.c.b16 %v1120, %v1119
    %v1404 = vpack.c.b16 %v1122, %v1121
    %v1405 = vpack.c.b16 %v1124, %v1123
    %v1406 = vpack.c.b16 %v1126, %v1125
    %v1407 = vpack.c.b16 %v1128, %v1127
    %v1408 = vpack.c.b16 %v1130, %v1129
    %v1409 = vpack.c.b16 %v1132, %v1131
    %v1410 = vpack.c.b16 %v1134, %v1133
    %v1411 = vpack.c.b16 %v1136, %v1135
    %v1412 = vpack.c.b16 %v1138, %v1137
    %v1413 = vpack.c.b16 %v1140, %v1139
    %v1414 = vpack.c.b16 %v1142, %v1141
    %v1415 = vpack.c.b16 %v1144, %v1143
    %v1416 = vpack.c.b16 %v1146, %v1145
    %v1417 = vpack.c.b16 %v1148, %v1147
    %v1418 = vpack.c.b16 %v1150, %v1149
    %v1419 = vpack.c.b16 %v1152, %v1151
    %v1420 = vpack.c.b16 %v1154, %v1153
    %v1421 = vpack.c.b16 %v1156, %v1155
    %v1422 = vpack.c.b16 %v1158, %v1157
    %v1423 = vpack.c.b16 %v1160, %v1159
    %v1424 = vpack.c.b16 %v1162, %v1161
    %v1425 = vpack.c.b16 %v1164, %v1163
    %v1426 = vpack.c.b16 %v1166, %v1165
    %v1427 = vpack.c.b16 %v1168, %v1167
    %v1428 = vpack.c.b16 %v1170, %v1169
    %v1429 = vpack.c.b16 %v1172, %v1171
    %v1430 = vpack.c.b16 %v1174, %v1173
    %v1431 = vpack.c.b16 %v1176, %v1175
    %v1432 = vpack.c.b16 %v1178, %v1177
    %v1433 = vpack.c.b16 %v1180, %v1179
    %v1434 = vpack.c.b16 %v1182, %v1181
    %v1435 = vpack.c.b16 %v1184, %v1183
    %v1436 = vpack.c.b16 %v1186, %v1185
    %v1437 = vpack.c.b16 %v1188, %v1187
    %v1438 = vpack.c.b16 %v1190, %v1189
    %v1439 = vpack.c.b16 %v1192, %v1191
    %v1440 = vpack.c.b16 %v1194, %v1193
    %v1441 = vpack.c.b16 %v1196, %v1195
    %v1442 = vpack.c.b16 %v1198, %v1197
    %v1443 = vpack.c.b16 %v1200, %v1199
    %v1444 = vpack.c.b16 %v1202, %v1201
    %v1445 = vpack.c.b16 %v1204, %v1203
    %v1446 = vpack.c.b16 %v1206, %v1205
    %v1447 = vpack.c.b16 %v1208, %v1207
    %v1448 = vpack.c.b16 %v1210, %v1209
    %v1449 = vpack.c.b16 %v1212, %v1211
    %v1450 = vpack.c.b16 %v1214, %v1213
    %v1451 = vpack.c.b16 %v1216, %v1215
    %v1452 = vpack.c.b16 %v1218, %v1217
    %v1453 = vpack.c.b16 %v1220, %v1219
    %v1454 = vpack.c.b16 %v1222, %v1221
    %v1455 = vpack.c.b16 %v1224, %v1223
    %v1456 = vpack.c.b16 %v1226, %v1225
    %v1457 = vpack.c.b16 %v1228, %v1227
    %v1458 = vpack.c.b16 %v1230, %v1229
    %v1459 = vpack.c.b16 %v1232, %v1231
    %v1460 = vpack.c.b16 %v1234, %v1233
    %v1461 = vpack.c.b16 %v1236, %v1235
    %v1462 = vpack.c.b16 %v1238, %v1237
    %v1463 = vpack.c.b16 %v1240, %v1239
    %v1464 = vpack.c.b16 %v1242, %v1241
    %v1465 = vpack.c.b16 %v1244, %v1243
    %v1466 = vpack.c.b16 %v1246, %v1245
    %v1467 = vpack.c.b16 %v1248, %v1247
    %v1468 = vpack.c.b16 %v1250, %v1249
    %v1469 = vpack.c.b16 %v1252, %v1251
    %v1470 = vpack.c.b16 %v1254, %v1253
    %v1471 = vpack.c.b16 %v1256, %v1255
    %v1472 = vpack.c.b16 %v1258, %v1257
    %v1473 = vpack.c.b16 %v1260, %v1259
    %v1474 = vpack.c.b16 %v1262, %v1261
    %v1475 = vpack.c.b16 %v1264, %v1263
    %v1476 = vpack.c.b16 %v1266, %v1265
    %v1477 = vpack.c.b16 %v1268, %v1267
    %v1478 = vpack.c.b16 %v1270, %v1269
    %v1479 = vpack.c.b16 %v1272, %v1271
    %v1480 = vpack.c.b16 %v1274, %v1273
    %v1481 = vpack.c.b16 %v1276, %v1275
    %v1482 = vpack.c.b16 %v1278, %v1277
    %v1483 = vpack.c.b16 %v1280, %v1279
    %v1484 = vpack.c.b16 %v1282, %v1281
    %v1485 = vpack.c.b16 %v1284, %v1283
    %v1486 = vpack.c.b16 %v1286, %v1285
    %1687 = vmatpush.bf16.msra.mxu0 %v1294
    %1688 = vmatpush.bf16.msra.mxu0 %v1293
    %1689 = vmatpush.bf16.msra.mxu0 %v1292
    %1690 = vmatpush.bf16.msra.mxu0 %v1291
    %1691 = vmatpush.bf16.msra.mxu0 %v1290
    %1692 = vmatpush.bf16.msra.mxu0 %v1289
    %1693 = vmatpush.bf16.msra.mxu0 %v1288
    %1694 = vmatpush.bf16.msra.mxu0 %v1287
    %1695 = vmatmul.bf16.gmra.mxu0 %v431
    %v1696 = vpop.f32.mrf.mxu0
    %v1697 = vadd.f32 %v427, %v1696
    %v1698 = vpop.f32.mrf.mxu0
    %1699 = vdwg.mxu0
    %1700 = vmatpush.bf16.msra.mxu0 %v1302
    %1701 = vmatpush.bf16.msra.mxu0 %v1301
    %1702 = vmatpush.bf16.msra.mxu0 %v1300
    %1703 = vmatpush.bf16.msra.mxu0 %v1299
    %1704 = vmatpush.bf16.msra.mxu0 %v1298
    %1705 = vmatpush.bf16.msra.mxu0 %v1297
    %1706 = vmatpush.bf16.msra.mxu0 %v1296
    %1707 = vmatpush.bf16.msra.mxu0 %v1295
    %1708 = vmatmul.bf16.gmra.mxu0 %v432
    %v1709 = vpop.f32.mrf.mxu0
    %v1710 = vadd.f32 %v1697, %v1709
    %v1711 = vpop.f32.mrf.mxu0
    %1712 = vdwg.mxu0
    %1713 = vmatpush.bf16.msra.mxu0 %v1310
    %1714 = vmatpush.bf16.msra.mxu0 %v1309
    %1715 = vmatpush.bf16.msra.mxu0 %v1308
    %1716 = vmatpush.bf16.msra.mxu0 %v1307
    %1717 = vmatpush.bf16.msra.mxu0 %v1306
    %1718 = vmatpush.bf16.msra.mxu0 %v1305
    %1719 = vmatpush.bf16.msra.mxu0 %v1304
    %1720 = vmatpush.bf16.msra.mxu0 %v1303
    %1721 = vmatmul.bf16.gmra.mxu0 %v433
    %v1722 = vpop.f32.mrf.mxu0
    %v1723 = vadd.f32 %v1710, %v1722
    %v1724 = vpop.f32.mrf.mxu0
    %1725 = vdwg.mxu0
    %1726 = vmatpush.bf16.msra.mxu0 %v1318
    %1727 = vmatpush.bf16.msra.mxu0 %v1317
    %1728 = vmatpush.bf16.msra.mxu0 %v1316
    %1729 = vmatpush.bf16.msra.mxu0 %v1315
    %1730 = vmatpush.bf16.msra.mxu0 %v1314
    %1731 = vmatpush.bf16.msra.mxu0 %v1313
    %1732 = vmatpush.bf16.msra.mxu0 %v1312
    %1733 = vmatpush.bf16.msra.mxu0 %v1311
    %1734 = vmatmul.bf16.gmra.mxu0 %v434
    %v1735 = vpop.f32.mrf.mxu0
    %v1736 = vadd.f32 %v1723, %v1735
    %v1737 = vpop.f32.mrf.mxu0
    %1738 = vdwg.mxu0
    %1739 = vmatpush.bf16.msra.mxu0 %v1326
    %1740 = vmatpush.bf16.msra.mxu0 %v1325
    %1741 = vmatpush.bf16.msra.mxu0 %v1324
    %1742 = vmatpush.bf16.msra.mxu0 %v1323
    %1743 = vmatpush.bf16.msra.mxu0 %v1322
    %1744 = vmatpush.bf16.msra.mxu0 %v1321
    %1745 = vmatpush.bf16.msra.mxu0 %v1320
    %1746 = vmatpush.bf16.msra.mxu0 %v1319
    %1747 = vmatmul.bf16.gmra.mxu0 %v435
    %v1748 = vpop.f32.mrf.mxu0
    %v1749 = vadd.f32 %v1736, %v1748
    %v1750 = vpop.f32.mrf.mxu0
    %1751 = vdwg.mxu0
    %1752 = vmatpush.bf16.msra.mxu0 %v1334
    %1753 = vmatpush.bf16.msra.mxu0 %v1333
    %1754 = vmatpush.bf16.msra.mxu0 %v1332
    %1755 = vmatpush.bf16.msra.mxu0 %v1331
    %1756 = vmatpush.bf16.msra.mxu0 %v1330
    %1757 = vmatpush.bf16.msra.mxu0 %v1329
    %1758 = vmatpush.bf16.msra.mxu0 %v1328
    %1759 = vmatpush.bf16.msra.mxu0 %v1327
    %1760 = vmatmul.bf16.gmra.mxu0 %v436
    %v1761 = vpop.f32.mrf.mxu0
    %v1762 = vadd.f32 %v1749, %v1761
    %v1763 = vpop.f32.mrf.mxu0
    %1764 = vdwg.mxu0
    %1765 = vmatpush.bf16.msra.mxu0 %v1342
    %1766 = vmatpush.bf16.msra.mxu0 %v1341
    %1767 = vmatpush.bf16.msra.mxu0 %v1340
    %1768 = vmatpush.bf16.msra.mxu0 %v1339
    %1769 = vmatpush.bf16.msra.mxu0 %v1338
    %1770 = vmatpush.bf16.msra.mxu0 %v1337
    %1771 = vmatpush.bf16.msra.mxu0 %v1336
    %1772 = vmatpush.bf16.msra.mxu0 %v1335
    %1773 = vmatmul.bf16.gmra.mxu0 %v437
    %v1774 = vpop.f32.mrf.mxu0
    %v1775 = vadd.f32 %v1762, %v1774
    %v1776 = vpop.f32.mrf.mxu0
    %1777 = vdwg.mxu0
    %1778 = vmatpush.bf16.msra.mxu0 %v1350
    %1779 = vmatpush.bf16.msra.mxu0 %v1349
    %1780 = vmatpush.bf16.msra.mxu0 %v1348
    %1781 = vmatpush.bf16.msra.mxu0 %v1347
    %1782 = vmatpush.bf16.msra.mxu0 %v1346
    %1783 = vmatpush.bf16.msra.mxu0 %v1345
    %1784 = vmatpush.bf16.msra.mxu0 %v1344
    %1785 = vmatpush.bf16.msra.mxu0 %v1343
    %1786 = vmatmul.bf16.gmra.mxu0 %v438
    %v1787 = vpop.f32.mrf.mxu0
    %v1788 = vadd.f32 %v1775, %v1787
    %v1789 = vpop.f32.mrf.mxu0
    %1790 = vdwg.mxu0
    %1791 = vmatpush.bf16.msra.mxu0 %v1358
    %1792 = vmatpush.bf16.msra.mxu0 %v1357
    %1793 = vmatpush.bf16.msra.mxu0 %v1356
    %1794 = vmatpush.bf16.msra.mxu0 %v1355
    %1795 = vmatpush.bf16.msra.mxu0 %v1354
    %1796 = vmatpush.bf16.msra.mxu0 %v1353
    %1797 = vmatpush.bf16.msra.mxu0 %v1352
    %1798 = vmatpush.bf16.msra.mxu0 %v1351
    %1799 = vmatmul.bf16.gmra.mxu0 %v441
    %v1800 = vpop.f32.mrf.mxu0
    %v1801 = vadd.f32 %v1788, %v1800
    %v1802 = vpop.f32.mrf.mxu0
    %1803 = vdwg.mxu0
    %1804 = vmatpush.bf16.msra.mxu0 %v1366
    %1805 = vmatpush.bf16.msra.mxu0 %v1365
    %1806 = vmatpush.bf16.msra.mxu0 %v1364
    %1807 = vmatpush.bf16.msra.mxu0 %v1363
    %1808 = vmatpush.bf16.msra.mxu0 %v1362
    %1809 = vmatpush.bf16.msra.mxu0 %v1361
    %1810 = vmatpush.bf16.msra.mxu0 %v1360
    %1811 = vmatpush.bf16.msra.mxu0 %v1359
    %1812 = vmatmul.bf16.gmra.mxu0 %v442
    %v1813 = vpop.f32.mrf.mxu0
    %v1814 = vadd.f32 %v1801, %v1813
    %v1815 = vpop.f32.mrf.mxu0
    %1816 = vdwg.mxu0
    %1817 = vmatpush.bf16.msra.mxu0 %v1374
    %1818 = vmatpush.bf16.msra.mxu0 %v1373
    %1819 = vmatpush.bf16.msra.mxu0 %v1372
    %1820 = vmatpush.bf16.msra.mxu0 %v1371
    %1821 = vmatpush.bf16.msra.mxu0 %v1370
    %1822 = vmatpush.bf16.msra.mxu0 %v1369
    %1823 = vmatpush.bf16.msra.mxu0 %v1368
    %1824 = vmatpush.bf16.msra.mxu0 %v1367
    %1825 = vmatmul.bf16.gmra.mxu0 %v443
    %v1826 = vpop.f32.mrf.mxu0
    %v1827 = vadd.f32 %v1814, %v1826
    %v1828 = vpop.f32.mrf.mxu0
    %1829 = vdwg.mxu0
    %1830 = vmatpush.bf16.msra.mxu0 %v1382
    %1831 = vmatpush.bf16.msra.mxu0 %v1381
    %1832 = vmatpush.bf16.msra.mxu0 %v1380
    %1833 = vmatpush.bf16.msra.mxu0 %v1379
    %1834 = vmatpush.bf16.msra.mxu0 %v1378
    %1835 = vmatpush.bf16.msra.mxu0 %v1377
    %1836 = vmatpush.bf16.msra.mxu0 %v1376
    %1837 = vmatpush.bf16.msra.mxu0 %v1375
    %1838 = vmatmul.bf16.gmra.mxu0 %v444
    %v1839 = vpop.f32.mrf.mxu0
    %v1840 = vadd.f32 %v1827, %v1839
    %v1841 = vpop.f32.mrf.mxu0
    %1842 = vdwg.mxu0
    %1843 = vmatpush.bf16.msra.mxu0 %v1390
    %1844 = vmatpush.bf16.msra.mxu0 %v1389
    %1845 = vmatpush.bf16.msra.mxu0 %v1388
    %1846 = vmatpush.bf16.msra.mxu0 %v1387
    %1847 = vmatpush.bf16.msra.mxu0 %v1386
    %1848 = vmatpush.bf16.msra.mxu0 %v1385
    %1849 = vmatpush.bf16.msra.mxu0 %v1384
    %1850 = vmatpush.bf16.msra.mxu0 %v1383
    %1851 = vmatmul.bf16.gmra.mxu0 %v445
    %v1852 = vpop.f32.mrf.mxu0
    %v1853 = vadd.f32 %v1840, %v1852
    %v1854 = vpop.f32.mrf.mxu0
    %1855 = vdwg.mxu0
    %1856 = vmatpush.bf16.msra.mxu0 %v1398
    %1857 = vmatpush.bf16.msra.mxu0 %v1397
    %1858 = vmatpush.bf16.msra.mxu0 %v1396
    %1859 = vmatpush.bf16.msra.mxu0 %v1395
    %1860 = vmatpush.bf16.msra.mxu0 %v1394
    %1861 = vmatpush.bf16.msra.mxu0 %v1393
    %1862 = vmatpush.bf16.msra.mxu0 %v1392
    %1863 = vmatpush.bf16.msra.mxu0 %v1391
    %1864 = vmatmul.bf16.gmra.mxu0 %v446
    %v1865 = vpop.f32.mrf.mxu0
    %v1866 = vadd.f32 %v1853, %v1865
    %v1867 = vpop.f32.mrf.mxu0
    %1868 = vdwg.mxu0
    %1869 = vmatpush.bf16.msra.mxu0 %v1406
    %1870 = vmatpush.bf16.msra.mxu0 %v1405
    %1871 = vmatpush.bf16.msra.mxu0 %v1404
    %1872 = vmatpush.bf16.msra.mxu0 %v1403
    %1873 = vmatpush.bf16.msra.mxu0 %v1402
    %1874 = vmatpush.bf16.msra.mxu0 %v1401
    %1875 = vmatpush.bf16.msra.mxu0 %v1400
    %1876 = vmatpush.bf16.msra.mxu0 %v1399
    %1877 = vmatmul.bf16.gmra.mxu0 %v447
    %v1878 = vpop.f32.mrf.mxu0
    %v1879 = vadd.f32 %v1866, %v1878
    %v1880 = vpop.f32.mrf.mxu0
    %1881 = vdwg.mxu0
    %1882 = vmatpush.bf16.msra.mxu0 %v1414
    %1883 = vmatpush.bf16.msra.mxu0 %v1413
    %1884 = vmatpush.bf16.msra.mxu0 %v1412
    %1885 = vmatpush.bf16.msra.mxu0 %v1411
    %1886 = vmatpush.bf16.msra.mxu0 %v1410
    %1887 = vmatpush.bf16.msra.mxu0 %v1409
    %1888 = vmatpush.bf16.msra.mxu0 %v1408
    %1889 = vmatpush.bf16.msra.mxu0 %v1407
    %1890 = vmatmul.bf16.gmra.mxu0 %v448
    %v1891 = vpop.f32.mrf.mxu0
    %v1892 = vadd.f32 %v1879, %v1891
    %v1893 = vpop.f32.mrf.mxu0
    %1894 = vdwg.mxu0
    %1895 = vmatpush.bf16.msra.mxu0 %v1422
    %1896 = vmatpush.bf16.msra.mxu0 %v1421
    %1897 = vmatpush.bf16.msra.mxu0 %v1420
    %1898 = vmatpush.bf16.msra.mxu0 %v1419
    %1899 = vmatpush.bf16.msra.mxu0 %v1418
    %1900 = vmatpush.bf16.msra.mxu0 %v1417
    %1901 = vmatpush.bf16.msra.mxu0 %v1416
    %1902 = vmatpush.bf16.msra.mxu0 %v1415
    %1903 = vmatmul.bf16.gmra.mxu0 %v451
    %v1904 = vpop.f32.mrf.mxu0
    %v1905 = vadd.f32 %v1892, %v1904
    %v1906 = vpop.f32.mrf.mxu0
    %1907 = vdwg.mxu0
    %1908 = vmatpush.bf16.msra.mxu0 %v1430
    %1909 = vmatpush.bf16.msra.mxu0 %v1429
    %1910 = vmatpush.bf16.msra.mxu0 %v1428
    %1911 = vmatpush.bf16.msra.mxu0 %v1427
    %1912 = vmatpush.bf16.msra.mxu0 %v1426
    %1913 = vmatpush.bf16.msra.mxu0 %v1425
    %1914 = vmatpush.bf16.msra.mxu0 %v1424
    %1915 = vmatpush.bf16.msra.mxu0 %v1423
    %1916 = vmatmul.bf16.gmra.mxu0 %v452
    %v1917 = vpop.f32.mrf.mxu0
    %v1918 = vadd.f32 %v1905, %v1917
    %v1919 = vpop.f32.mrf.mxu0
    %1920 = vdwg.mxu0
    %1921 = vmatpush.bf16.msra.mxu0 %v1438
    %1922 = vmatpush.bf16.msra.mxu0 %v1437
    %1923 = vmatpush.bf16.msra.mxu0 %v1436
    %1924 = vmatpush.bf16.msra.mxu0 %v1435
    %1925 = vmatpush.bf16.msra.mxu0 %v1434
    %1926 = vmatpush.bf16.msra.mxu0 %v1433
    %1927 = vmatpush.bf16.msra.mxu0 %v1432
    %1928 = vmatpush.bf16.msra.mxu0 %v1431
    %1929 = vmatmul.bf16.gmra.mxu0 %v453
    %v1930 = vpop.f32.mrf.mxu0
    %v1931 = vadd.f32 %v1918, %v1930
    %v1932 = vpop.f32.mrf.mxu0
    %1933 = vdwg.mxu0
    %1934 = vmatpush.bf16.msra.mxu0 %v1446
    %1935 = vmatpush.bf16.msra.mxu0 %v1445
    %1936 = vmatpush.bf16.msra.mxu0 %v1444
    %1937 = vmatpush.bf16.msra.mxu0 %v1443
    %1938 = vmatpush.bf16.msra.mxu0 %v1442
    %1939 = vmatpush.bf16.msra.mxu0 %v1441
    %1940 = vmatpush.bf16.msra.mxu0 %v1440
    %1941 = vmatpush.bf16.msra.mxu0 %v1439
    %1942 = vmatmul.bf16.gmra.mxu0 %v454
    %v1943 = vpop.f32.mrf.mxu0
    %v1944 = vadd.f32 %v1931, %v1943
    %v1945 = vpop.f32.mrf.mxu0
    %1946 = vdwg.mxu0
    %1947 = vmatpush.bf16.msra.mxu0 %v1454
    %1948 = vmatpush.bf16.msra.mxu0 %v1453
    %1949 = vmatpush.bf16.msra.mxu0 %v1452
    %1950 = vmatpush.bf16.msra.mxu0 %v1451
    %1951 = vmatpush.bf16.msra.mxu0 %v1450
    %1952 = vmatpush.bf16.msra.mxu0 %v1449
    %1953 = vmatpush.bf16.msra.mxu0 %v1448
    %1954 = vmatpush.bf16.msra.mxu0 %v1447
    %1955 = vmatmul.bf16.gmra.mxu0 %v455
    %v1956 = vpop.f32.mrf.mxu0
    %v1957 = vadd.f32 %v1944, %v1956
    %v1958 = vpop.f32.mrf.mxu0
    %1959 = vdwg.mxu0
    %1960 = vmatpush.bf16.msra.mxu0 %v1462
    %1961 = vmatpush.bf16.msra.mxu0 %v1461
    %1962 = vmatpush.bf16.msra.mxu0 %v1460
    %1963 = vmatpush.bf16.msra.mxu0 %v1459
    %1964 = vmatpush.bf16.msra.mxu0 %v1458
    %1965 = vmatpush.bf16.msra.mxu0 %v1457
    %1966 = vmatpush.bf16.msra.mxu0 %v1456
    %1967 = vmatpush.bf16.msra.mxu0 %v1455
    %1968 = vmatmul.bf16.gmra.mxu0 %v456
    %v1969 = vpop.f32.mrf.mxu0
    %v1970 = vadd.f32 %v1957, %v1969
    %v1971 = vpop.f32.mrf.mxu0
    %1972 = vdwg.mxu0
    %1973 = vmatpush.bf16.msra.mxu0 %v1470
    %1974 = vmatpush.bf16.msra.mxu0 %v1469
    %1975 = vmatpush.bf16.msra.mxu0 %v1468
    %1976 = vmatpush.bf16.msra.mxu0 %v1467
    %1977 = vmatpush.bf16.msra.mxu0 %v1466
    %1978 = vmatpush.bf16.msra.mxu0 %v1465
    %1979 = vmatpush.bf16.msra.mxu0 %v1464
    %1980 = vmatpush.bf16.msra.mxu0 %v1463
    %1981 = vmatmul.bf16.gmra.mxu0 %v457
    %v1982 = vpop.f32.mrf.mxu0
    %v1983 = vadd.f32 %v1970, %v1982
    %v1984 = vpop.f32.mrf.mxu0
    %1985 = vdwg.mxu0
    %1986 = vmatpush.bf16.msra.mxu0 %v1478
    %1987 = vmatpush.bf16.msra.mxu0 %v1477
    %1988 = vmatpush.bf16.msra.mxu0 %v1476
    %1989 = vmatpush.bf16.msra.mxu0 %v1475
    %1990 = vmatpush.bf16.msra.mxu0 %v1474
    %1991 = vmatpush.bf16.msra.mxu0 %v1473
    %1992 = vmatpush.bf16.msra.mxu0 %v1472
    %1993 = vmatpush.bf16.msra.mxu0 %v1471
    %1994 = vmatmul.bf16.gmra.mxu0 %v458
    %v1995 = vpop.f32.mrf.mxu0
    %v1996 = vadd.f32 %v1983, %v1995
    %v1997 = vpop.f32.mrf.mxu0
    %1998 = vdwg.mxu0
    %1999 = vmatpush.bf16.msra.mxu0 %v1486
    %2000 = vmatpush.bf16.msra.mxu0 %v1485
    %2001 = vmatpush.bf16.msra.mxu0 %v1484
    %2002 = vmatpush.bf16.msra.mxu0 %v1483
    %2003 = vmatpush.bf16.msra.mxu0 %v1482
    %2004 = vmatpush.bf16.msra.mxu0 %v1481
    %2005 = vmatpush.bf16.msra.mxu0 %v1480
    %2006 = vmatpush.bf16.msra.mxu0 %v1479
    %2007 = vmatmul.bf16.gmra.mxu0 %v461
    %v2008 = vpop.f32.mrf.mxu0
    %v2009 = vadd.f32 %v1996, %v2008
    %v2010 = vpop.f32.mrf.mxu0
    %2011 = vdwg.mxu0
    %v2012 = vmax.f32 %v2009, 0.0
    %v2013 = vpack.c.bf16 %v2012, %v2012
    %v2014 = vld [vmem:[%s3] sm:$0xf]
    %v2015 = vld [vmem:[%s3 + $0x4] sm:$0xf]
    %v2016 = vld [vmem:[%s3 + $0x8] sm:$0xf]
    %v2017 = vld [vmem:[%s3 + $0xc] sm:$0xf]
    %v2018 = vld [vmem:[%s3 + $0x10] sm:$0xf]
    %v2019 = vld [vmem:[%s3 + $0x14] sm:$0xf]
    %v2020 = vld [vmem:[%s3 + $0x18] sm:$0xf]
    %v2021 = vld [vmem:[%s3 + $0x1c] sm:$0xf]
    %v2022 = vld [vmem:[%s3 + $0x20] sm:$0xf]
    %v2023 = vld [vmem:[%s3 + $0x24] sm:$0xf]
    %v2024 = vld [vmem:[%s3 + $0x28] sm:$0xf]
    %v2025 = vld [vmem:[%s3 + $0x2c] sm:$0xf]
    %v2026 = vld [vmem:[%s3 + $0x30] sm:$0xf]
    %v2027 = vld [vmem:[%s3 + $0x34] sm:$0xf]
    %v2028 = vld [vmem:[%s3 + $0x38] sm:$0xf]
    %v2029 = vld [vmem:[%s3 + $0x3c] sm:$0xf]
    %v2030 = vld [vmem:[%s4] sm:$0x1]
    %v2032 = vperm.slane %v2030, 0
    %v2050 = vunpack.c.l.b16 %v2014
    %v2051 = vunpack.c.l.b16 %v2015
    %v2052 = vunpack.c.l.b16 %v2016
    %v2053 = vunpack.c.l.b16 %v2017
    %v2054 = vunpack.c.l.b16 %v2018
    %v2055 = vunpack.c.l.b16 %v2019
    %v2056 = vunpack.c.l.b16 %v2020
    %v2057 = vunpack.c.l.b16 %v2021
    %v2058 = vunpack.c.l.b16 %v2022
    %v2059 = vunpack.c.l.b16 %v2023
    %v2060 = vunpack.c.l.b16 %v2024
    %v2061 = vunpack.c.l.b16 %v2025
    %v2062 = vunpack.c.l.b16 %v2026
    %v2063 = vunpack.c.l.b16 %v2027
    %v2064 = vunpack.c.l.b16 %v2028
    %v2065 = vunpack.c.l.b16 %v2029
    %v2066 = vpack.c.b16 %v2051, %v2050
    %v2067 = vpack.c.b16 %v2053, %v2052
    %v2068 = vpack.c.b16 %v2055, %v2054
    %v2069 = vpack.c.b16 %v2057, %v2056
    %v2070 = vpack.c.b16 %v2059, %v2058
    %v2071 = vpack.c.b16 %v2061, %v2060
    %v2072 = vpack.c.b16 %v2063, %v2062
    %v2073 = vpack.c.b16 %v2065, %v2064
    %2082 = vmatpush.bf16.msra.mxu0 %v2073
    %2083 = vmatpush.bf16.msra.mxu0 %v2072
    %2084 = vmatpush.bf16.msra.mxu0 %v2071
    %2085 = vmatpush.bf16.msra.mxu0 %v2070
    %2086 = vmatpush.bf16.msra.mxu0 %v2069
    %2087 = vmatpush.bf16.msra.mxu0 %v2068
    %2088 = vmatpush.bf16.msra.mxu0 %v2067
    %2089 = vmatpush.bf16.msra.mxu0 %v2066
    %2090 = vmatmul.bf16.gmra.mxu0 %v2013
    %v2091 = vpop.f32.mrf.mxu0
    %v2092 = vadd.f32 %v2032, %v2091
    %v2093 = vpop.f32.mrf.mxu0
    %2094 = vdwg.mxu0
    %2095 = vst [vmem:[#allocation2] sm:$0x3] %v2092
    // Predicated region
    $region22: #{cnn_classifier_forward.5} parent=1 // pred_check
      _
    $region23: #{cnn_classifier_forward.5} parent=1 // pred_check_branch
      %2097 = sbr.rel (0) target = $region25
    $region24: #{cnn_classifier_forward.5} parent=1 // pred_region
      %2099 = vsyncadd [#allocation3], 0
      %s2101 = sshll.u32 [#allocation2], 4
      %s2102 = int_to_ptr.vmem [resolvable:$true] %s2101
      %s2103 = sshll.u32 %s5, 4
      %s2104 = int_to_ptr.hbm [resolvable:$true] %s2103
      %2106 = dma.vmem_to_hbm [thread:$0]  %s2102, 32, %s2104, [#allocation3]
    $region25: #{cnn_classifier_forward.5} parent=1 // pred_fallthru
      _
    // Predicated region
    $region26: #{cnn_classifier_forward.5} parent=1 // pred_check
      _
    $region27: #{cnn_classifier_forward.5} parent=1 // pred_check_branch
      %2108 = sbr.rel (0) target = $region29
    $region28: #{cnn_classifier_forward.5} parent=1 // pred_region
      %2110 = dma.done [#allocation3], 32
    $region29: #{cnn_classifier_forward.5} parent=1 // pred_fallthru
      _
    %2111 = vsyncpa [#allocation3], 1

// kernel: cnn_classifier_forward.3
$region0: #{cnn_classifier_forward.3}
  #allocation0 [shape = 'u32[]', space=smem, size = 0x4, offset = 0x4, fixed_abs, tag = 'smem constant byte address 0x4 - core index']
  #allocation1 [shape = 'u32[72,128]{1,0:T(1,128)}', space=vmem, size = 0x9000, scoped, tag = 'internal scratch']
  #allocation2 [shape = 'f32[756,128]{1,0:T(8,128)}', space=vmem, size = 0x5f000, scoped, tag = 'scratch operand']
  %s0 = inlined_call_operand.vmem [shape: f32[2,800,1], index: 0, kind: input, shape index: {}]
  %s1 = inlined_call_operand.vmem [shape: f32[9,128], index: 1, kind: input, shape index: {}]
  %s2 = inlined_call_operand.vmem [shape: f32[1,128], index: 2, kind: input, shape index: {}]
  %s3 = inlined_call_operand.vmem [shape: bf16[2,176,128], index: 3, kind: output, shape index: {}]
  %s4 = sld [smem:[#allocation0]]
  $region45: #{cnn_classifier_forward.3} parent=0
    _
  %s6 = ssub.s32 1, %s4
  %s7 = scalar_select 0, %s6, %s4
  loop: start=0, step=1, limit=4
  $region2: #{cnn_classifier_forward.3} parent=0 // loop_pre_header
    _
  $region3: #{cnn_classifier_forward.3} parent=0 // loop_header
    %s9 = sphi 0, %s13
    %p10 = scmp.ge.s32.totalorder %s9, 4
    %s19 = sphi 0, %s21
    %s22 = sphi 0, %s19
    %s23 = sphi 0, %s22
    %s39 = sphi 0, %s23
    %s43 = sphi 0, %s43
    %s45 = sphi 0, %s43
    %s46 = sphi 0, %s45
    %s60 = sphi 0, %s46
    %s64 = sphi 0, %s64
    %s66 = sphi 0, %s64
    %s67 = sphi 0, %s66
    %s81 = sphi 0, %s67
    %s87 = sphi 0, %s89
    %s90 = sphi 0, %s87
    %s91 = sphi 0, %s90
    %s107 = sphi 0, %s91
  $region4: #{cnn_classifier_forward.3} parent=0 // loop_header_branch
    %12 = sbr.rel (%p10) target = $region8
  $region5: #{cnn_classifier_forward.3} parent=0 // loop_body
    %s14 = ssub.s32 %s9, 1
    %s15 = ssub.s32 %s9, 2
    %s16 = sadd.s32 %s9, 1
    %s17 = ssub.s32 %s9, %s16
    %p18 = scmp.eq.s32.totalorder %s17, 0
    %s20 = sadd.s32 %s19, 1
    %s21 = scalar_select %p18, %s19, %s20
    %p24 = pneg %p18
    %p25 = scmp.eq.s32.totalorder %s9, 1
    %p26 = por %p24, %p25
    %p27 = scmp.ne.s32.totalorder %s19, %s22
    %p28 = scmp.eq.s32.totalorder %s9, 0
    %p29 = por %p27, %p28
    %p30 = scmp.ne.s32.totalorder %s19, %s22
    %p31 = scmp.eq.s32.totalorder %s14, 1
    %p32 = por %p30, %p31
    %p33 = scmp.ne.s32.totalorder %s22, %s23
    %p34 = scmp.eq.s32.totalorder %s14, 0
    %p35 = por %p33, %p34
    %p36 = scmp.ne.s32.totalorder %s22, %s23
    %p37 = scmp.eq.s32.totalorder %s15, 1
    %p38 = por %p36, %p37
    %p40 = scmp.ne.s32.totalorder %s23, %s39
    %p41 = scmp.eq.s32.totalorder %s15, 0
    %p42 = por %p40, %p41
    %s44 = sadd.s32 %s43, 1
    %p47 = scmp.eq.s32.totalorder %s9, 1
    %p48 = scmp.ne.s32.totalorder %s43, %s45
    %p49 = scmp.eq.s32.totalorder %s9, 0
    %p50 = por %p48, %p49
    %p51 = scmp.ne.s32.totalorder %s43, %s45
    %p52 = scmp.eq.s32.totalorder %s14, 1
    %p53 = por %p51, %p52
    %p54 = scmp.ne.s32.totalorder %s45, %s46
    %p55 = scmp.eq.s32.totalorder %s14, 0
    %p56 = por %p54, %p55
    %p57 = scmp.ne.s32.totalorder %s45, %s46
    %p58 = scmp.eq.s32.totalorder %s15, 1
    %p59 = por %p57, %p58
    %p61 = scmp.ne.s32.totalorder %s46, %s60
    %p62 = scmp.eq.s32.totalorder %s15, 0
    %p63 = por %p61, %p62
    %s65 = sadd.s32 %s64, 1
    %p68 = scmp.eq.s32.totalorder %s9, 1
    %p69 = scmp.ne.s32.totalorder %s64, %s66
    %p70 = scmp.eq.s32.totalorder %s9, 0
    %p71 = por %p69, %p70
    %p72 = scmp.ne.s32.totalorder %s64, %s66
    %p73 = scmp.eq.s32.totalorder %s14, 1
    %p74 = por %p72, %p73
    %p75 = scmp.ne.s32.totalorder %s66, %s67
    %p76 = scmp.eq.s32.totalorder %s14, 0
    %p77 = por %p75, %p76
    %p78 = scmp.ne.s32.totalorder %s66, %s67
    %p79 = scmp.eq.s32.totalorder %s15, 1
    %p80 = por %p78, %p79
    %p82 = scmp.ne.s32.totalorder %s67, %s81
    %p83 = scmp.eq.s32.totalorder %s15, 0
    %p84 = por %p82, %p83
    %s85 = ssub.s32 %s9, %s16
    %p86 = scmp.eq.s32.totalorder %s85, 0
    %s88 = sadd.s32 %s87, 1
    %s89 = scalar_select %p86, %s87, %s88
    %p92 = pneg %p86
    %p93 = scmp.eq.s32.totalorder %s9, 1
    %p94 = por %p92, %p93
    %p95 = scmp.ne.s32.totalorder %s87, %s90
    %p96 = scmp.eq.s32.totalorder %s9, 0
    %p97 = por %p95, %p96
    %p98 = scmp.ne.s32.totalorder %s87, %s90
    %p99 = scmp.eq.s32.totalorder %s14, 1
    %p100 = por %p98, %p99
    %p101 = scmp.ne.s32.totalorder %s90, %s91
    %p102 = scmp.eq.s32.totalorder %s14, 0
    %p103 = por %p101, %p102
    %p104 = scmp.ne.s32.totalorder %s90, %s91
    %p105 = scmp.eq.s32.totalorder %s15, 1
    %p106 = por %p104, %p105
    %p108 = scmp.ne.s32.totalorder %s91, %s107
    %p109 = scmp.eq.s32.totalorder %s15, 0
    %p110 = por %p108, %p109
    %p111 = scmp.le.s32.totalorder 1, %s9
    %p112 = scmp.lt.s32.totalorder %s9, 3
    %p113 = pnand %p111, %p112
    %p114 = pneg %p113
    // Predicated region
    $region9: #{cnn_classifier_forward.3} parent=5 // pred_check
      _
    $region10: #{cnn_classifier_forward.3} parent=5 // pred_check_branch
      %116 = sbr.rel (%p113) target = $region12
    $region11: #{cnn_classifier_forward.3} parent=5 // pred_region
      %s117 = ssub.s32 %s9, 1
      // Predicated region
      $region13: #{cnn_classifier_forward.3} parent=11 // pred_check
        %p118 = pneg %p56
      $region14: #{cnn_classifier_forward.3} parent=11 // pred_check_branch
        %120 = sbr.rel (%p118) target = $region16
      $region15: #{cnn_classifier_forward.3} parent=11 // pred_region
        _
      $region16: #{cnn_classifier_forward.3} parent=11 // pred_fallthru
        _
      // Predicated region
      $region17: #{cnn_classifier_forward.3} parent=11 // pred_check
        %p121 = pneg %p77
      $region18: #{cnn_classifier_forward.3} parent=11 // pred_check_branch
        %123 = sbr.rel (%p121) target = $region20
      $region19: #{cnn_classifier_forward.3} parent=11 // pred_region
        _
      $region20: #{cnn_classifier_forward.3} parent=11 // pred_fallthru
        _
    $region12: #{cnn_classifier_forward.3} parent=5 // pred_fallthru
      _
    %p124 = scmp.lt.s32.totalorder %s9, 2
    // Predicated region
    $region21: #{cnn_classifier_forward.3} parent=5 // pred_check
      %p125 = pneg %p124
    $region22: #{cnn_classifier_forward.3} parent=5 // pred_check_branch
      %127 = sbr.rel (%p125) target = $region24
    $region23: #{cnn_classifier_forward.3} parent=5 // pred_region
      // Predicated region
      $region25: #{cnn_classifier_forward.3} parent=23 // pred_check
        %p128 = pneg %p29
      $region26: #{cnn_classifier_forward.3} parent=23 // pred_check_branch
        %130 = sbr.rel (%p128) target = $region28
      $region27: #{cnn_classifier_forward.3} parent=23 // pred_region
        %p131 = scmp.lt.s32.totalorder %s9, 1
        %s132 = scalar_select %p131, %s9, 1
        %s133 = smul.addr %s132, 100
        %s134 = smul.addr %s133, 8
        %s135 = scalar_lea.vmem %s0, %s134
      $region28: #{cnn_classifier_forward.3} parent=23 // pred_fallthru
        _
    $region24: #{cnn_classifier_forward.3} parent=5 // pred_fallthru
      _
    %p136 = scmp.le.s32.totalorder 1, %s9
    %p137 = scmp.lt.s32.totalorder %s9, 3
    %p138 = pnand %p136, %p137
    %p139 = pneg %p138
    // Predicated region
    $region29: #{cnn_classifier_forward.3} parent=5 // pred_check
      _
    $region30: #{cnn_classifier_forward.3} parent=5 // pred_check_branch
      %141 = sbr.rel (%p138) target = $region32
    $region31: #{cnn_classifier_forward.3} parent=5 // pred_region
      %s142 = ssub.s32 %s9, 1
      %p143 = scmp.lt.s32.totalorder %s14, 1
      %s144 = scalar_select %p143, %s14, 1
      %s145 = smul.addr %s144, 100
      %s146 = smul.addr %s145, 8
      %s147 = scalar_lea.vmem %s0, %s146
      %p148 = pneg %p35
      %p149 = pneg %p32
      %p150 = pneg %p56
      %p151 = pneg %p53
      %p152 = pneg %p77
      %p153 = pneg %p74
      %p154 = pneg %p103
      %p155 = pneg %p100
      %p156 = scmp.lt.s32.totalorder %s14, 1
      %s157 = scalar_select %p156, %s14, 1
      %s158 = smul.addr %s157, 22
      %s159 = smul.addr %s158, 4
      %s160 = scalar_lea.vmem %s3, %s159
      %p161 = scmp.lt.s32.totalorder %s14, 1
      %s162 = scalar_select %p161, %s14, 1
      %s163 = smul.addr %s162, 100
      %s164 = smul.addr %s163, 8
      %s165 = scalar_lea.vmem %s0, %s164
      %p166 = scmp.lt.s32.totalorder %s14, 1
      %s167 = scalar_select %p166, %s14, 1
      %s168 = smul.addr %s167, 22
      %s169 = smul.addr %s168, 4
      %s170 = scalar_lea.vmem %s3, %s169
      %v172 = vld [vmem:[%s165] sm:$0xff]
      %v173 = vld [vmem:[%s165 + $0x8] sm:$0xff]
      %v174 = vld [vmem:[%s165 + $0x10] sm:$0xff]
      %v175 = vld [vmem:[%s165 + $0x18] sm:$0xff]
      %v176 = vld [vmem:[%s165 + $0x20] sm:$0xff]
      %v177 = vld [vmem:[%s165 + $0x28] sm:$0xff]
      %v178 = vld [vmem:[%s165 + $0x30] sm:$0xff]
      %v179 = vld [vmem:[%s165 + $0x38] sm:$0xff]
      %v180 = vld [vmem:[%s165 + $0x40] sm:$0xff]
      %v181 = vld [vmem:[%s165 + $0x48] sm:$0xff]
      %v182 = vld [vmem:[%s165 + $0x50] sm:$0xff]
      %v183 = vld [vmem:[%s165 + $0x58] sm:$0xff]
      %v184 = vld [vmem:[%s165 + $0x60] sm:$0xff]
      %v185 = vld [vmem:[%s165 + $0x68] sm:$0xff]
      %v186 = vld [vmem:[%s165 + $0x70] sm:$0xff]
      %v187 = vld [vmem:[%s165 + $0x78] sm:$0xff]
      %v188 = vld [vmem:[%s165 + $0x80] sm:$0xff]
      %v189 = vld [vmem:[%s165 + $0x88] sm:$0xff]
      %v190 = vld [vmem:[%s165 + $0x90] sm:$0xff]
      %v191 = vld [vmem:[%s165 + $0x98] sm:$0xff]
      %v192 = vld [vmem:[%s165 + $0xa0] sm:$0xff]
      %v193 = vld [vmem:[%s165 + $0xa8] sm:$0xff]
      %v194 = vld [vmem:[%s165 + $0xb0] sm:$0xff]
      %v195 = vld [vmem:[%s165 + $0xb8] sm:$0xff]
      %v196 = vld [vmem:[%s165 + $0xc0] sm:$0xff]
      %v197 = vld [vmem:[%s165 + $0xc8] sm:$0xff]
      %v198 = vld [vmem:[%s165 + $0xd0] sm:$0xff]
      %v199 = vld [vmem:[%s165 + $0xd8] sm:$0xff]
      %v200 = vld [vmem:[%s165 + $0xe0] sm:$0xff]
      %v201 = vld [vmem:[%s165 + $0xe8] sm:$0xff]
      %v202 = vld [vmem:[%s165 + $0xf0] sm:$0xff]
      %v203 = vld [vmem:[%s165 + $0xf8] sm:$0xff]
      %v204 = vld [vmem:[%s165 + $0x100] sm:$0xff]
      %v205 = vld [vmem:[%s165 + $0x108] sm:$0xff]
      %v206 = vld [vmem:[%s165 + $0x110] sm:$0xff]
      %v207 = vld [vmem:[%s165 + $0x118] sm:$0xff]
      %v208 = vld [vmem:[%s165 + $0x120] sm:$0xff]
      %v209 = vld [vmem:[%s165 + $0x128] sm:$0xff]
      %v210 = vld [vmem:[%s165 + $0x130] sm:$0xff]
      %v211 = vld [vmem:[%s165 + $0x138] sm:$0xff]
      %v212 = vld [vmem:[%s165 + $0x140] sm:$0xff]
      %v213 = vld [vmem:[%s165 + $0x148] sm:$0xff]
      %v214 = vld [vmem:[%s165 + $0x150] sm:$0xff]
      %v215 = vld [vmem:[%s165 + $0x158] sm:$0xff]
      %v216 = vld [vmem:[%s165 + $0x160] sm:$0xff]
      %v217 = vld [vmem:[%s165 + $0x168] sm:$0xff]
      %v218 = vld [vmem:[%s165 + $0x170] sm:$0xff]
      %v219 = vld [vmem:[%s165 + $0x178] sm:$0xff]
      %v220 = vld [vmem:[%s165 + $0x180] sm:$0xff]
      %v221 = vld [vmem:[%s165 + $0x188] sm:$0xff]
      %v222 = vld [vmem:[%s165 + $0x190] sm:$0xff]
      %v223 = vld [vmem:[%s165 + $0x198] sm:$0xff]
      %v224 = vld [vmem:[%s165 + $0x1a0] sm:$0xff]
      %v225 = vld [vmem:[%s165 + $0x1a8] sm:$0xff]
      %v226 = vld [vmem:[%s165 + $0x1b0] sm:$0xff]
      %v227 = vld [vmem:[%s165 + $0x1b8] sm:$0xff]
      %v228 = vld [vmem:[%s165 + $0x1c0] sm:$0xff]
      %v229 = vld [vmem:[%s165 + $0x1c8] sm:$0xff]
      %v230 = vld [vmem:[%s165 + $0x1d0] sm:$0xff]
      %v231 = vld [vmem:[%s165 + $0x1d8] sm:$0xff]
      %v232 = vld [vmem:[%s165 + $0x1e0] sm:$0xff]
      %v233 = vld [vmem:[%s165 + $0x1e8] sm:$0xff]
      %v234 = vld [vmem:[%s165 + $0x1f0] sm:$0xff]
      %v235 = vld [vmem:[%s165 + $0x1f8] sm:$0xff]
      %v236 = vld [vmem:[%s165 + $0x200] sm:$0xff]
      %v237 = vld [vmem:[%s165 + $0x208] sm:$0xff]
      %v238 = vld [vmem:[%s165 + $0x210] sm:$0xff]
      %v239 = vld [vmem:[%s165 + $0x218] sm:$0xff]
      %v240 = vld [vmem:[%s165 + $0x220] sm:$0xff]
      %v241 = vld [vmem:[%s165 + $0x228] sm:$0xff]
      %v242 = vld [vmem:[%s165 + $0x230] sm:$0xff]
      %v243 = vld [vmem:[%s165 + $0x238] sm:$0xff]
      %v244 = vld [vmem:[%s165 + $0x240] sm:$0xff]
      %v245 = vld [vmem:[%s165 + $0x248] sm:$0xff]
      %v246 = vld [vmem:[%s165 + $0x250] sm:$0xff]
      %v247 = vld [vmem:[%s165 + $0x258] sm:$0xff]
      %v248 = vld [vmem:[%s165 + $0x260] sm:$0xff]
      %v249 = vld [vmem:[%s165 + $0x268] sm:$0xff]
      %v250 = vld [vmem:[%s165 + $0x270] sm:$0xff]
      %v251 = vld [vmem:[%s165 + $0x278] sm:$0xff]
      %v252 = vld [vmem:[%s165 + $0x280] sm:$0xff]
      %v253 = vld [vmem:[%s165 + $0x288] sm:$0xff]
      %v254 = vld [vmem:[%s165 + $0x290] sm:$0xff]
      %v255 = vld [vmem:[%s165 + $0x298] sm:$0xff]
      %v256 = vld [vmem:[%s165 + $0x2a0] sm:$0xff]
      %v257 = vld [vmem:[%s165 + $0x2a8] sm:$0xff]
      %v258 = vld [vmem:[%s165 + $0x2b0] sm:$0xff]
      %v259 = vld [vmem:[%s165 + $0x2b8] sm:$0xff]
      %v260 = vld [vmem:[%s165 + $0x2c0] sm:$0xff]
      %v261 = vld [vmem:[%s165 + $0x2c8] sm:$0xff]
      %v262 = vld [vmem:[%s165 + $0x2d0] sm:$0xff]
      %v263 = vld [vmem:[%s1] sm:$0x1]
      %265 = vset.pattern.permute.xlu0 0
      %266 = vperm.xlu0 %265, %v172
      %v267 = vpop.permute.xlu0 %266
      %270 = vset.pattern.permute.xlu0 0
      %271 = vperm.xlu0 %270, %v173
      %v272 = vpop.permute.xlu0 %271
      %275 = vset.pattern.permute.xlu0 0
      %276 = vperm.xlu0 %275, %v174
      %v277 = vpop.permute.xlu0 %276
      %280 = vset.pattern.permute.xlu0 0
      %281 = vperm.xlu0 %280, %v175
      %v282 = vpop.permute.xlu0 %281
      %285 = vset.pattern.permute.xlu0 0
      %286 = vperm.xlu0 %285, %v176
      %v287 = vpop.permute.xlu0 %286
      %290 = vset.pattern.permute.xlu0 0
      %291 = vperm.xlu0 %290, %v177
      %v292 = vpop.permute.xlu0 %291
      %295 = vset.pattern.permute.xlu0 0
      %296 = vperm.xlu0 %295, %v178
      %v297 = vpop.permute.xlu0 %296
      %300 = vset.pattern.permute.xlu0 0
      %301 = vperm.xlu0 %300, %v179
      %v302 = vpop.permute.xlu0 %301
      %305 = vset.pattern.permute.xlu0 0
      %306 = vperm.xlu0 %305, %v180
      %v307 = vpop.permute.xlu0 %306
      %310 = vset.pattern.permute.xlu0 0
      %311 = vperm.xlu0 %310, %v181
      %v312 = vpop.permute.xlu0 %311
      %315 = vset.pattern.permute.xlu0 0
      %316 = vperm.xlu0 %315, %v182
      %v317 = vpop.permute.xlu0 %316
      %320 = vset.pattern.permute.xlu0 0
      %321 = vperm.xlu0 %320, %v183
      %v322 = vpop.permute.xlu0 %321
      %325 = vset.pattern.permute.xlu0 0
      %326 = vperm.xlu0 %325, %v184
      %v327 = vpop.permute.xlu0 %326
      %330 = vset.pattern.permute.xlu0 0
      %331 = vperm.xlu0 %330, %v185
      %v332 = vpop.permute.xlu0 %331
      %335 = vset.pattern.permute.xlu0 0
      %336 = vperm.xlu0 %335, %v186
      %v337 = vpop.permute.xlu0 %336
      %340 = vset.pattern.permute.xlu0 0
      %341 = vperm.xlu0 %340, %v187
      %v342 = vpop.permute.xlu0 %341
      %345 = vset.pattern.permute.xlu0 0
      %346 = vperm.xlu0 %345, %v188
      %v347 = vpop.permute.xlu0 %346
      %350 = vset.pattern.permute.xlu0 0
      %351 = vperm.xlu0 %350, %v189
      %v352 = vpop.permute.xlu0 %351
      %355 = vset.pattern.permute.xlu0 0
      %356 = vperm.xlu0 %355, %v190
      %v357 = vpop.permute.xlu0 %356
      %360 = vset.pattern.permute.xlu0 0
      %361 = vperm.xlu0 %360, %v191
      %v362 = vpop.permute.xlu0 %361
      %365 = vset.pattern.permute.xlu0 0
      %366 = vperm.xlu0 %365, %v192
      %v367 = vpop.permute.xlu0 %366
      %370 = vset.pattern.permute.xlu0 0
      %371 = vperm.xlu0 %370, %v193
      %v372 = vpop.permute.xlu0 %371
      %375 = vset.pattern.permute.xlu0 0
      %376 = vperm.xlu0 %375, %v194
      %v377 = vpop.permute.xlu0 %376
      %380 = vset.pattern.permute.xlu0 0
      %381 = vperm.xlu0 %380, %v195
      %v382 = vpop.permute.xlu0 %381
      %385 = vset.pattern.permute.xlu0 0
      %386 = vperm.xlu0 %385, %v196
      %v387 = vpop.permute.xlu0 %386
      %390 = vset.pattern.permute.xlu0 0
      %391 = vperm.xlu0 %390, %v197
      %v392 = vpop.permute.xlu0 %391
      %395 = vset.pattern.permute.xlu0 0
      %396 = vperm.xlu0 %395, %v198
      %v397 = vpop.permute.xlu0 %396
      %400 = vset.pattern.permute.xlu0 0
      %401 = vperm.xlu0 %400, %v199
      %v402 = vpop.permute.xlu0 %401
      %405 = vset.pattern.permute.xlu0 0
      %406 = vperm.xlu0 %405, %v200
      %v407 = vpop.permute.xlu0 %406
      %410 = vset.pattern.permute.xlu0 0
      %411 = vperm.xlu0 %410, %v201
      %v412 = vpop.permute.xlu0 %411
      %415 = vset.pattern.permute.xlu0 0
      %416 = vperm.xlu0 %415, %v202
      %v417 = vpop.permute.xlu0 %416
      %420 = vset.pattern.permute.xlu0 0
      %421 = vperm.xlu0 %420, %v203
      %v422 = vpop.permute.xlu0 %421
      %425 = vset.pattern.permute.xlu0 0
      %426 = vperm.xlu0 %425, %v204
      %v427 = vpop.permute.xlu0 %426
      %430 = vset.pattern.permute.xlu0 0
      %431 = vperm.xlu0 %430, %v205
      %v432 = vpop.permute.xlu0 %431
      %435 = vset.pattern.permute.xlu0 0
      %436 = vperm.xlu0 %435, %v206
      %v437 = vpop.permute.xlu0 %436
      %440 = vset.pattern.permute.xlu0 0
      %441 = vperm.xlu0 %440, %v207
      %v442 = vpop.permute.xlu0 %441
      %445 = vset.pattern.permute.xlu0 0
      %446 = vperm.xlu0 %445, %v208
      %v447 = vpop.permute.xlu0 %446
      %450 = vset.pattern.permute.xlu0 0
      %451 = vperm.xlu0 %450, %v209
      %v452 = vpop.permute.xlu0 %451
      %455 = vset.pattern.permute.xlu0 0
      %456 = vperm.xlu0 %455, %v210
      %v457 = vpop.permute.xlu0 %456
      %460 = vset.pattern.permute.xlu0 0
      %461 = vperm.xlu0 %460, %v211
      %v462 = vpop.permute.xlu0 %461
      %465 = vset.pattern.permute.xlu0 0
      %466 = vperm.xlu0 %465, %v212
      %v467 = vpop.permute.xlu0 %466
      %470 = vset.pattern.permute.xlu0 0
      %471 = vperm.xlu0 %470, %v213
      %v472 = vpop.permute.xlu0 %471
      %475 = vset.pattern.permute.xlu0 0
      %476 = vperm.xlu0 %475, %v214
      %v477 = vpop.permute.xlu0 %476
      %480 = vset.pattern.permute.xlu0 0
      %481 = vperm.xlu0 %480, %v215
      %v482 = vpop.permute.xlu0 %481
      %485 = vset.pattern.permute.xlu0 0
      %486 = vperm.xlu0 %485, %v216
      %v487 = vpop.permute.xlu0 %486
      %490 = vset.pattern.permute.xlu0 0
      %491 = vperm.xlu0 %490, %v217
      %v492 = vpop.permute.xlu0 %491
      %495 = vset.pattern.permute.xlu0 0
      %496 = vperm.xlu0 %495, %v218
      %v497 = vpop.permute.xlu0 %496
      %500 = vset.pattern.permute.xlu0 0
      %501 = vperm.xlu0 %500, %v219
      %v502 = vpop.permute.xlu0 %501
      %505 = vset.pattern.permute.xlu0 0
      %506 = vperm.xlu0 %505, %v220
      %v507 = vpop.permute.xlu0 %506
      %510 = vset.pattern.permute.xlu0 0
      %511 = vperm.xlu0 %510, %v221
      %v512 = vpop.permute.xlu0 %511
      %515 = vset.pattern.permute.xlu0 0
      %516 = vperm.xlu0 %515, %v222
      %v517 = vpop.permute.xlu0 %516
      %520 = vset.pattern.permute.xlu0 0
      %521 = vperm.xlu0 %520, %v223
      %v522 = vpop.permute.xlu0 %521
      %525 = vset.pattern.permute.xlu0 0
      %526 = vperm.xlu0 %525, %v224
      %v527 = vpop.permute.xlu0 %526
      %530 = vset.pattern.permute.xlu0 0
      %531 = vperm.xlu0 %530, %v225
      %v532 = vpop.permute.xlu0 %531
      %535 = vset.pattern.permute.xlu0 0
      %536 = vperm.xlu0 %535, %v226
      %v537 = vpop.permute.xlu0 %536
      %540 = vset.pattern.permute.xlu0 0
      %541 = vperm.xlu0 %540, %v227
      %v542 = vpop.permute.xlu0 %541
      %545 = vset.pattern.permute.xlu0 0
      %546 = vperm.xlu0 %545, %v228
      %v547 = vpop.permute.xlu0 %546
      %550 = vset.pattern.permute.xlu0 0
      %551 = vperm.xlu0 %550, %v229
      %v552 = vpop.permute.xlu0 %551
      %555 = vset.pattern.permute.xlu0 0
      %556 = vperm.xlu0 %555, %v230
      %v557 = vpop.permute.xlu0 %556
      %560 = vset.pattern.permute.xlu0 0
      %561 = vperm.xlu0 %560, %v231
      %v562 = vpop.permute.xlu0 %561
      %565 = vset.pattern.permute.xlu0 0
      %566 = vperm.xlu0 %565, %v232
      %v567 = vpop.permute.xlu0 %566
      %570 = vset.pattern.permute.xlu0 0
      %571 = vperm.xlu0 %570, %v233
      %v572 = vpop.permute.xlu0 %571
      %575 = vset.pattern.permute.xlu0 0
      %576 = vperm.xlu0 %575, %v234
      %v577 = vpop.permute.xlu0 %576
      %580 = vset.pattern.permute.xlu0 0
      %581 = vperm.xlu0 %580, %v235
      %v582 = vpop.permute.xlu0 %581
      %585 = vset.pattern.permute.xlu0 0
      %586 = vperm.xlu0 %585, %v236
      %v587 = vpop.permute.xlu0 %586
      %590 = vset.pattern.permute.xlu0 0
      %591 = vperm.xlu0 %590, %v237
      %v592 = vpop.permute.xlu0 %591
      %595 = vset.pattern.permute.xlu0 0
      %596 = vperm.xlu0 %595, %v238
      %v597 = vpop.permute.xlu0 %596
      %600 = vset.pattern.permute.xlu0 0
      %601 = vperm.xlu0 %600, %v239
      %v602 = vpop.permute.xlu0 %601
      %605 = vset.pattern.permute.xlu0 0
      %606 = vperm.xlu0 %605, %v240
      %v607 = vpop.permute.xlu0 %606
      %610 = vset.pattern.permute.xlu0 0
      %611 = vperm.xlu0 %610, %v241
      %v612 = vpop.permute.xlu0 %611
      %615 = vset.pattern.permute.xlu0 0
      %616 = vperm.xlu0 %615, %v242
      %v617 = vpop.permute.xlu0 %616
      %620 = vset.pattern.permute.xlu0 0
      %621 = vperm.xlu0 %620, %v243
      %v622 = vpop.permute.xlu0 %621
      %625 = vset.pattern.permute.xlu0 0
      %626 = vperm.xlu0 %625, %v244
      %v627 = vpop.permute.xlu0 %626
      %630 = vset.pattern.permute.xlu0 0
      %631 = vperm.xlu0 %630, %v245
      %v632 = vpop.permute.xlu0 %631
      %635 = vset.pattern.permute.xlu0 0
      %636 = vperm.xlu0 %635, %v246
      %v637 = vpop.permute.xlu0 %636
      %640 = vset.pattern.permute.xlu0 0
      %641 = vperm.xlu0 %640, %v247
      %v642 = vpop.permute.xlu0 %641
      %645 = vset.pattern.permute.xlu0 0
      %646 = vperm.xlu0 %645, %v248
      %v647 = vpop.permute.xlu0 %646
      %650 = vset.pattern.permute.xlu0 0
      %651 = vperm.xlu0 %650, %v249
      %v652 = vpop.permute.xlu0 %651
      %655 = vset.pattern.permute.xlu0 0
      %656 = vperm.xlu0 %655, %v250
      %v657 = vpop.permute.xlu0 %656
      %660 = vset.pattern.permute.xlu0 0
      %661 = vperm.xlu0 %660, %v251
      %v662 = vpop.permute.xlu0 %661
      %665 = vset.pattern.permute.xlu0 0
      %666 = vperm.xlu0 %665, %v252
      %v667 = vpop.permute.xlu0 %666
      %670 = vset.pattern.permute.xlu0 0
      %671 = vperm.xlu0 %670, %v253
      %v672 = vpop.permute.xlu0 %671
      %675 = vset.pattern.permute.xlu0 0
      %676 = vperm.xlu0 %675, %v254
      %v677 = vpop.permute.xlu0 %676
      %680 = vset.pattern.permute.xlu0 0
      %681 = vperm.xlu0 %680, %v255
      %v682 = vpop.permute.xlu0 %681
      %685 = vset.pattern.permute.xlu0 0
      %686 = vperm.xlu0 %685, %v256
      %v687 = vpop.permute.xlu0 %686
      %690 = vset.pattern.permute.xlu0 0
      %691 = vperm.xlu0 %690, %v257
      %v692 = vpop.permute.xlu0 %691
      %695 = vset.pattern.permute.xlu0 0
      %696 = vperm.xlu0 %695, %v258
      %v697 = vpop.permute.xlu0 %696
      %700 = vset.pattern.permute.xlu0 0
      %701 = vperm.xlu0 %700, %v259
      %v702 = vpop.permute.xlu0 %701
      %705 = vset.pattern.permute.xlu0 0
      %706 = vperm.xlu0 %705, %v260
      %v707 = vpop.permute.xlu0 %706
      %710 = vset.pattern.permute.xlu0 0
      %711 = vperm.xlu0 %710, %v261
      %v712 = vpop.permute.xlu0 %711
      %715 = vset.pattern.permute.xlu0 0
      %716 = vperm.xlu0 %715, %v262
      %v717 = vpop.permute.xlu0 %716
      %v719 = vperm.slane %v263, 0
      %v720 = vmul.f32 %v267, %v719
      %v721 = vmul.f32 %v272, %v719
      %v722 = vmul.f32 %v277, %v719
      %v723 = vmul.f32 %v282, %v719
      %v724 = vmul.f32 %v287, %v719
      %v725 = vmul.f32 %v292, %v719
      %v726 = vmul.f32 %v297, %v719
      %v727 = vmul.f32 %v302, %v719
      %v728 = vmul.f32 %v307, %v719
      %v729 = vmul.f32 %v312, %v719
      %v730 = vmul.f32 %v317, %v719
      %v731 = vmul.f32 %v322, %v719
      %v732 = vmul.f32 %v327, %v719
      %v733 = vmul.f32 %v332, %v719
      %v734 = vmul.f32 %v337, %v719
      %v735 = vmul.f32 %v342, %v719
      %v736 = vmul.f32 %v347, %v719
      %v737 = vmul.f32 %v352, %v719
      %v738 = vmul.f32 %v357, %v719
      %v739 = vmul.f32 %v362, %v719
      %v740 = vmul.f32 %v367, %v719
      %v741 = vmul.f32 %v372, %v719
      %v742 = vmul.f32 %v377, %v719
      %v743 = vmul.f32 %v382, %v719
      %v744 = vmul.f32 %v387, %v719
      %v745 = vmul.f32 %v392, %v719
      %v746 = vmul.f32 %v397, %v719
      %v747 = vmul.f32 %v402, %v719
      %v748 = vmul.f32 %v407, %v719
      %v749 = vmul.f32 %v412, %v719
      %v750 = vmul.f32 %v417, %v719
      %v751 = vmul.f32 %v422, %v719
      %v752 = vmul.f32 %v427, %v719
      %v753 = vmul.f32 %v432, %v719
      %v754 = vmul.f32 %v437, %v719
      %v755 = vmul.f32 %v442, %v719
      %v756 = vmul.f32 %v447, %v719
      %v757 = vmul.f32 %v452, %v719
      %v758 = vmul.f32 %v457, %v719
      %v759 = vmul.f32 %v462, %v719
      %v760 = vmul.f32 %v467, %v719
      %v761 = vmul.f32 %v472, %v719
      %v762 = vmul.f32 %v477, %v719
      %v763 = vmul.f32 %v482, %v719
      %v764 = vmul.f32 %v487, %v719
      %v765 = vmul.f32 %v492, %v719
      %v766 = vmul.f32 %v497, %v719
      %v767 = vmul.f32 %v502, %v719
      %v768 = vmul.f32 %v507, %v719
      %v769 = vmul.f32 %v512, %v719
      %v770 = vmul.f32 %v517, %v719
      %v771 = vmul.f32 %v522, %v719
      %v772 = vmul.f32 %v527, %v719
      %v773 = vmul.f32 %v532, %v719
      %v774 = vmul.f32 %v537, %v719
      %v775 = vmul.f32 %v542, %v719
      %v776 = vmul.f32 %v547, %v719
      %v777 = vmul.f32 %v552, %v719
      %v778 = vmul.f32 %v557, %v719
      %v779 = vmul.f32 %v562, %v719
      %v780 = vmul.f32 %v567, %v719
      %v781 = vmul.f32 %v572, %v719
      %v782 = vmul.f32 %v577, %v719
      %v783 = vmul.f32 %v582, %v719
      %v784 = vmul.f32 %v587, %v719
      %v785 = vmul.f32 %v592, %v719
      %v786 = vmul.f32 %v597, %v719
      %v787 = vmul.f32 %v602, %v719
      %v788 = vmul.f32 %v607, %v719
      %v789 = vmul.f32 %v612, %v719
      %v790 = vmul.f32 %v617, %v719
      %v791 = vmul.f32 %v622, %v719
      %v792 = vmul.f32 %v627, %v719
      %v793 = vmul.f32 %v632, %v719
      %v794 = vmul.f32 %v637, %v719
      %v795 = vmul.f32 %v642, %v719
      %v796 = vmul.f32 %v647, %v719
      %v797 = vmul.f32 %v652, %v719
      %v798 = vmul.f32 %v657, %v719
      %v799 = vmul.f32 %v662, %v719
      %v800 = vmul.f32 %v667, %v719
      %v801 = vmul.f32 %v672, %v719
      %v802 = vmul.f32 %v677, %v719
      %v803 = vmul.f32 %v682, %v719
      %v804 = vmul.f32 %v687, %v719
      %v805 = vmul.f32 %v692, %v719
      %v806 = vmul.f32 %v697, %v719
      %v807 = vmul.f32 %v702, %v719
      %v808 = vmul.f32 %v707, %v719
      %v809 = vmul.f32 %v712, %v719
      %v810 = vmul.f32 %v717, %v719
      %v811 = vadd.f32 %v720, 0.0
      %v812 = vadd.f32 %v721, 0.0
      %v813 = vadd.f32 %v722, 0.0
      %v814 = vadd.f32 %v723, 0.0
      %v815 = vadd.f32 %v724, 0.0
      %v816 = vadd.f32 %v725, 0.0
      %v817 = vadd.f32 %v726, 0.0
      %v818 = vadd.f32 %v727, 0.0
      %v819 = vadd.f32 %v728, 0.0
      %v820 = vadd.f32 %v729, 0.0
      %v821 = vadd.f32 %v730, 0.0
      %v822 = vadd.f32 %v731, 0.0
      %v823 = vadd.f32 %v732, 0.0
      %v824 = vadd.f32 %v733, 0.0
      %v825 = vadd.f32 %v734, 0.0
      %v826 = vadd.f32 %v735, 0.0
      %v827 = vadd.f32 %v736, 0.0
      %v828 = vadd.f32 %v737, 0.0
      %v829 = vadd.f32 %v738, 0.0
      %v830 = vadd.f32 %v739, 0.0
      %v831 = vadd.f32 %v740, 0.0
      %v832 = vadd.f32 %v741, 0.0
      %v833 = vadd.f32 %v742, 0.0
      %v834 = vadd.f32 %v743, 0.0
      %v835 = vadd.f32 %v744, 0.0
      %v836 = vadd.f32 %v745, 0.0
      %v837 = vadd.f32 %v746, 0.0
      %v838 = vadd.f32 %v747, 0.0
      %v839 = vadd.f32 %v748, 0.0
      %v840 = vadd.f32 %v749, 0.0
      %v841 = vadd.f32 %v750, 0.0
      %v842 = vadd.f32 %v751, 0.0
      %v843 = vadd.f32 %v752, 0.0
      %v844 = vadd.f32 %v753, 0.0
      %v845 = vadd.f32 %v754, 0.0
      %v846 = vadd.f32 %v755, 0.0
      %v847 = vadd.f32 %v756, 0.0
      %v848 = vadd.f32 %v757, 0.0
      %v849 = vadd.f32 %v758, 0.0
      %v850 = vadd.f32 %v759, 0.0
      %v851 = vadd.f32 %v760, 0.0
      %v852 = vadd.f32 %v761, 0.0
      %v853 = vadd.f32 %v762, 0.0
      %v854 = vadd.f32 %v763, 0.0
      %v855 = vadd.f32 %v764, 0.0
      %v856 = vadd.f32 %v765, 0.0
      %v857 = vadd.f32 %v766, 0.0
      %v858 = vadd.f32 %v767, 0.0
      %v859 = vadd.f32 %v768, 0.0
      %v860 = vadd.f32 %v769, 0.0
      %v861 = vadd.f32 %v770, 0.0
      %v862 = vadd.f32 %v771, 0.0
      %v863 = vadd.f32 %v772, 0.0
      %v864 = vadd.f32 %v773, 0.0
      %v865 = vadd.f32 %v774, 0.0
      %v866 = vadd.f32 %v775, 0.0
      %v867 = vadd.f32 %v776, 0.0
      %v868 = vadd.f32 %v777, 0.0
      %v869 = vadd.f32 %v778, 0.0
      %v870 = vadd.f32 %v779, 0.0
      %v871 = vadd.f32 %v780, 0.0
      %v872 = vadd.f32 %v781, 0.0
      %v873 = vadd.f32 %v782, 0.0
      %v874 = vadd.f32 %v783, 0.0
      %v875 = vadd.f32 %v784, 0.0
      %v876 = vadd.f32 %v785, 0.0
      %v877 = vadd.f32 %v786, 0.0
      %v878 = vadd.f32 %v787, 0.0
      %v879 = vadd.f32 %v788, 0.0
      %v880 = vadd.f32 %v789, 0.0
      %v881 = vadd.f32 %v790, 0.0
      %v882 = vadd.f32 %v791, 0.0
      %v883 = vadd.f32 %v792, 0.0
      %v884 = vadd.f32 %v793, 0.0
      %v885 = vadd.f32 %v794, 0.0
      %v886 = vadd.f32 %v795, 0.0
      %v887 = vadd.f32 %v796, 0.0
      %v888 = vadd.f32 %v797, 0.0
      %v889 = vadd.f32 %v798, 0.0
      %v890 = vadd.f32 %v799, 0.0
      %v891 = vadd.f32 %v800, 0.0
      %v892 = vadd.f32 %v801, 0.0
      %v893 = vadd.f32 %v802, 0.0
      %v894 = vadd.f32 %v803, 0.0
      %v895 = vadd.f32 %v804, 0.0
      %v896 = vadd.f32 %v805, 0.0
      %v897 = vadd.f32 %v806, 0.0
      %v898 = vadd.f32 %v807, 0.0
      %v899 = vadd.f32 %v808, 0.0
      %v900 = vadd.f32 %v809, 0.0
      %v901 = vadd.f32 %v810, 0.0
      %v902 = vld [vmem:[%s165 + $0x1] sm:$0xff]
      %v903 = vld [vmem:[%s165 + $0x9] sm:$0xff]
      %v904 = vld [vmem:[%s165 + $0x11] sm:$0xff]
      %v905 = vld [vmem:[%s165 + $0x19] sm:$0xff]
      %v906 = vld [vmem:[%s165 + $0x21] sm:$0xff]
      %v907 = vld [vmem:[%s165 + $0x29] sm:$0xff]
      %v908 = vld [vmem:[%s165 + $0x31] sm:$0xff]
      %v909 = vld [vmem:[%s165 + $0x39] sm:$0xff]
      %v910 = vld [vmem:[%s165 + $0x41] sm:$0xff]
      %v911 = vld [vmem:[%s165 + $0x49] sm:$0xff]
      %v912 = vld [vmem:[%s165 + $0x51] sm:$0xff]
      %v913 = vld [vmem:[%s165 + $0x59] sm:$0xff]
      %v914 = vld [vmem:[%s165 + $0x61] sm:$0xff]
      %v915 = vld [vmem:[%s165 + $0x69] sm:$0xff]
      %v916 = vld [vmem:[%s165 + $0x71] sm:$0xff]
      %v917 = vld [vmem:[%s165 + $0x79] sm:$0xff]
      %v918 = vld [vmem:[%s165 + $0x81] sm:$0xff]
      %v919 = vld [vmem:[%s165 + $0x89] sm:$0xff]
      %v920 = vld [vmem:[%s165 + $0x91] sm:$0xff]
      %v921 = vld [vmem:[%s165 + $0x99] sm:$0xff]
      %v922 = vld [vmem:[%s165 + $0xa1] sm:$0xff]
      %v923 = vld [vmem:[%s165 + $0xa9] sm:$0xff]
      %v924 = vld [vmem:[%s165 + $0xb1] sm:$0xff]
      %v925 = vld [vmem:[%s165 + $0xb9] sm:$0xff]
      %v926 = vld [vmem:[%s165 + $0xc1] sm:$0xff]
      %v927 = vld [vmem:[%s165 + $0xc9] sm:$0xff]
      %v928 = vld [vmem:[%s165 + $0xd1] sm:$0xff]
      %v929 = vld [vmem:[%s165 + $0xd9] sm:$0xff]
      %v930 = vld [vmem:[%s165 + $0xe1] sm:$0xff]
      %v931 = vld [vmem:[%s165 + $0xe9] sm:$0xff]
      %v932 = vld [vmem:[%s165 + $0xf1] sm:$0xff]
      %v933 = vld [vmem:[%s165 + $0xf9] sm:$0xff]
      %v934 = vld [vmem:[%s165 + $0x101] sm:$0xff]
      %v935 = vld [vmem:[%s165 + $0x109] sm:$0xff]
      %v936 = vld [vmem:[%s165 + $0x111] sm:$0xff]
      %v937 = vld [vmem:[%s165 + $0x119] sm:$0xff]
      %v938 = vld [vmem:[%s165 + $0x121] sm:$0xff]
      %v939 = vld [vmem:[%s165 + $0x129] sm:$0xff]
      %v940 = vld [vmem:[%s165 + $0x131] sm:$0xff]
      %v941 = vld [vmem:[%s165 + $0x139] sm:$0xff]
      %v942 = vld [vmem:[%s165 + $0x141] sm:$0xff]
      %v943 = vld [vmem:[%s165 + $0x149] sm:$0xff]
      %v944 = vld [vmem:[%s165 + $0x151] sm:$0xff]
      %v945 = vld [vmem:[%s165 + $0x159] sm:$0xff]
      %v946 = vld [vmem:[%s165 + $0x161] sm:$0xff]
      %v947 = vld [vmem:[%s165 + $0x169] sm:$0xff]
      %v948 = vld [vmem:[%s165 + $0x171] sm:$0xff]
      %v949 = vld [vmem:[%s165 + $0x179] sm:$0xff]
      %v950 = vld [vmem:[%s165 + $0x181] sm:$0xff]
      %v951 = vld [vmem:[%s165 + $0x189] sm:$0xff]
      %v952 = vld [vmem:[%s165 + $0x191] sm:$0xff]
      %v953 = vld [vmem:[%s165 + $0x199] sm:$0xff]
      %v954 = vld [vmem:[%s165 + $0x1a1] sm:$0xff]
      %v955 = vld [vmem:[%s165 + $0x1a9] sm:$0xff]
      %v956 = vld [vmem:[%s165 + $0x1b1] sm:$0xff]
      %v957 = vld [vmem:[%s165 + $0x1b9] sm:$0xff]
      %v958 = vld [vmem:[%s165 + $0x1c1] sm:$0xff]
      %v959 = vld [vmem:[%s165 + $0x1c9] sm:$0xff]
      %v960 = vld [vmem:[%s165 + $0x1d1] sm:$0xff]
      %v961 = vld [vmem:[%s165 + $0x1d9] sm:$0xff]
      %v962 = vld [vmem:[%s165 + $0x1e1] sm:$0xff]
      %v963 = vld [vmem:[%s165 + $0x1e9] sm:$0xff]
      %v964 = vld [vmem:[%s165 + $0x1f1] sm:$0xff]
      %v965 = vld [vmem:[%s165 + $0x1f9] sm:$0xff]
      %v966 = vld [vmem:[%s165 + $0x201] sm:$0xff]
      %v967 = vld [vmem:[%s165 + $0x209] sm:$0xff]
      %v968 = vld [vmem:[%s165 + $0x211] sm:$0xff]
      %v969 = vld [vmem:[%s165 + $0x219] sm:$0xff]
      %v970 = vld [vmem:[%s165 + $0x221] sm:$0xff]
      %v971 = vld [vmem:[%s165 + $0x229] sm:$0xff]
      %v972 = vld [vmem:[%s165 + $0x231] sm:$0xff]
      %v973 = vld [vmem:[%s165 + $0x239] sm:$0xff]
      %v974 = vld [vmem:[%s165 + $0x241] sm:$0xff]
      %v975 = vld [vmem:[%s165 + $0x249] sm:$0xff]
      %v976 = vld [vmem:[%s165 + $0x251] sm:$0xff]
      %v977 = vld [vmem:[%s165 + $0x259] sm:$0xff]
      %v978 = vld [vmem:[%s165 + $0x261] sm:$0xff]
      %v979 = vld [vmem:[%s165 + $0x269] sm:$0xff]
      %v980 = vld [vmem:[%s165 + $0x271] sm:$0xff]
      %v981 = vld [vmem:[%s165 + $0x279] sm:$0xff]
      %v982 = vld [vmem:[%s165 + $0x281] sm:$0xff]
      %v983 = vld [vmem:[%s165 + $0x289] sm:$0xff]
      %v984 = vld [vmem:[%s165 + $0x291] sm:$0xff]
      %v985 = vld [vmem:[%s165 + $0x299] sm:$0xff]
      %v986 = vld [vmem:[%s165 + $0x2a1] sm:$0xff]
      %v987 = vld [vmem:[%s165 + $0x2a9] sm:$0xff]
      %v988 = vld [vmem:[%s165 + $0x2b1] sm:$0xff]
      %v989 = vld [vmem:[%s165 + $0x2b9] sm:$0xff]
      %v990 = vld [vmem:[%s165 + $0x2c1] sm:$0xff]
      %v991 = vld [vmem:[%s165 + $0x2c9] sm:$0xff]
      %v992 = vld [vmem:[%s165 + $0x2d1] sm:$0xff]
      %v993 = vld [vmem:[%s1 + $0x1] sm:$0x1]
      %995 = vset.pattern.permute.xlu0 0
      %996 = vperm.xlu0 %995, %v902
      %v997 = vpop.permute.xlu0 %996
      %1000 = vset.pattern.permute.xlu0 0
      %1001 = vperm.xlu0 %1000, %v903
      %v1002 = vpop.permute.xlu0 %1001
      %1005 = vset.pattern.permute.xlu0 0
      %1006 = vperm.xlu0 %1005, %v904
      %v1007 = vpop.permute.xlu0 %1006
      %1010 = vset.pattern.permute.xlu0 0
      %1011 = vperm.xlu0 %1010, %v905
      %v1012 = vpop.permute.xlu0 %1011
      %1015 = vset.pattern.permute.xlu0 0
      %1016 = vperm.xlu0 %1015, %v906
      %v1017 = vpop.permute.xlu0 %1016
      %1020 = vset.pattern.permute.xlu0 0
      %1021 = vperm.xlu0 %1020, %v907
      %v1022 = vpop.permute.xlu0 %1021
      %1025 = vset.pattern.permute.xlu0 0
      %1026 = vperm.xlu0 %1025, %v908
      %v1027 = vpop.permute.xlu0 %1026
      %1030 = vset.pattern.permute.xlu0 0
      %1031 = vperm.xlu0 %1030, %v909
      %v1032 = vpop.permute.xlu0 %1031
      %1035 = vset.pattern.permute.xlu0 0
      %1036 = vperm.xlu0 %1035, %v910
      %v1037 = vpop.permute.xlu0 %1036
      %1040 = vset.pattern.permute.xlu0 0
      %1041 = vperm.xlu0 %1040, %v911
      %v1042 = vpop.permute.xlu0 %1041
      %1045 = vset.pattern.permute.xlu0 0
      %1046 = vperm.xlu0 %1045, %v912
      %v1047 = vpop.permute.xlu0 %1046
      %1050 = vset.pattern.permute.xlu0 0
      %1051 = vperm.xlu0 %1050, %v913
      %v1052 = vpop.permute.xlu0 %1051
      %1055 = vset.pattern.permute.xlu0 0
      %1056 = vperm.xlu0 %1055, %v914
      %v1057 = vpop.permute.xlu0 %1056
      %1060 = vset.pattern.permute.xlu0 0
      %1061 = vperm.xlu0 %1060, %v915
      %v1062 = vpop.permute.xlu0 %1061
      %1065 = vset.pattern.permute.xlu0 0
      %1066 = vperm.xlu0 %1065, %v916
      %v1067 = vpop.permute.xlu0 %1066
      %1070 = vset.pattern.permute.xlu0 0
      %1071 = vperm.xlu0 %1070, %v917
      %v1072 = vpop.permute.xlu0 %1071
      %1075 = vset.pattern.permute.xlu0 0
      %1076 = vperm.xlu0 %1075, %v918
      %v1077 = vpop.permute.xlu0 %1076
      %1080 = vset.pattern.permute.xlu0 0
      %1081 = vperm.xlu0 %1080, %v919
      %v1082 = vpop.permute.xlu0 %1081
      %1085 = vset.pattern.permute.xlu0 0
      %1086 = vperm.xlu0 %1085, %v920
      %v1087 = vpop.permute.xlu0 %1086
      %1090 = vset.pattern.permute.xlu0 0
      %1091 = vperm.xlu0 %1090, %v921
      %v1092 = vpop.permute.xlu0 %1091
      %1095 = vset.pattern.permute.xlu0 0
      %1096 = vperm.xlu0 %1095, %v922
      %v1097 = vpop.permute.xlu0 %1096
      %1100 = vset.pattern.permute.xlu0 0
      %1101 = vperm.xlu0 %1100, %v923
      %v1102 = vpop.permute.xlu0 %1101
      %1105 = vset.pattern.permute.xlu0 0
      %1106 = vperm.xlu0 %1105, %v924
      %v1107 = vpop.permute.xlu0 %1106
      %1110 = vset.pattern.permute.xlu0 0
      %1111 = vperm.xlu0 %1110, %v925
      %v1112 = vpop.permute.xlu0 %1111
      %1115 = vset.pattern.permute.xlu0 0
      %1116 = vperm.xlu0 %1115, %v926
      %v1117 = vpop.permute.xlu0 %1116
      %1120 = vset.pattern.permute.xlu0 0
      %1121 = vperm.xlu0 %1120, %v927
      %v1122 = vpop.permute.xlu0 %1121
      %1125 = vset.pattern.permute.xlu0 0
      %1126 = vperm.xlu0 %1125, %v928
      %v1127 = vpop.permute.xlu0 %1126
      %1130 = vset.pattern.permute.xlu0 0
      %1131 = vperm.xlu0 %1130, %v929
      %v1132 = vpop.permute.xlu0 %1131
      %1135 = vset.pattern.permute.xlu0 0
      %1136 = vperm.xlu0 %1135, %v930
      %v1137 = vpop.permute.xlu0 %1136
      %1140 = vset.pattern.permute.xlu0 0
      %1141 = vperm.xlu0 %1140, %v931
      %v1142 = vpop.permute.xlu0 %1141
      %1145 = vset.pattern.permute.xlu0 0
      %1146 = vperm.xlu0 %1145, %v932
      %v1147 = vpop.permute.xlu0 %1146
      %1150 = vset.pattern.permute.xlu0 0
      %1151 = vperm.xlu0 %1150, %v933
      %v1152 = vpop.permute.xlu0 %1151
      %1155 = vset.pattern.permute.xlu0 0
      %1156 = vperm.xlu0 %1155, %v934
      %v1157 = vpop.permute.xlu0 %1156
      %1160 = vset.pattern.permute.xlu0 0
      %1161 = vperm.xlu0 %1160, %v935
      %v1162 = vpop.permute.xlu0 %1161
      %1165 = vset.pattern.permute.xlu0 0
      %1166 = vperm.xlu0 %1165, %v936
      %v1167 = vpop.permute.xlu0 %1166
      %1170 = vset.pattern.permute.xlu0 0
      %1171 = vperm.xlu0 %1170, %v937
      %v1172 = vpop.permute.xlu0 %1171
      %1175 = vset.pattern.permute.xlu0 0
      %1176 = vperm.xlu0 %1175, %v938
      %v1177 = vpop.permute.xlu0 %1176
      %1180 = vset.pattern.permute.xlu0 0
      %1181 = vperm.xlu0 %1180, %v939
      %v1182 = vpop.permute.xlu0 %1181
      %1185 = vset.pattern.permute.xlu0 0
      %1186 = vperm.xlu0 %1185, %v940
      %v1187 = vpop.permute.xlu0 %1186
      %1190 = vset.pattern.permute.xlu0 0
      %1191 = vperm.xlu0 %1190, %v941
      %v1192 = vpop.permute.xlu0 %1191
      %1195 = vset.pattern.permute.xlu0 0
      %1196 = vperm.xlu0 %1195, %v942
      %v1197 = vpop.permute.xlu0 %1196
      %1200 = vset.pattern.permute.xlu0 0
      %1201 = vperm.xlu0 %1200, %v943
      %v1202 = vpop.permute.xlu0 %1201
      %1205 = vset.pattern.permute.xlu0 0
      %1206 = vperm.xlu0 %1205, %v944
      %v1207 = vpop.permute.xlu0 %1206
      %1210 = vset.pattern.permute.xlu0 0
      %1211 = vperm.xlu0 %1210, %v945
      %v1212 = vpop.permute.xlu0 %1211
      %1215 = vset.pattern.permute.xlu0 0
      %1216 = vperm.xlu0 %1215, %v946
      %v1217 = vpop.permute.xlu0 %1216
      %1220 = vset.pattern.permute.xlu0 0
      %1221 = vperm.xlu0 %1220, %v947
      %v1222 = vpop.permute.xlu0 %1221
      %1225 = vset.pattern.permute.xlu0 0
      %1226 = vperm.xlu0 %1225, %v948
      %v1227 = vpop.permute.xlu0 %1226
      %1230 = vset.pattern.permute.xlu0 0
      %1231 = vperm.xlu0 %1230, %v949
      %v1232 = vpop.permute.xlu0 %1231
      %1235 = vset.pattern.permute.xlu0 0
      %1236 = vperm.xlu0 %1235, %v950
      %v1237 = vpop.permute.xlu0 %1236
      %1240 = vset.pattern.permute.xlu0 0
      %1241 = vperm.xlu0 %1240, %v951
      %v1242 = vpop.permute.xlu0 %1241
      %1245 = vset.pattern.permute.xlu0 0
      %1246 = vperm.xlu0 %1245, %v952
      %v1247 = vpop.permute.xlu0 %1246
      %1250 = vset.pattern.permute.xlu0 0
      %1251 = vperm.xlu0 %1250, %v953
      %v1252 = vpop.permute.xlu0 %1251
      %1255 = vset.pattern.permute.xlu0 0
      %1256 = vperm.xlu0 %1255, %v954
      %v1257 = vpop.permute.xlu0 %1256
      %1260 = vset.pattern.permute.xlu0 0
      %1261 = vperm.xlu0 %1260, %v955
      %v1262 = vpop.permute.xlu0 %1261
      %1265 = vset.pattern.permute.xlu0 0
      %1266 = vperm.xlu0 %1265, %v956
      %v1267 = vpop.permute.xlu0 %1266
      %1270 = vset.pattern.permute.xlu0 0
      %1271 = vperm.xlu0 %1270, %v957
      %v1272 = vpop.permute.xlu0 %1271
      %1275 = vset.pattern.permute.xlu0 0
      %1276 = vperm.xlu0 %1275, %v958
      %v1277 = vpop.permute.xlu0 %1276
      %1280 = vset.pattern.permute.xlu0 0
      %1281 = vperm.xlu0 %1280, %v959
      %v1282 = vpop.permute.xlu0 %1281
      %1285 = vset.pattern.permute.xlu0 0
      %1286 = vperm.xlu0 %1285, %v960
      %v1287 = vpop.permute.xlu0 %1286
      %1290 = vset.pattern.permute.xlu0 0
      %1291 = vperm.xlu0 %1290, %v961
      %v1292 = vpop.permute.xlu0 %1291
      %1295 = vset.pattern.permute.xlu0 0
      %1296 = vperm.xlu0 %1295, %v962
      %v1297 = vpop.permute.xlu0 %1296
      %1300 = vset.pattern.permute.xlu0 0
      %1301 = vperm.xlu0 %1300, %v963
      %v1302 = vpop.permute.xlu0 %1301
      %1305 = vset.pattern.permute.xlu0 0
      %1306 = vperm.xlu0 %1305, %v964
      %v1307 = vpop.permute.xlu0 %1306
      %1310 = vset.pattern.permute.xlu0 0
      %1311 = vperm.xlu0 %1310, %v965
      %v1312 = vpop.permute.xlu0 %1311
      %1315 = vset.pattern.permute.xlu0 0
      %1316 = vperm.xlu0 %1315, %v966
      %v1317 = vpop.permute.xlu0 %1316
      %1320 = vset.pattern.permute.xlu0 0
      %1321 = vperm.xlu0 %1320, %v967
      %v1322 = vpop.permute.xlu0 %1321
      %1325 = vset.pattern.permute.xlu0 0
      %1326 = vperm.xlu0 %1325, %v968
      %v1327 = vpop.permute.xlu0 %1326
      %1330 = vset.pattern.permute.xlu0 0
      %1331 = vperm.xlu0 %1330, %v969
      %v1332 = vpop.permute.xlu0 %1331
      %1335 = vset.pattern.permute.xlu0 0
      %1336 = vperm.xlu0 %1335, %v970
      %v1337 = vpop.permute.xlu0 %1336
      %1340 = vset.pattern.permute.xlu0 0
      %1341 = vperm.xlu0 %1340, %v971
      %v1342 = vpop.permute.xlu0 %1341
      %1345 = vset.pattern.permute.xlu0 0
      %1346 = vperm.xlu0 %1345, %v972
      %v1347 = vpop.permute.xlu0 %1346
      %1350 = vset.pattern.permute.xlu0 0
      %1351 = vperm.xlu0 %1350, %v973
      %v1352 = vpop.permute.xlu0 %1351
      %1355 = vset.pattern.permute.xlu0 0
      %1356 = vperm.xlu0 %1355, %v974
      %v1357 = vpop.permute.xlu0 %1356
      %1360 = vset.pattern.permute.xlu0 0
      %1361 = vperm.xlu0 %1360, %v975
      %v1362 = vpop.permute.xlu0 %1361
      %1365 = vset.pattern.permute.xlu0 0
      %1366 = vperm.xlu0 %1365, %v976
      %v1367 = vpop.permute.xlu0 %1366
      %1370 = vset.pattern.permute.xlu0 0
      %1371 = vperm.xlu0 %1370, %v977
      %v1372 = vpop.permute.xlu0 %1371
      %1375 = vset.pattern.permute.xlu0 0
      %1376 = vperm.xlu0 %1375, %v978
      %v1377 = vpop.permute.xlu0 %1376
      %1380 = vset.pattern.permute.xlu0 0
      %1381 = vperm.xlu0 %1380, %v979
      %v1382 = vpop.permute.xlu0 %1381
      %1385 = vset.pattern.permute.xlu0 0
      %1386 = vperm.xlu0 %1385, %v980
      %v1387 = vpop.permute.xlu0 %1386
      %1390 = vset.pattern.permute.xlu0 0
      %1391 = vperm.xlu0 %1390, %v981
      %v1392 = vpop.permute.xlu0 %1391
      %1395 = vset.pattern.permute.xlu0 0
      %1396 = vperm.xlu0 %1395, %v982
      %v1397 = vpop.permute.xlu0 %1396
      %1400 = vset.pattern.permute.xlu0 0
      %1401 = vperm.xlu0 %1400, %v983
      %v1402 = vpop.permute.xlu0 %1401
      %1405 = vset.pattern.permute.xlu0 0
      %1406 = vperm.xlu0 %1405, %v984
      %v1407 = vpop.permute.xlu0 %1406
      %1410 = vset.pattern.permute.xlu0 0
      %1411 = vperm.xlu0 %1410, %v985
      %v1412 = vpop.permute.xlu0 %1411
      %1415 = vset.pattern.permute.xlu0 0
      %1416 = vperm.xlu0 %1415, %v986
      %v1417 = vpop.permute.xlu0 %1416
      %1420 = vset.pattern.permute.xlu0 0
      %1421 = vperm.xlu0 %1420, %v987
      %v1422 = vpop.permute.xlu0 %1421
      %1425 = vset.pattern.permute.xlu0 0
      %1426 = vperm.xlu0 %1425, %v988
      %v1427 = vpop.permute.xlu0 %1426
      %1430 = vset.pattern.permute.xlu0 0
      %1431 = vperm.xlu0 %1430, %v989
      %v1432 = vpop.permute.xlu0 %1431
      %1435 = vset.pattern.permute.xlu0 0
      %1436 = vperm.xlu0 %1435, %v990
      %v1437 = vpop.permute.xlu0 %1436
      %1440 = vset.pattern.permute.xlu0 0
      %1441 = vperm.xlu0 %1440, %v991
      %v1442 = vpop.permute.xlu0 %1441
      %1445 = vset.pattern.permute.xlu0 0
      %1446 = vperm.xlu0 %1445, %v992
      %v1447 = vpop.permute.xlu0 %1446
      %v1449 = vperm.slane %v993, 0
      %v1450 = vmul.f32 %v997, %v1449
      %v1451 = vmul.f32 %v1002, %v1449
      %v1452 = vmul.f32 %v1007, %v1449
      %v1453 = vmul.f32 %v1012, %v1449
      %v1454 = vmul.f32 %v1017, %v1449
      %v1455 = vmul.f32 %v1022, %v1449
      %v1456 = vmul.f32 %v1027, %v1449
      %v1457 = vmul.f32 %v1032, %v1449
      %v1458 = vmul.f32 %v1037, %v1449
      %v1459 = vmul.f32 %v1042, %v1449
      %v1460 = vmul.f32 %v1047, %v1449
      %v1461 = vmul.f32 %v1052, %v1449
      %v1462 = vmul.f32 %v1057, %v1449
      %v1463 = vmul.f32 %v1062, %v1449
      %v1464 = vmul.f32 %v1067, %v1449
      %v1465 = vmul.f32 %v1072, %v1449
      %v1466 = vmul.f32 %v1077, %v1449
      %v1467 = vmul.f32 %v1082, %v1449
      %v1468 = vmul.f32 %v1087, %v1449
      %v1469 = vmul.f32 %v1092, %v1449
      %v1470 = vmul.f32 %v1097, %v1449
      %v1471 = vmul.f32 %v1102, %v1449
      %v1472 = vmul.f32 %v1107, %v1449
      %v1473 = vmul.f32 %v1112, %v1449
      %v1474 = vmul.f32 %v1117, %v1449
      %v1475 = vmul.f32 %v1122, %v1449
      %v1476 = vmul.f32 %v1127, %v1449
      %v1477 = vmul.f32 %v1132, %v1449
      %v1478 = vmul.f32 %v1137, %v1449
      %v1479 = vmul.f32 %v1142, %v1449
      %v1480 = vmul.f32 %v1147, %v1449
      %v1481 = vmul.f32 %v1152, %v1449
      %v1482 = vmul.f32 %v1157, %v1449
      %v1483 = vmul.f32 %v1162, %v1449
      %v1484 = vmul.f32 %v1167, %v1449
      %v1485 = vmul.f32 %v1172, %v1449
      %v1486 = vmul.f32 %v1177, %v1449
      %v1487 = vmul.f32 %v1182, %v1449
      %v1488 = vmul.f32 %v1187, %v1449
      %v1489 = vmul.f32 %v1192, %v1449
      %v1490 = vmul.f32 %v1197, %v1449
      %v1491 = vmul.f32 %v1202, %v1449
      %v1492 = vmul.f32 %v1207, %v1449
      %v1493 = vmul.f32 %v1212, %v1449
      %v1494 = vmul.f32 %v1217, %v1449
      %v1495 = vmul.f32 %v1222, %v1449
      %v1496 = vmul.f32 %v1227, %v1449
      %v1497 = vmul.f32 %v1232, %v1449
      %v1498 = vmul.f32 %v1237, %v1449
      %v1499 = vmul.f32 %v1242, %v1449
      %v1500 = vmul.f32 %v1247, %v1449
      %v1501 = vmul.f32 %v1252, %v1449
      %v1502 = vmul.f32 %v1257, %v1449
      %v1503 = vmul.f32 %v1262, %v1449
      %v1504 = vmul.f32 %v1267, %v1449
      %v1505 = vmul.f32 %v1272, %v1449
      %v1506 = vmul.f32 %v1277, %v1449
      %v1507 = vmul.f32 %v1282, %v1449
      %v1508 = vmul.f32 %v1287, %v1449
      %v1509 = vmul.f32 %v1292, %v1449
      %v1510 = vmul.f32 %v1297, %v1449
      %v1511 = vmul.f32 %v1302, %v1449
      %v1512 = vmul.f32 %v1307, %v1449
      %v1513 = vmul.f32 %v1312, %v1449
      %v1514 = vmul.f32 %v1317, %v1449
      %v1515 = vmul.f32 %v1322, %v1449
      %v1516 = vmul.f32 %v1327, %v1449
      %v1517 = vmul.f32 %v1332, %v1449
      %v1518 = vmul.f32 %v1337, %v1449
      %v1519 = vmul.f32 %v1342, %v1449
      %v1520 = vmul.f32 %v1347, %v1449
      %v1521 = vmul.f32 %v1352, %v1449
      %v1522 = vmul.f32 %v1357, %v1449
      %v1523 = vmul.f32 %v1362, %v1449
      %v1524 = vmul.f32 %v1367, %v1449
      %v1525 = vmul.f32 %v1372, %v1449
      %v1526 = vmul.f32 %v1377, %v1449
      %v1527 = vmul.f32 %v1382, %v1449
      %v1528 = vmul.f32 %v1387, %v1449
      %v1529 = vmul.f32 %v1392, %v1449
      %v1530 = vmul.f32 %v1397, %v1449
      %v1531 = vmul.f32 %v1402, %v1449
      %v1532 = vmul.f32 %v1407, %v1449
      %v1533 = vmul.f32 %v1412, %v1449
      %v1534 = vmul.f32 %v1417, %v1449
      %v1535 = vmul.f32 %v1422, %v1449
      %v1536 = vmul.f32 %v1427, %v1449
      %v1537 = vmul.f32 %v1432, %v1449
      %v1538 = vmul.f32 %v1437, %v1449
      %v1539 = vmul.f32 %v1442, %v1449
      %v1540 = vmul.f32 %v1447, %v1449
      %v1541 = vadd.f32 %v811, %v1450
      %v1542 = vadd.f32 %v812, %v1451
      %v1543 = vadd.f32 %v813, %v1452
      %v1544 = vadd.f32 %v814, %v1453
      %v1545 = vadd.f32 %v815, %v1454
      %v1546 = vadd.f32 %v816, %v1455
      %v1547 = vadd.f32 %v817, %v1456
      %v1548 = vadd.f32 %v818, %v1457
      %v1549 = vadd.f32 %v819, %v1458
      %v1550 = vadd.f32 %v820, %v1459
      %v1551 = vadd.f32 %v821, %v1460
      %v1552 = vadd.f32 %v822, %v1461
      %v1553 = vadd.f32 %v823, %v1462
      %v1554 = vadd.f32 %v824, %v1463
      %v1555 = vadd.f32 %v825, %v1464
      %v1556 = vadd.f32 %v826, %v1465
      %v1557 = vadd.f32 %v827, %v1466
      %v1558 = vadd.f32 %v828, %v1467
      %v1559 = vadd.f32 %v829, %v1468
      %v1560 = vadd.f32 %v830, %v1469
      %v1561 = vadd.f32 %v831, %v1470
      %v1562 = vadd.f32 %v832, %v1471
      %v1563 = vadd.f32 %v833, %v1472
      %v1564 = vadd.f32 %v834, %v1473
      %v1565 = vadd.f32 %v835, %v1474
      %v1566 = vadd.f32 %v836, %v1475
      %v1567 = vadd.f32 %v837, %v1476
      %v1568 = vadd.f32 %v838, %v1477
      %v1569 = vadd.f32 %v839, %v1478
      %v1570 = vadd.f32 %v840, %v1479
      %v1571 = vadd.f32 %v841, %v1480
      %v1572 = vadd.f32 %v842, %v1481
      %v1573 = vadd.f32 %v843, %v1482
      %v1574 = vadd.f32 %v844, %v1483
      %v1575 = vadd.f32 %v845, %v1484
      %v1576 = vadd.f32 %v846, %v1485
      %v1577 = vadd.f32 %v847, %v1486
      %v1578 = vadd.f32 %v848, %v1487
      %v1579 = vadd.f32 %v849, %v1488
      %v1580 = vadd.f32 %v850, %v1489
      %v1581 = vadd.f32 %v851, %v1490
      %v1582 = vadd.f32 %v852, %v1491
      %v1583 = vadd.f32 %v853, %v1492
      %v1584 = vadd.f32 %v854, %v1493
      %v1585 = vadd.f32 %v855, %v1494
      %v1586 = vadd.f32 %v856, %v1495
      %v1587 = vadd.f32 %v857, %v1496
      %v1588 = vadd.f32 %v858, %v1497
      %v1589 = vadd.f32 %v859, %v1498
      %v1590 = vadd.f32 %v860, %v1499
      %v1591 = vadd.f32 %v861, %v1500
      %v1592 = vadd.f32 %v862, %v1501
      %v1593 = vadd.f32 %v863, %v1502
      %v1594 = vadd.f32 %v864, %v1503
      %v1595 = vadd.f32 %v865, %v1504
      %v1596 = vadd.f32 %v866, %v1505
      %v1597 = vadd.f32 %v867, %v1506
      %v1598 = vadd.f32 %v868, %v1507
      %v1599 = vadd.f32 %v869, %v1508
      %v1600 = vadd.f32 %v870, %v1509
      %v1601 = vadd.f32 %v871, %v1510
      %v1602 = vadd.f32 %v872, %v1511
      %v1603 = vadd.f32 %v873, %v1512
      %v1604 = vadd.f32 %v874, %v1513
      %v1605 = vadd.f32 %v875, %v1514
      %v1606 = vadd.f32 %v876, %v1515
      %v1607 = vadd.f32 %v877, %v1516
      %v1608 = vadd.f32 %v878, %v1517
      %v1609 = vadd.f32 %v879, %v1518
      %v1610 = vadd.f32 %v880, %v1519
      %v1611 = vadd.f32 %v881, %v1520
      %v1612 = vadd.f32 %v882, %v1521
      %v1613 = vadd.f32 %v883, %v1522
      %v1614 = vadd.f32 %v884, %v1523
      %v1615 = vadd.f32 %v885, %v1524
      %v1616 = vadd.f32 %v886, %v1525
      %v1617 = vadd.f32 %v887, %v1526
      %v1618 = vadd.f32 %v888, %v1527
      %v1619 = vadd.f32 %v889, %v1528
      %v1620 = vadd.f32 %v890, %v1529
      %v1621 = vadd.f32 %v891, %v1530
      %v1622 = vadd.f32 %v892, %v1531
      %v1623 = vadd.f32 %v893, %v1532
      %v1624 = vadd.f32 %v894, %v1533
      %v1625 = vadd.f32 %v895, %v1534
      %v1626 = vadd.f32 %v896, %v1535
      %v1627 = vadd.f32 %v897, %v1536
      %v1628 = vadd.f32 %v898, %v1537
      %v1629 = vadd.f32 %v899, %v1538
      %v1630 = vadd.f32 %v900, %v1539
      %v1631 = vadd.f32 %v901, %v1540
      %v1632 = vld [vmem:[%s165 + $0x2] sm:$0xff]
      %v1633 = vld [vmem:[%s165 + $0xa] sm:$0xff]
      %v1634 = vld [vmem:[%s165 + $0x12] sm:$0xff]
      %v1635 = vld [vmem:[%s165 + $0x1a] sm:$0xff]
      %v1636 = vld [vmem:[%s165 + $0x22] sm:$0xff]
      %v1637 = vld [vmem:[%s165 + $0x2a] sm:$0xff]
      %v1638 = vld [vmem:[%s165 + $0x32] sm:$0xff]
      %v1639 = vld [vmem:[%s165 + $0x3a] sm:$0xff]
      %v1640 = vld [vmem:[%s165 + $0x42] sm:$0xff]
      %v1641 = vld [vmem:[%s165 + $0x4a] sm:$0xff]
      %v1642 = vld [vmem:[%s165 + $0x52] sm:$0xff]
      %v1643 = vld [vmem:[%s165 + $0x5a] sm:$0xff]
      %v1644 = vld [vmem:[%s165 + $0x62] sm:$0xff]
      %v1645 = vld [vmem:[%s165 + $0x6a] sm:$0xff]
      %v1646 = vld [vmem:[%s165 + $0x72] sm:$0xff]
      %v1647 = vld [vmem:[%s165 + $0x7a] sm:$0xff]
      %v1648 = vld [vmem:[%s165 + $0x82] sm:$0xff]
      %v1649 = vld [vmem:[%s165 + $0x8a] sm:$0xff]
      %v1650 = vld [vmem:[%s165 + $0x92] sm:$0xff]
      %v1651 = vld [vmem:[%s165 + $0x9a] sm:$0xff]
      %v1652 = vld [vmem:[%s165 + $0xa2] sm:$0xff]
      %v1653 = vld [vmem:[%s165 + $0xaa] sm:$0xff]
      %v1654 = vld [vmem:[%s165 + $0xb2] sm:$0xff]
      %v1655 = vld [vmem:[%s165 + $0xba] sm:$0xff]
      %v1656 = vld [vmem:[%s165 + $0xc2] sm:$0xff]
      %v1657 = vld [vmem:[%s165 + $0xca] sm:$0xff]
      %v1658 = vld [vmem:[%s165 + $0xd2] sm:$0xff]
      %v1659 = vld [vmem:[%s165 + $0xda] sm:$0xff]
      %v1660 = vld [vmem:[%s165 + $0xe2] sm:$0xff]
      %v1661 = vld [vmem:[%s165 + $0xea] sm:$0xff]
      %v1662 = vld [vmem:[%s165 + $0xf2] sm:$0xff]
      %v1663 = vld [vmem:[%s165 + $0xfa] sm:$0xff]
      %v1664 = vld [vmem:[%s165 + $0x102] sm:$0xff]
      %v1665 = vld [vmem:[%s165 + $0x10a] sm:$0xff]
      %v1666 = vld [vmem:[%s165 + $0x112] sm:$0xff]
      %v1667 = vld [vmem:[%s165 + $0x11a] sm:$0xff]
      %v1668 = vld [vmem:[%s165 + $0x122] sm:$0xff]
      %v1669 = vld [vmem:[%s165 + $0x12a] sm:$0xff]
      %v1670 = vld [vmem:[%s165 + $0x132] sm:$0xff]
      %v1671 = vld [vmem:[%s165 + $0x13a] sm:$0xff]
      %v1672 = vld [vmem:[%s165 + $0x142] sm:$0xff]
      %v1673 = vld [vmem:[%s165 + $0x14a] sm:$0xff]
      %v1674 = vld [vmem:[%s165 + $0x152] sm:$0xff]
      %v1675 = vld [vmem:[%s165 + $0x15a] sm:$0xff]
      %v1676 = vld [vmem:[%s165 + $0x162] sm:$0xff]
      %v1677 = vld [vmem:[%s165 + $0x16a] sm:$0xff]
      %v1678 = vld [vmem:[%s165 + $0x172] sm:$0xff]
      %v1679 = vld [vmem:[%s165 + $0x17a] sm:$0xff]
      %v1680 = vld [vmem:[%s165 + $0x182] sm:$0xff]
      %v1681 = vld [vmem:[%s165 + $0x18a] sm:$0xff]
      %v1682 = vld [vmem:[%s165 + $0x192] sm:$0xff]
      %v1683 = vld [vmem:[%s165 + $0x19a] sm:$0xff]
      %v1684 = vld [vmem:[%s165 + $0x1a2] sm:$0xff]
      %v1685 = vld [vmem:[%s165 + $0x1aa] sm:$0xff]
      %v1686 = vld [vmem:[%s165 + $0x1b2] sm:$0xff]
      %v1687 = vld [vmem:[%s165 + $0x1ba] sm:$0xff]
      %v1688 = vld [vmem:[%s165 + $0x1c2] sm:$0xff]
      %v1689 = vld [vmem:[%s165 + $0x1ca] sm:$0xff]
      %v1690 = vld [vmem:[%s165 + $0x1d2] sm:$0xff]
      %v1691 = vld [vmem:[%s165 + $0x1da] sm:$0xff]
      %v1692 = vld [vmem:[%s165 + $0x1e2] sm:$0xff]
      %v1693 = vld [vmem:[%s165 + $0x1ea] sm:$0xff]
      %v1694 = vld [vmem:[%s165 + $0x1f2] sm:$0xff]
      %v1695 = vld [vmem:[%s165 + $0x1fa] sm:$0xff]
      %v1696 = vld [vmem:[%s165 + $0x202] sm:$0xff]
      %v1697 = vld [vmem:[%s165 + $0x20a] sm:$0xff]
      %v1698 = vld [vmem:[%s165 + $0x212] sm:$0xff]
      %v1699 = vld [vmem:[%s165 + $0x21a] sm:$0xff]
      %v1700 = vld [vmem:[%s165 + $0x222] sm:$0xff]
      %v1701 = vld [vmem:[%s165 + $0x22a] sm:$0xff]
      %v1702 = vld [vmem:[%s165 + $0x232] sm:$0xff]
      %v1703 = vld [vmem:[%s165 + $0x23a] sm:$0xff]
      %v1704 = vld [vmem:[%s165 + $0x242] sm:$0xff]
      %v1705 = vld [vmem:[%s165 + $0x24a] sm:$0xff]
      %v1706 = vld [vmem:[%s165 + $0x252] sm:$0xff]
      %v1707 = vld [vmem:[%s165 + $0x25a] sm:$0xff]
      %v1708 = vld [vmem:[%s165 + $0x262] sm:$0xff]
      %v1709 = vld [vmem:[%s165 + $0x26a] sm:$0xff]
      %v1710 = vld [vmem:[%s165 + $0x272] sm:$0xff]
      %v1711 = vld [vmem:[%s165 + $0x27a] sm:$0xff]
      %v1712 = vld [vmem:[%s165 + $0x282] sm:$0xff]
      %v1713 = vld [vmem:[%s165 + $0x28a] sm:$0xff]
      %v1714 = vld [vmem:[%s165 + $0x292] sm:$0xff]
      %v1715 = vld [vmem:[%s165 + $0x29a] sm:$0xff]
      %v1716 = vld [vmem:[%s165 + $0x2a2] sm:$0xff]
      %v1717 = vld [vmem:[%s165 + $0x2aa] sm:$0xff]
      %v1718 = vld [vmem:[%s165 + $0x2b2] sm:$0xff]
      %v1719 = vld [vmem:[%s165 + $0x2ba] sm:$0xff]
      %v1720 = vld [vmem:[%s165 + $0x2c2] sm:$0xff]
      %v1721 = vld [vmem:[%s165 + $0x2ca] sm:$0xff]
      %v1722 = vld [vmem:[%s165 + $0x2d2] sm:$0xff]
      %v1723 = vld [vmem:[%s1 + $0x2] sm:$0x1]
      %1725 = vset.pattern.permute.xlu0 0
      %1726 = vperm.xlu0 %1725, %v1632
      %v1727 = vpop.permute.xlu0 %1726
      %1730 = vset.pattern.permute.xlu0 0
      %1731 = vperm.xlu0 %1730, %v1633
      %v1732 = vpop.permute.xlu0 %1731
      %1735 = vset.pattern.permute.xlu0 0
      %1736 = vperm.xlu0 %1735, %v1634
      %v1737 = vpop.permute.xlu0 %1736
      %1740 = vset.pattern.permute.xlu0 0
      %1741 = vperm.xlu0 %1740, %v1635
      %v1742 = vpop.permute.xlu0 %1741
      %1745 = vset.pattern.permute.xlu0 0
      %1746 = vperm.xlu0 %1745, %v1636
      %v1747 = vpop.permute.xlu0 %1746
      %1750 = vset.pattern.permute.xlu0 0
      %1751 = vperm.xlu0 %1750, %v1637
      %v1752 = vpop.permute.xlu0 %1751
      %1755 = vset.pattern.permute.xlu0 0
      %1756 = vperm.xlu0 %1755, %v1638
      %v1757 = vpop.permute.xlu0 %1756
      %1760 = vset.pattern.permute.xlu0 0
      %1761 = vperm.xlu0 %1760, %v1639
      %v1762 = vpop.permute.xlu0 %1761
      %1765 = vset.pattern.permute.xlu0 0
      %1766 = vperm.xlu0 %1765, %v1640
      %v1767 = vpop.permute.xlu0 %1766
      %1770 = vset.pattern.permute.xlu0 0
      %1771 = vperm.xlu0 %1770, %v1641
      %v1772 = vpop.permute.xlu0 %1771
      %1775 = vset.pattern.permute.xlu0 0
      %1776 = vperm.xlu0 %1775, %v1642
      %v1777 = vpop.permute.xlu0 %1776
      %1780 = vset.pattern.permute.xlu0 0
      %1781 = vperm.xlu0 %1780, %v1643
      %v1782 = vpop.permute.xlu0 %1781
      %1785 = vset.pattern.permute.xlu0 0
      %1786 = vperm.xlu0 %1785, %v1644
      %v1787 = vpop.permute.xlu0 %1786
      %1790 = vset.pattern.permute.xlu0 0
      %1791 = vperm.xlu0 %1790, %v1645
      %v1792 = vpop.permute.xlu0 %1791
      %1795 = vset.pattern.permute.xlu0 0
      %1796 = vperm.xlu0 %1795, %v1646
      %v1797 = vpop.permute.xlu0 %1796
      %1800 = vset.pattern.permute.xlu0 0
      %1801 = vperm.xlu0 %1800, %v1647
      %v1802 = vpop.permute.xlu0 %1801
      %1805 = vset.pattern.permute.xlu0 0
      %1806 = vperm.xlu0 %1805, %v1648
      %v1807 = vpop.permute.xlu0 %1806
      %1810 = vset.pattern.permute.xlu0 0
      %1811 = vperm.xlu0 %1810, %v1649
      %v1812 = vpop.permute.xlu0 %1811
      %1815 = vset.pattern.permute.xlu0 0
      %1816 = vperm.xlu0 %1815, %v1650
      %v1817 = vpop.permute.xlu0 %1816
      %1820 = vset.pattern.permute.xlu0 0
      %1821 = vperm.xlu0 %1820, %v1651
      %v1822 = vpop.permute.xlu0 %1821
      %1825 = vset.pattern.permute.xlu0 0
      %1826 = vperm.xlu0 %1825, %v1652
      %v1827 = vpop.permute.xlu0 %1826
      %1830 = vset.pattern.permute.xlu0 0
      %1831 = vperm.xlu0 %1830, %v1653
      %v1832 = vpop.permute.xlu0 %1831
      %1835 = vset.pattern.permute.xlu0 0
      %1836 = vperm.xlu0 %1835, %v1654
      %v1837 = vpop.permute.xlu0 %1836
      %1840 = vset.pattern.permute.xlu0 0
      %1841 = vperm.xlu0 %1840, %v1655
      %v1842 = vpop.permute.xlu0 %1841
      %1845 = vset.pattern.permute.xlu0 0
      %1846 = vperm.xlu0 %1845, %v1656
      %v1847 = vpop.permute.xlu0 %1846
      %1850 = vset.pattern.permute.xlu0 0
      %1851 = vperm.xlu0 %1850, %v1657
      %v1852 = vpop.permute.xlu0 %1851
      %1855 = vset.pattern.permute.xlu0 0
      %1856 = vperm.xlu0 %1855, %v1658
      %v1857 = vpop.permute.xlu0 %1856
      %1860 = vset.pattern.permute.xlu0 0
      %1861 = vperm.xlu0 %1860, %v1659
      %v1862 = vpop.permute.xlu0 %1861
      %1865 = vset.pattern.permute.xlu0 0
      %1866 = vperm.xlu0 %1865, %v1660
      %v1867 = vpop.permute.xlu0 %1866
      %1870 = vset.pattern.permute.xlu0 0
      %1871 = vperm.xlu0 %1870, %v1661
      %v1872 = vpop.permute.xlu0 %1871
      %1875 = vset.pattern.permute.xlu0 0
      %1876 = vperm.xlu0 %1875, %v1662
      %v1877 = vpop.permute.xlu0 %1876
      %1880 = vset.pattern.permute.xlu0 0
      %1881 = vperm.xlu0 %1880, %v1663
      %v1882 = vpop.permute.xlu0 %1881
      %1885 = vset.pattern.permute.xlu0 0
      %1886 = vperm.xlu0 %1885, %v1664
      %v1887 = vpop.permute.xlu0 %1886
      %1890 = vset.pattern.permute.xlu0 0
      %1891 = vperm.xlu0 %1890, %v1665
      %v1892 = vpop.permute.xlu0 %1891
      %1895 = vset.pattern.permute.xlu0 0
      %1896 = vperm.xlu0 %1895, %v1666
      %v1897 = vpop.permute.xlu0 %1896
      %1900 = vset.pattern.permute.xlu0 0
      %1901 = vperm.xlu0 %1900, %v1667
      %v1902 = vpop.permute.xlu0 %1901
      %1905 = vset.pattern.permute.xlu0 0
      %1906 = vperm.xlu0 %1905, %v1668
      %v1907 = vpop.permute.xlu0 %1906
      %1910 = vset.pattern.permute.xlu0 0
      %1911 = vperm.xlu0 %1910, %v1669
      %v1912 = vpop.permute.xlu0 %1911
      %1915 = vset.pattern.permute.xlu0 0
      %1916 = vperm.xlu0 %1915, %v1670
      %v1917 = vpop.permute.xlu0 %1916
      %1920 = vset.pattern.permute.xlu0 0
      %1921 = vperm.xlu0 %1920, %v1671
      %v1922 = vpop.permute.xlu0 %1921
      %1925 = vset.pattern.permute.xlu0 0
      %1926 = vperm.xlu0 %1925, %v1672
      %v1927 = vpop.permute.xlu0 %1926
      %1930 = vset.pattern.permute.xlu0 0
      %1931 = vperm.xlu0 %1930, %v1673
      %v1932 = vpop.permute.xlu0 %1931
      %1935 = vset.pattern.permute.xlu0 0
      %1936 = vperm.xlu0 %1935, %v1674
      %v1937 = vpop.permute.xlu0 %1936
      %1940 = vset.pattern.permute.xlu0 0
      %1941 = vperm.xlu0 %1940, %v1675
      %v1942 = vpop.permute.xlu0 %1941
      %1945 = vset.pattern.permute.xlu0 0
      %1946 = vperm.xlu0 %1945, %v1676
      %v1947 = vpop.permute.xlu0 %1946
      %1950 = vset.pattern.permute.xlu0 0
      %1951 = vperm.xlu0 %1950, %v1677
      %v1952 = vpop.permute.xlu0 %1951
      %1955 = vset.pattern.permute.xlu0 0
      %1956 = vperm.xlu0 %1955, %v1678
      %v1957 = vpop.permute.xlu0 %1956
      %1960 = vset.pattern.permute.xlu0 0
      %1961 = vperm.xlu0 %1960, %v1679
      %v1962 = vpop.permute.xlu0 %1961
      %1965 = vset.pattern.permute.xlu0 0
      %1966 = vperm.xlu0 %1965, %v1680
      %v1967 = vpop.permute.xlu0 %1966
      %1970 = vset.pattern.permute.xlu0 0
      %1971 = vperm.xlu0 %1970, %v1681
      %v1972 = vpop.permute.xlu0 %1971
      %1975 = vset.pattern.permute.xlu0 0
      %1976 = vperm.xlu0 %1975, %v1682
      %v1977 = vpop.permute.xlu0 %1976
      %1980 = vset.pattern.permute.xlu0 0
      %1981 = vperm.xlu0 %1980, %v1683
      %v1982 = vpop.permute.xlu0 %1981
      %1985 = vset.pattern.permute.xlu0 0
      %1986 = vperm.xlu0 %1985, %v1684
      %v1987 = vpop.permute.xlu0 %1986
      %1990 = vset.pattern.permute.xlu0 0
      %1991 = vperm.xlu0 %1990, %v1685
      %v1992 = vpop.permute.xlu0 %1991
      %1995 = vset.pattern.permute.xlu0 0
      %1996 = vperm.xlu0 %1995, %v1686
      %v1997 = vpop.permute.xlu0 %1996
      %2000 = vset.pattern.permute.xlu0 0
      %2001 = vperm.xlu0 %2000, %v1687
      %v2002 = vpop.permute.xlu0 %2001
      %2005 = vset.pattern.permute.xlu0 0
      %2006 = vperm.xlu0 %2005, %v1688
      %v2007 = vpop.permute.xlu0 %2006
      %2010 = vset.pattern.permute.xlu0 0
      %2011 = vperm.xlu0 %2010, %v1689
      %v2012 = vpop.permute.xlu0 %2011
      %2015 = vset.pattern.permute.xlu0 0
      %2016 = vperm.xlu0 %2015, %v1690
      %v2017 = vpop.permute.xlu0 %2016
      %2020 = vset.pattern.permute.xlu0 0
      %2021 = vperm.xlu0 %2020, %v1691
      %v2022 = vpop.permute.xlu0 %2021
      %2025 = vset.pattern.permute.xlu0 0
      %2026 = vperm.xlu0 %2025, %v1692
      %v2027 = vpop.permute.xlu0 %2026
      %2030 = vset.pattern.permute.xlu0 0
      %2031 = vperm.xlu0 %2030, %v1693
      %v2032 = vpop.permute.xlu0 %2031
      %2035 = vset.pattern.permute.xlu0 0
      %2036 = vperm.xlu0 %2035, %v1694
      %v2037 = vpop.permute.xlu0 %2036
      %2040 = vset.pattern.permute.xlu0 0
      %2041 = vperm.xlu0 %2040, %v1695
      %v2042 = vpop.permute.xlu0 %2041
      %2045 = vset.pattern.permute.xlu0 0
      %2046 = vperm.xlu0 %2045, %v1696
      %v2047 = vpop.permute.xlu0 %2046
      %2050 = vset.pattern.permute.xlu0 0
      %2051 = vperm.xlu0 %2050, %v1697
      %v2052 = vpop.permute.xlu0 %2051
      %2055 = vset.pattern.permute.xlu0 0
      %2056 = vperm.xlu0 %2055, %v1698
      %v2057 = vpop.permute.xlu0 %2056
      %2060 = vset.pattern.permute.xlu0 0
      %2061 = vperm.xlu0 %2060, %v1699
      %v2062 = vpop.permute.xlu0 %2061
      %2065 = vset.pattern.permute.xlu0 0
      %2066 = vperm.xlu0 %2065, %v1700
      %v2067 = vpop.permute.xlu0 %2066
      %2070 = vset.pattern.permute.xlu0 0
      %2071 = vperm.xlu0 %2070, %v1701
      %v2072 = vpop.permute.xlu0 %2071
      %2075 = vset.pattern.permute.xlu0 0
      %2076 = vperm.xlu0 %2075, %v1702
      %v2077 = vpop.permute.xlu0 %2076
      %2080 = vset.pattern.permute.xlu0 0
      %2081 = vperm.xlu0 %2080, %v1703
      %v2082 = vpop.permute.xlu0 %2081
      %2085 = vset.pattern.permute.xlu0 0
      %2086 = vperm.xlu0 %2085, %v1704
      %v2087 = vpop.permute.xlu0 %2086
      %2090 = vset.pattern.permute.xlu0 0
      %2091 = vperm.xlu0 %2090, %v1705
      %v2092 = vpop.permute.xlu0 %2091
      %2095 = vset.pattern.permute.xlu0 0
      %2096 = vperm.xlu0 %2095, %v1706
      %v2097 = vpop.permute.xlu0 %2096
      %2100 = vset.pattern.permute.xlu0 0
      %2101 = vperm.xlu0 %2100, %v1707
      %v2102 = vpop.permute.xlu0 %2101
      %2105 = vset.pattern.permute.xlu0 0
      %2106 = vperm.xlu0 %2105, %v1708
      %v2107 = vpop.permute.xlu0 %2106
      %2110 = vset.pattern.permute.xlu0 0
      %2111 = vperm.xlu0 %2110, %v1709
      %v2112 = vpop.permute.xlu0 %2111
      %2115 = vset.pattern.permute.xlu0 0
      %2116 = vperm.xlu0 %2115, %v1710
      %v2117 = vpop.permute.xlu0 %2116
      %2120 = vset.pattern.permute.xlu0 0
      %2121 = vperm.xlu0 %2120, %v1711
      %v2122 = vpop.permute.xlu0 %2121
      %2125 = vset.pattern.permute.xlu0 0
      %2126 = vperm.xlu0 %2125, %v1712
      %v2127 = vpop.permute.xlu0 %2126
      %2130 = vset.pattern.permute.xlu0 0
      %2131 = vperm.xlu0 %2130, %v1713
      %v2132 = vpop.permute.xlu0 %2131
      %2135 = vset.pattern.permute.xlu0 0
      %2136 = vperm.xlu0 %2135, %v1714
      %v2137 = vpop.permute.xlu0 %2136
      %2140 = vset.pattern.permute.xlu0 0
      %2141 = vperm.xlu0 %2140, %v1715
      %v2142 = vpop.permute.xlu0 %2141
      %2145 = vset.pattern.permute.xlu0 0
      %2146 = vperm.xlu0 %2145, %v1716
      %v2147 = vpop.permute.xlu0 %2146
      %2150 = vset.pattern.permute.xlu0 0
      %2151 = vperm.xlu0 %2150, %v1717
      %v2152 = vpop.permute.xlu0 %2151
      %2155 = vset.pattern.permute.xlu0 0
      %2156 = vperm.xlu0 %2155, %v1718
      %v2157 = vpop.permute.xlu0 %2156
      %2160 = vset.pattern.permute.xlu0 0
      %2161 = vperm.xlu0 %2160, %v1719
      %v2162 = vpop.permute.xlu0 %2161
      %2165 = vset.pattern.permute.xlu0 0
      %2166 = vperm.xlu0 %2165, %v1720
      %v2167 = vpop.permute.xlu0 %2166
      %2170 = vset.pattern.permute.xlu0 0
      %2171 = vperm.xlu0 %2170, %v1721
      %v2172 = vpop.permute.xlu0 %2171
      %2175 = vset.pattern.permute.xlu0 0
      %2176 = vperm.xlu0 %2175, %v1722
      %v2177 = vpop.permute.xlu0 %2176
      %v2179 = vperm.slane %v1723, 0
      %v2180 = vmul.f32 %v1727, %v2179
      %v2181 = vmul.f32 %v1732, %v2179
      %v2182 = vmul.f32 %v1737, %v2179
      %v2183 = vmul.f32 %v1742, %v2179
      %v2184 = vmul.f32 %v1747, %v2179
      %v2185 = vmul.f32 %v1752, %v2179
      %v2186 = vmul.f32 %v1757, %v2179
      %v2187 = vmul.f32 %v1762, %v2179
      %v2188 = vmul.f32 %v1767, %v2179
      %v2189 = vmul.f32 %v1772, %v2179
      %v2190 = vmul.f32 %v1777, %v2179
      %v2191 = vmul.f32 %v1782, %v2179
      %v2192 = vmul.f32 %v1787, %v2179
      %v2193 = vmul.f32 %v1792, %v2179
      %v2194 = vmul.f32 %v1797, %v2179
      %v2195 = vmul.f32 %v1802, %v2179
      %v2196 = vmul.f32 %v1807, %v2179
      %v2197 = vmul.f32 %v1812, %v2179
      %v2198 = vmul.f32 %v1817, %v2179
      %v2199 = vmul.f32 %v1822, %v2179
      %v2200 = vmul.f32 %v1827, %v2179
      %v2201 = vmul.f32 %v1832, %v2179
      %v2202 = vmul.f32 %v1837, %v2179
      %v2203 = vmul.f32 %v1842, %v2179
      %v2204 = vmul.f32 %v1847, %v2179
      %v2205 = vmul.f32 %v1852, %v2179
      %v2206 = vmul.f32 %v1857, %v2179
      %v2207 = vmul.f32 %v1862, %v2179
      %v2208 = vmul.f32 %v1867, %v2179
      %v2209 = vmul.f32 %v1872, %v2179
      %v2210 = vmul.f32 %v1877, %v2179
      %v2211 = vmul.f32 %v1882, %v2179
      %v2212 = vmul.f32 %v1887, %v2179
      %v2213 = vmul.f32 %v1892, %v2179
      %v2214 = vmul.f32 %v1897, %v2179
      %v2215 = vmul.f32 %v1902, %v2179
      %v2216 = vmul.f32 %v1907, %v2179
      %v2217 = vmul.f32 %v1912, %v2179
      %v2218 = vmul.f32 %v1917, %v2179
      %v2219 = vmul.f32 %v1922, %v2179
      %v2220 = vmul.f32 %v1927, %v2179
      %v2221 = vmul.f32 %v1932, %v2179
      %v2222 = vmul.f32 %v1937, %v2179
      %v2223 = vmul.f32 %v1942, %v2179
      %v2224 = vmul.f32 %v1947, %v2179
      %v2225 = vmul.f32 %v1952, %v2179
      %v2226 = vmul.f32 %v1957, %v2179
      %v2227 = vmul.f32 %v1962, %v2179
      %v2228 = vmul.f32 %v1967, %v2179
      %v2229 = vmul.f32 %v1972, %v2179
      %v2230 = vmul.f32 %v1977, %v2179
      %v2231 = vmul.f32 %v1982, %v2179
      %v2232 = vmul.f32 %v1987, %v2179
      %v2233 = vmul.f32 %v1992, %v2179
      %v2234 = vmul.f32 %v1997, %v2179
      %v2235 = vmul.f32 %v2002, %v2179
      %v2236 = vmul.f32 %v2007, %v2179
      %v2237 = vmul.f32 %v2012, %v2179
      %v2238 = vmul.f32 %v2017, %v2179
      %v2239 = vmul.f32 %v2022, %v2179
      %v2240 = vmul.f32 %v2027, %v2179
      %v2241 = vmul.f32 %v2032, %v2179
      %v2242 = vmul.f32 %v2037, %v2179
      %v2243 = vmul.f32 %v2042, %v2179
      %v2244 = vmul.f32 %v2047, %v2179
      %v2245 = vmul.f32 %v2052, %v2179
      %v2246 = vmul.f32 %v2057, %v2179
      %v2247 = vmul.f32 %v2062, %v2179
      %v2248 = vmul.f32 %v2067, %v2179
      %v2249 = vmul.f32 %v2072, %v2179
      %v2250 = vmul.f32 %v2077, %v2179
      %v2251 = vmul.f32 %v2082, %v2179
      %v2252 = vmul.f32 %v2087, %v2179
      %v2253 = vmul.f32 %v2092, %v2179
      %v2254 = vmul.f32 %v2097, %v2179
      %v2255 = vmul.f32 %v2102, %v2179
      %v2256 = vmul.f32 %v2107, %v2179
      %v2257 = vmul.f32 %v2112, %v2179
      %v2258 = vmul.f32 %v2117, %v2179
      %v2259 = vmul.f32 %v2122, %v2179
      %v2260 = vmul.f32 %v2127, %v2179
      %v2261 = vmul.f32 %v2132, %v2179
      %v2262 = vmul.f32 %v2137, %v2179
      %v2263 = vmul.f32 %v2142, %v2179
      %v2264 = vmul.f32 %v2147, %v2179
      %v2265 = vmul.f32 %v2152, %v2179
      %v2266 = vmul.f32 %v2157, %v2179
      %v2267 = vmul.f32 %v2162, %v2179
      %v2268 = vmul.f32 %v2167, %v2179
      %v2269 = vmul.f32 %v2172, %v2179
      %v2270 = vmul.f32 %v2177, %v2179
      %v2271 = vadd.f32 %v1541, %v2180
      %v2272 = vadd.f32 %v1542, %v2181
      %v2273 = vadd.f32 %v1543, %v2182
      %v2274 = vadd.f32 %v1544, %v2183
      %v2275 = vadd.f32 %v1545, %v2184
      %v2276 = vadd.f32 %v1546, %v2185
      %v2277 = vadd.f32 %v1547, %v2186
      %v2278 = vadd.f32 %v1548, %v2187
      %v2279 = vadd.f32 %v1549, %v2188
      %v2280 = vadd.f32 %v1550, %v2189
      %v2281 = vadd.f32 %v1551, %v2190
      %v2282 = vadd.f32 %v1552, %v2191
      %v2283 = vadd.f32 %v1553, %v2192
      %v2284 = vadd.f32 %v1554, %v2193
      %v2285 = vadd.f32 %v1555, %v2194
      %v2286 = vadd.f32 %v1556, %v2195
      %v2287 = vadd.f32 %v1557, %v2196
      %v2288 = vadd.f32 %v1558, %v2197
      %v2289 = vadd.f32 %v1559, %v2198
      %v2290 = vadd.f32 %v1560, %v2199
      %v2291 = vadd.f32 %v1561, %v2200
      %v2292 = vadd.f32 %v1562, %v2201
      %v2293 = vadd.f32 %v1563, %v2202
      %v2294 = vadd.f32 %v1564, %v2203
      %v2295 = vadd.f32 %v1565, %v2204
      %v2296 = vadd.f32 %v1566, %v2205
      %v2297 = vadd.f32 %v1567, %v2206
      %v2298 = vadd.f32 %v1568, %v2207
      %v2299 = vadd.f32 %v1569, %v2208
      %v2300 = vadd.f32 %v1570, %v2209
      %v2301 = vadd.f32 %v1571, %v2210
      %v2302 = vadd.f32 %v1572, %v2211
      %v2303 = vadd.f32 %v1573, %v2212
      %v2304 = vadd.f32 %v1574, %v2213
      %v2305 = vadd.f32 %v1575, %v2214
      %v2306 = vadd.f32 %v1576, %v2215
      %v2307 = vadd.f32 %v1577, %v2216
      %v2308 = vadd.f32 %v1578, %v2217
      %v2309 = vadd.f32 %v1579, %v2218
      %v2310 = vadd.f32 %v1580, %v2219
      %v2311 = vadd.f32 %v1581, %v2220
      %v2312 = vadd.f32 %v1582, %v2221
      %v2313 = vadd.f32 %v1583, %v2222
      %v2314 = vadd.f32 %v1584, %v2223
      %v2315 = vadd.f32 %v1585, %v2224
      %v2316 = vadd.f32 %v1586, %v2225
      %v2317 = vadd.f32 %v1587, %v2226
      %v2318 = vadd.f32 %v1588, %v2227
      %v2319 = vadd.f32 %v1589, %v2228
      %v2320 = vadd.f32 %v1590, %v2229
      %v2321 = vadd.f32 %v1591, %v2230
      %v2322 = vadd.f32 %v1592, %v2231
      %v2323 = vadd.f32 %v1593, %v2232
      %v2324 = vadd.f32 %v1594, %v2233
      %v2325 = vadd.f32 %v1595, %v2234
      %v2326 = vadd.f32 %v1596, %v2235
      %v2327 = vadd.f32 %v1597, %v2236
      %v2328 = vadd.f32 %v1598, %v2237
      %v2329 = vadd.f32 %v1599, %v2238
      %v2330 = vadd.f32 %v1600, %v2239
      %v2331 = vadd.f32 %v1601, %v2240
      %v2332 = vadd.f32 %v1602, %v2241
      %v2333 = vadd.f32 %v1603, %v2242
      %v2334 = vadd.f32 %v1604, %v2243
      %v2335 = vadd.f32 %v1605, %v2244
      %v2336 = vadd.f32 %v1606, %v2245
      %v2337 = vadd.f32 %v1607, %v2246
      %v2338 = vadd.f32 %v1608, %v2247
      %v2339 = vadd.f32 %v1609, %v2248
      %v2340 = vadd.f32 %v1610, %v2249
      %v2341 = vadd.f32 %v1611, %v2250
      %v2342 = vadd.f32 %v1612, %v2251
      %v2343 = vadd.f32 %v1613, %v2252
      %v2344 = vadd.f32 %v1614, %v2253
      %v2345 = vadd.f32 %v1615, %v2254
      %v2346 = vadd.f32 %v1616, %v2255
      %v2347 = vadd.f32 %v1617, %v2256
      %v2348 = vadd.f32 %v1618, %v2257
      %v2349 = vadd.f32 %v1619, %v2258
      %v2350 = vadd.f32 %v1620, %v2259
      %v2351 = vadd.f32 %v1621, %v2260
      %v2352 = vadd.f32 %v1622, %v2261
      %v2353 = vadd.f32 %v1623, %v2262
      %v2354 = vadd.f32 %v1624, %v2263
      %v2355 = vadd.f32 %v1625, %v2264
      %v2356 = vadd.f32 %v1626, %v2265
      %v2357 = vadd.f32 %v1627, %v2266
      %v2358 = vadd.f32 %v1628, %v2267
      %v2359 = vadd.f32 %v1629, %v2268
      %v2360 = vadd.f32 %v1630, %v2269
      %v2361 = vadd.f32 %v1631, %v2270
      %v2362 = vld [vmem:[%s165 + $0x1c] sm:$0xff]
      %v2363 = vld [vmem:[%s165 + $0x24] sm:$0xff]
      %v2364 = vld [vmem:[%s165 + $0x2c] sm:$0xff]
      %v2365 = vld [vmem:[%s165 + $0x34] sm:$0xff]
      %v2366 = vld [vmem:[%s165 + $0x3c] sm:$0xff]
      %v2367 = vld [vmem:[%s165 + $0x44] sm:$0xff]
      %v2368 = vld [vmem:[%s165 + $0x4c] sm:$0xff]
      %v2369 = vld [vmem:[%s165 + $0x54] sm:$0xff]
      %v2370 = vld [vmem:[%s165 + $0x5c] sm:$0xff]
      %v2371 = vld [vmem:[%s165 + $0x64] sm:$0xff]
      %v2372 = vld [vmem:[%s165 + $0x6c] sm:$0xff]
      %v2373 = vld [vmem:[%s165 + $0x74] sm:$0xff]
      %v2374 = vld [vmem:[%s165 + $0x7c] sm:$0xff]
      %v2375 = vld [vmem:[%s165 + $0x84] sm:$0xff]
      %v2376 = vld [vmem:[%s165 + $0x8c] sm:$0xff]
      %v2377 = vld [vmem:[%s165 + $0x94] sm:$0xff]
      %v2378 = vld [vmem:[%s165 + $0x9c] sm:$0xff]
      %v2379 = vld [vmem:[%s165 + $0xa4] sm:$0xff]
      %v2380 = vld [vmem:[%s165 + $0xac] sm:$0xff]
      %v2381 = vld [vmem:[%s165 + $0xb4] sm:$0xff]
      %v2382 = vld [vmem:[%s165 + $0xbc] sm:$0xff]
      %v2383 = vld [vmem:[%s165 + $0xc4] sm:$0xff]
      %v2384 = vld [vmem:[%s165 + $0xcc] sm:$0xff]
      %v2385 = vld [vmem:[%s165 + $0xd4] sm:$0xff]
      %v2386 = vld [vmem:[%s165 + $0xdc] sm:$0xff]
      %v2387 = vld [vmem:[%s165 + $0xe4] sm:$0xff]
      %v2388 = vld [vmem:[%s165 + $0xec] sm:$0xff]
      %v2389 = vld [vmem:[%s165 + $0xf4] sm:$0xff]
      %v2390 = vld [vmem:[%s165 + $0xfc] sm:$0xff]
      %v2391 = vld [vmem:[%s165 + $0x104] sm:$0xff]
      %v2392 = vld [vmem:[%s165 + $0x10c] sm:$0xff]
      %v2393 = vld [vmem:[%s165 + $0x114] sm:$0xff]
      %v2394 = vld [vmem:[%s165 + $0x11c] sm:$0xff]
      %v2395 = vld [vmem:[%s165 + $0x124] sm:$0xff]
      %v2396 = vld [vmem:[%s165 + $0x12c] sm:$0xff]
      %v2397 = vld [vmem:[%s165 + $0x134] sm:$0xff]
      %v2398 = vld [vmem:[%s165 + $0x13c] sm:$0xff]
      %v2399 = vld [vmem:[%s165 + $0x144] sm:$0xff]
      %v2400 = vld [vmem:[%s165 + $0x14c] sm:$0xff]
      %v2401 = vld [vmem:[%s165 + $0x154] sm:$0xff]
      %v2402 = vld [vmem:[%s165 + $0x15c] sm:$0xff]
      %v2403 = vld [vmem:[%s165 + $0x164] sm:$0xff]
      %v2404 = vld [vmem:[%s165 + $0x16c] sm:$0xff]
      %v2405 = vld [vmem:[%s165 + $0x174] sm:$0xff]
      %v2406 = vld [vmem:[%s165 + $0x17c] sm:$0xff]
      %v2407 = vld [vmem:[%s165 + $0x184] sm:$0xff]
      %v2408 = vld [vmem:[%s165 + $0x18c] sm:$0xff]
      %v2409 = vld [vmem:[%s165 + $0x194] sm:$0xff]
      %v2410 = vld [vmem:[%s165 + $0x19c] sm:$0xff]
      %v2411 = vld [vmem:[%s165 + $0x1a4] sm:$0xff]
      %v2412 = vld [vmem:[%s165 + $0x1ac] sm:$0xff]
      %v2413 = vld [vmem:[%s165 + $0x1b4] sm:$0xff]
      %v2414 = vld [vmem:[%s165 + $0x1bc] sm:$0xff]
      %v2415 = vld [vmem:[%s165 + $0x1c4] sm:$0xff]
      %v2416 = vld [vmem:[%s165 + $0x1cc] sm:$0xff]
      %v2417 = vld [vmem:[%s165 + $0x1d4] sm:$0xff]
      %v2418 = vld [vmem:[%s165 + $0x1dc] sm:$0xff]
      %v2419 = vld [vmem:[%s165 + $0x1e4] sm:$0xff]
      %v2420 = vld [vmem:[%s165 + $0x1ec] sm:$0xff]
      %v2421 = vld [vmem:[%s165 + $0x1f4] sm:$0xff]
      %v2422 = vld [vmem:[%s165 + $0x1fc] sm:$0xff]
      %v2423 = vld [vmem:[%s165 + $0x204] sm:$0xff]
      %v2424 = vld [vmem:[%s165 + $0x20c] sm:$0xff]
      %v2425 = vld [vmem:[%s165 + $0x214] sm:$0xff]
      %v2426 = vld [vmem:[%s165 + $0x21c] sm:$0xff]
      %v2427 = vld [vmem:[%s165 + $0x224] sm:$0xff]
      %v2428 = vld [vmem:[%s165 + $0x22c] sm:$0xff]
      %v2429 = vld [vmem:[%s165 + $0x234] sm:$0xff]
      %v2430 = vld [vmem:[%s165 + $0x23c] sm:$0xff]
      %v2431 = vld [vmem:[%s165 + $0x244] sm:$0xff]
      %v2432 = vld [vmem:[%s165 + $0x24c] sm:$0xff]
      %v2433 = vld [vmem:[%s165 + $0x254] sm:$0xff]
      %v2434 = vld [vmem:[%s165 + $0x25c] sm:$0xff]
      %v2435 = vld [vmem:[%s165 + $0x264] sm:$0xff]
      %v2436 = vld [vmem:[%s165 + $0x26c] sm:$0xff]
      %v2437 = vld [vmem:[%s165 + $0x274] sm:$0xff]
      %v2438 = vld [vmem:[%s165 + $0x27c] sm:$0xff]
      %v2439 = vld [vmem:[%s165 + $0x284] sm:$0xff]
      %v2440 = vld [vmem:[%s165 + $0x28c] sm:$0xff]
      %v2441 = vld [vmem:[%s165 + $0x294] sm:$0xff]
      %v2442 = vld [vmem:[%s165 + $0x29c] sm:$0xff]
      %v2443 = vld [vmem:[%s165 + $0x2a4] sm:$0xff]
      %v2444 = vld [vmem:[%s165 + $0x2ac] sm:$0xff]
      %v2445 = vld [vmem:[%s165 + $0x2b4] sm:$0xff]
      %v2446 = vld [vmem:[%s165 + $0x2bc] sm:$0xff]
      %v2447 = vld [vmem:[%s165 + $0x2c4] sm:$0xff]
      %v2448 = vld [vmem:[%s165 + $0x2cc] sm:$0xff]
      %v2449 = vld [vmem:[%s165 + $0x2d4] sm:$0xff]
      %v2450 = vld [vmem:[%s165 + $0x2dc] sm:$0xff]
      %v2451 = vld [vmem:[%s165 + $0x2e4] sm:$0xff]
      %v2452 = vld [vmem:[%s165 + $0x2ec] sm:$0xff]
      %v2453 = vld [vmem:[%s1 + $0x3] sm:$0x1]
      %2455 = vset.pattern.permute.xlu0 0
      %2456 = vperm.xlu0 %2455, %v2362
      %v2457 = vpop.permute.xlu0 %2456
      %2460 = vset.pattern.permute.xlu0 0
      %2461 = vperm.xlu0 %2460, %v2363
      %v2462 = vpop.permute.xlu0 %2461
      %2465 = vset.pattern.permute.xlu0 0
      %2466 = vperm.xlu0 %2465, %v2364
      %v2467 = vpop.permute.xlu0 %2466
      %2470 = vset.pattern.permute.xlu0 0
      %2471 = vperm.xlu0 %2470, %v2365
      %v2472 = vpop.permute.xlu0 %2471
      %2475 = vset.pattern.permute.xlu0 0
      %2476 = vperm.xlu0 %2475, %v2366
      %v2477 = vpop.permute.xlu0 %2476
      %2480 = vset.pattern.permute.xlu0 0
      %2481 = vperm.xlu0 %2480, %v2367
      %v2482 = vpop.permute.xlu0 %2481
      %2485 = vset.pattern.permute.xlu0 0
      %2486 = vperm.xlu0 %2485, %v2368
      %v2487 = vpop.permute.xlu0 %2486
      %2490 = vset.pattern.permute.xlu0 0
      %2491 = vperm.xlu0 %2490, %v2369
      %v2492 = vpop.permute.xlu0 %2491
      %2495 = vset.pattern.permute.xlu0 0
      %2496 = vperm.xlu0 %2495, %v2370
      %v2497 = vpop.permute.xlu0 %2496
      %2500 = vset.pattern.permute.xlu0 0
      %2501 = vperm.xlu0 %2500, %v2371
      %v2502 = vpop.permute.xlu0 %2501
      %2505 = vset.pattern.permute.xlu0 0
      %2506 = vperm.xlu0 %2505, %v2372
      %v2507 = vpop.permute.xlu0 %2506
      %2510 = vset.pattern.permute.xlu0 0
      %2511 = vperm.xlu0 %2510, %v2373
      %v2512 = vpop.permute.xlu0 %2511
      %2515 = vset.pattern.permute.xlu0 0
      %2516 = vperm.xlu0 %2515, %v2374
      %v2517 = vpop.permute.xlu0 %2516
      %2520 = vset.pattern.permute.xlu0 0
      %2521 = vperm.xlu0 %2520, %v2375
      %v2522 = vpop.permute.xlu0 %2521
      %2525 = vset.pattern.permute.xlu0 0
      %2526 = vperm.xlu0 %2525, %v2376
      %v2527 = vpop.permute.xlu0 %2526
      %2530 = vset.pattern.permute.xlu0 0
      %2531 = vperm.xlu0 %2530, %v2377
      %v2532 = vpop.permute.xlu0 %2531
      %2535 = vset.pattern.permute.xlu0 0
      %2536 = vperm.xlu0 %2535, %v2378
      %v2537 = vpop.permute.xlu0 %2536
      %2540 = vset.pattern.permute.xlu0 0
      %2541 = vperm.xlu0 %2540, %v2379
      %v2542 = vpop.permute.xlu0 %2541
      %2545 = vset.pattern.permute.xlu0 0
      %2546 = vperm.xlu0 %2545, %v2380
      %v2547 = vpop.permute.xlu0 %2546
      %2550 = vset.pattern.permute.xlu0 0
      %2551 = vperm.xlu0 %2550, %v2381
      %v2552 = vpop.permute.xlu0 %2551
      %2555 = vset.pattern.permute.xlu0 0
      %2556 = vperm.xlu0 %2555, %v2382
      %v2557 = vpop.permute.xlu0 %2556
      %2560 = vset.pattern.permute.xlu0 0
      %2561 = vperm.xlu0 %2560, %v2383
      %v2562 = vpop.permute.xlu0 %2561
      %2565 = vset.pattern.permute.xlu0 0
      %2566 = vperm.xlu0 %2565, %v2384
      %v2567 = vpop.permute.xlu0 %2566
      %2570 = vset.pattern.permute.xlu0 0
      %2571 = vperm.xlu0 %2570, %v2385
      %v2572 = vpop.permute.xlu0 %2571
      %2575 = vset.pattern.permute.xlu0 0
      %2576 = vperm.xlu0 %2575, %v2386
      %v2577 = vpop.permute.xlu0 %2576
      %2580 = vset.pattern.permute.xlu0 0
      %2581 = vperm.xlu0 %2580, %v2387
      %v2582 = vpop.permute.xlu0 %2581
      %2585 = vset.pattern.permute.xlu0 0
      %2586 = vperm.xlu0 %2585, %v2388
      %v2587 = vpop.permute.xlu0 %2586
      %2590 = vset.pattern.permute.xlu0 0
      %2591 = vperm.xlu0 %2590, %v2389
      %v2592 = vpop.permute.xlu0 %2591
      %2595 = vset.pattern.permute.xlu0 0
      %2596 = vperm.xlu0 %2595, %v2390
      %v2597 = vpop.permute.xlu0 %2596
      %2600 = vset.pattern.permute.xlu0 0
      %2601 = vperm.xlu0 %2600, %v2391
      %v2602 = vpop.permute.xlu0 %2601
      %2605 = vset.pattern.permute.xlu0 0
      %2606 = vperm.xlu0 %2605, %v2392
      %v2607 = vpop.permute.xlu0 %2606
      %2610 = vset.pattern.permute.xlu0 0
      %2611 = vperm.xlu0 %2610, %v2393
      %v2612 = vpop.permute.xlu0 %2611
      %2615 = vset.pattern.permute.xlu0 0
      %2616 = vperm.xlu0 %2615, %v2394
      %v2617 = vpop.permute.xlu0 %2616
      %2620 = vset.pattern.permute.xlu0 0
      %2621 = vperm.xlu0 %2620, %v2395
      %v2622 = vpop.permute.xlu0 %2621
      %2625 = vset.pattern.permute.xlu0 0
      %2626 = vperm.xlu0 %2625, %v2396
      %v2627 = vpop.permute.xlu0 %2626
      %2630 = vset.pattern.permute.xlu0 0
      %2631 = vperm.xlu0 %2630, %v2397
      %v2632 = vpop.permute.xlu0 %2631
      %2635 = vset.pattern.permute.xlu0 0
      %2636 = vperm.xlu0 %2635, %v2398
      %v2637 = vpop.permute.xlu0 %2636
      %2640 = vset.pattern.permute.xlu0 0
      %2641 = vperm.xlu0 %2640, %v2399
      %v2642 = vpop.permute.xlu0 %2641
      %2645 = vset.pattern.permute.xlu0 0
      %2646 = vperm.xlu0 %2645, %v2400
      %v2647 = vpop.permute.xlu0 %2646
      %2650 = vset.pattern.permute.xlu0 0
      %2651 = vperm.xlu0 %2650, %v2401
      %v2652 = vpop.permute.xlu0 %2651
      %2655 = vset.pattern.permute.xlu0 0
      %2656 = vperm.xlu0 %2655, %v2402
      %v2657 = vpop.permute.xlu0 %2656
      %2660 = vset.pattern.permute.xlu0 0
      %2661 = vperm.xlu0 %2660, %v2403
      %v2662 = vpop.permute.xlu0 %2661
      %2665 = vset.pattern.permute.xlu0 0
      %2666 = vperm.xlu0 %2665, %v2404
      %v2667 = vpop.permute.xlu0 %2666
      %2670 = vset.pattern.permute.xlu0 0
      %2671 = vperm.xlu0 %2670, %v2405
      %v2672 = vpop.permute.xlu0 %2671
      %2675 = vset.pattern.permute.xlu0 0
      %2676 = vperm.xlu0 %2675, %v2406
      %v2677 = vpop.permute.xlu0 %2676
      %2680 = vset.pattern.permute.xlu0 0
      %2681 = vperm.xlu0 %2680, %v2407
      %v2682 = vpop.permute.xlu0 %2681
      %2685 = vset.pattern.permute.xlu0 0
      %2686 = vperm.xlu0 %2685, %v2408
      %v2687 = vpop.permute.xlu0 %2686
      %2690 = vset.pattern.permute.xlu0 0
      %2691 = vperm.xlu0 %2690, %v2409
      %v2692 = vpop.permute.xlu0 %2691
      %2695 = vset.pattern.permute.xlu0 0
      %2696 = vperm.xlu0 %2695, %v2410
      %v2697 = vpop.permute.xlu0 %2696
      %2700 = vset.pattern.permute.xlu0 0
      %2701 = vperm.xlu0 %2700, %v2411
      %v2702 = vpop.permute.xlu0 %2701
      %2705 = vset.pattern.permute.xlu0 0
      %2706 = vperm.xlu0 %2705, %v2412
      %v2707 = vpop.permute.xlu0 %2706
      %2710 = vset.pattern.permute.xlu0 0
      %2711 = vperm.xlu0 %2710, %v2413
      %v2712 = vpop.permute.xlu0 %2711
      %2715 = vset.pattern.permute.xlu0 0
      %2716 = vperm.xlu0 %2715, %v2414
      %v2717 = vpop.permute.xlu0 %2716
      %2720 = vset.pattern.permute.xlu0 0
      %2721 = vperm.xlu0 %2720, %v2415
      %v2722 = vpop.permute.xlu0 %2721
      %2725 = vset.pattern.permute.xlu0 0
      %2726 = vperm.xlu0 %2725, %v2416
      %v2727 = vpop.permute.xlu0 %2726
      %2730 = vset.pattern.permute.xlu0 0
      %2731 = vperm.xlu0 %2730, %v2417
      %v2732 = vpop.permute.xlu0 %2731
      %2735 = vset.pattern.permute.xlu0 0
      %2736 = vperm.xlu0 %2735, %v2418
      %v2737 = vpop.permute.xlu0 %2736
      %2740 = vset.pattern.permute.xlu0 0
      %2741 = vperm.xlu0 %2740, %v2419
      %v2742 = vpop.permute.xlu0 %2741
      %2745 = vset.pattern.permute.xlu0 0
      %2746 = vperm.xlu0 %2745, %v2420
      %v2747 = vpop.permute.xlu0 %2746
      %2750 = vset.pattern.permute.xlu0 0
      %2751 = vperm.xlu0 %2750, %v2421
      %v2752 = vpop.permute.xlu0 %2751
      %2755 = vset.pattern.permute.xlu0 0
      %2756 = vperm.xlu0 %2755, %v2422
      %v2757 = vpop.permute.xlu0 %2756
      %2760 = vset.pattern.permute.xlu0 0
      %2761 = vperm.xlu0 %2760, %v2423
      %v2762 = vpop.permute.xlu0 %2761
      %2765 = vset.pattern.permute.xlu0 0
      %2766 = vperm.xlu0 %2765, %v2424
      %v2767 = vpop.permute.xlu0 %2766
      %2770 = vset.pattern.permute.xlu0 0
      %2771 = vperm.xlu0 %2770, %v2425
      %v2772 = vpop.permute.xlu0 %2771
      %2775 = vset.pattern.permute.xlu0 0
      %2776 = vperm.xlu0 %2775, %v2426
      %v2777 = vpop.permute.xlu0 %2776
      %2780 = vset.pattern.permute.xlu0 0
      %2781 = vperm.xlu0 %2780, %v2427
      %v2782 = vpop.permute.xlu0 %2781
      %2785 = vset.pattern.permute.xlu0 0
      %2786 = vperm.xlu0 %2785, %v2428
      %v2787 = vpop.permute.xlu0 %2786
      %2790 = vset.pattern.permute.xlu0 0
      %2791 = vperm.xlu0 %2790, %v2429
      %v2792 = vpop.permute.xlu0 %2791
      %2795 = vset.pattern.permute.xlu0 0
      %2796 = vperm.xlu0 %2795, %v2430
      %v2797 = vpop.permute.xlu0 %2796
      %2800 = vset.pattern.permute.xlu0 0
      %2801 = vperm.xlu0 %2800, %v2431
      %v2802 = vpop.permute.xlu0 %2801
      %2805 = vset.pattern.permute.xlu0 0
      %2806 = vperm.xlu0 %2805, %v2432
      %v2807 = vpop.permute.xlu0 %2806
      %2810 = vset.pattern.permute.xlu0 0
      %2811 = vperm.xlu0 %2810, %v2433
      %v2812 = vpop.permute.xlu0 %2811
      %2815 = vset.pattern.permute.xlu0 0
      %2816 = vperm.xlu0 %2815, %v2434
      %v2817 = vpop.permute.xlu0 %2816
      %2820 = vset.pattern.permute.xlu0 0
      %2821 = vperm.xlu0 %2820, %v2435
      %v2822 = vpop.permute.xlu0 %2821
      %2825 = vset.pattern.permute.xlu0 0
      %2826 = vperm.xlu0 %2825, %v2436
      %v2827 = vpop.permute.xlu0 %2826
      %2830 = vset.pattern.permute.xlu0 0
      %2831 = vperm.xlu0 %2830, %v2437
      %v2832 = vpop.permute.xlu0 %2831
      %2835 = vset.pattern.permute.xlu0 0
      %2836 = vperm.xlu0 %2835, %v2438
      %v2837 = vpop.permute.xlu0 %2836
      %2840 = vset.pattern.permute.xlu0 0
      %2841 = vperm.xlu0 %2840, %v2439
      %v2842 = vpop.permute.xlu0 %2841
      %2845 = vset.pattern.permute.xlu0 0
      %2846 = vperm.xlu0 %2845, %v2440
      %v2847 = vpop.permute.xlu0 %2846
      %2850 = vset.pattern.permute.xlu0 0
      %2851 = vperm.xlu0 %2850, %v2441
      %v2852 = vpop.permute.xlu0 %2851
      %2855 = vset.pattern.permute.xlu0 0
      %2856 = vperm.xlu0 %2855, %v2442
      %v2857 = vpop.permute.xlu0 %2856
      %2860 = vset.pattern.permute.xlu0 0
      %2861 = vperm.xlu0 %2860, %v2443
      %v2862 = vpop.permute.xlu0 %2861
      %2865 = vset.pattern.permute.xlu0 0
      %2866 = vperm.xlu0 %2865, %v2444
      %v2867 = vpop.permute.xlu0 %2866
      %2870 = vset.pattern.permute.xlu0 0
      %2871 = vperm.xlu0 %2870, %v2445
      %v2872 = vpop.permute.xlu0 %2871
      %2875 = vset.pattern.permute.xlu0 0
      %2876 = vperm.xlu0 %2875, %v2446
      %v2877 = vpop.permute.xlu0 %2876
      %2880 = vset.pattern.permute.xlu0 0
      %2881 = vperm.xlu0 %2880, %v2447
      %v2882 = vpop.permute.xlu0 %2881
      %2885 = vset.pattern.permute.xlu0 0
      %2886 = vperm.xlu0 %2885, %v2448
      %v2887 = vpop.permute.xlu0 %2886
      %2890 = vset.pattern.permute.xlu0 0
      %2891 = vperm.xlu0 %2890, %v2449
      %v2892 = vpop.permute.xlu0 %2891
      %2895 = vset.pattern.permute.xlu0 0
      %2896 = vperm.xlu0 %2895, %v2450
      %v2897 = vpop.permute.xlu0 %2896
      %2900 = vset.pattern.permute.xlu0 0
      %2901 = vperm.xlu0 %2900, %v2451
      %v2902 = vpop.permute.xlu0 %2901
      %2905 = vset.pattern.permute.xlu0 0
      %2906 = vperm.xlu0 %2905, %v2452
      %v2907 = vpop.permute.xlu0 %2906
      %v2909 = vperm.slane %v2453, 0
      %v2910 = vmul.f32 %v2457, %v2909
      %v2911 = vmul.f32 %v2462, %v2909
      %v2912 = vmul.f32 %v2467, %v2909
      %v2913 = vmul.f32 %v2472, %v2909
      %v2914 = vmul.f32 %v2477, %v2909
      %v2915 = vmul.f32 %v2482, %v2909
      %v2916 = vmul.f32 %v2487, %v2909
      %v2917 = vmul.f32 %v2492, %v2909
      %v2918 = vmul.f32 %v2497, %v2909
      %v2919 = vmul.f32 %v2502, %v2909
      %v2920 = vmul.f32 %v2507, %v2909
      %v2921 = vmul.f32 %v2512, %v2909
      %v2922 = vmul.f32 %v2517, %v2909
      %v2923 = vmul.f32 %v2522, %v2909
      %v2924 = vmul.f32 %v2527, %v2909
      %v2925 = vmul.f32 %v2532, %v2909
      %v2926 = vmul.f32 %v2537, %v2909
      %v2927 = vmul.f32 %v2542, %v2909
      %v2928 = vmul.f32 %v2547, %v2909
      %v2929 = vmul.f32 %v2552, %v2909
      %v2930 = vmul.f32 %v2557, %v2909
      %v2931 = vmul.f32 %v2562, %v2909
      %v2932 = vmul.f32 %v2567, %v2909
      %v2933 = vmul.f32 %v2572, %v2909
      %v2934 = vmul.f32 %v2577, %v2909
      %v2935 = vmul.f32 %v2582, %v2909
      %v2936 = vmul.f32 %v2587, %v2909
      %v2937 = vmul.f32 %v2592, %v2909
      %v2938 = vmul.f32 %v2597, %v2909
      %v2939 = vmul.f32 %v2602, %v2909
      %v2940 = vmul.f32 %v2607, %v2909
      %v2941 = vmul.f32 %v2612, %v2909
      %v2942 = vmul.f32 %v2617, %v2909
      %v2943 = vmul.f32 %v2622, %v2909
      %v2944 = vmul.f32 %v2627, %v2909
      %v2945 = vmul.f32 %v2632, %v2909
      %v2946 = vmul.f32 %v2637, %v2909
      %v2947 = vmul.f32 %v2642, %v2909
      %v2948 = vmul.f32 %v2647, %v2909
      %v2949 = vmul.f32 %v2652, %v2909
      %v2950 = vmul.f32 %v2657, %v2909
      %v2951 = vmul.f32 %v2662, %v2909
      %v2952 = vmul.f32 %v2667, %v2909
      %v2953 = vmul.f32 %v2672, %v2909
      %v2954 = vmul.f32 %v2677, %v2909
      %v2955 = vmul.f32 %v2682, %v2909
      %v2956 = vmul.f32 %v2687, %v2909
      %v2957 = vmul.f32 %v2692, %v2909
      %v2958 = vmul.f32 %v2697, %v2909
      %v2959 = vmul.f32 %v2702, %v2909
      %v2960 = vmul.f32 %v2707, %v2909
      %v2961 = vmul.f32 %v2712, %v2909
      %v2962 = vmul.f32 %v2717, %v2909
      %v2963 = vmul.f32 %v2722, %v2909
      %v2964 = vmul.f32 %v2727, %v2909
      %v2965 = vmul.f32 %v2732, %v2909
      %v2966 = vmul.f32 %v2737, %v2909
      %v2967 = vmul.f32 %v2742, %v2909
      %v2968 = vmul.f32 %v2747, %v2909
      %v2969 = vmul.f32 %v2752, %v2909
      %v2970 = vmul.f32 %v2757, %v2909
      %v2971 = vmul.f32 %v2762, %v2909
      %v2972 = vmul.f32 %v2767, %v2909
      %v2973 = vmul.f32 %v2772, %v2909
      %v2974 = vmul.f32 %v2777, %v2909
      %v2975 = vmul.f32 %v2782, %v2909
      %v2976 = vmul.f32 %v2787, %v2909
      %v2977 = vmul.f32 %v2792, %v2909
      %v2978 = vmul.f32 %v2797, %v2909
      %v2979 = vmul.f32 %v2802, %v2909
      %v2980 = vmul.f32 %v2807, %v2909
      %v2981 = vmul.f32 %v2812, %v2909
      %v2982 = vmul.f32 %v2817, %v2909
      %v2983 = vmul.f32 %v2822, %v2909
      %v2984 = vmul.f32 %v2827, %v2909
      %v2985 = vmul.f32 %v2832, %v2909
      %v2986 = vmul.f32 %v2837, %v2909
      %v2987 = vmul.f32 %v2842, %v2909
      %v2988 = vmul.f32 %v2847, %v2909
      %v2989 = vmul.f32 %v2852, %v2909
      %v2990 = vmul.f32 %v2857, %v2909
      %v2991 = vmul.f32 %v2862, %v2909
      %v2992 = vmul.f32 %v2867, %v2909
      %v2993 = vmul.f32 %v2872, %v2909
      %v2994 = vmul.f32 %v2877, %v2909
      %v2995 = vmul.f32 %v2882, %v2909
      %v2996 = vmul.f32 %v2887, %v2909
      %v2997 = vmul.f32 %v2892, %v2909
      %v2998 = vmul.f32 %v2897, %v2909
      %v2999 = vmul.f32 %v2902, %v2909
      %v3000 = vmul.f32 %v2907, %v2909
      %v3001 = vadd.f32 %v2271, %v2910
      %v3002 = vadd.f32 %v2272, %v2911
      %v3003 = vadd.f32 %v2273, %v2912
      %v3004 = vadd.f32 %v2274, %v2913
      %v3005 = vadd.f32 %v2275, %v2914
      %v3006 = vadd.f32 %v2276, %v2915
      %v3007 = vadd.f32 %v2277, %v2916
      %v3008 = vadd.f32 %v2278, %v2917
      %v3009 = vadd.f32 %v2279, %v2918
      %v3010 = vadd.f32 %v2280, %v2919
      %v3011 = vadd.f32 %v2281, %v2920
      %v3012 = vadd.f32 %v2282, %v2921
      %v3013 = vadd.f32 %v2283, %v2922
      %v3014 = vadd.f32 %v2284, %v2923
      %v3015 = vadd.f32 %v2285, %v2924
      %v3016 = vadd.f32 %v2286, %v2925
      %v3017 = vadd.f32 %v2287, %v2926
      %v3018 = vadd.f32 %v2288, %v2927
      %v3019 = vadd.f32 %v2289, %v2928
      %v3020 = vadd.f32 %v2290, %v2929
      %v3021 = vadd.f32 %v2291, %v2930
      %v3022 = vadd.f32 %v2292, %v2931
      %v3023 = vadd.f32 %v2293, %v2932
      %v3024 = vadd.f32 %v2294, %v2933
      %v3025 = vadd.f32 %v2295, %v2934
      %v3026 = vadd.f32 %v2296, %v2935
      %v3027 = vadd.f32 %v2297, %v2936
      %v3028 = vadd.f32 %v2298, %v2937
      %v3029 = vadd.f32 %v2299, %v2938
      %v3030 = vadd.f32 %v2300, %v2939
      %v3031 = vadd.f32 %v2301, %v2940
      %v3032 = vadd.f32 %v2302, %v2941
      %v3033 = vadd.f32 %v2303, %v2942
      %v3034 = vadd.f32 %v2304, %v2943
      %v3035 = vadd.f32 %v2305, %v2944
      %v3036 = vadd.f32 %v2306, %v2945
      %v3037 = vadd.f32 %v2307, %v2946
      %v3038 = vadd.f32 %v2308, %v2947
      %v3039 = vadd.f32 %v2309, %v2948
      %v3040 = vadd.f32 %v2310, %v2949
      %v3041 = vadd.f32 %v2311, %v2950
      %v3042 = vadd.f32 %v2312, %v2951
      %v3043 = vadd.f32 %v2313, %v2952
      %v3044 = vadd.f32 %v2314, %v2953
      %v3045 = vadd.f32 %v2315, %v2954
      %v3046 = vadd.f32 %v2316, %v2955
      %v3047 = vadd.f32 %v2317, %v2956
      %v3048 = vadd.f32 %v2318, %v2957
      %v3049 = vadd.f32 %v2319, %v2958
      %v3050 = vadd.f32 %v2320, %v2959
      %v3051 = vadd.f32 %v2321, %v2960
      %v3052 = vadd.f32 %v2322, %v2961
      %v3053 = vadd.f32 %v2323, %v2962
      %v3054 = vadd.f32 %v2324, %v2963
      %v3055 = vadd.f32 %v2325, %v2964
      %v3056 = vadd.f32 %v2326, %v2965
      %v3057 = vadd.f32 %v2327, %v2966
      %v3058 = vadd.f32 %v2328, %v2967
      %v3059 = vadd.f32 %v2329, %v2968
      %v3060 = vadd.f32 %v2330, %v2969
      %v3061 = vadd.f32 %v2331, %v2970
      %v3062 = vadd.f32 %v2332, %v2971
      %v3063 = vadd.f32 %v2333, %v2972
      %v3064 = vadd.f32 %v2334, %v2973
      %v3065 = vadd.f32 %v2335, %v2974
      %v3066 = vadd.f32 %v2336, %v2975
      %v3067 = vadd.f32 %v2337, %v2976
      %v3068 = vadd.f32 %v2338, %v2977
      %v3069 = vadd.f32 %v2339, %v2978
      %v3070 = vadd.f32 %v2340, %v2979
      %v3071 = vadd.f32 %v2341, %v2980
      %v3072 = vadd.f32 %v2342, %v2981
      %v3073 = vadd.f32 %v2343, %v2982
      %v3074 = vadd.f32 %v2344, %v2983
      %v3075 = vadd.f32 %v2345, %v2984
      %v3076 = vadd.f32 %v2346, %v2985
      %v3077 = vadd.f32 %v2347, %v2986
      %v3078 = vadd.f32 %v2348, %v2987
      %v3079 = vadd.f32 %v2349, %v2988
      %v3080 = vadd.f32 %v2350, %v2989
      %v3081 = vadd.f32 %v2351, %v2990
      %v3082 = vadd.f32 %v2352, %v2991
      %v3083 = vadd.f32 %v2353, %v2992
      %v3084 = vadd.f32 %v2354, %v2993
      %v3085 = vadd.f32 %v2355, %v2994
      %v3086 = vadd.f32 %v2356, %v2995
      %v3087 = vadd.f32 %v2357, %v2996
      %v3088 = vadd.f32 %v2358, %v2997
      %v3089 = vadd.f32 %v2359, %v2998
      %v3090 = vadd.f32 %v2360, %v2999
      %v3091 = vadd.f32 %v2361, %v3000
      %v3092 = vld [vmem:[%s165 + $0x1d] sm:$0xff]
      %v3093 = vld [vmem:[%s165 + $0x25] sm:$0xff]
      %v3094 = vld [vmem:[%s165 + $0x2d] sm:$0xff]
      %v3095 = vld [vmem:[%s165 + $0x35] sm:$0xff]
      %v3096 = vld [vmem:[%s165 + $0x3d] sm:$0xff]
      %v3097 = vld [vmem:[%s165 + $0x45] sm:$0xff]
      %v3098 = vld [vmem:[%s165 + $0x4d] sm:$0xff]
      %v3099 = vld [vmem:[%s165 + $0x55] sm:$0xff]
      %v3100 = vld [vmem:[%s165 + $0x5d] sm:$0xff]
      %v3101 = vld [vmem:[%s165 + $0x65] sm:$0xff]
      %v3102 = vld [vmem:[%s165 + $0x6d] sm:$0xff]
      %v3103 = vld [vmem:[%s165 + $0x75] sm:$0xff]
      %v3104 = vld [vmem:[%s165 + $0x7d] sm:$0xff]
      %v3105 = vld [vmem:[%s165 + $0x85] sm:$0xff]
      %v3106 = vld [vmem:[%s165 + $0x8d] sm:$0xff]
      %v3107 = vld [vmem:[%s165 + $0x95] sm:$0xff]
      %v3108 = vld [vmem:[%s165 + $0x9d] sm:$0xff]
      %v3109 = vld [vmem:[%s165 + $0xa5] sm:$0xff]
      %v3110 = vld [vmem:[%s165 + $0xad] sm:$0xff]
      %v3111 = vld [vmem:[%s165 + $0xb5] sm:$0xff]
      %v3112 = vld [vmem:[%s165 + $0xbd] sm:$0xff]
      %v3113 = vld [vmem:[%s165 + $0xc5] sm:$0xff]
      %v3114 = vld [vmem:[%s165 + $0xcd] sm:$0xff]
      %v3115 = vld [vmem:[%s165 + $0xd5] sm:$0xff]
      %v3116 = vld [vmem:[%s165 + $0xdd] sm:$0xff]
      %v3117 = vld [vmem:[%s165 + $0xe5] sm:$0xff]
      %v3118 = vld [vmem:[%s165 + $0xed] sm:$0xff]
      %v3119 = vld [vmem:[%s165 + $0xf5] sm:$0xff]
      %v3120 = vld [vmem:[%s165 + $0xfd] sm:$0xff]
      %v3121 = vld [vmem:[%s165 + $0x105] sm:$0xff]
      %v3122 = vld [vmem:[%s165 + $0x10d] sm:$0xff]
      %v3123 = vld [vmem:[%s165 + $0x115] sm:$0xff]
      %v3124 = vld [vmem:[%s165 + $0x11d] sm:$0xff]
      %v3125 = vld [vmem:[%s165 + $0x125] sm:$0xff]
      %v3126 = vld [vmem:[%s165 + $0x12d] sm:$0xff]
      %v3127 = vld [vmem:[%s165 + $0x135] sm:$0xff]
      %v3128 = vld [vmem:[%s165 + $0x13d] sm:$0xff]
      %v3129 = vld [vmem:[%s165 + $0x145] sm:$0xff]
      %v3130 = vld [vmem:[%s165 + $0x14d] sm:$0xff]
      %v3131 = vld [vmem:[%s165 + $0x155] sm:$0xff]
      %v3132 = vld [vmem:[%s165 + $0x15d] sm:$0xff]
      %v3133 = vld [vmem:[%s165 + $0x165] sm:$0xff]
      %v3134 = vld [vmem:[%s165 + $0x16d] sm:$0xff]
      %v3135 = vld [vmem:[%s165 + $0x175] sm:$0xff]
      %v3136 = vld [vmem:[%s165 + $0x17d] sm:$0xff]
      %v3137 = vld [vmem:[%s165 + $0x185] sm:$0xff]
      %v3138 = vld [vmem:[%s165 + $0x18d] sm:$0xff]
      %v3139 = vld [vmem:[%s165 + $0x195] sm:$0xff]
      %v3140 = vld [vmem:[%s165 + $0x19d] sm:$0xff]
      %v3141 = vld [vmem:[%s165 + $0x1a5] sm:$0xff]
      %v3142 = vld [vmem:[%s165 + $0x1ad] sm:$0xff]
      %v3143 = vld [vmem:[%s165 + $0x1b5] sm:$0xff]
      %v3144 = vld [vmem:[%s165 + $0x1bd] sm:$0xff]
      %v3145 = vld [vmem:[%s165 + $0x1c5] sm:$0xff]
      %v3146 = vld [vmem:[%s165 + $0x1cd] sm:$0xff]
      %v3147 = vld [vmem:[%s165 + $0x1d5] sm:$0xff]
      %v3148 = vld [vmem:[%s165 + $0x1dd] sm:$0xff]
      %v3149 = vld [vmem:[%s165 + $0x1e5] sm:$0xff]
      %v3150 = vld [vmem:[%s165 + $0x1ed] sm:$0xff]
      %v3151 = vld [vmem:[%s165 + $0x1f5] sm:$0xff]
      %v3152 = vld [vmem:[%s165 + $0x1fd] sm:$0xff]
      %v3153 = vld [vmem:[%s165 + $0x205] sm:$0xff]
      %v3154 = vld [vmem:[%s165 + $0x20d] sm:$0xff]
      %v3155 = vld [vmem:[%s165 + $0x215] sm:$0xff]
      %v3156 = vld [vmem:[%s165 + $0x21d] sm:$0xff]
      %v3157 = vld [vmem:[%s165 + $0x225] sm:$0xff]
      %v3158 = vld [vmem:[%s165 + $0x22d] sm:$0xff]
      %v3159 = vld [vmem:[%s165 + $0x235] sm:$0xff]
      %v3160 = vld [vmem:[%s165 + $0x23d] sm:$0xff]
      %v3161 = vld [vmem:[%s165 + $0x245] sm:$0xff]
      %v3162 = vld [vmem:[%s165 + $0x24d] sm:$0xff]
      %v3163 = vld [vmem:[%s165 + $0x255] sm:$0xff]
      %v3164 = vld [vmem:[%s165 + $0x25d] sm:$0xff]
      %v3165 = vld [vmem:[%s165 + $0x265] sm:$0xff]
      %v3166 = vld [vmem:[%s165 + $0x26d] sm:$0xff]
      %v3167 = vld [vmem:[%s165 + $0x275] sm:$0xff]
      %v3168 = vld [vmem:[%s165 + $0x27d] sm:$0xff]
      %v3169 = vld [vmem:[%s165 + $0x285] sm:$0xff]
      %v3170 = vld [vmem:[%s165 + $0x28d] sm:$0xff]
      %v3171 = vld [vmem:[%s165 + $0x295] sm:$0xff]
      %v3172 = vld [vmem:[%s165 + $0x29d] sm:$0xff]
      %v3173 = vld [vmem:[%s165 + $0x2a5] sm:$0xff]
      %v3174 = vld [vmem:[%s165 + $0x2ad] sm:$0xff]
      %v3175 = vld [vmem:[%s165 + $0x2b5] sm:$0xff]
      %v3176 = vld [vmem:[%s165 + $0x2bd] sm:$0xff]
      %v3177 = vld [vmem:[%s165 + $0x2c5] sm:$0xff]
      %v3178 = vld [vmem:[%s165 + $0x2cd] sm:$0xff]
      %v3179 = vld [vmem:[%s165 + $0x2d5] sm:$0xff]
      %v3180 = vld [vmem:[%s165 + $0x2dd] sm:$0xff]
      %v3181 = vld [vmem:[%s165 + $0x2e5] sm:$0xff]
      %v3182 = vld [vmem:[%s165 + $0x2ed] sm:$0xff]
      %v3183 = vld [vmem:[%s1 + $0x4] sm:$0x1]
      %3185 = vset.pattern.permute.xlu0 0
      %3186 = vperm.xlu0 %3185, %v3092
      %v3187 = vpop.permute.xlu0 %3186
      %3190 = vset.pattern.permute.xlu0 0
      %3191 = vperm.xlu0 %3190, %v3093
      %v3192 = vpop.permute.xlu0 %3191
      %3195 = vset.pattern.permute.xlu0 0
      %3196 = vperm.xlu0 %3195, %v3094
      %v3197 = vpop.permute.xlu0 %3196
      %3200 = vset.pattern.permute.xlu0 0
      %3201 = vperm.xlu0 %3200, %v3095
      %v3202 = vpop.permute.xlu0 %3201
      %3205 = vset.pattern.permute.xlu0 0
      %3206 = vperm.xlu0 %3205, %v3096
      %v3207 = vpop.permute.xlu0 %3206
      %3210 = vset.pattern.permute.xlu0 0
      %3211 = vperm.xlu0 %3210, %v3097
      %v3212 = vpop.permute.xlu0 %3211
      %3215 = vset.pattern.permute.xlu0 0
      %3216 = vperm.xlu0 %3215, %v3098
      %v3217 = vpop.permute.xlu0 %3216
      %3220 = vset.pattern.permute.xlu0 0
      %3221 = vperm.xlu0 %3220, %v3099
      %v3222 = vpop.permute.xlu0 %3221
      %3225 = vset.pattern.permute.xlu0 0
      %3226 = vperm.xlu0 %3225, %v3100
      %v3227 = vpop.permute.xlu0 %3226
      %3230 = vset.pattern.permute.xlu0 0
      %3231 = vperm.xlu0 %3230, %v3101
      %v3232 = vpop.permute.xlu0 %3231
      %3235 = vset.pattern.permute.xlu0 0
      %3236 = vperm.xlu0 %3235, %v3102
      %v3237 = vpop.permute.xlu0 %3236
      %3240 = vset.pattern.permute.xlu0 0
      %3241 = vperm.xlu0 %3240, %v3103
      %v3242 = vpop.permute.xlu0 %3241
      %3245 = vset.pattern.permute.xlu0 0
      %3246 = vperm.xlu0 %3245, %v3104
      %v3247 = vpop.permute.xlu0 %3246
      %3250 = vset.pattern.permute.xlu0 0
      %3251 = vperm.xlu0 %3250, %v3105
      %v3252 = vpop.permute.xlu0 %3251
      %3255 = vset.pattern.permute.xlu0 0
      %3256 = vperm.xlu0 %3255, %v3106
      %v3257 = vpop.permute.xlu0 %3256
      %3260 = vset.pattern.permute.xlu0 0
      %3261 = vperm.xlu0 %3260, %v3107
      %v3262 = vpop.permute.xlu0 %3261
      %3265 = vset.pattern.permute.xlu0 0
      %3266 = vperm.xlu0 %3265, %v3108
      %v3267 = vpop.permute.xlu0 %3266
      %3270 = vset.pattern.permute.xlu0 0
      %3271 = vperm.xlu0 %3270, %v3109
      %v3272 = vpop.permute.xlu0 %3271
      %3275 = vset.pattern.permute.xlu0 0
      %3276 = vperm.xlu0 %3275, %v3110
      %v3277 = vpop.permute.xlu0 %3276
      %3280 = vset.pattern.permute.xlu0 0
      %3281 = vperm.xlu0 %3280, %v3111
      %v3282 = vpop.permute.xlu0 %3281
      %3285 = vset.pattern.permute.xlu0 0
      %3286 = vperm.xlu0 %3285, %v3112
      %v3287 = vpop.permute.xlu0 %3286
      %3290 = vset.pattern.permute.xlu0 0
      %3291 = vperm.xlu0 %3290, %v3113
      %v3292 = vpop.permute.xlu0 %3291
      %3295 = vset.pattern.permute.xlu0 0
      %3296 = vperm.xlu0 %3295, %v3114
      %v3297 = vpop.permute.xlu0 %3296
      %3300 = vset.pattern.permute.xlu0 0
      %3301 = vperm.xlu0 %3300, %v3115
      %v3302 = vpop.permute.xlu0 %3301
      %3305 = vset.pattern.permute.xlu0 0
      %3306 = vperm.xlu0 %3305, %v3116
      %v3307 = vpop.permute.xlu0 %3306
      %3310 = vset.pattern.permute.xlu0 0
      %3311 = vperm.xlu0 %3310, %v3117
      %v3312 = vpop.permute.xlu0 %3311
      %3315 = vset.pattern.permute.xlu0 0
      %3316 = vperm.xlu0 %3315, %v3118
      %v3317 = vpop.permute.xlu0 %3316
      %3320 = vset.pattern.permute.xlu0 0
      %3321 = vperm.xlu0 %3320, %v3119
      %v3322 = vpop.permute.xlu0 %3321
      %3325 = vset.pattern.permute.xlu0 0
      %3326 = vperm.xlu0 %3325, %v3120
      %v3327 = vpop.permute.xlu0 %3326
      %3330 = vset.pattern.permute.xlu0 0
      %3331 = vperm.xlu0 %3330, %v3121
      %v3332 = vpop.permute.xlu0 %3331
      %3335 = vset.pattern.permute.xlu0 0
      %3336 = vperm.xlu0 %3335, %v3122
      %v3337 = vpop.permute.xlu0 %3336
      %3340 = vset.pattern.permute.xlu0 0
      %3341 = vperm.xlu0 %3340, %v3123
      %v3342 = vpop.permute.xlu0 %3341
      %3345 = vset.pattern.permute.xlu0 0
      %3346 = vperm.xlu0 %3345, %v3124
      %v3347 = vpop.permute.xlu0 %3346
      %3350 = vset.pattern.permute.xlu0 0
      %3351 = vperm.xlu0 %3350, %v3125
      %v3352 = vpop.permute.xlu0 %3351
      %3355 = vset.pattern.permute.xlu0 0
      %3356 = vperm.xlu0 %3355, %v3126
      %v3357 = vpop.permute.xlu0 %3356
      %3360 = vset.pattern.permute.xlu0 0
      %3361 = vperm.xlu0 %3360, %v3127
      %v3362 = vpop.permute.xlu0 %3361
      %3365 = vset.pattern.permute.xlu0 0
      %3366 = vperm.xlu0 %3365, %v3128
      %v3367 = vpop.permute.xlu0 %3366
      %3370 = vset.pattern.permute.xlu0 0
      %3371 = vperm.xlu0 %3370, %v3129
      %v3372 = vpop.permute.xlu0 %3371
      %3375 = vset.pattern.permute.xlu0 0
      %3376 = vperm.xlu0 %3375, %v3130
      %v3377 = vpop.permute.xlu0 %3376
      %3380 = vset.pattern.permute.xlu0 0
      %3381 = vperm.xlu0 %3380, %v3131
      %v3382 = vpop.permute.xlu0 %3381
      %3385 = vset.pattern.permute.xlu0 0
      %3386 = vperm.xlu0 %3385, %v3132
      %v3387 = vpop.permute.xlu0 %3386
      %3390 = vset.pattern.permute.xlu0 0
      %3391 = vperm.xlu0 %3390, %v3133
      %v3392 = vpop.permute.xlu0 %3391
      %3395 = vset.pattern.permute.xlu0 0
      %3396 = vperm.xlu0 %3395, %v3134
      %v3397 = vpop.permute.xlu0 %3396
      %3400 = vset.pattern.permute.xlu0 0
      %3401 = vperm.xlu0 %3400, %v3135
      %v3402 = vpop.permute.xlu0 %3401
      %3405 = vset.pattern.permute.xlu0 0
      %3406 = vperm.xlu0 %3405, %v3136
      %v3407 = vpop.permute.xlu0 %3406
      %3410 = vset.pattern.permute.xlu0 0
      %3411 = vperm.xlu0 %3410, %v3137
      %v3412 = vpop.permute.xlu0 %3411
      %3415 = vset.pattern.permute.xlu0 0
      %3416 = vperm.xlu0 %3415, %v3138
      %v3417 = vpop.permute.xlu0 %3416
      %3420 = vset.pattern.permute.xlu0 0
      %3421 = vperm.xlu0 %3420, %v3139
      %v3422 = vpop.permute.xlu0 %3421
      %3425 = vset.pattern.permute.xlu0 0
      %3426 = vperm.xlu0 %3425, %v3140
      %v3427 = vpop.permute.xlu0 %3426
      %3430 = vset.pattern.permute.xlu0 0
      %3431 = vperm.xlu0 %3430, %v3141
      %v3432 = vpop.permute.xlu0 %3431
      %3435 = vset.pattern.permute.xlu0 0
      %3436 = vperm.xlu0 %3435, %v3142
      %v3437 = vpop.permute.xlu0 %3436
      %3440 = vset.pattern.permute.xlu0 0
      %3441 = vperm.xlu0 %3440, %v3143
      %v3442 = vpop.permute.xlu0 %3441
      %3445 = vset.pattern.permute.xlu0 0
      %3446 = vperm.xlu0 %3445, %v3144
      %v3447 = vpop.permute.xlu0 %3446
      %3450 = vset.pattern.permute.xlu0 0
      %3451 = vperm.xlu0 %3450, %v3145
      %v3452 = vpop.permute.xlu0 %3451
      %3455 = vset.pattern.permute.xlu0 0
      %3456 = vperm.xlu0 %3455, %v3146
      %v3457 = vpop.permute.xlu0 %3456
      %3460 = vset.pattern.permute.xlu0 0
      %3461 = vperm.xlu0 %3460, %v3147
      %v3462 = vpop.permute.xlu0 %3461
      %3465 = vset.pattern.permute.xlu0 0
      %3466 = vperm.xlu0 %3465, %v3148
      %v3467 = vpop.permute.xlu0 %3466
      %3470 = vset.pattern.permute.xlu0 0
      %3471 = vperm.xlu0 %3470, %v3149
      %v3472 = vpop.permute.xlu0 %3471
      %3475 = vset.pattern.permute.xlu0 0
      %3476 = vperm.xlu0 %3475, %v3150
      %v3477 = vpop.permute.xlu0 %3476
      %3480 = vset.pattern.permute.xlu0 0
      %3481 = vperm.xlu0 %3480, %v3151
      %v3482 = vpop.permute.xlu0 %3481
      %3485 = vset.pattern.permute.xlu0 0
      %3486 = vperm.xlu0 %3485, %v3152
      %v3487 = vpop.permute.xlu0 %3486
      %3490 = vset.pattern.permute.xlu0 0
      %3491 = vperm.xlu0 %3490, %v3153
      %v3492 = vpop.permute.xlu0 %3491
      %3495 = vset.pattern.permute.xlu0 0
      %3496 = vperm.xlu0 %3495, %v3154
      %v3497 = vpop.permute.xlu0 %3496
      %3500 = vset.pattern.permute.xlu0 0
      %3501 = vperm.xlu0 %3500, %v3155
      %v3502 = vpop.permute.xlu0 %3501
      %3505 = vset.pattern.permute.xlu0 0
      %3506 = vperm.xlu0 %3505, %v3156
      %v3507 = vpop.permute.xlu0 %3506
      %3510 = vset.pattern.permute.xlu0 0
      %3511 = vperm.xlu0 %3510, %v3157
      %v3512 = vpop.permute.xlu0 %3511
      %3515 = vset.pattern.permute.xlu0 0
      %3516 = vperm.xlu0 %3515, %v3158
      %v3517 = vpop.permute.xlu0 %3516
      %3520 = vset.pattern.permute.xlu0 0
      %3521 = vperm.xlu0 %3520, %v3159
      %v3522 = vpop.permute.xlu0 %3521
      %3525 = vset.pattern.permute.xlu0 0
      %3526 = vperm.xlu0 %3525, %v3160
      %v3527 = vpop.permute.xlu0 %3526
      %3530 = vset.pattern.permute.xlu0 0
      %3531 = vperm.xlu0 %3530, %v3161
      %v3532 = vpop.permute.xlu0 %3531
      %3535 = vset.pattern.permute.xlu0 0
      %3536 = vperm.xlu0 %3535, %v3162
      %v3537 = vpop.permute.xlu0 %3536
      %3540 = vset.pattern.permute.xlu0 0
      %3541 = vperm.xlu0 %3540, %v3163
      %v3542 = vpop.permute.xlu0 %3541
      %3545 = vset.pattern.permute.xlu0 0
      %3546 = vperm.xlu0 %3545, %v3164
      %v3547 = vpop.permute.xlu0 %3546
      %3550 = vset.pattern.permute.xlu0 0
      %3551 = vperm.xlu0 %3550, %v3165
      %v3552 = vpop.permute.xlu0 %3551
      %3555 = vset.pattern.permute.xlu0 0
      %3556 = vperm.xlu0 %3555, %v3166
      %v3557 = vpop.permute.xlu0 %3556
      %3560 = vset.pattern.permute.xlu0 0
      %3561 = vperm.xlu0 %3560, %v3167
      %v3562 = vpop.permute.xlu0 %3561
      %3565 = vset.pattern.permute.xlu0 0
      %3566 = vperm.xlu0 %3565, %v3168
      %v3567 = vpop.permute.xlu0 %3566
      %3570 = vset.pattern.permute.xlu0 0
      %3571 = vperm.xlu0 %3570, %v3169
      %v3572 = vpop.permute.xlu0 %3571
      %3575 = vset.pattern.permute.xlu0 0
      %3576 = vperm.xlu0 %3575, %v3170
      %v3577 = vpop.permute.xlu0 %3576
      %3580 = vset.pattern.permute.xlu0 0
      %3581 = vperm.xlu0 %3580, %v3171
      %v3582 = vpop.permute.xlu0 %3581
      %3585 = vset.pattern.permute.xlu0 0
      %3586 = vperm.xlu0 %3585, %v3172
      %v3587 = vpop.permute.xlu0 %3586
      %3590 = vset.pattern.permute.xlu0 0
      %3591 = vperm.xlu0 %3590, %v3173
      %v3592 = vpop.permute.xlu0 %3591
      %3595 = vset.pattern.permute.xlu0 0
      %3596 = vperm.xlu0 %3595, %v3174
      %v3597 = vpop.permute.xlu0 %3596
      %3600 = vset.pattern.permute.xlu0 0
      %3601 = vperm.xlu0 %3600, %v3175
      %v3602 = vpop.permute.xlu0 %3601
      %3605 = vset.pattern.permute.xlu0 0
      %3606 = vperm.xlu0 %3605, %v3176
      %v3607 = vpop.permute.xlu0 %3606
      %3610 = vset.pattern.permute.xlu0 0
      %3611 = vperm.xlu0 %3610, %v3177
      %v3612 = vpop.permute.xlu0 %3611
      %3615 = vset.pattern.permute.xlu0 0
      %3616 = vperm.xlu0 %3615, %v3178
      %v3617 = vpop.permute.xlu0 %3616
      %3620 = vset.pattern.permute.xlu0 0
      %3621 = vperm.xlu0 %3620, %v3179
      %v3622 = vpop.permute.xlu0 %3621
      %3625 = vset.pattern.permute.xlu0 0
      %3626 = vperm.xlu0 %3625, %v3180
      %v3627 = vpop.permute.xlu0 %3626
      %3630 = vset.pattern.permute.xlu0 0
      %3631 = vperm.xlu0 %3630, %v3181
      %v3632 = vpop.permute.xlu0 %3631
      %3635 = vset.pattern.permute.xlu0 0
      %3636 = vperm.xlu0 %3635, %v3182
      %v3637 = vpop.permute.xlu0 %3636
      %v3639 = vperm.slane %v3183, 0
      %v3640 = vmul.f32 %v3187, %v3639
      %v3641 = vmul.f32 %v3192, %v3639
      %v3642 = vmul.f32 %v3197, %v3639
      %v3643 = vmul.f32 %v3202, %v3639
      %v3644 = vmul.f32 %v3207, %v3639
      %v3645 = vmul.f32 %v3212, %v3639
      %v3646 = vmul.f32 %v3217, %v3639
      %v3647 = vmul.f32 %v3222, %v3639
      %v3648 = vmul.f32 %v3227, %v3639
      %v3649 = vmul.f32 %v3232, %v3639
      %v3650 = vmul.f32 %v3237, %v3639
      %v3651 = vmul.f32 %v3242, %v3639
      %v3652 = vmul.f32 %v3247, %v3639
      %v3653 = vmul.f32 %v3252, %v3639
      %v3654 = vmul.f32 %v3257, %v3639
      %v3655 = vmul.f32 %v3262, %v3639
      %v3656 = vmul.f32 %v3267, %v3639
      %v3657 = vmul.f32 %v3272, %v3639
      %v3658 = vmul.f32 %v3277, %v3639
      %v3659 = vmul.f32 %v3282, %v3639
      %v3660 = vmul.f32 %v3287, %v3639
      %v3661 = vmul.f32 %v3292, %v3639
      %v3662 = vmul.f32 %v3297, %v3639
      %v3663 = vmul.f32 %v3302, %v3639
      %v3664 = vmul.f32 %v3307, %v3639
      %v3665 = vmul.f32 %v3312, %v3639
      %v3666 = vmul.f32 %v3317, %v3639
      %v3667 = vmul.f32 %v3322, %v3639
      %v3668 = vmul.f32 %v3327, %v3639
      %v3669 = vmul.f32 %v3332, %v3639
      %v3670 = vmul.f32 %v3337, %v3639
      %v3671 = vmul.f32 %v3342, %v3639
      %v3672 = vmul.f32 %v3347, %v3639
      %v3673 = vmul.f32 %v3352, %v3639
      %v3674 = vmul.f32 %v3357, %v3639
      %v3675 = vmul.f32 %v3362, %v3639
      %v3676 = vmul.f32 %v3367, %v3639
      %v3677 = vmul.f32 %v3372, %v3639
      %v3678 = vmul.f32 %v3377, %v3639
      %v3679 = vmul.f32 %v3382, %v3639
      %v3680 = vmul.f32 %v3387, %v3639
      %v3681 = vmul.f32 %v3392, %v3639
      %v3682 = vmul.f32 %v3397, %v3639
      %v3683 = vmul.f32 %v3402, %v3639
      %v3684 = vmul.f32 %v3407, %v3639
      %v3685 = vmul.f32 %v3412, %v3639
      %v3686 = vmul.f32 %v3417, %v3639
      %v3687 = vmul.f32 %v3422, %v3639
      %v3688 = vmul.f32 %v3427, %v3639
      %v3689 = vmul.f32 %v3432, %v3639
      %v3690 = vmul.f32 %v3437, %v3639
      %v3691 = vmul.f32 %v3442, %v3639
      %v3692 = vmul.f32 %v3447, %v3639
      %v3693 = vmul.f32 %v3452, %v3639
      %v3694 = vmul.f32 %v3457, %v3639
      %v3695 = vmul.f32 %v3462, %v3639
      %v3696 = vmul.f32 %v3467, %v3639
      %v3697 = vmul.f32 %v3472, %v3639
      %v3698 = vmul.f32 %v3477, %v3639
      %v3699 = vmul.f32 %v3482, %v3639
      %v3700 = vmul.f32 %v3487, %v3639
      %v3701 = vmul.f32 %v3492, %v3639
      %v3702 = vmul.f32 %v3497, %v3639
      %v3703 = vmul.f32 %v3502, %v3639
      %v3704 = vmul.f32 %v3507, %v3639
      %v3705 = vmul.f32 %v3512, %v3639
      %v3706 = vmul.f32 %v3517, %v3639
      %v3707 = vmul.f32 %v3522, %v3639
      %v3708 = vmul.f32 %v3527, %v3639
      %v3709 = vmul.f32 %v3532, %v3639
      %v3710 = vmul.f32 %v3537, %v3639
      %v3711 = vmul.f32 %v3542, %v3639
      %v3712 = vmul.f32 %v3547, %v3639
      %v3713 = vmul.f32 %v3552, %v3639
      %v3714 = vmul.f32 %v3557, %v3639
      %v3715 = vmul.f32 %v3562, %v3639
      %v3716 = vmul.f32 %v3567, %v3639
      %v3717 = vmul.f32 %v3572, %v3639
      %v3718 = vmul.f32 %v3577, %v3639
      %v3719 = vmul.f32 %v3582, %v3639
      %v3720 = vmul.f32 %v3587, %v3639
      %v3721 = vmul.f32 %v3592, %v3639
      %v3722 = vmul.f32 %v3597, %v3639
      %v3723 = vmul.f32 %v3602, %v3639
      %v3724 = vmul.f32 %v3607, %v3639
      %v3725 = vmul.f32 %v3612, %v3639
      %v3726 = vmul.f32 %v3617, %v3639
      %v3727 = vmul.f32 %v3622, %v3639
      %v3728 = vmul.f32 %v3627, %v3639
      %v3729 = vmul.f32 %v3632, %v3639
      %v3730 = vmul.f32 %v3637, %v3639
      %v3731 = vadd.f32 %v3001, %v3640
      %v3732 = vadd.f32 %v3002, %v3641
      %v3733 = vadd.f32 %v3003, %v3642
      %v3734 = vadd.f32 %v3004, %v3643
      %v3735 = vadd.f32 %v3005, %v3644
      %v3736 = vadd.f32 %v3006, %v3645
      %v3737 = vadd.f32 %v3007, %v3646
      %v3738 = vadd.f32 %v3008, %v3647
      %v3739 = vadd.f32 %v3009, %v3648
      %v3740 = vadd.f32 %v3010, %v3649
      %v3741 = vadd.f32 %v3011, %v3650
      %v3742 = vadd.f32 %v3012, %v3651
      %v3743 = vadd.f32 %v3013, %v3652
      %v3744 = vadd.f32 %v3014, %v3653
      %v3745 = vadd.f32 %v3015, %v3654
      %v3746 = vadd.f32 %v3016, %v3655
      %v3747 = vadd.f32 %v3017, %v3656
      %v3748 = vadd.f32 %v3018, %v3657
      %v3749 = vadd.f32 %v3019, %v3658
      %v3750 = vadd.f32 %v3020, %v3659
      %v3751 = vadd.f32 %v3021, %v3660
      %v3752 = vadd.f32 %v3022, %v3661
      %v3753 = vadd.f32 %v3023, %v3662
      %v3754 = vadd.f32 %v3024, %v3663
      %v3755 = vadd.f32 %v3025, %v3664
      %v3756 = vadd.f32 %v3026, %v3665
      %v3757 = vadd.f32 %v3027, %v3666
      %v3758 = vadd.f32 %v3028, %v3667
      %v3759 = vadd.f32 %v3029, %v3668
      %v3760 = vadd.f32 %v3030, %v3669
      %v3761 = vadd.f32 %v3031, %v3670
      %v3762 = vadd.f32 %v3032, %v3671
      %v3763 = vadd.f32 %v3033, %v3672
      %v3764 = vadd.f32 %v3034, %v3673
      %v3765 = vadd.f32 %v3035, %v3674
      %v3766 = vadd.f32 %v3036, %v3675
      %v3767 = vadd.f32 %v3037, %v3676
      %v3768 = vadd.f32 %v3038, %v3677
      %v3769 = vadd.f32 %v3039, %v3678
      %v3770 = vadd.f32 %v3040, %v3679
      %v3771 = vadd.f32 %v3041, %v3680
      %v3772 = vadd.f32 %v3042, %v3681
      %v3773 = vadd.f32 %v3043, %v3682
      %v3774 = vadd.f32 %v3044, %v3683
      %v3775 = vadd.f32 %v3045, %v3684
      %v3776 = vadd.f32 %v3046, %v3685
      %v3777 = vadd.f32 %v3047, %v3686
      %v3778 = vadd.f32 %v3048, %v3687
      %v3779 = vadd.f32 %v3049, %v3688
      %v3780 = vadd.f32 %v3050, %v3689
      %v3781 = vadd.f32 %v3051, %v3690
      %v3782 = vadd.f32 %v3052, %v3691
      %v3783 = vadd.f32 %v3053, %v3692
      %v3784 = vadd.f32 %v3054, %v3693
      %v3785 = vadd.f32 %v3055, %v3694
      %v3786 = vadd.f32 %v3056, %v3695
      %v3787 = vadd.f32 %v3057, %v3696
      %v3788 = vadd.f32 %v3058, %v3697
      %v3789 = vadd.f32 %v3059, %v3698
      %v3790 = vadd.f32 %v3060, %v3699
      %v3791 = vadd.f32 %v3061, %v3700
      %v3792 = vadd.f32 %v3062, %v3701
      %v3793 = vadd.f32 %v3063, %v3702
      %v3794 = vadd.f32 %v3064, %v3703
      %v3795 = vadd.f32 %v3065, %v3704
      %v3796 = vadd.f32 %v3066, %v3705
      %v3797 = vadd.f32 %v3067, %v3706
      %v3798 = vadd.f32 %v3068, %v3707
      %v3799 = vadd.f32 %v3069, %v3708
      %v3800 = vadd.f32 %v3070, %v3709
      %v3801 = vadd.f32 %v3071, %v3710
      %v3802 = vadd.f32 %v3072, %v3711
      %v3803 = vadd.f32 %v3073, %v3712
      %v3804 = vadd.f32 %v3074, %v3713
      %v3805 = vadd.f32 %v3075, %v3714
      %v3806 = vadd.f32 %v3076, %v3715
      %v3807 = vadd.f32 %v3077, %v3716
      %v3808 = vadd.f32 %v3078, %v3717
      %v3809 = vadd.f32 %v3079, %v3718
      %v3810 = vadd.f32 %v3080, %v3719
      %v3811 = vadd.f32 %v3081, %v3720
      %v3812 = vadd.f32 %v3082, %v3721
      %v3813 = vadd.f32 %v3083, %v3722
      %v3814 = vadd.f32 %v3084, %v3723
      %v3815 = vadd.f32 %v3085, %v3724
      %v3816 = vadd.f32 %v3086, %v3725
      %v3817 = vadd.f32 %v3087, %v3726
      %v3818 = vadd.f32 %v3088, %v3727
      %v3819 = vadd.f32 %v3089, %v3728
      %v3820 = vadd.f32 %v3090, %v3729
      %v3821 = vadd.f32 %v3091, %v3730
      %v3822 = vld [vmem:[%s165 + $0x1e] sm:$0xff]
      %v3823 = vld [vmem:[%s165 + $0x26] sm:$0xff]
      %v3824 = vld [vmem:[%s165 + $0x2e] sm:$0xff]
      %v3825 = vld [vmem:[%s165 + $0x36] sm:$0xff]
      %v3826 = vld [vmem:[%s165 + $0x3e] sm:$0xff]
      %v3827 = vld [vmem:[%s165 + $0x46] sm:$0xff]
      %v3828 = vld [vmem:[%s165 + $0x4e] sm:$0xff]
      %v3829 = vld [vmem:[%s165 + $0x56] sm:$0xff]
      %v3830 = vld [vmem:[%s165 + $0x5e] sm:$0xff]
      %v3831 = vld [vmem:[%s165 + $0x66] sm:$0xff]
      %v3832 = vld [vmem:[%s165 + $0x6e] sm:$0xff]
      %v3833 = vld [vmem:[%s165 + $0x76] sm:$0xff]
      %v3834 = vld [vmem:[%s165 + $0x7e] sm:$0xff]
      %v3835 = vld [vmem:[%s165 + $0x86] sm:$0xff]
      %v3836 = vld [vmem:[%s165 + $0x8e] sm:$0xff]
      %v3837 = vld [vmem:[%s165 + $0x96] sm:$0xff]
      %v3838 = vld [vmem:[%s165 + $0x9e] sm:$0xff]
      %v3839 = vld [vmem:[%s165 + $0xa6] sm:$0xff]
      %v3840 = vld [vmem:[%s165 + $0xae] sm:$0xff]
      %v3841 = vld [vmem:[%s165 + $0xb6] sm:$0xff]
      %v3842 = vld [vmem:[%s165 + $0xbe] sm:$0xff]
      %v3843 = vld [vmem:[%s165 + $0xc6] sm:$0xff]
      %v3844 = vld [vmem:[%s165 + $0xce] sm:$0xff]
      %v3845 = vld [vmem:[%s165 + $0xd6] sm:$0xff]
      %v3846 = vld [vmem:[%s165 + $0xde] sm:$0xff]
      %v3847 = vld [vmem:[%s165 + $0xe6] sm:$0xff]
      %v3848 = vld [vmem:[%s165 + $0xee] sm:$0xff]
      %v3849 = vld [vmem:[%s165 + $0xf6] sm:$0xff]
      %v3850 = vld [vmem:[%s165 + $0xfe] sm:$0xff]
      %v3851 = vld [vmem:[%s165 + $0x106] sm:$0xff]
      %v3852 = vld [vmem:[%s165 + $0x10e] sm:$0xff]
      %v3853 = vld [vmem:[%s165 + $0x116] sm:$0xff]
      %v3854 = vld [vmem:[%s165 + $0x11e] sm:$0xff]
      %v3855 = vld [vmem:[%s165 + $0x126] sm:$0xff]
      %v3856 = vld [vmem:[%s165 + $0x12e] sm:$0xff]
      %v3857 = vld [vmem:[%s165 + $0x136] sm:$0xff]
      %v3858 = vld [vmem:[%s165 + $0x13e] sm:$0xff]
      %v3859 = vld [vmem:[%s165 + $0x146] sm:$0xff]
      %v3860 = vld [vmem:[%s165 + $0x14e] sm:$0xff]
      %v3861 = vld [vmem:[%s165 + $0x156] sm:$0xff]
      %v3862 = vld [vmem:[%s165 + $0x15e] sm:$0xff]
      %v3863 = vld [vmem:[%s165 + $0x166] sm:$0xff]
      %v3864 = vld [vmem:[%s165 + $0x16e] sm:$0xff]
      %v3865 = vld [vmem:[%s165 + $0x176] sm:$0xff]
      %v3866 = vld [vmem:[%s165 + $0x17e] sm:$0xff]
      %v3867 = vld [vmem:[%s165 + $0x186] sm:$0xff]
      %v3868 = vld [vmem:[%s165 + $0x18e] sm:$0xff]
      %v3869 = vld [vmem:[%s165 + $0x196] sm:$0xff]
      %v3870 = vld [vmem:[%s165 + $0x19e] sm:$0xff]
      %v3871 = vld [vmem:[%s165 + $0x1a6] sm:$0xff]
      %v3872 = vld [vmem:[%s165 + $0x1ae] sm:$0xff]
      %v3873 = vld [vmem:[%s165 + $0x1b6] sm:$0xff]
      %v3874 = vld [vmem:[%s165 + $0x1be] sm:$0xff]
      %v3875 = vld [vmem:[%s165 + $0x1c6] sm:$0xff]
      %v3876 = vld [vmem:[%s165 + $0x1ce] sm:$0xff]
      %v3877 = vld [vmem:[%s165 + $0x1d6] sm:$0xff]
      %v3878 = vld [vmem:[%s165 + $0x1de] sm:$0xff]
      %v3879 = vld [vmem:[%s165 + $0x1e6] sm:$0xff]
      %v3880 = vld [vmem:[%s165 + $0x1ee] sm:$0xff]
      %v3881 = vld [vmem:[%s165 + $0x1f6] sm:$0xff]
      %v3882 = vld [vmem:[%s165 + $0x1fe] sm:$0xff]
      %v3883 = vld [vmem:[%s165 + $0x206] sm:$0xff]
      %v3884 = vld [vmem:[%s165 + $0x20e] sm:$0xff]
      %v3885 = vld [vmem:[%s165 + $0x216] sm:$0xff]
      %v3886 = vld [vmem:[%s165 + $0x21e] sm:$0xff]
      %v3887 = vld [vmem:[%s165 + $0x226] sm:$0xff]
      %v3888 = vld [vmem:[%s165 + $0x22e] sm:$0xff]
      %v3889 = vld [vmem:[%s165 + $0x236] sm:$0xff]
      %v3890 = vld [vmem:[%s165 + $0x23e] sm:$0xff]
      %v3891 = vld [vmem:[%s165 + $0x246] sm:$0xff]
      %v3892 = vld [vmem:[%s165 + $0x24e] sm:$0xff]
      %v3893 = vld [vmem:[%s165 + $0x256] sm:$0xff]
      %v3894 = vld [vmem:[%s165 + $0x25e] sm:$0xff]
      %v3895 = vld [vmem:[%s165 + $0x266] sm:$0xff]
      %v3896 = vld [vmem:[%s165 + $0x26e] sm:$0xff]
      %v3897 = vld [vmem:[%s165 + $0x276] sm:$0xff]
      %v3898 = vld [vmem:[%s165 + $0x27e] sm:$0xff]
      %v3899 = vld [vmem:[%s165 + $0x286] sm:$0xff]
      %v3900 = vld [vmem:[%s165 + $0x28e] sm:$0xff]
      %v3901 = vld [vmem:[%s165 + $0x296] sm:$0xff]
      %v3902 = vld [vmem:[%s165 + $0x29e] sm:$0xff]
      %v3903 = vld [vmem:[%s165 + $0x2a6] sm:$0xff]
      %v3904 = vld [vmem:[%s165 + $0x2ae] sm:$0xff]
      %v3905 = vld [vmem:[%s165 + $0x2b6] sm:$0xff]
      %v3906 = vld [vmem:[%s165 + $0x2be] sm:$0xff]
      %v3907 = vld [vmem:[%s165 + $0x2c6] sm:$0xff]
      %v3908 = vld [vmem:[%s165 + $0x2ce] sm:$0xff]
      %v3909 = vld [vmem:[%s165 + $0x2d6] sm:$0xff]
      %v3910 = vld [vmem:[%s165 + $0x2de] sm:$0xff]
      %v3911 = vld [vmem:[%s165 + $0x2e6] sm:$0xff]
      %v3912 = vld [vmem:[%s165 + $0x2ee] sm:$0xff]
      %v3913 = vld [vmem:[%s1 + $0x5] sm:$0x1]
      %3915 = vset.pattern.permute.xlu0 0
      %3916 = vperm.xlu0 %3915, %v3822
      %v3917 = vpop.permute.xlu0 %3916
      %3920 = vset.pattern.permute.xlu0 0
      %3921 = vperm.xlu0 %3920, %v3823
      %v3922 = vpop.permute.xlu0 %3921
      %3925 = vset.pattern.permute.xlu0 0
      %3926 = vperm.xlu0 %3925, %v3824
      %v3927 = vpop.permute.xlu0 %3926
      %3930 = vset.pattern.permute.xlu0 0
      %3931 = vperm.xlu0 %3930, %v3825
      %v3932 = vpop.permute.xlu0 %3931
      %3935 = vset.pattern.permute.xlu0 0
      %3936 = vperm.xlu0 %3935, %v3826
      %v3937 = vpop.permute.xlu0 %3936
      %3940 = vset.pattern.permute.xlu0 0
      %3941 = vperm.xlu0 %3940, %v3827
      %v3942 = vpop.permute.xlu0 %3941
      %3945 = vset.pattern.permute.xlu0 0
      %3946 = vperm.xlu0 %3945, %v3828
      %v3947 = vpop.permute.xlu0 %3946
      %3950 = vset.pattern.permute.xlu0 0
      %3951 = vperm.xlu0 %3950, %v3829
      %v3952 = vpop.permute.xlu0 %3951
      %3955 = vset.pattern.permute.xlu0 0
      %3956 = vperm.xlu0 %3955, %v3830
      %v3957 = vpop.permute.xlu0 %3956
      %3960 = vset.pattern.permute.xlu0 0
      %3961 = vperm.xlu0 %3960, %v3831
      %v3962 = vpop.permute.xlu0 %3961
      %3965 = vset.pattern.permute.xlu0 0
      %3966 = vperm.xlu0 %3965, %v3832
      %v3967 = vpop.permute.xlu0 %3966
      %3970 = vset.pattern.permute.xlu0 0
      %3971 = vperm.xlu0 %3970, %v3833
      %v3972 = vpop.permute.xlu0 %3971
      %3975 = vset.pattern.permute.xlu0 0
      %3976 = vperm.xlu0 %3975, %v3834
      %v3977 = vpop.permute.xlu0 %3976
      %3980 = vset.pattern.permute.xlu0 0
      %3981 = vperm.xlu0 %3980, %v3835
      %v3982 = vpop.permute.xlu0 %3981
      %3985 = vset.pattern.permute.xlu0 0
      %3986 = vperm.xlu0 %3985, %v3836
      %v3987 = vpop.permute.xlu0 %3986
      %3990 = vset.pattern.permute.xlu0 0
      %3991 = vperm.xlu0 %3990, %v3837
      %v3992 = vpop.permute.xlu0 %3991
      %3995 = vset.pattern.permute.xlu0 0
      %3996 = vperm.xlu0 %3995, %v3838
      %v3997 = vpop.permute.xlu0 %3996
      %4000 = vset.pattern.permute.xlu0 0
      %4001 = vperm.xlu0 %4000, %v3839
      %v4002 = vpop.permute.xlu0 %4001
      %4005 = vset.pattern.permute.xlu0 0
      %4006 = vperm.xlu0 %4005, %v3840
      %v4007 = vpop.permute.xlu0 %4006
      %4010 = vset.pattern.permute.xlu0 0
      %4011 = vperm.xlu0 %4010, %v3841
      %v4012 = vpop.permute.xlu0 %4011
      %4015 = vset.pattern.permute.xlu0 0
      %4016 = vperm.xlu0 %4015, %v3842
      %v4017 = vpop.permute.xlu0 %4016
      %4020 = vset.pattern.permute.xlu0 0
      %4021 = vperm.xlu0 %4020, %v3843
      %v4022 = vpop.permute.xlu0 %4021
      %4025 = vset.pattern.permute.xlu0 0
      %4026 = vperm.xlu0 %4025, %v3844
      %v4027 = vpop.permute.xlu0 %4026
      %4030 = vset.pattern.permute.xlu0 0
      %4031 = vperm.xlu0 %4030, %v3845
      %v4032 = vpop.permute.xlu0 %4031
      %4035 = vset.pattern.permute.xlu0 0
      %4036 = vperm.xlu0 %4035, %v3846
      %v4037 = vpop.permute.xlu0 %4036
      %4040 = vset.pattern.permute.xlu0 0
      %4041 = vperm.xlu0 %4040, %v3847
      %v4042 = vpop.permute.xlu0 %4041
      %4045 = vset.pattern.permute.xlu0 0
      %4046 = vperm.xlu0 %4045, %v3848
      %v4047 = vpop.permute.xlu0 %4046
      %4050 = vset.pattern.permute.xlu0 0
      %4051 = vperm.xlu0 %4050, %v3849
      %v4052 = vpop.permute.xlu0 %4051
      %4055 = vset.pattern.permute.xlu0 0
      %4056 = vperm.xlu0 %4055, %v3850
      %v4057 = vpop.permute.xlu0 %4056
      %4060 = vset.pattern.permute.xlu0 0
      %4061 = vperm.xlu0 %4060, %v3851
      %v4062 = vpop.permute.xlu0 %4061
      %4065 = vset.pattern.permute.xlu0 0
      %4066 = vperm.xlu0 %4065, %v3852
      %v4067 = vpop.permute.xlu0 %4066
      %4070 = vset.pattern.permute.xlu0 0
      %4071 = vperm.xlu0 %4070, %v3853
      %v4072 = vpop.permute.xlu0 %4071
      %4075 = vset.pattern.permute.xlu0 0
      %4076 = vperm.xlu0 %4075, %v3854
      %v4077 = vpop.permute.xlu0 %4076
      %4080 = vset.pattern.permute.xlu0 0
      %4081 = vperm.xlu0 %4080, %v3855
      %v4082 = vpop.permute.xlu0 %4081
      %4085 = vset.pattern.permute.xlu0 0
      %4086 = vperm.xlu0 %4085, %v3856
      %v4087 = vpop.permute.xlu0 %4086
      %4090 = vset.pattern.permute.xlu0 0
      %4091 = vperm.xlu0 %4090, %v3857
      %v4092 = vpop.permute.xlu0 %4091
      %4095 = vset.pattern.permute.xlu0 0
      %4096 = vperm.xlu0 %4095, %v3858
      %v4097 = vpop.permute.xlu0 %4096
      %4100 = vset.pattern.permute.xlu0 0
      %4101 = vperm.xlu0 %4100, %v3859
      %v4102 = vpop.permute.xlu0 %4101
      %4105 = vset.pattern.permute.xlu0 0
      %4106 = vperm.xlu0 %4105, %v3860
      %v4107 = vpop.permute.xlu0 %4106
      %4110 = vset.pattern.permute.xlu0 0
      %4111 = vperm.xlu0 %4110, %v3861
      %v4112 = vpop.permute.xlu0 %4111
      %4115 = vset.pattern.permute.xlu0 0
      %4116 = vperm.xlu0 %4115, %v3862
      %v4117 = vpop.permute.xlu0 %4116
      %4120 = vset.pattern.permute.xlu0 0
      %4121 = vperm.xlu0 %4120, %v3863
      %v4122 = vpop.permute.xlu0 %4121
      %4125 = vset.pattern.permute.xlu0 0
      %4126 = vperm.xlu0 %4125, %v3864
      %v4127 = vpop.permute.xlu0 %4126
      %4130 = vset.pattern.permute.xlu0 0
      %4131 = vperm.xlu0 %4130, %v3865
      %v4132 = vpop.permute.xlu0 %4131
      %4135 = vset.pattern.permute.xlu0 0
      %4136 = vperm.xlu0 %4135, %v3866
      %v4137 = vpop.permute.xlu0 %4136
      %4140 = vset.pattern.permute.xlu0 0
      %4141 = vperm.xlu0 %4140, %v3867
      %v4142 = vpop.permute.xlu0 %4141
      %4145 = vset.pattern.permute.xlu0 0
      %4146 = vperm.xlu0 %4145, %v3868
      %v4147 = vpop.permute.xlu0 %4146
      %4150 = vset.pattern.permute.xlu0 0
      %4151 = vperm.xlu0 %4150, %v3869
      %v4152 = vpop.permute.xlu0 %4151
      %4155 = vset.pattern.permute.xlu0 0
      %4156 = vperm.xlu0 %4155, %v3870
      %v4157 = vpop.permute.xlu0 %4156
      %4160 = vset.pattern.permute.xlu0 0
      %4161 = vperm.xlu0 %4160, %v3871
      %v4162 = vpop.permute.xlu0 %4161
      %4165 = vset.pattern.permute.xlu0 0
      %4166 = vperm.xlu0 %4165, %v3872
      %v4167 = vpop.permute.xlu0 %4166
      %4170 = vset.pattern.permute.xlu0 0
      %4171 = vperm.xlu0 %4170, %v3873
      %v4172 = vpop.permute.xlu0 %4171
      %4175 = vset.pattern.permute.xlu0 0
      %4176 = vperm.xlu0 %4175, %v3874
      %v4177 = vpop.permute.xlu0 %4176
      %4180 = vset.pattern.permute.xlu0 0
      %4181 = vperm.xlu0 %4180, %v3875
      %v4182 = vpop.permute.xlu0 %4181
      %4185 = vset.pattern.permute.xlu0 0
      %4186 = vperm.xlu0 %4185, %v3876
      %v4187 = vpop.permute.xlu0 %4186
      %4190 = vset.pattern.permute.xlu0 0
      %4191 = vperm.xlu0 %4190, %v3877
      %v4192 = vpop.permute.xlu0 %4191
      %4195 = vset.pattern.permute.xlu0 0
      %4196 = vperm.xlu0 %4195, %v3878
      %v4197 = vpop.permute.xlu0 %4196
      %4200 = vset.pattern.permute.xlu0 0
      %4201 = vperm.xlu0 %4200, %v3879
      %v4202 = vpop.permute.xlu0 %4201
      %4205 = vset.pattern.permute.xlu0 0
      %4206 = vperm.xlu0 %4205, %v3880
      %v4207 = vpop.permute.xlu0 %4206
      %4210 = vset.pattern.permute.xlu0 0
      %4211 = vperm.xlu0 %4210, %v3881
      %v4212 = vpop.permute.xlu0 %4211
      %4215 = vset.pattern.permute.xlu0 0
      %4216 = vperm.xlu0 %4215, %v3882
      %v4217 = vpop.permute.xlu0 %4216
      %4220 = vset.pattern.permute.xlu0 0
      %4221 = vperm.xlu0 %4220, %v3883
      %v4222 = vpop.permute.xlu0 %4221
      %4225 = vset.pattern.permute.xlu0 0
      %4226 = vperm.xlu0 %4225, %v3884
      %v4227 = vpop.permute.xlu0 %4226
      %4230 = vset.pattern.permute.xlu0 0
      %4231 = vperm.xlu0 %4230, %v3885
      %v4232 = vpop.permute.xlu0 %4231
      %4235 = vset.pattern.permute.xlu0 0
      %4236 = vperm.xlu0 %4235, %v3886
      %v4237 = vpop.permute.xlu0 %4236
      %4240 = vset.pattern.permute.xlu0 0
      %4241 = vperm.xlu0 %4240, %v3887
      %v4242 = vpop.permute.xlu0 %4241
      %4245 = vset.pattern.permute.xlu0 0
      %4246 = vperm.xlu0 %4245, %v3888
      %v4247 = vpop.permute.xlu0 %4246
      %4250 = vset.pattern.permute.xlu0 0
      %4251 = vperm.xlu0 %4250, %v3889
      %v4252 = vpop.permute.xlu0 %4251
      %4255 = vset.pattern.permute.xlu0 0
      %4256 = vperm.xlu0 %4255, %v3890
      %v4257 = vpop.permute.xlu0 %4256
      %4260 = vset.pattern.permute.xlu0 0
      %4261 = vperm.xlu0 %4260, %v3891
      %v4262 = vpop.permute.xlu0 %4261
      %4265 = vset.pattern.permute.xlu0 0
      %4266 = vperm.xlu0 %4265, %v3892
      %v4267 = vpop.permute.xlu0 %4266
      %4270 = vset.pattern.permute.xlu0 0
      %4271 = vperm.xlu0 %4270, %v3893
      %v4272 = vpop.permute.xlu0 %4271
      %4275 = vset.pattern.permute.xlu0 0
      %4276 = vperm.xlu0 %4275, %v3894
      %v4277 = vpop.permute.xlu0 %4276
      %4280 = vset.pattern.permute.xlu0 0
      %4281 = vperm.xlu0 %4280, %v3895
      %v4282 = vpop.permute.xlu0 %4281
      %4285 = vset.pattern.permute.xlu0 0
      %4286 = vperm.xlu0 %4285, %v3896
      %v4287 = vpop.permute.xlu0 %4286
      %4290 = vset.pattern.permute.xlu0 0
      %4291 = vperm.xlu0 %4290, %v3897
      %v4292 = vpop.permute.xlu0 %4291
      %4295 = vset.pattern.permute.xlu0 0
      %4296 = vperm.xlu0 %4295, %v3898
      %v4297 = vpop.permute.xlu0 %4296
      %4300 = vset.pattern.permute.xlu0 0
      %4301 = vperm.xlu0 %4300, %v3899
      %v4302 = vpop.permute.xlu0 %4301
      %4305 = vset.pattern.permute.xlu0 0
      %4306 = vperm.xlu0 %4305, %v3900
      %v4307 = vpop.permute.xlu0 %4306
      %4310 = vset.pattern.permute.xlu0 0
      %4311 = vperm.xlu0 %4310, %v3901
      %v4312 = vpop.permute.xlu0 %4311
      %4315 = vset.pattern.permute.xlu0 0
      %4316 = vperm.xlu0 %4315, %v3902
      %v4317 = vpop.permute.xlu0 %4316
      %4320 = vset.pattern.permute.xlu0 0
      %4321 = vperm.xlu0 %4320, %v3903
      %v4322 = vpop.permute.xlu0 %4321
      %4325 = vset.pattern.permute.xlu0 0
      %4326 = vperm.xlu0 %4325, %v3904
      %v4327 = vpop.permute.xlu0 %4326
      %4330 = vset.pattern.permute.xlu0 0
      %4331 = vperm.xlu0 %4330, %v3905
      %v4332 = vpop.permute.xlu0 %4331
      %4335 = vset.pattern.permute.xlu0 0
      %4336 = vperm.xlu0 %4335, %v3906
      %v4337 = vpop.permute.xlu0 %4336
      %4340 = vset.pattern.permute.xlu0 0
      %4341 = vperm.xlu0 %4340, %v3907
      %v4342 = vpop.permute.xlu0 %4341
      %4345 = vset.pattern.permute.xlu0 0
      %4346 = vperm.xlu0 %4345, %v3908
      %v4347 = vpop.permute.xlu0 %4346
      %4350 = vset.pattern.permute.xlu0 0
      %4351 = vperm.xlu0 %4350, %v3909
      %v4352 = vpop.permute.xlu0 %4351
      %4355 = vset.pattern.permute.xlu0 0
      %4356 = vperm.xlu0 %4355, %v3910
      %v4357 = vpop.permute.xlu0 %4356
      %4360 = vset.pattern.permute.xlu0 0
      %4361 = vperm.xlu0 %4360, %v3911
      %v4362 = vpop.permute.xlu0 %4361
      %4365 = vset.pattern.permute.xlu0 0
      %4366 = vperm.xlu0 %4365, %v3912
      %v4367 = vpop.permute.xlu0 %4366
      %v4369 = vperm.slane %v3913, 0
      %v4370 = vmul.f32 %v3917, %v4369
      %v4371 = vmul.f32 %v3922, %v4369
      %v4372 = vmul.f32 %v3927, %v4369
      %v4373 = vmul.f32 %v3932, %v4369
      %v4374 = vmul.f32 %v3937, %v4369
      %v4375 = vmul.f32 %v3942, %v4369
      %v4376 = vmul.f32 %v3947, %v4369
      %v4377 = vmul.f32 %v3952, %v4369
      %v4378 = vmul.f32 %v3957, %v4369
      %v4379 = vmul.f32 %v3962, %v4369
      %v4380 = vmul.f32 %v3967, %v4369
      %v4381 = vmul.f32 %v3972, %v4369
      %v4382 = vmul.f32 %v3977, %v4369
      %v4383 = vmul.f32 %v3982, %v4369
      %v4384 = vmul.f32 %v3987, %v4369
      %v4385 = vmul.f32 %v3992, %v4369
      %v4386 = vmul.f32 %v3997, %v4369
      %v4387 = vmul.f32 %v4002, %v4369
      %v4388 = vmul.f32 %v4007, %v4369
      %v4389 = vmul.f32 %v4012, %v4369
      %v4390 = vmul.f32 %v4017, %v4369
      %v4391 = vmul.f32 %v4022, %v4369
      %v4392 = vmul.f32 %v4027, %v4369
      %v4393 = vmul.f32 %v4032, %v4369
      %v4394 = vmul.f32 %v4037, %v4369
      %v4395 = vmul.f32 %v4042, %v4369
      %v4396 = vmul.f32 %v4047, %v4369
      %v4397 = vmul.f32 %v4052, %v4369
      %v4398 = vmul.f32 %v4057, %v4369
      %v4399 = vmul.f32 %v4062, %v4369
      %v4400 = vmul.f32 %v4067, %v4369
      %v4401 = vmul.f32 %v4072, %v4369
      %v4402 = vmul.f32 %v4077, %v4369
      %v4403 = vmul.f32 %v4082, %v4369
      %v4404 = vmul.f32 %v4087, %v4369
      %v4405 = vmul.f32 %v4092, %v4369
      %v4406 = vmul.f32 %v4097, %v4369
      %v4407 = vmul.f32 %v4102, %v4369
      %v4408 = vmul.f32 %v4107, %v4369
      %v4409 = vmul.f32 %v4112, %v4369
      %v4410 = vmul.f32 %v4117, %v4369
      %v4411 = vmul.f32 %v4122, %v4369
      %v4412 = vmul.f32 %v4127, %v4369
      %v4413 = vmul.f32 %v4132, %v4369
      %v4414 = vmul.f32 %v4137, %v4369
      %v4415 = vmul.f32 %v4142, %v4369
      %v4416 = vmul.f32 %v4147, %v4369
      %v4417 = vmul.f32 %v4152, %v4369
      %v4418 = vmul.f32 %v4157, %v4369
      %v4419 = vmul.f32 %v4162, %v4369
      %v4420 = vmul.f32 %v4167, %v4369
      %v4421 = vmul.f32 %v4172, %v4369
      %v4422 = vmul.f32 %v4177, %v4369
      %v4423 = vmul.f32 %v4182, %v4369
      %v4424 = vmul.f32 %v4187, %v4369
      %v4425 = vmul.f32 %v4192, %v4369
      %v4426 = vmul.f32 %v4197, %v4369
      %v4427 = vmul.f32 %v4202, %v4369
      %v4428 = vmul.f32 %v4207, %v4369
      %v4429 = vmul.f32 %v4212, %v4369
      %v4430 = vmul.f32 %v4217, %v4369
      %v4431 = vmul.f32 %v4222, %v4369
      %v4432 = vmul.f32 %v4227, %v4369
      %v4433 = vmul.f32 %v4232, %v4369
      %v4434 = vmul.f32 %v4237, %v4369
      %v4435 = vmul.f32 %v4242, %v4369
      %v4436 = vmul.f32 %v4247, %v4369
      %v4437 = vmul.f32 %v4252, %v4369
      %v4438 = vmul.f32 %v4257, %v4369
      %v4439 = vmul.f32 %v4262, %v4369
      %v4440 = vmul.f32 %v4267, %v4369
      %v4441 = vmul.f32 %v4272, %v4369
      %v4442 = vmul.f32 %v4277, %v4369
      %v4443 = vmul.f32 %v4282, %v4369
      %v4444 = vmul.f32 %v4287, %v4369
      %v4445 = vmul.f32 %v4292, %v4369
      %v4446 = vmul.f32 %v4297, %v4369
      %v4447 = vmul.f32 %v4302, %v4369
      %v4448 = vmul.f32 %v4307, %v4369
      %v4449 = vmul.f32 %v4312, %v4369
      %v4450 = vmul.f32 %v4317, %v4369
      %v4451 = vmul.f32 %v4322, %v4369
      %v4452 = vmul.f32 %v4327, %v4369
      %v4453 = vmul.f32 %v4332, %v4369
      %v4454 = vmul.f32 %v4337, %v4369
      %v4455 = vmul.f32 %v4342, %v4369
      %v4456 = vmul.f32 %v4347, %v4369
      %v4457 = vmul.f32 %v4352, %v4369
      %v4458 = vmul.f32 %v4357, %v4369
      %v4459 = vmul.f32 %v4362, %v4369
      %v4460 = vmul.f32 %v4367, %v4369
      %v4461 = vadd.f32 %v3731, %v4370
      %v4462 = vadd.f32 %v3732, %v4371
      %v4463 = vadd.f32 %v3733, %v4372
      %v4464 = vadd.f32 %v3734, %v4373
      %v4465 = vadd.f32 %v3735, %v4374
      %v4466 = vadd.f32 %v3736, %v4375
      %v4467 = vadd.f32 %v3737, %v4376
      %v4468 = vadd.f32 %v3738, %v4377
      %v4469 = vadd.f32 %v3739, %v4378
      %v4470 = vadd.f32 %v3740, %v4379
      %v4471 = vadd.f32 %v3741, %v4380
      %v4472 = vadd.f32 %v3742, %v4381
      %v4473 = vadd.f32 %v3743, %v4382
      %v4474 = vadd.f32 %v3744, %v4383
      %v4475 = vadd.f32 %v3745, %v4384
      %v4476 = vadd.f32 %v3746, %v4385
      %v4477 = vadd.f32 %v3747, %v4386
      %v4478 = vadd.f32 %v3748, %v4387
      %v4479 = vadd.f32 %v3749, %v4388
      %v4480 = vadd.f32 %v3750, %v4389
      %v4481 = vadd.f32 %v3751, %v4390
      %v4482 = vadd.f32 %v3752, %v4391
      %v4483 = vadd.f32 %v3753, %v4392
      %v4484 = vadd.f32 %v3754, %v4393
      %v4485 = vadd.f32 %v3755, %v4394
      %v4486 = vadd.f32 %v3756, %v4395
      %v4487 = vadd.f32 %v3757, %v4396
      %v4488 = vadd.f32 %v3758, %v4397
      %v4489 = vadd.f32 %v3759, %v4398
      %v4490 = vadd.f32 %v3760, %v4399
      %v4491 = vadd.f32 %v3761, %v4400
      %v4492 = vadd.f32 %v3762, %v4401
      %v4493 = vadd.f32 %v3763, %v4402
      %v4494 = vadd.f32 %v3764, %v4403
      %v4495 = vadd.f32 %v3765, %v4404
      %v4496 = vadd.f32 %v3766, %v4405
      %v4497 = vadd.f32 %v3767, %v4406
      %v4498 = vadd.f32 %v3768, %v4407
      %v4499 = vadd.f32 %v3769, %v4408
      %v4500 = vadd.f32 %v3770, %v4409
      %v4501 = vadd.f32 %v3771, %v4410
      %v4502 = vadd.f32 %v3772, %v4411
      %v4503 = vadd.f32 %v3773, %v4412
      %v4504 = vadd.f32 %v3774, %v4413
      %v4505 = vadd.f32 %v3775, %v4414
      %v4506 = vadd.f32 %v3776, %v4415
      %v4507 = vadd.f32 %v3777, %v4416
      %v4508 = vadd.f32 %v3778, %v4417
      %v4509 = vadd.f32 %v3779, %v4418
      %v4510 = vadd.f32 %v3780, %v4419
      %v4511 = vadd.f32 %v3781, %v4420
      %v4512 = vadd.f32 %v3782, %v4421
      %v4513 = vadd.f32 %v3783, %v4422
      %v4514 = vadd.f32 %v3784, %v4423
      %v4515 = vadd.f32 %v3785, %v4424
      %v4516 = vadd.f32 %v3786, %v4425
      %v4517 = vadd.f32 %v3787, %v4426
      %v4518 = vadd.f32 %v3788, %v4427
      %v4519 = vadd.f32 %v3789, %v4428
      %v4520 = vadd.f32 %v3790, %v4429
      %v4521 = vadd.f32 %v3791, %v4430
      %v4522 = vadd.f32 %v3792, %v4431
      %v4523 = vadd.f32 %v3793, %v4432
      %v4524 = vadd.f32 %v3794, %v4433
      %v4525 = vadd.f32 %v3795, %v4434
      %v4526 = vadd.f32 %v3796, %v4435
      %v4527 = vadd.f32 %v3797, %v4436
      %v4528 = vadd.f32 %v3798, %v4437
      %v4529 = vadd.f32 %v3799, %v4438
      %v4530 = vadd.f32 %v3800, %v4439
      %v4531 = vadd.f32 %v3801, %v4440
      %v4532 = vadd.f32 %v3802, %v4441
      %v4533 = vadd.f32 %v3803, %v4442
      %v4534 = vadd.f32 %v3804, %v4443
      %v4535 = vadd.f32 %v3805, %v4444
      %v4536 = vadd.f32 %v3806, %v4445
      %v4537 = vadd.f32 %v3807, %v4446
      %v4538 = vadd.f32 %v3808, %v4447
      %v4539 = vadd.f32 %v3809, %v4448
      %v4540 = vadd.f32 %v3810, %v4449
      %v4541 = vadd.f32 %v3811, %v4450
      %v4542 = vadd.f32 %v3812, %v4451
      %v4543 = vadd.f32 %v3813, %v4452
      %v4544 = vadd.f32 %v3814, %v4453
      %v4545 = vadd.f32 %v3815, %v4454
      %v4546 = vadd.f32 %v3816, %v4455
      %v4547 = vadd.f32 %v3817, %v4456
      %v4548 = vadd.f32 %v3818, %v4457
      %v4549 = vadd.f32 %v3819, %v4458
      %v4550 = vadd.f32 %v3820, %v4459
      %v4551 = vadd.f32 %v3821, %v4460
      %v4552 = vld [vmem:[%s165 + $0x38] sm:$0xff]
      %v4553 = vld [vmem:[%s165 + $0x40] sm:$0xff]
      %v4554 = vld [vmem:[%s165 + $0x48] sm:$0xff]
      %v4555 = vld [vmem:[%s165 + $0x50] sm:$0xff]
      %v4556 = vld [vmem:[%s165 + $0x58] sm:$0xff]
      %v4557 = vld [vmem:[%s165 + $0x60] sm:$0xff]
      %v4558 = vld [vmem:[%s165 + $0x68] sm:$0xff]
      %v4559 = vld [vmem:[%s165 + $0x70] sm:$0xff]
      %v4560 = vld [vmem:[%s165 + $0x78] sm:$0xff]
      %v4561 = vld [vmem:[%s165 + $0x80] sm:$0xff]
      %v4562 = vld [vmem:[%s165 + $0x88] sm:$0xff]
      %v4563 = vld [vmem:[%s165 + $0x90] sm:$0xff]
      %v4564 = vld [vmem:[%s165 + $0x98] sm:$0xff]
      %v4565 = vld [vmem:[%s165 + $0xa0] sm:$0xff]
      %v4566 = vld [vmem:[%s165 + $0xa8] sm:$0xff]
      %v4567 = vld [vmem:[%s165 + $0xb0] sm:$0xff]
      %v4568 = vld [vmem:[%s165 + $0xb8] sm:$0xff]
      %v4569 = vld [vmem:[%s165 + $0xc0] sm:$0xff]
      %v4570 = vld [vmem:[%s165 + $0xc8] sm:$0xff]
      %v4571 = vld [vmem:[%s165 + $0xd0] sm:$0xff]
      %v4572 = vld [vmem:[%s165 + $0xd8] sm:$0xff]
      %v4573 = vld [vmem:[%s165 + $0xe0] sm:$0xff]
      %v4574 = vld [vmem:[%s165 + $0xe8] sm:$0xff]
      %v4575 = vld [vmem:[%s165 + $0xf0] sm:$0xff]
      %v4576 = vld [vmem:[%s165 + $0xf8] sm:$0xff]
      %v4577 = vld [vmem:[%s165 + $0x100] sm:$0xff]
      %v4578 = vld [vmem:[%s165 + $0x108] sm:$0xff]
      %v4579 = vld [vmem:[%s165 + $0x110] sm:$0xff]
      %v4580 = vld [vmem:[%s165 + $0x118] sm:$0xff]
      %v4581 = vld [vmem:[%s165 + $0x120] sm:$0xff]
      %v4582 = vld [vmem:[%s165 + $0x128] sm:$0xff]
      %v4583 = vld [vmem:[%s165 + $0x130] sm:$0xff]
      %v4584 = vld [vmem:[%s165 + $0x138] sm:$0xff]
      %v4585 = vld [vmem:[%s165 + $0x140] sm:$0xff]
      %v4586 = vld [vmem:[%s165 + $0x148] sm:$0xff]
      %v4587 = vld [vmem:[%s165 + $0x150] sm:$0xff]
      %v4588 = vld [vmem:[%s165 + $0x158] sm:$0xff]
      %v4589 = vld [vmem:[%s165 + $0x160] sm:$0xff]
      %v4590 = vld [vmem:[%s165 + $0x168] sm:$0xff]
      %v4591 = vld [vmem:[%s165 + $0x170] sm:$0xff]
      %v4592 = vld [vmem:[%s165 + $0x178] sm:$0xff]
      %v4593 = vld [vmem:[%s165 + $0x180] sm:$0xff]
      %v4594 = vld [vmem:[%s165 + $0x188] sm:$0xff]
      %v4595 = vld [vmem:[%s165 + $0x190] sm:$0xff]
      %v4596 = vld [vmem:[%s165 + $0x198] sm:$0xff]
      %v4597 = vld [vmem:[%s165 + $0x1a0] sm:$0xff]
      %v4598 = vld [vmem:[%s165 + $0x1a8] sm:$0xff]
      %v4599 = vld [vmem:[%s165 + $0x1b0] sm:$0xff]
      %v4600 = vld [vmem:[%s165 + $0x1b8] sm:$0xff]
      %v4601 = vld [vmem:[%s165 + $0x1c0] sm:$0xff]
      %v4602 = vld [vmem:[%s165 + $0x1c8] sm:$0xff]
      %v4603 = vld [vmem:[%s165 + $0x1d0] sm:$0xff]
      %v4604 = vld [vmem:[%s165 + $0x1d8] sm:$0xff]
      %v4605 = vld [vmem:[%s165 + $0x1e0] sm:$0xff]
      %v4606 = vld [vmem:[%s165 + $0x1e8] sm:$0xff]
      %v4607 = vld [vmem:[%s165 + $0x1f0] sm:$0xff]
      %v4608 = vld [vmem:[%s165 + $0x1f8] sm:$0xff]
      %v4609 = vld [vmem:[%s165 + $0x200] sm:$0xff]
      %v4610 = vld [vmem:[%s165 + $0x208] sm:$0xff]
      %v4611 = vld [vmem:[%s165 + $0x210] sm:$0xff]
      %v4612 = vld [vmem:[%s165 + $0x218] sm:$0xff]
      %v4613 = vld [vmem:[%s165 + $0x220] sm:$0xff]
      %v4614 = vld [vmem:[%s165 + $0x228] sm:$0xff]
      %v4615 = vld [vmem:[%s165 + $0x230] sm:$0xff]
      %v4616 = vld [vmem:[%s165 + $0x238] sm:$0xff]
      %v4617 = vld [vmem:[%s165 + $0x240] sm:$0xff]
      %v4618 = vld [vmem:[%s165 + $0x248] sm:$0xff]
      %v4619 = vld [vmem:[%s165 + $0x250] sm:$0xff]
      %v4620 = vld [vmem:[%s165 + $0x258] sm:$0xff]
      %v4621 = vld [vmem:[%s165 + $0x260] sm:$0xff]
      %v4622 = vld [vmem:[%s165 + $0x268] sm:$0xff]
      %v4623 = vld [vmem:[%s165 + $0x270] sm:$0xff]
      %v4624 = vld [vmem:[%s165 + $0x278] sm:$0xff]
      %v4625 = vld [vmem:[%s165 + $0x280] sm:$0xff]
      %v4626 = vld [vmem:[%s165 + $0x288] sm:$0xff]
      %v4627 = vld [vmem:[%s165 + $0x290] sm:$0xff]
      %v4628 = vld [vmem:[%s165 + $0x298] sm:$0xff]
      %v4629 = vld [vmem:[%s165 + $0x2a0] sm:$0xff]
      %v4630 = vld [vmem:[%s165 + $0x2a8] sm:$0xff]
      %v4631 = vld [vmem:[%s165 + $0x2b0] sm:$0xff]
      %v4632 = vld [vmem:[%s165 + $0x2b8] sm:$0xff]
      %v4633 = vld [vmem:[%s165 + $0x2c0] sm:$0xff]
      %v4634 = vld [vmem:[%s165 + $0x2c8] sm:$0xff]
      %v4635 = vld [vmem:[%s165 + $0x2d0] sm:$0xff]
      %v4636 = vld [vmem:[%s165 + $0x2d8] sm:$0xff]
      %v4637 = vld [vmem:[%s165 + $0x2e0] sm:$0xff]
      %v4638 = vld [vmem:[%s165 + $0x2e8] sm:$0xff]
      %v4639 = vld [vmem:[%s165 + $0x2f0] sm:$0xff]
      %v4640 = vld [vmem:[%s165 + $0x2f8] sm:$0xff]
      %v4641 = vld [vmem:[%s165 + $0x300] sm:$0xff]
      %v4642 = vld [vmem:[%s165 + $0x308] sm:$0xff]
      %v4643 = vld [vmem:[%s1 + $0x6] sm:$0x1]
      %4645 = vset.pattern.permute.xlu0 0
      %4646 = vperm.xlu0 %4645, %v4552
      %v4647 = vpop.permute.xlu0 %4646
      %4650 = vset.pattern.permute.xlu0 0
      %4651 = vperm.xlu0 %4650, %v4553
      %v4652 = vpop.permute.xlu0 %4651
      %4655 = vset.pattern.permute.xlu0 0
      %4656 = vperm.xlu0 %4655, %v4554
      %v4657 = vpop.permute.xlu0 %4656
      %4660 = vset.pattern.permute.xlu0 0
      %4661 = vperm.xlu0 %4660, %v4555
      %v4662 = vpop.permute.xlu0 %4661
      %4665 = vset.pattern.permute.xlu0 0
      %4666 = vperm.xlu0 %4665, %v4556
      %v4667 = vpop.permute.xlu0 %4666
      %4670 = vset.pattern.permute.xlu0 0
      %4671 = vperm.xlu0 %4670, %v4557
      %v4672 = vpop.permute.xlu0 %4671
      %4675 = vset.pattern.permute.xlu0 0
      %4676 = vperm.xlu0 %4675, %v4558
      %v4677 = vpop.permute.xlu0 %4676
      %4680 = vset.pattern.permute.xlu0 0
      %4681 = vperm.xlu0 %4680, %v4559
      %v4682 = vpop.permute.xlu0 %4681
      %4685 = vset.pattern.permute.xlu0 0
      %4686 = vperm.xlu0 %4685, %v4560
      %v4687 = vpop.permute.xlu0 %4686
      %4690 = vset.pattern.permute.xlu0 0
      %4691 = vperm.xlu0 %4690, %v4561
      %v4692 = vpop.permute.xlu0 %4691
      %4695 = vset.pattern.permute.xlu0 0
      %4696 = vperm.xlu0 %4695, %v4562
      %v4697 = vpop.permute.xlu0 %4696
      %4700 = vset.pattern.permute.xlu0 0
      %4701 = vperm.xlu0 %4700, %v4563
      %v4702 = vpop.permute.xlu0 %4701
      %4705 = vset.pattern.permute.xlu0 0
      %4706 = vperm.xlu0 %4705, %v4564
      %v4707 = vpop.permute.xlu0 %4706
      %4710 = vset.pattern.permute.xlu0 0
      %4711 = vperm.xlu0 %4710, %v4565
      %v4712 = vpop.permute.xlu0 %4711
      %4715 = vset.pattern.permute.xlu0 0
      %4716 = vperm.xlu0 %4715, %v4566
      %v4717 = vpop.permute.xlu0 %4716
      %4720 = vset.pattern.permute.xlu0 0
      %4721 = vperm.xlu0 %4720, %v4567
      %v4722 = vpop.permute.xlu0 %4721
      %4725 = vset.pattern.permute.xlu0 0
      %4726 = vperm.xlu0 %4725, %v4568
      %v4727 = vpop.permute.xlu0 %4726
      %4730 = vset.pattern.permute.xlu0 0
      %4731 = vperm.xlu0 %4730, %v4569
      %v4732 = vpop.permute.xlu0 %4731
      %4735 = vset.pattern.permute.xlu0 0
      %4736 = vperm.xlu0 %4735, %v4570
      %v4737 = vpop.permute.xlu0 %4736
      %4740 = vset.pattern.permute.xlu0 0
      %4741 = vperm.xlu0 %4740, %v4571
      %v4742 = vpop.permute.xlu0 %4741
      %4745 = vset.pattern.permute.xlu0 0
      %4746 = vperm.xlu0 %4745, %v4572
      %v4747 = vpop.permute.xlu0 %4746
      %4750 = vset.pattern.permute.xlu0 0
      %4751 = vperm.xlu0 %4750, %v4573
      %v4752 = vpop.permute.xlu0 %4751
      %4755 = vset.pattern.permute.xlu0 0
      %4756 = vperm.xlu0 %4755, %v4574
      %v4757 = vpop.permute.xlu0 %4756
      %4760 = vset.pattern.permute.xlu0 0
      %4761 = vperm.xlu0 %4760, %v4575
      %v4762 = vpop.permute.xlu0 %4761
      %4765 = vset.pattern.permute.xlu0 0
      %4766 = vperm.xlu0 %4765, %v4576
      %v4767 = vpop.permute.xlu0 %4766
      %4770 = vset.pattern.permute.xlu0 0
      %4771 = vperm.xlu0 %4770, %v4577
      %v4772 = vpop.permute.xlu0 %4771
      %4775 = vset.pattern.permute.xlu0 0
      %4776 = vperm.xlu0 %4775, %v4578
      %v4777 = vpop.permute.xlu0 %4776
      %4780 = vset.pattern.permute.xlu0 0
      %4781 = vperm.xlu0 %4780, %v4579
      %v4782 = vpop.permute.xlu0 %4781
      %4785 = vset.pattern.permute.xlu0 0
      %4786 = vperm.xlu0 %4785, %v4580
      %v4787 = vpop.permute.xlu0 %4786
      %4790 = vset.pattern.permute.xlu0 0
      %4791 = vperm.xlu0 %4790, %v4581
      %v4792 = vpop.permute.xlu0 %4791
      %4795 = vset.pattern.permute.xlu0 0
      %4796 = vperm.xlu0 %4795, %v4582
      %v4797 = vpop.permute.xlu0 %4796
      %4800 = vset.pattern.permute.xlu0 0
      %4801 = vperm.xlu0 %4800, %v4583
      %v4802 = vpop.permute.xlu0 %4801
      %4805 = vset.pattern.permute.xlu0 0
      %4806 = vperm.xlu0 %4805, %v4584
      %v4807 = vpop.permute.xlu0 %4806
      %4810 = vset.pattern.permute.xlu0 0
      %4811 = vperm.xlu0 %4810, %v4585
      %v4812 = vpop.permute.xlu0 %4811
      %4815 = vset.pattern.permute.xlu0 0
      %4816 = vperm.xlu0 %4815, %v4586
      %v4817 = vpop.permute.xlu0 %4816
      %4820 = vset.pattern.permute.xlu0 0
      %4821 = vperm.xlu0 %4820, %v4587
      %v4822 = vpop.permute.xlu0 %4821
      %4825 = vset.pattern.permute.xlu0 0
      %4826 = vperm.xlu0 %4825, %v4588
      %v4827 = vpop.permute.xlu0 %4826
      %4830 = vset.pattern.permute.xlu0 0
      %4831 = vperm.xlu0 %4830, %v4589
      %v4832 = vpop.permute.xlu0 %4831
      %4835 = vset.pattern.permute.xlu0 0
      %4836 = vperm.xlu0 %4835, %v4590
      %v4837 = vpop.permute.xlu0 %4836
      %4840 = vset.pattern.permute.xlu0 0
      %4841 = vperm.xlu0 %4840, %v4591
      %v4842 = vpop.permute.xlu0 %4841
      %4845 = vset.pattern.permute.xlu0 0
      %4846 = vperm.xlu0 %4845, %v4592
      %v4847 = vpop.permute.xlu0 %4846
      %4850 = vset.pattern.permute.xlu0 0
      %4851 = vperm.xlu0 %4850, %v4593
      %v4852 = vpop.permute.xlu0 %4851
      %4855 = vset.pattern.permute.xlu0 0
      %4856 = vperm.xlu0 %4855, %v4594
      %v4857 = vpop.permute.xlu0 %4856
      %4860 = vset.pattern.permute.xlu0 0
      %4861 = vperm.xlu0 %4860, %v4595
      %v4862 = vpop.permute.xlu0 %4861
      %4865 = vset.pattern.permute.xlu0 0
      %4866 = vperm.xlu0 %4865, %v4596
      %v4867 = vpop.permute.xlu0 %4866
      %4870 = vset.pattern.permute.xlu0 0
      %4871 = vperm.xlu0 %4870, %v4597
      %v4872 = vpop.permute.xlu0 %4871
      %4875 = vset.pattern.permute.xlu0 0
      %4876 = vperm.xlu0 %4875, %v4598
      %v4877 = vpop.permute.xlu0 %4876
      %4880 = vset.pattern.permute.xlu0 0
      %4881 = vperm.xlu0 %4880, %v4599
      %v4882 = vpop.permute.xlu0 %4881
      %4885 = vset.pattern.permute.xlu0 0
      %4886 = vperm.xlu0 %4885, %v4600
      %v4887 = vpop.permute.xlu0 %4886
      %4890 = vset.pattern.permute.xlu0 0
      %4891 = vperm.xlu0 %4890, %v4601
      %v4892 = vpop.permute.xlu0 %4891
      %4895 = vset.pattern.permute.xlu0 0
      %4896 = vperm.xlu0 %4895, %v4602
      %v4897 = vpop.permute.xlu0 %4896
      %4900 = vset.pattern.permute.xlu0 0
      %4901 = vperm.xlu0 %4900, %v4603
      %v4902 = vpop.permute.xlu0 %4901
      %4905 = vset.pattern.permute.xlu0 0
      %4906 = vperm.xlu0 %4905, %v4604
      %v4907 = vpop.permute.xlu0 %4906
      %4910 = vset.pattern.permute.xlu0 0
      %4911 = vperm.xlu0 %4910, %v4605
      %v4912 = vpop.permute.xlu0 %4911
      %4915 = vset.pattern.permute.xlu0 0
      %4916 = vperm.xlu0 %4915, %v4606
      %v4917 = vpop.permute.xlu0 %4916
      %4920 = vset.pattern.permute.xlu0 0
      %4921 = vperm.xlu0 %4920, %v4607
      %v4922 = vpop.permute.xlu0 %4921
      %4925 = vset.pattern.permute.xlu0 0
      %4926 = vperm.xlu0 %4925, %v4608
      %v4927 = vpop.permute.xlu0 %4926
      %4930 = vset.pattern.permute.xlu0 0
      %4931 = vperm.xlu0 %4930, %v4609
      %v4932 = vpop.permute.xlu0 %4931
      %4935 = vset.pattern.permute.xlu0 0
      %4936 = vperm.xlu0 %4935, %v4610
      %v4937 = vpop.permute.xlu0 %4936
      %4940 = vset.pattern.permute.xlu0 0
      %4941 = vperm.xlu0 %4940, %v4611
      %v4942 = vpop.permute.xlu0 %4941
      %4945 = vset.pattern.permute.xlu0 0
      %4946 = vperm.xlu0 %4945, %v4612
      %v4947 = vpop.permute.xlu0 %4946
      %4950 = vset.pattern.permute.xlu0 0
      %4951 = vperm.xlu0 %4950, %v4613
      %v4952 = vpop.permute.xlu0 %4951
      %4955 = vset.pattern.permute.xlu0 0
      %4956 = vperm.xlu0 %4955, %v4614
      %v4957 = vpop.permute.xlu0 %4956
      %4960 = vset.pattern.permute.xlu0 0
      %4961 = vperm.xlu0 %4960, %v4615
      %v4962 = vpop.permute.xlu0 %4961
      %4965 = vset.pattern.permute.xlu0 0
      %4966 = vperm.xlu0 %4965, %v4616
      %v4967 = vpop.permute.xlu0 %4966
      %4970 = vset.pattern.permute.xlu0 0
      %4971 = vperm.xlu0 %4970, %v4617
      %v4972 = vpop.permute.xlu0 %4971
      %4975 = vset.pattern.permute.xlu0 0
      %4976 = vperm.xlu0 %4975, %v4618
      %v4977 = vpop.permute.xlu0 %4976
      %4980 = vset.pattern.permute.xlu0 0
      %4981 = vperm.xlu0 %4980, %v4619
      %v4982 = vpop.permute.xlu0 %4981
      %4985 = vset.pattern.permute.xlu0 0
      %4986 = vperm.xlu0 %4985, %v4620
      %v4987 = vpop.permute.xlu0 %4986
      %4990 = vset.pattern.permute.xlu0 0
      %4991 = vperm.xlu0 %4990, %v4621
      %v4992 = vpop.permute.xlu0 %4991
      %4995 = vset.pattern.permute.xlu0 0
      %4996 = vperm.xlu0 %4995, %v4622
      %v4997 = vpop.permute.xlu0 %4996
      %5000 = vset.pattern.permute.xlu0 0
      %5001 = vperm.xlu0 %5000, %v4623
      %v5002 = vpop.permute.xlu0 %5001
      %5005 = vset.pattern.permute.xlu0 0
      %5006 = vperm.xlu0 %5005, %v4624
      %v5007 = vpop.permute.xlu0 %5006
      %5010 = vset.pattern.permute.xlu0 0
      %5011 = vperm.xlu0 %5010, %v4625
      %v5012 = vpop.permute.xlu0 %5011
      %5015 = vset.pattern.permute.xlu0 0
      %5016 = vperm.xlu0 %5015, %v4626
      %v5017 = vpop.permute.xlu0 %5016
      %5020 = vset.pattern.permute.xlu0 0
      %5021 = vperm.xlu0 %5020, %v4627
      %v5022 = vpop.permute.xlu0 %5021
      %5025 = vset.pattern.permute.xlu0 0
      %5026 = vperm.xlu0 %5025, %v4628
      %v5027 = vpop.permute.xlu0 %5026
      %5030 = vset.pattern.permute.xlu0 0
      %5031 = vperm.xlu0 %5030, %v4629
      %v5032 = vpop.permute.xlu0 %5031
      %5035 = vset.pattern.permute.xlu0 0
      %5036 = vperm.xlu0 %5035, %v4630
      %v5037 = vpop.permute.xlu0 %5036
      %5040 = vset.pattern.permute.xlu0 0
      %5041 = vperm.xlu0 %5040, %v4631
      %v5042 = vpop.permute.xlu0 %5041
      %5045 = vset.pattern.permute.xlu0 0
      %5046 = vperm.xlu0 %5045, %v4632
      %v5047 = vpop.permute.xlu0 %5046
      %5050 = vset.pattern.permute.xlu0 0
      %5051 = vperm.xlu0 %5050, %v4633
      %v5052 = vpop.permute.xlu0 %5051
      %5055 = vset.pattern.permute.xlu0 0
      %5056 = vperm.xlu0 %5055, %v4634
      %v5057 = vpop.permute.xlu0 %5056
      %5060 = vset.pattern.permute.xlu0 0
      %5061 = vperm.xlu0 %5060, %v4635
      %v5062 = vpop.permute.xlu0 %5061
      %5065 = vset.pattern.permute.xlu0 0
      %5066 = vperm.xlu0 %5065, %v4636
      %v5067 = vpop.permute.xlu0 %5066
      %5070 = vset.pattern.permute.xlu0 0
      %5071 = vperm.xlu0 %5070, %v4637
      %v5072 = vpop.permute.xlu0 %5071
      %5075 = vset.pattern.permute.xlu0 0
      %5076 = vperm.xlu0 %5075, %v4638
      %v5077 = vpop.permute.xlu0 %5076
      %5080 = vset.pattern.permute.xlu0 0
      %5081 = vperm.xlu0 %5080, %v4639
      %v5082 = vpop.permute.xlu0 %5081
      %5085 = vset.pattern.permute.xlu0 0
      %5086 = vperm.xlu0 %5085, %v4640
      %v5087 = vpop.permute.xlu0 %5086
      %5090 = vset.pattern.permute.xlu0 0
      %5091 = vperm.xlu0 %5090, %v4641
      %v5092 = vpop.permute.xlu0 %5091
      %5095 = vset.pattern.permute.xlu0 0
      %5096 = vperm.xlu0 %5095, %v4642
      %v5097 = vpop.permute.xlu0 %5096
      %v5099 = vperm.slane %v4643, 0
      %v5100 = vmul.f32 %v4647, %v5099
      %v5101 = vmul.f32 %v4652, %v5099
      %v5102 = vmul.f32 %v4657, %v5099
      %v5103 = vmul.f32 %v4662, %v5099
      %v5104 = vmul.f32 %v4667, %v5099
      %v5105 = vmul.f32 %v4672, %v5099
      %v5106 = vmul.f32 %v4677, %v5099
      %v5107 = vmul.f32 %v4682, %v5099
      %v5108 = vmul.f32 %v4687, %v5099
      %v5109 = vmul.f32 %v4692, %v5099
      %v5110 = vmul.f32 %v4697, %v5099
      %v5111 = vmul.f32 %v4702, %v5099
      %v5112 = vmul.f32 %v4707, %v5099
      %v5113 = vmul.f32 %v4712, %v5099
      %v5114 = vmul.f32 %v4717, %v5099
      %v5115 = vmul.f32 %v4722, %v5099
      %v5116 = vmul.f32 %v4727, %v5099
      %v5117 = vmul.f32 %v4732, %v5099
      %v5118 = vmul.f32 %v4737, %v5099
      %v5119 = vmul.f32 %v4742, %v5099
      %v5120 = vmul.f32 %v4747, %v5099
      %v5121 = vmul.f32 %v4752, %v5099
      %v5122 = vmul.f32 %v4757, %v5099
      %v5123 = vmul.f32 %v4762, %v5099
      %v5124 = vmul.f32 %v4767, %v5099
      %v5125 = vmul.f32 %v4772, %v5099
      %v5126 = vmul.f32 %v4777, %v5099
      %v5127 = vmul.f32 %v4782, %v5099
      %v5128 = vmul.f32 %v4787, %v5099
      %v5129 = vmul.f32 %v4792, %v5099
      %v5130 = vmul.f32 %v4797, %v5099
      %v5131 = vmul.f32 %v4802, %v5099
      %v5132 = vmul.f32 %v4807, %v5099
      %v5133 = vmul.f32 %v4812, %v5099
      %v5134 = vmul.f32 %v4817, %v5099
      %v5135 = vmul.f32 %v4822, %v5099
      %v5136 = vmul.f32 %v4827, %v5099
      %v5137 = vmul.f32 %v4832, %v5099
      %v5138 = vmul.f32 %v4837, %v5099
      %v5139 = vmul.f32 %v4842, %v5099
      %v5140 = vmul.f32 %v4847, %v5099
      %v5141 = vmul.f32 %v4852, %v5099
      %v5142 = vmul.f32 %v4857, %v5099
      %v5143 = vmul.f32 %v4862, %v5099
      %v5144 = vmul.f32 %v4867, %v5099
      %v5145 = vmul.f32 %v4872, %v5099
      %v5146 = vmul.f32 %v4877, %v5099
      %v5147 = vmul.f32 %v4882, %v5099
      %v5148 = vmul.f32 %v4887, %v5099
      %v5149 = vmul.f32 %v4892, %v5099
      %v5150 = vmul.f32 %v4897, %v5099
      %v5151 = vmul.f32 %v4902, %v5099
      %v5152 = vmul.f32 %v4907, %v5099
      %v5153 = vmul.f32 %v4912, %v5099
      %v5154 = vmul.f32 %v4917, %v5099
      %v5155 = vmul.f32 %v4922, %v5099
      %v5156 = vmul.f32 %v4927, %v5099
      %v5157 = vmul.f32 %v4932, %v5099
      %v5158 = vmul.f32 %v4937, %v5099
      %v5159 = vmul.f32 %v4942, %v5099
      %v5160 = vmul.f32 %v4947, %v5099
      %v5161 = vmul.f32 %v4952, %v5099
      %v5162 = vmul.f32 %v4957, %v5099
      %v5163 = vmul.f32 %v4962, %v5099
      %v5164 = vmul.f32 %v4967, %v5099
      %v5165 = vmul.f32 %v4972, %v5099
      %v5166 = vmul.f32 %v4977, %v5099
      %v5167 = vmul.f32 %v4982, %v5099
      %v5168 = vmul.f32 %v4987, %v5099
      %v5169 = vmul.f32 %v4992, %v5099
      %v5170 = vmul.f32 %v4997, %v5099
      %v5171 = vmul.f32 %v5002, %v5099
      %v5172 = vmul.f32 %v5007, %v5099
      %v5173 = vmul.f32 %v5012, %v5099
      %v5174 = vmul.f32 %v5017, %v5099
      %v5175 = vmul.f32 %v5022, %v5099
      %v5176 = vmul.f32 %v5027, %v5099
      %v5177 = vmul.f32 %v5032, %v5099
      %v5178 = vmul.f32 %v5037, %v5099
      %v5179 = vmul.f32 %v5042, %v5099
      %v5180 = vmul.f32 %v5047, %v5099
      %v5181 = vmul.f32 %v5052, %v5099
      %v5182 = vmul.f32 %v5057, %v5099
      %v5183 = vmul.f32 %v5062, %v5099
      %v5184 = vmul.f32 %v5067, %v5099
      %v5185 = vmul.f32 %v5072, %v5099
      %v5186 = vmul.f32 %v5077, %v5099
      %v5187 = vmul.f32 %v5082, %v5099
      %v5188 = vmul.f32 %v5087, %v5099
      %v5189 = vmul.f32 %v5092, %v5099
      %v5190 = vmul.f32 %v5097, %v5099
      %v5191 = vadd.f32 %v4461, %v5100
      %v5192 = vadd.f32 %v4462, %v5101
      %v5193 = vadd.f32 %v4463, %v5102
      %v5194 = vadd.f32 %v4464, %v5103
      %v5195 = vadd.f32 %v4465, %v5104
      %v5196 = vadd.f32 %v4466, %v5105
      %v5197 = vadd.f32 %v4467, %v5106
      %v5198 = vadd.f32 %v4468, %v5107
      %v5199 = vadd.f32 %v4469, %v5108
      %v5200 = vadd.f32 %v4470, %v5109
      %v5201 = vadd.f32 %v4471, %v5110
      %v5202 = vadd.f32 %v4472, %v5111
      %v5203 = vadd.f32 %v4473, %v5112
      %v5204 = vadd.f32 %v4474, %v5113
      %v5205 = vadd.f32 %v4475, %v5114
      %v5206 = vadd.f32 %v4476, %v5115
      %v5207 = vadd.f32 %v4477, %v5116
      %v5208 = vadd.f32 %v4478, %v5117
      %v5209 = vadd.f32 %v4479, %v5118
      %v5210 = vadd.f32 %v4480, %v5119
      %v5211 = vadd.f32 %v4481, %v5120
      %v5212 = vadd.f32 %v4482, %v5121
      %v5213 = vadd.f32 %v4483, %v5122
      %v5214 = vadd.f32 %v4484, %v5123
      %v5215 = vadd.f32 %v4485, %v5124
      %v5216 = vadd.f32 %v4486, %v5125
      %v5217 = vadd.f32 %v4487, %v5126
      %v5218 = vadd.f32 %v4488, %v5127
      %v5219 = vadd.f32 %v4489, %v5128
      %v5220 = vadd.f32 %v4490, %v5129
      %v5221 = vadd.f32 %v4491, %v5130
      %v5222 = vadd.f32 %v4492, %v5131
      %v5223 = vadd.f32 %v4493, %v5132
      %v5224 = vadd.f32 %v4494, %v5133
      %v5225 = vadd.f32 %v4495, %v5134
      %v5226 = vadd.f32 %v4496, %v5135
      %v5227 = vadd.f32 %v4497, %v5136
      %v5228 = vadd.f32 %v4498, %v5137
      %v5229 = vadd.f32 %v4499, %v5138
      %v5230 = vadd.f32 %v4500, %v5139
      %v5231 = vadd.f32 %v4501, %v5140
      %v5232 = vadd.f32 %v4502, %v5141
      %v5233 = vadd.f32 %v4503, %v5142
      %v5234 = vadd.f32 %v4504, %v5143
      %v5235 = vadd.f32 %v4505, %v5144
      %v5236 = vadd.f32 %v4506, %v5145
      %v5237 = vadd.f32 %v4507, %v5146
      %v5238 = vadd.f32 %v4508, %v5147
      %v5239 = vadd.f32 %v4509, %v5148
      %v5240 = vadd.f32 %v4510, %v5149
      %v5241 = vadd.f32 %v4511, %v5150
      %v5242 = vadd.f32 %v4512, %v5151
      %v5243 = vadd.f32 %v4513, %v5152
      %v5244 = vadd.f32 %v4514, %v5153
      %v5245 = vadd.f32 %v4515, %v5154
      %v5246 = vadd.f32 %v4516, %v5155
      %v5247 = vadd.f32 %v4517, %v5156
      %v5248 = vadd.f32 %v4518, %v5157
      %v5249 = vadd.f32 %v4519, %v5158
      %v5250 = vadd.f32 %v4520, %v5159
      %v5251 = vadd.f32 %v4521, %v5160
      %v5252 = vadd.f32 %v4522, %v5161
      %v5253 = vadd.f32 %v4523, %v5162
      %v5254 = vadd.f32 %v4524, %v5163
      %v5255 = vadd.f32 %v4525, %v5164
      %v5256 = vadd.f32 %v4526, %v5165
      %v5257 = vadd.f32 %v4527, %v5166
      %v5258 = vadd.f32 %v4528, %v5167
      %v5259 = vadd.f32 %v4529, %v5168
      %v5260 = vadd.f32 %v4530, %v5169
      %v5261 = vadd.f32 %v4531, %v5170
      %v5262 = vadd.f32 %v4532, %v5171
      %v5263 = vadd.f32 %v4533, %v5172
      %v5264 = vadd.f32 %v4534, %v5173
      %v5265 = vadd.f32 %v4535, %v5174
      %v5266 = vadd.f32 %v4536, %v5175
      %v5267 = vadd.f32 %v4537, %v5176
      %v5268 = vadd.f32 %v4538, %v5177
      %v5269 = vadd.f32 %v4539, %v5178
      %v5270 = vadd.f32 %v4540, %v5179
      %v5271 = vadd.f32 %v4541, %v5180
      %v5272 = vadd.f32 %v4542, %v5181
      %v5273 = vadd.f32 %v4543, %v5182
      %v5274 = vadd.f32 %v4544, %v5183
      %v5275 = vadd.f32 %v4545, %v5184
      %v5276 = vadd.f32 %v4546, %v5185
      %v5277 = vadd.f32 %v4547, %v5186
      %v5278 = vadd.f32 %v4548, %v5187
      %v5279 = vadd.f32 %v4549, %v5188
      %v5280 = vadd.f32 %v4550, %v5189
      %v5281 = vadd.f32 %v4551, %v5190
      %v5282 = vld [vmem:[%s165 + $0x39] sm:$0xff]
      %v5283 = vld [vmem:[%s165 + $0x41] sm:$0xff]
      %v5284 = vld [vmem:[%s165 + $0x49] sm:$0xff]
      %v5285 = vld [vmem:[%s165 + $0x51] sm:$0xff]
      %v5286 = vld [vmem:[%s165 + $0x59] sm:$0xff]
      %v5287 = vld [vmem:[%s165 + $0x61] sm:$0xff]
      %v5288 = vld [vmem:[%s165 + $0x69] sm:$0xff]
      %v5289 = vld [vmem:[%s165 + $0x71] sm:$0xff]
      %v5290 = vld [vmem:[%s165 + $0x79] sm:$0xff]
      %v5291 = vld [vmem:[%s165 + $0x81] sm:$0xff]
      %v5292 = vld [vmem:[%s165 + $0x89] sm:$0xff]
      %v5293 = vld [vmem:[%s165 + $0x91] sm:$0xff]
      %v5294 = vld [vmem:[%s165 + $0x99] sm:$0xff]
      %v5295 = vld [vmem:[%s165 + $0xa1] sm:$0xff]
      %v5296 = vld [vmem:[%s165 + $0xa9] sm:$0xff]
      %v5297 = vld [vmem:[%s165 + $0xb1] sm:$0xff]
      %v5298 = vld [vmem:[%s165 + $0xb9] sm:$0xff]
      %v5299 = vld [vmem:[%s165 + $0xc1] sm:$0xff]
      %v5300 = vld [vmem:[%s165 + $0xc9] sm:$0xff]
      %v5301 = vld [vmem:[%s165 + $0xd1] sm:$0xff]
      %v5302 = vld [vmem:[%s165 + $0xd9] sm:$0xff]
      %v5303 = vld [vmem:[%s165 + $0xe1] sm:$0xff]
      %v5304 = vld [vmem:[%s165 + $0xe9] sm:$0xff]
      %v5305 = vld [vmem:[%s165 + $0xf1] sm:$0xff]
      %v5306 = vld [vmem:[%s165 + $0xf9] sm:$0xff]
      %v5307 = vld [vmem:[%s165 + $0x101] sm:$0xff]
      %v5308 = vld [vmem:[%s165 + $0x109] sm:$0xff]
      %v5309 = vld [vmem:[%s165 + $0x111] sm:$0xff]
      %v5310 = vld [vmem:[%s165 + $0x119] sm:$0xff]
      %v5311 = vld [vmem:[%s165 + $0x121] sm:$0xff]
      %v5312 = vld [vmem:[%s165 + $0x129] sm:$0xff]
      %v5313 = vld [vmem:[%s165 + $0x131] sm:$0xff]
      %v5314 = vld [vmem:[%s165 + $0x139] sm:$0xff]
      %v5315 = vld [vmem:[%s165 + $0x141] sm:$0xff]
      %v5316 = vld [vmem:[%s165 + $0x149] sm:$0xff]
      %v5317 = vld [vmem:[%s165 + $0x151] sm:$0xff]
      %v5318 = vld [vmem:[%s165 + $0x159] sm:$0xff]
      %v5319 = vld [vmem:[%s165 + $0x161] sm:$0xff]
      %v5320 = vld [vmem:[%s165 + $0x169] sm:$0xff]
      %v5321 = vld [vmem:[%s165 + $0x171] sm:$0xff]
      %v5322 = vld [vmem:[%s165 + $0x179] sm:$0xff]
      %v5323 = vld [vmem:[%s165 + $0x181] sm:$0xff]
      %v5324 = vld [vmem:[%s165 + $0x189] sm:$0xff]
      %v5325 = vld [vmem:[%s165 + $0x191] sm:$0xff]
      %v5326 = vld [vmem:[%s165 + $0x199] sm:$0xff]
      %v5327 = vld [vmem:[%s165 + $0x1a1] sm:$0xff]
      %v5328 = vld [vmem:[%s165 + $0x1a9] sm:$0xff]
      %v5329 = vld [vmem:[%s165 + $0x1b1] sm:$0xff]
      %v5330 = vld [vmem:[%s165 + $0x1b9] sm:$0xff]
      %v5331 = vld [vmem:[%s165 + $0x1c1] sm:$0xff]
      %v5332 = vld [vmem:[%s165 + $0x1c9] sm:$0xff]
      %v5333 = vld [vmem:[%s165 + $0x1d1] sm:$0xff]
      %v5334 = vld [vmem:[%s165 + $0x1d9] sm:$0xff]
      %v5335 = vld [vmem:[%s165 + $0x1e1] sm:$0xff]
      %v5336 = vld [vmem:[%s165 + $0x1e9] sm:$0xff]
      %v5337 = vld [vmem:[%s165 + $0x1f1] sm:$0xff]
      %v5338 = vld [vmem:[%s165 + $0x1f9] sm:$0xff]
      %v5339 = vld [vmem:[%s165 + $0x201] sm:$0xff]
      %v5340 = vld [vmem:[%s165 + $0x209] sm:$0xff]
      %v5341 = vld [vmem:[%s165 + $0x211] sm:$0xff]
      %v5342 = vld [vmem:[%s165 + $0x219] sm:$0xff]
      %v5343 = vld [vmem:[%s165 + $0x221] sm:$0xff]
      %v5344 = vld [vmem:[%s165 + $0x229] sm:$0xff]
      %v5345 = vld [vmem:[%s165 + $0x231] sm:$0xff]
      %v5346 = vld [vmem:[%s165 + $0x239] sm:$0xff]
      %v5347 = vld [vmem:[%s165 + $0x241] sm:$0xff]
      %v5348 = vld [vmem:[%s165 + $0x249] sm:$0xff]
      %v5349 = vld [vmem:[%s165 + $0x251] sm:$0xff]
      %v5350 = vld [vmem:[%s165 + $0x259] sm:$0xff]
      %v5351 = vld [vmem:[%s165 + $0x261] sm:$0xff]
      %v5352 = vld [vmem:[%s165 + $0x269] sm:$0xff]
      %v5353 = vld [vmem:[%s165 + $0x271] sm:$0xff]
      %v5354 = vld [vmem:[%s165 + $0x279] sm:$0xff]
      %v5355 = vld [vmem:[%s165 + $0x281] sm:$0xff]
      %v5356 = vld [vmem:[%s165 + $0x289] sm:$0xff]
      %v5357 = vld [vmem:[%s165 + $0x291] sm:$0xff]
      %v5358 = vld [vmem:[%s165 + $0x299] sm:$0xff]
      %v5359 = vld [vmem:[%s165 + $0x2a1] sm:$0xff]
      %v5360 = vld [vmem:[%s165 + $0x2a9] sm:$0xff]
      %v5361 = vld [vmem:[%s165 + $0x2b1] sm:$0xff]
      %v5362 = vld [vmem:[%s165 + $0x2b9] sm:$0xff]
      %v5363 = vld [vmem:[%s165 + $0x2c1] sm:$0xff]
      %v5364 = vld [vmem:[%s165 + $0x2c9] sm:$0xff]
      %v5365 = vld [vmem:[%s165 + $0x2d1] sm:$0xff]
      %v5366 = vld [vmem:[%s165 + $0x2d9] sm:$0xff]
      %v5367 = vld [vmem:[%s165 + $0x2e1] sm:$0xff]
      %v5368 = vld [vmem:[%s165 + $0x2e9] sm:$0xff]
      %v5369 = vld [vmem:[%s165 + $0x2f1] sm:$0xff]
      %v5370 = vld [vmem:[%s165 + $0x2f9] sm:$0xff]
      %v5371 = vld [vmem:[%s165 + $0x301] sm:$0xff]
      %v5372 = vld [vmem:[%s165 + $0x309] sm:$0xff]
      %v5373 = vld [vmem:[%s1 + $0x7] sm:$0x1]
      %5375 = vset.pattern.permute.xlu0 0
      %5376 = vperm.xlu0 %5375, %v5282
      %v5377 = vpop.permute.xlu0 %5376
      %5380 = vset.pattern.permute.xlu0 0
      %5381 = vperm.xlu0 %5380, %v5283
      %v5382 = vpop.permute.xlu0 %5381
      %5385 = vset.pattern.permute.xlu0 0
      %5386 = vperm.xlu0 %5385, %v5284
      %v5387 = vpop.permute.xlu0 %5386
      %5390 = vset.pattern.permute.xlu0 0
      %5391 = vperm.xlu0 %5390, %v5285
      %v5392 = vpop.permute.xlu0 %5391
      %5395 = vset.pattern.permute.xlu0 0
      %5396 = vperm.xlu0 %5395, %v5286
      %v5397 = vpop.permute.xlu0 %5396
      %5400 = vset.pattern.permute.xlu0 0
      %5401 = vperm.xlu0 %5400, %v5287
      %v5402 = vpop.permute.xlu0 %5401
      %5405 = vset.pattern.permute.xlu0 0
      %5406 = vperm.xlu0 %5405, %v5288
      %v5407 = vpop.permute.xlu0 %5406
      %5410 = vset.pattern.permute.xlu0 0
      %5411 = vperm.xlu0 %5410, %v5289
      %v5412 = vpop.permute.xlu0 %5411
      %5415 = vset.pattern.permute.xlu0 0
      %5416 = vperm.xlu0 %5415, %v5290
      %v5417 = vpop.permute.xlu0 %5416
      %5420 = vset.pattern.permute.xlu0 0
      %5421 = vperm.xlu0 %5420, %v5291
      %v5422 = vpop.permute.xlu0 %5421
      %5425 = vset.pattern.permute.xlu0 0
      %5426 = vperm.xlu0 %5425, %v5292
      %v5427 = vpop.permute.xlu0 %5426
      %5430 = vset.pattern.permute.xlu0 0
      %5431 = vperm.xlu0 %5430, %v5293
      %v5432 = vpop.permute.xlu0 %5431
      %5435 = vset.pattern.permute.xlu0 0
      %5436 = vperm.xlu0 %5435, %v5294
      %v5437 = vpop.permute.xlu0 %5436
      %5440 = vset.pattern.permute.xlu0 0
      %5441 = vperm.xlu0 %5440, %v5295
      %v5442 = vpop.permute.xlu0 %5441
      %5445 = vset.pattern.permute.xlu0 0
      %5446 = vperm.xlu0 %5445, %v5296
      %v5447 = vpop.permute.xlu0 %5446
      %5450 = vset.pattern.permute.xlu0 0
      %5451 = vperm.xlu0 %5450, %v5297
      %v5452 = vpop.permute.xlu0 %5451
      %5455 = vset.pattern.permute.xlu0 0
      %5456 = vperm.xlu0 %5455, %v5298
      %v5457 = vpop.permute.xlu0 %5456
      %5460 = vset.pattern.permute.xlu0 0
      %5461 = vperm.xlu0 %5460, %v5299
      %v5462 = vpop.permute.xlu0 %5461
      %5465 = vset.pattern.permute.xlu0 0
      %5466 = vperm.xlu0 %5465, %v5300
      %v5467 = vpop.permute.xlu0 %5466
      %5470 = vset.pattern.permute.xlu0 0
      %5471 = vperm.xlu0 %5470, %v5301
      %v5472 = vpop.permute.xlu0 %5471
      %5475 = vset.pattern.permute.xlu0 0
      %5476 = vperm.xlu0 %5475, %v5302
      %v5477 = vpop.permute.xlu0 %5476
      %5480 = vset.pattern.permute.xlu0 0
      %5481 = vperm.xlu0 %5480, %v5303
      %v5482 = vpop.permute.xlu0 %5481
      %5485 = vset.pattern.permute.xlu0 0
      %5486 = vperm.xlu0 %5485, %v5304
      %v5487 = vpop.permute.xlu0 %5486
      %5490 = vset.pattern.permute.xlu0 0
      %5491 = vperm.xlu0 %5490, %v5305
      %v5492 = vpop.permute.xlu0 %5491
      %5495 = vset.pattern.permute.xlu0 0
      %5496 = vperm.xlu0 %5495, %v5306
      %v5497 = vpop.permute.xlu0 %5496
      %5500 = vset.pattern.permute.xlu0 0
      %5501 = vperm.xlu0 %5500, %v5307
      %v5502 = vpop.permute.xlu0 %5501
      %5505 = vset.pattern.permute.xlu0 0
      %5506 = vperm.xlu0 %5505, %v5308
      %v5507 = vpop.permute.xlu0 %5506
      %5510 = vset.pattern.permute.xlu0 0
      %5511 = vperm.xlu0 %5510, %v5309
      %v5512 = vpop.permute.xlu0 %5511
      %5515 = vset.pattern.permute.xlu0 0
      %5516 = vperm.xlu0 %5515, %v5310
      %v5517 = vpop.permute.xlu0 %5516
      %5520 = vset.pattern.permute.xlu0 0
      %5521 = vperm.xlu0 %5520, %v5311
      %v5522 = vpop.permute.xlu0 %5521
      %5525 = vset.pattern.permute.xlu0 0
      %5526 = vperm.xlu0 %5525, %v5312
      %v5527 = vpop.permute.xlu0 %5526
      %5530 = vset.pattern.permute.xlu0 0
      %5531 = vperm.xlu0 %5530, %v5313
      %v5532 = vpop.permute.xlu0 %5531
      %5535 = vset.pattern.permute.xlu0 0
      %5536 = vperm.xlu0 %5535, %v5314
      %v5537 = vpop.permute.xlu0 %5536
      %5540 = vset.pattern.permute.xlu0 0
      %5541 = vperm.xlu0 %5540, %v5315
      %v5542 = vpop.permute.xlu0 %5541
      %5545 = vset.pattern.permute.xlu0 0
      %5546 = vperm.xlu0 %5545, %v5316
      %v5547 = vpop.permute.xlu0 %5546
      %5550 = vset.pattern.permute.xlu0 0
      %5551 = vperm.xlu0 %5550, %v5317
      %v5552 = vpop.permute.xlu0 %5551
      %5555 = vset.pattern.permute.xlu0 0
      %5556 = vperm.xlu0 %5555, %v5318
      %v5557 = vpop.permute.xlu0 %5556
      %5560 = vset.pattern.permute.xlu0 0
      %5561 = vperm.xlu0 %5560, %v5319
      %v5562 = vpop.permute.xlu0 %5561
      %5565 = vset.pattern.permute.xlu0 0
      %5566 = vperm.xlu0 %5565, %v5320
      %v5567 = vpop.permute.xlu0 %5566
      %5570 = vset.pattern.permute.xlu0 0
      %5571 = vperm.xlu0 %5570, %v5321
      %v5572 = vpop.permute.xlu0 %5571
      %5575 = vset.pattern.permute.xlu0 0
      %5576 = vperm.xlu0 %5575, %v5322
      %v5577 = vpop.permute.xlu0 %5576
      %5580 = vset.pattern.permute.xlu0 0
      %5581 = vperm.xlu0 %5580, %v5323
      %v5582 = vpop.permute.xlu0 %5581
      %5585 = vset.pattern.permute.xlu0 0
      %5586 = vperm.xlu0 %5585, %v5324
      %v5587 = vpop.permute.xlu0 %5586
      %5590 = vset.pattern.permute.xlu0 0
      %5591 = vperm.xlu0 %5590, %v5325
      %v5592 = vpop.permute.xlu0 %5591
      %5595 = vset.pattern.permute.xlu0 0
      %5596 = vperm.xlu0 %5595, %v5326
      %v5597 = vpop.permute.xlu0 %5596
      %5600 = vset.pattern.permute.xlu0 0
      %5601 = vperm.xlu0 %5600, %v5327
      %v5602 = vpop.permute.xlu0 %5601
      %5605 = vset.pattern.permute.xlu0 0
      %5606 = vperm.xlu0 %5605, %v5328
      %v5607 = vpop.permute.xlu0 %5606
      %5610 = vset.pattern.permute.xlu0 0
      %5611 = vperm.xlu0 %5610, %v5329
      %v5612 = vpop.permute.xlu0 %5611
      %5615 = vset.pattern.permute.xlu0 0
      %5616 = vperm.xlu0 %5615, %v5330
      %v5617 = vpop.permute.xlu0 %5616
      %5620 = vset.pattern.permute.xlu0 0
      %5621 = vperm.xlu0 %5620, %v5331
      %v5622 = vpop.permute.xlu0 %5621
      %5625 = vset.pattern.permute.xlu0 0
      %5626 = vperm.xlu0 %5625, %v5332
      %v5627 = vpop.permute.xlu0 %5626
      %5630 = vset.pattern.permute.xlu0 0
      %5631 = vperm.xlu0 %5630, %v5333
      %v5632 = vpop.permute.xlu0 %5631
      %5635 = vset.pattern.permute.xlu0 0
      %5636 = vperm.xlu0 %5635, %v5334
      %v5637 = vpop.permute.xlu0 %5636
      %5640 = vset.pattern.permute.xlu0 0
      %5641 = vperm.xlu0 %5640, %v5335
      %v5642 = vpop.permute.xlu0 %5641
      %5645 = vset.pattern.permute.xlu0 0
      %5646 = vperm.xlu0 %5645, %v5336
      %v5647 = vpop.permute.xlu0 %5646
      %5650 = vset.pattern.permute.xlu0 0
      %5651 = vperm.xlu0 %5650, %v5337
      %v5652 = vpop.permute.xlu0 %5651
      %5655 = vset.pattern.permute.xlu0 0
      %5656 = vperm.xlu0 %5655, %v5338
      %v5657 = vpop.permute.xlu0 %5656
      %5660 = vset.pattern.permute.xlu0 0
      %5661 = vperm.xlu0 %5660, %v5339
      %v5662 = vpop.permute.xlu0 %5661
      %5665 = vset.pattern.permute.xlu0 0
      %5666 = vperm.xlu0 %5665, %v5340
      %v5667 = vpop.permute.xlu0 %5666
      %5670 = vset.pattern.permute.xlu0 0
      %5671 = vperm.xlu0 %5670, %v5341
      %v5672 = vpop.permute.xlu0 %5671
      %5675 = vset.pattern.permute.xlu0 0
      %5676 = vperm.xlu0 %5675, %v5342
      %v5677 = vpop.permute.xlu0 %5676
      %5680 = vset.pattern.permute.xlu0 0
      %5681 = vperm.xlu0 %5680, %v5343
      %v5682 = vpop.permute.xlu0 %5681
      %5685 = vset.pattern.permute.xlu0 0
      %5686 = vperm.xlu0 %5685, %v5344
      %v5687 = vpop.permute.xlu0 %5686
      %5690 = vset.pattern.permute.xlu0 0
      %5691 = vperm.xlu0 %5690, %v5345
      %v5692 = vpop.permute.xlu0 %5691
      %5695 = vset.pattern.permute.xlu0 0
      %5696 = vperm.xlu0 %5695, %v5346
      %v5697 = vpop.permute.xlu0 %5696
      %5700 = vset.pattern.permute.xlu0 0
      %5701 = vperm.xlu0 %5700, %v5347
      %v5702 = vpop.permute.xlu0 %5701
      %5705 = vset.pattern.permute.xlu0 0
      %5706 = vperm.xlu0 %5705, %v5348
      %v5707 = vpop.permute.xlu0 %5706
      %5710 = vset.pattern.permute.xlu0 0
      %5711 = vperm.xlu0 %5710, %v5349
      %v5712 = vpop.permute.xlu0 %5711
      %5715 = vset.pattern.permute.xlu0 0
      %5716 = vperm.xlu0 %5715, %v5350
      %v5717 = vpop.permute.xlu0 %5716
      %5720 = vset.pattern.permute.xlu0 0
      %5721 = vperm.xlu0 %5720, %v5351
      %v5722 = vpop.permute.xlu0 %5721
      %5725 = vset.pattern.permute.xlu0 0
      %5726 = vperm.xlu0 %5725, %v5352
      %v5727 = vpop.permute.xlu0 %5726
      %5730 = vset.pattern.permute.xlu0 0
      %5731 = vperm.xlu0 %5730, %v5353
      %v5732 = vpop.permute.xlu0 %5731
      %5735 = vset.pattern.permute.xlu0 0
      %5736 = vperm.xlu0 %5735, %v5354
      %v5737 = vpop.permute.xlu0 %5736
      %5740 = vset.pattern.permute.xlu0 0
      %5741 = vperm.xlu0 %5740, %v5355
      %v5742 = vpop.permute.xlu0 %5741
      %5745 = vset.pattern.permute.xlu0 0
      %5746 = vperm.xlu0 %5745, %v5356
      %v5747 = vpop.permute.xlu0 %5746
      %5750 = vset.pattern.permute.xlu0 0
      %5751 = vperm.xlu0 %5750, %v5357
      %v5752 = vpop.permute.xlu0 %5751
      %5755 = vset.pattern.permute.xlu0 0
      %5756 = vperm.xlu0 %5755, %v5358
      %v5757 = vpop.permute.xlu0 %5756
      %5760 = vset.pattern.permute.xlu0 0
      %5761 = vperm.xlu0 %5760, %v5359
      %v5762 = vpop.permute.xlu0 %5761
      %5765 = vset.pattern.permute.xlu0 0
      %5766 = vperm.xlu0 %5765, %v5360
      %v5767 = vpop.permute.xlu0 %5766
      %5770 = vset.pattern.permute.xlu0 0
      %5771 = vperm.xlu0 %5770, %v5361
      %v5772 = vpop.permute.xlu0 %5771
      %5775 = vset.pattern.permute.xlu0 0
      %5776 = vperm.xlu0 %5775, %v5362
      %v5777 = vpop.permute.xlu0 %5776
      %5780 = vset.pattern.permute.xlu0 0
      %5781 = vperm.xlu0 %5780, %v5363
      %v5782 = vpop.permute.xlu0 %5781
      %5785 = vset.pattern.permute.xlu0 0
      %5786 = vperm.xlu0 %5785, %v5364
      %v5787 = vpop.permute.xlu0 %5786
      %5790 = vset.pattern.permute.xlu0 0
      %5791 = vperm.xlu0 %5790, %v5365
      %v5792 = vpop.permute.xlu0 %5791
      %5795 = vset.pattern.permute.xlu0 0
      %5796 = vperm.xlu0 %5795, %v5366
      %v5797 = vpop.permute.xlu0 %5796
      %5800 = vset.pattern.permute.xlu0 0
      %5801 = vperm.xlu0 %5800, %v5367
      %v5802 = vpop.permute.xlu0 %5801
      %5805 = vset.pattern.permute.xlu0 0
      %5806 = vperm.xlu0 %5805, %v5368
      %v5807 = vpop.permute.xlu0 %5806
      %5810 = vset.pattern.permute.xlu0 0
      %5811 = vperm.xlu0 %5810, %v5369
      %v5812 = vpop.permute.xlu0 %5811
      %5815 = vset.pattern.permute.xlu0 0
      %5816 = vperm.xlu0 %5815, %v5370
      %v5817 = vpop.permute.xlu0 %5816
      %5820 = vset.pattern.permute.xlu0 0
      %5821 = vperm.xlu0 %5820, %v5371
      %v5822 = vpop.permute.xlu0 %5821
      %5825 = vset.pattern.permute.xlu0 0
      %5826 = vperm.xlu0 %5825, %v5372
      %v5827 = vpop.permute.xlu0 %5826
      %v5829 = vperm.slane %v5373, 0
      %v5830 = vmul.f32 %v5377, %v5829
      %v5831 = vmul.f32 %v5382, %v5829
      %v5832 = vmul.f32 %v5387, %v5829
      %v5833 = vmul.f32 %v5392, %v5829
      %v5834 = vmul.f32 %v5397, %v5829
      %v5835 = vmul.f32 %v5402, %v5829
      %v5836 = vmul.f32 %v5407, %v5829
      %v5837 = vmul.f32 %v5412, %v5829
      %v5838 = vmul.f32 %v5417, %v5829
      %v5839 = vmul.f32 %v5422, %v5829
      %v5840 = vmul.f32 %v5427, %v5829
      %v5841 = vmul.f32 %v5432, %v5829
      %v5842 = vmul.f32 %v5437, %v5829
      %v5843 = vmul.f32 %v5442, %v5829
      %v5844 = vmul.f32 %v5447, %v5829
      %v5845 = vmul.f32 %v5452, %v5829
      %v5846 = vmul.f32 %v5457, %v5829
      %v5847 = vmul.f32 %v5462, %v5829
      %v5848 = vmul.f32 %v5467, %v5829
      %v5849 = vmul.f32 %v5472, %v5829
      %v5850 = vmul.f32 %v5477, %v5829
      %v5851 = vmul.f32 %v5482, %v5829
      %v5852 = vmul.f32 %v5487, %v5829
      %v5853 = vmul.f32 %v5492, %v5829
      %v5854 = vmul.f32 %v5497, %v5829
      %v5855 = vmul.f32 %v5502, %v5829
      %v5856 = vmul.f32 %v5507, %v5829
      %v5857 = vmul.f32 %v5512, %v5829
      %v5858 = vmul.f32 %v5517, %v5829
      %v5859 = vmul.f32 %v5522, %v5829
      %v5860 = vmul.f32 %v5527, %v5829
      %v5861 = vmul.f32 %v5532, %v5829
      %v5862 = vmul.f32 %v5537, %v5829
      %v5863 = vmul.f32 %v5542, %v5829
      %v5864 = vmul.f32 %v5547, %v5829
      %v5865 = vmul.f32 %v5552, %v5829
      %v5866 = vmul.f32 %v5557, %v5829
      %v5867 = vmul.f32 %v5562, %v5829
      %v5868 = vmul.f32 %v5567, %v5829
      %v5869 = vmul.f32 %v5572, %v5829
      %v5870 = vmul.f32 %v5577, %v5829
      %v5871 = vmul.f32 %v5582, %v5829
      %v5872 = vmul.f32 %v5587, %v5829
      %v5873 = vmul.f32 %v5592, %v5829
      %v5874 = vmul.f32 %v5597, %v5829
      %v5875 = vmul.f32 %v5602, %v5829
      %v5876 = vmul.f32 %v5607, %v5829
      %v5877 = vmul.f32 %v5612, %v5829
      %v5878 = vmul.f32 %v5617, %v5829
      %v5879 = vmul.f32 %v5622, %v5829
      %v5880 = vmul.f32 %v5627, %v5829
      %v5881 = vmul.f32 %v5632, %v5829
      %v5882 = vmul.f32 %v5637, %v5829
      %v5883 = vmul.f32 %v5642, %v5829
      %v5884 = vmul.f32 %v5647, %v5829
      %v5885 = vmul.f32 %v5652, %v5829
      %v5886 = vmul.f32 %v5657, %v5829
      %v5887 = vmul.f32 %v5662, %v5829
      %v5888 = vmul.f32 %v5667, %v5829
      %v5889 = vmul.f32 %v5672, %v5829
      %v5890 = vmul.f32 %v5677, %v5829
      %v5891 = vmul.f32 %v5682, %v5829
      %v5892 = vmul.f32 %v5687, %v5829
      %v5893 = vmul.f32 %v5692, %v5829
      %v5894 = vmul.f32 %v5697, %v5829
      %v5895 = vmul.f32 %v5702, %v5829
      %v5896 = vmul.f32 %v5707, %v5829
      %v5897 = vmul.f32 %v5712, %v5829
      %v5898 = vmul.f32 %v5717, %v5829
      %v5899 = vmul.f32 %v5722, %v5829
      %v5900 = vmul.f32 %v5727, %v5829
      %v5901 = vmul.f32 %v5732, %v5829
      %v5902 = vmul.f32 %v5737, %v5829
      %v5903 = vmul.f32 %v5742, %v5829
      %v5904 = vmul.f32 %v5747, %v5829
      %v5905 = vmul.f32 %v5752, %v5829
      %v5906 = vmul.f32 %v5757, %v5829
      %v5907 = vmul.f32 %v5762, %v5829
      %v5908 = vmul.f32 %v5767, %v5829
      %v5909 = vmul.f32 %v5772, %v5829
      %v5910 = vmul.f32 %v5777, %v5829
      %v5911 = vmul.f32 %v5782, %v5829
      %v5912 = vmul.f32 %v5787, %v5829
      %v5913 = vmul.f32 %v5792, %v5829
      %v5914 = vmul.f32 %v5797, %v5829
      %v5915 = vmul.f32 %v5802, %v5829
      %v5916 = vmul.f32 %v5807, %v5829
      %v5917 = vmul.f32 %v5812, %v5829
      %v5918 = vmul.f32 %v5817, %v5829
      %v5919 = vmul.f32 %v5822, %v5829
      %v5920 = vmul.f32 %v5827, %v5829
      %v5921 = vadd.f32 %v5191, %v5830
      %v5922 = vadd.f32 %v5192, %v5831
      %v5923 = vadd.f32 %v5193, %v5832
      %v5924 = vadd.f32 %v5194, %v5833
      %v5925 = vadd.f32 %v5195, %v5834
      %v5926 = vadd.f32 %v5196, %v5835
      %v5927 = vadd.f32 %v5197, %v5836
      %v5928 = vadd.f32 %v5198, %v5837
      %v5929 = vadd.f32 %v5199, %v5838
      %v5930 = vadd.f32 %v5200, %v5839
      %v5931 = vadd.f32 %v5201, %v5840
      %v5932 = vadd.f32 %v5202, %v5841
      %v5933 = vadd.f32 %v5203, %v5842
      %v5934 = vadd.f32 %v5204, %v5843
      %v5935 = vadd.f32 %v5205, %v5844
      %v5936 = vadd.f32 %v5206, %v5845
      %v5937 = vadd.f32 %v5207, %v5846
      %v5938 = vadd.f32 %v5208, %v5847
      %v5939 = vadd.f32 %v5209, %v5848
      %v5940 = vadd.f32 %v5210, %v5849
      %v5941 = vadd.f32 %v5211, %v5850
      %v5942 = vadd.f32 %v5212, %v5851
      %v5943 = vadd.f32 %v5213, %v5852
      %v5944 = vadd.f32 %v5214, %v5853
      %v5945 = vadd.f32 %v5215, %v5854
      %v5946 = vadd.f32 %v5216, %v5855
      %v5947 = vadd.f32 %v5217, %v5856
      %v5948 = vadd.f32 %v5218, %v5857
      %v5949 = vadd.f32 %v5219, %v5858
      %v5950 = vadd.f32 %v5220, %v5859
      %v5951 = vadd.f32 %v5221, %v5860
      %v5952 = vadd.f32 %v5222, %v5861
      %v5953 = vadd.f32 %v5223, %v5862
      %v5954 = vadd.f32 %v5224, %v5863
      %v5955 = vadd.f32 %v5225, %v5864
      %v5956 = vadd.f32 %v5226, %v5865
      %v5957 = vadd.f32 %v5227, %v5866
      %v5958 = vadd.f32 %v5228, %v5867
      %v5959 = vadd.f32 %v5229, %v5868
      %v5960 = vadd.f32 %v5230, %v5869
      %v5961 = vadd.f32 %v5231, %v5870
      %v5962 = vadd.f32 %v5232, %v5871
      %v5963 = vadd.f32 %v5233, %v5872
      %v5964 = vadd.f32 %v5234, %v5873
      %v5965 = vadd.f32 %v5235, %v5874
      %v5966 = vadd.f32 %v5236, %v5875
      %v5967 = vadd.f32 %v5237, %v5876
      %v5968 = vadd.f32 %v5238, %v5877
      %v5969 = vadd.f32 %v5239, %v5878
      %v5970 = vadd.f32 %v5240, %v5879
      %v5971 = vadd.f32 %v5241, %v5880
      %v5972 = vadd.f32 %v5242, %v5881
      %v5973 = vadd.f32 %v5243, %v5882
      %v5974 = vadd.f32 %v5244, %v5883
      %v5975 = vadd.f32 %v5245, %v5884
      %v5976 = vadd.f32 %v5246, %v5885
      %v5977 = vadd.f32 %v5247, %v5886
      %v5978 = vadd.f32 %v5248, %v5887
      %v5979 = vadd.f32 %v5249, %v5888
      %v5980 = vadd.f32 %v5250, %v5889
      %v5981 = vadd.f32 %v5251, %v5890
      %v5982 = vadd.f32 %v5252, %v5891
      %v5983 = vadd.f32 %v5253, %v5892
      %v5984 = vadd.f32 %v5254, %v5893
      %v5985 = vadd.f32 %v5255, %v5894
      %v5986 = vadd.f32 %v5256, %v5895
      %v5987 = vadd.f32 %v5257, %v5896
      %v5988 = vadd.f32 %v5258, %v5897
      %v5989 = vadd.f32 %v5259, %v5898
      %v5990 = vadd.f32 %v5260, %v5899
      %v5991 = vadd.f32 %v5261, %v5900
      %v5992 = vadd.f32 %v5262, %v5901
      %v5993 = vadd.f32 %v5263, %v5902
      %v5994 = vadd.f32 %v5264, %v5903
      %v5995 = vadd.f32 %v5265, %v5904
      %v5996 = vadd.f32 %v5266, %v5905
      %v5997 = vadd.f32 %v5267, %v5906
      %v5998 = vadd.f32 %v5268, %v5907
      %v5999 = vadd.f32 %v5269, %v5908
      %v6000 = vadd.f32 %v5270, %v5909
      %v6001 = vadd.f32 %v5271, %v5910
      %v6002 = vadd.f32 %v5272, %v5911
      %v6003 = vadd.f32 %v5273, %v5912
      %v6004 = vadd.f32 %v5274, %v5913
      %v6005 = vadd.f32 %v5275, %v5914
      %v6006 = vadd.f32 %v5276, %v5915
      %v6007 = vadd.f32 %v5277, %v5916
      %v6008 = vadd.f32 %v5278, %v5917
      %v6009 = vadd.f32 %v5279, %v5918
      %v6010 = vadd.f32 %v5280, %v5919
      %v6011 = vadd.f32 %v5281, %v5920
      %v6012 = vld [vmem:[%s165 + $0x3a] sm:$0xff]
      %v6013 = vld [vmem:[%s165 + $0x42] sm:$0xff]
      %v6014 = vld [vmem:[%s165 + $0x4a] sm:$0xff]
      %v6015 = vld [vmem:[%s165 + $0x52] sm:$0xff]
      %v6016 = vld [vmem:[%s165 + $0x5a] sm:$0xff]
      %v6017 = vld [vmem:[%s165 + $0x62] sm:$0xff]
      %v6018 = vld [vmem:[%s165 + $0x6a] sm:$0xff]
      %v6019 = vld [vmem:[%s165 + $0x72] sm:$0xff]
      %v6020 = vld [vmem:[%s165 + $0x7a] sm:$0xff]
      %v6021 = vld [vmem:[%s165 + $0x82] sm:$0xff]
      %v6022 = vld [vmem:[%s165 + $0x8a] sm:$0xff]
      %v6023 = vld [vmem:[%s165 + $0x92] sm:$0xff]
      %v6024 = vld [vmem:[%s165 + $0x9a] sm:$0xff]
      %v6025 = vld [vmem:[%s165 + $0xa2] sm:$0xff]
      %v6026 = vld [vmem:[%s165 + $0xaa] sm:$0xff]
      %v6027 = vld [vmem:[%s165 + $0xb2] sm:$0xff]
      %v6028 = vld [vmem:[%s165 + $0xba] sm:$0xff]
      %v6029 = vld [vmem:[%s165 + $0xc2] sm:$0xff]
      %v6030 = vld [vmem:[%s165 + $0xca] sm:$0xff]
      %v6031 = vld [vmem:[%s165 + $0xd2] sm:$0xff]
      %v6032 = vld [vmem:[%s165 + $0xda] sm:$0xff]
      %v6033 = vld [vmem:[%s165 + $0xe2] sm:$0xff]
      %v6034 = vld [vmem:[%s165 + $0xea] sm:$0xff]
      %v6035 = vld [vmem:[%s165 + $0xf2] sm:$0xff]
      %v6036 = vld [vmem:[%s165 + $0xfa] sm:$0xff]
      %v6037 = vld [vmem:[%s165 + $0x102] sm:$0xff]
      %v6038 = vld [vmem:[%s165 + $0x10a] sm:$0xff]
      %v6039 = vld [vmem:[%s165 + $0x112] sm:$0xff]
      %v6040 = vld [vmem:[%s165 + $0x11a] sm:$0xff]
      %v6041 = vld [vmem:[%s165 + $0x122] sm:$0xff]
      %v6042 = vld [vmem:[%s165 + $0x12a] sm:$0xff]
      %v6043 = vld [vmem:[%s165 + $0x132] sm:$0xff]
      %v6044 = vld [vmem:[%s165 + $0x13a] sm:$0xff]
      %v6045 = vld [vmem:[%s165 + $0x142] sm:$0xff]
      %v6046 = vld [vmem:[%s165 + $0x14a] sm:$0xff]
      %v6047 = vld [vmem:[%s165 + $0x152] sm:$0xff]
      %v6048 = vld [vmem:[%s165 + $0x15a] sm:$0xff]
      %v6049 = vld [vmem:[%s165 + $0x162] sm:$0xff]
      %v6050 = vld [vmem:[%s165 + $0x16a] sm:$0xff]
      %v6051 = vld [vmem:[%s165 + $0x172] sm:$0xff]
      %v6052 = vld [vmem:[%s165 + $0x17a] sm:$0xff]
      %v6053 = vld [vmem:[%s165 + $0x182] sm:$0xff]
      %v6054 = vld [vmem:[%s165 + $0x18a] sm:$0xff]
      %v6055 = vld [vmem:[%s165 + $0x192] sm:$0xff]
      %v6056 = vld [vmem:[%s165 + $0x19a] sm:$0xff]
      %v6057 = vld [vmem:[%s165 + $0x1a2] sm:$0xff]
      %v6058 = vld [vmem:[%s165 + $0x1aa] sm:$0xff]
      %v6059 = vld [vmem:[%s165 + $0x1b2] sm:$0xff]
      %v6060 = vld [vmem:[%s165 + $0x1ba] sm:$0xff]
      %v6061 = vld [vmem:[%s165 + $0x1c2] sm:$0xff]
      %v6062 = vld [vmem:[%s165 + $0x1ca] sm:$0xff]
      %v6063 = vld [vmem:[%s165 + $0x1d2] sm:$0xff]
      %v6064 = vld [vmem:[%s165 + $0x1da] sm:$0xff]
      %v6065 = vld [vmem:[%s165 + $0x1e2] sm:$0xff]
      %v6066 = vld [vmem:[%s165 + $0x1ea] sm:$0xff]
      %v6067 = vld [vmem:[%s165 + $0x1f2] sm:$0xff]
      %v6068 = vld [vmem:[%s165 + $0x1fa] sm:$0xff]
      %v6069 = vld [vmem:[%s165 + $0x202] sm:$0xff]
      %v6070 = vld [vmem:[%s165 + $0x20a] sm:$0xff]
      %v6071 = vld [vmem:[%s165 + $0x212] sm:$0xff]
      %v6072 = vld [vmem:[%s165 + $0x21a] sm:$0xff]
      %v6073 = vld [vmem:[%s165 + $0x222] sm:$0xff]
      %v6074 = vld [vmem:[%s165 + $0x22a] sm:$0xff]
      %v6075 = vld [vmem:[%s165 + $0x232] sm:$0xff]
      %v6076 = vld [vmem:[%s165 + $0x23a] sm:$0xff]
      %v6077 = vld [vmem:[%s165 + $0x242] sm:$0xff]
      %v6078 = vld [vmem:[%s165 + $0x24a] sm:$0xff]
      %v6079 = vld [vmem:[%s165 + $0x252] sm:$0xff]
      %v6080 = vld [vmem:[%s165 + $0x25a] sm:$0xff]
      %v6081 = vld [vmem:[%s165 + $0x262] sm:$0xff]
      %v6082 = vld [vmem:[%s165 + $0x26a] sm:$0xff]
      %v6083 = vld [vmem:[%s165 + $0x272] sm:$0xff]
      %v6084 = vld [vmem:[%s165 + $0x27a] sm:$0xff]
      %v6085 = vld [vmem:[%s165 + $0x282] sm:$0xff]
      %v6086 = vld [vmem:[%s165 + $0x28a] sm:$0xff]
      %v6087 = vld [vmem:[%s165 + $0x292] sm:$0xff]
      %v6088 = vld [vmem:[%s165 + $0x29a] sm:$0xff]
      %v6089 = vld [vmem:[%s165 + $0x2a2] sm:$0xff]
      %v6090 = vld [vmem:[%s165 + $0x2aa] sm:$0xff]
      %v6091 = vld [vmem:[%s165 + $0x2b2] sm:$0xff]
      %v6092 = vld [vmem:[%s165 + $0x2ba] sm:$0xff]
      %v6093 = vld [vmem:[%s165 + $0x2c2] sm:$0xff]
      %v6094 = vld [vmem:[%s165 + $0x2ca] sm:$0xff]
      %v6095 = vld [vmem:[%s165 + $0x2d2] sm:$0xff]
      %v6096 = vld [vmem:[%s165 + $0x2da] sm:$0xff]
      %v6097 = vld [vmem:[%s165 + $0x2e2] sm:$0xff]
      %v6098 = vld [vmem:[%s165 + $0x2ea] sm:$0xff]
      %v6099 = vld [vmem:[%s165 + $0x2f2] sm:$0xff]
      %v6100 = vld [vmem:[%s165 + $0x2fa] sm:$0xff]
      %v6101 = vld [vmem:[%s165 + $0x302] sm:$0xff]
      %v6102 = vld [vmem:[%s165 + $0x30a] sm:$0xff]
      %v6103 = vld [vmem:[%s1 + $0x8] sm:$0x1]
      %6105 = vset.pattern.permute.xlu0 0
      %6106 = vperm.xlu0 %6105, %v6012
      %v6107 = vpop.permute.xlu0 %6106
      %6110 = vset.pattern.permute.xlu0 0
      %6111 = vperm.xlu0 %6110, %v6013
      %v6112 = vpop.permute.xlu0 %6111
      %6115 = vset.pattern.permute.xlu0 0
      %6116 = vperm.xlu0 %6115, %v6014
      %v6117 = vpop.permute.xlu0 %6116
      %6120 = vset.pattern.permute.xlu0 0
      %6121 = vperm.xlu0 %6120, %v6015
      %v6122 = vpop.permute.xlu0 %6121
      %6125 = vset.pattern.permute.xlu0 0
      %6126 = vperm.xlu0 %6125, %v6016
      %v6127 = vpop.permute.xlu0 %6126
      %6130 = vset.pattern.permute.xlu0 0
      %6131 = vperm.xlu0 %6130, %v6017
      %v6132 = vpop.permute.xlu0 %6131
      %6135 = vset.pattern.permute.xlu0 0
      %6136 = vperm.xlu0 %6135, %v6018
      %v6137 = vpop.permute.xlu0 %6136
      %6140 = vset.pattern.permute.xlu0 0
      %6141 = vperm.xlu0 %6140, %v6019
      %v6142 = vpop.permute.xlu0 %6141
      %6145 = vset.pattern.permute.xlu0 0
      %6146 = vperm.xlu0 %6145, %v6020
      %v6147 = vpop.permute.xlu0 %6146
      %6150 = vset.pattern.permute.xlu0 0
      %6151 = vperm.xlu0 %6150, %v6021
      %v6152 = vpop.permute.xlu0 %6151
      %6155 = vset.pattern.permute.xlu0 0
      %6156 = vperm.xlu0 %6155, %v6022
      %v6157 = vpop.permute.xlu0 %6156
      %6160 = vset.pattern.permute.xlu0 0
      %6161 = vperm.xlu0 %6160, %v6023
      %v6162 = vpop.permute.xlu0 %6161
      %6165 = vset.pattern.permute.xlu0 0
      %6166 = vperm.xlu0 %6165, %v6024
      %v6167 = vpop.permute.xlu0 %6166
      %6170 = vset.pattern.permute.xlu0 0
      %6171 = vperm.xlu0 %6170, %v6025
      %v6172 = vpop.permute.xlu0 %6171
      %6175 = vset.pattern.permute.xlu0 0
      %6176 = vperm.xlu0 %6175, %v6026
      %v6177 = vpop.permute.xlu0 %6176
      %6180 = vset.pattern.permute.xlu0 0
      %6181 = vperm.xlu0 %6180, %v6027
      %v6182 = vpop.permute.xlu0 %6181
      %6185 = vset.pattern.permute.xlu0 0
      %6186 = vperm.xlu0 %6185, %v6028
      %v6187 = vpop.permute.xlu0 %6186
      %6190 = vset.pattern.permute.xlu0 0
      %6191 = vperm.xlu0 %6190, %v6029
      %v6192 = vpop.permute.xlu0 %6191
      %6195 = vset.pattern.permute.xlu0 0
      %6196 = vperm.xlu0 %6195, %v6030
      %v6197 = vpop.permute.xlu0 %6196
      %6200 = vset.pattern.permute.xlu0 0
      %6201 = vperm.xlu0 %6200, %v6031
      %v6202 = vpop.permute.xlu0 %6201
      %6205 = vset.pattern.permute.xlu0 0
      %6206 = vperm.xlu0 %6205, %v6032
      %v6207 = vpop.permute.xlu0 %6206
      %6210 = vset.pattern.permute.xlu0 0
      %6211 = vperm.xlu0 %6210, %v6033
      %v6212 = vpop.permute.xlu0 %6211
      %6215 = vset.pattern.permute.xlu0 0
      %6216 = vperm.xlu0 %6215, %v6034
      %v6217 = vpop.permute.xlu0 %6216
      %6220 = vset.pattern.permute.xlu0 0
      %6221 = vperm.xlu0 %6220, %v6035
      %v6222 = vpop.permute.xlu0 %6221
      %6225 = vset.pattern.permute.xlu0 0
      %6226 = vperm.xlu0 %6225, %v6036
      %v6227 = vpop.permute.xlu0 %6226
      %6230 = vset.pattern.permute.xlu0 0
      %6231 = vperm.xlu0 %6230, %v6037
      %v6232 = vpop.permute.xlu0 %6231
      %6235 = vset.pattern.permute.xlu0 0
      %6236 = vperm.xlu0 %6235, %v6038
      %v6237 = vpop.permute.xlu0 %6236
      %6240 = vset.pattern.permute.xlu0 0
      %6241 = vperm.xlu0 %6240, %v6039
      %v6242 = vpop.permute.xlu0 %6241
      %6245 = vset.pattern.permute.xlu0 0
      %6246 = vperm.xlu0 %6245, %v6040
      %v6247 = vpop.permute.xlu0 %6246
      %6250 = vset.pattern.permute.xlu0 0
      %6251 = vperm.xlu0 %6250, %v6041
      %v6252 = vpop.permute.xlu0 %6251
      %6255 = vset.pattern.permute.xlu0 0
      %6256 = vperm.xlu0 %6255, %v6042
      %v6257 = vpop.permute.xlu0 %6256
      %6260 = vset.pattern.permute.xlu0 0
      %6261 = vperm.xlu0 %6260, %v6043
      %v6262 = vpop.permute.xlu0 %6261
      %6265 = vset.pattern.permute.xlu0 0
      %6266 = vperm.xlu0 %6265, %v6044
      %v6267 = vpop.permute.xlu0 %6266
      %6270 = vset.pattern.permute.xlu0 0
      %6271 = vperm.xlu0 %6270, %v6045
      %v6272 = vpop.permute.xlu0 %6271
      %6275 = vset.pattern.permute.xlu0 0
      %6276 = vperm.xlu0 %6275, %v6046
      %v6277 = vpop.permute.xlu0 %6276
      %6280 = vset.pattern.permute.xlu0 0
      %6281 = vperm.xlu0 %6280, %v6047
      %v6282 = vpop.permute.xlu0 %6281
      %6285 = vset.pattern.permute.xlu0 0
      %6286 = vperm.xlu0 %6285, %v6048
      %v6287 = vpop.permute.xlu0 %6286
      %6290 = vset.pattern.permute.xlu0 0
      %6291 = vperm.xlu0 %6290, %v6049
      %v6292 = vpop.permute.xlu0 %6291
      %6295 = vset.pattern.permute.xlu0 0
      %6296 = vperm.xlu0 %6295, %v6050
      %v6297 = vpop.permute.xlu0 %6296
      %6300 = vset.pattern.permute.xlu0 0
      %6301 = vperm.xlu0 %6300, %v6051
      %v6302 = vpop.permute.xlu0 %6301
      %6305 = vset.pattern.permute.xlu0 0
      %6306 = vperm.xlu0 %6305, %v6052
      %v6307 = vpop.permute.xlu0 %6306
      %6310 = vset.pattern.permute.xlu0 0
      %6311 = vperm.xlu0 %6310, %v6053
      %v6312 = vpop.permute.xlu0 %6311
      %6315 = vset.pattern.permute.xlu0 0
      %6316 = vperm.xlu0 %6315, %v6054
      %v6317 = vpop.permute.xlu0 %6316
      %6320 = vset.pattern.permute.xlu0 0
      %6321 = vperm.xlu0 %6320, %v6055
      %v6322 = vpop.permute.xlu0 %6321
      %6325 = vset.pattern.permute.xlu0 0
      %6326 = vperm.xlu0 %6325, %v6056
      %v6327 = vpop.permute.xlu0 %6326
      %6330 = vset.pattern.permute.xlu0 0
      %6331 = vperm.xlu0 %6330, %v6057
      %v6332 = vpop.permute.xlu0 %6331
      %6335 = vset.pattern.permute.xlu0 0
      %6336 = vperm.xlu0 %6335, %v6058
      %v6337 = vpop.permute.xlu0 %6336
      %6340 = vset.pattern.permute.xlu0 0
      %6341 = vperm.xlu0 %6340, %v6059
      %v6342 = vpop.permute.xlu0 %6341
      %6345 = vset.pattern.permute.xlu0 0
      %6346 = vperm.xlu0 %6345, %v6060
      %v6347 = vpop.permute.xlu0 %6346
      %6350 = vset.pattern.permute.xlu0 0
      %6351 = vperm.xlu0 %6350, %v6061
      %v6352 = vpop.permute.xlu0 %6351
      %6355 = vset.pattern.permute.xlu0 0
      %6356 = vperm.xlu0 %6355, %v6062
      %v6357 = vpop.permute.xlu0 %6356
      %6360 = vset.pattern.permute.xlu0 0
      %6361 = vperm.xlu0 %6360, %v6063
      %v6362 = vpop.permute.xlu0 %6361
      %6365 = vset.pattern.permute.xlu0 0
      %6366 = vperm.xlu0 %6365, %v6064
      %v6367 = vpop.permute.xlu0 %6366
      %6370 = vset.pattern.permute.xlu0 0
      %6371 = vperm.xlu0 %6370, %v6065
      %v6372 = vpop.permute.xlu0 %6371
      %6375 = vset.pattern.permute.xlu0 0
      %6376 = vperm.xlu0 %6375, %v6066
      %v6377 = vpop.permute.xlu0 %6376
      %6380 = vset.pattern.permute.xlu0 0
      %6381 = vperm.xlu0 %6380, %v6067
      %v6382 = vpop.permute.xlu0 %6381
      %6385 = vset.pattern.permute.xlu0 0
      %6386 = vperm.xlu0 %6385, %v6068
      %v6387 = vpop.permute.xlu0 %6386
      %6390 = vset.pattern.permute.xlu0 0
      %6391 = vperm.xlu0 %6390, %v6069
      %v6392 = vpop.permute.xlu0 %6391
      %6395 = vset.pattern.permute.xlu0 0
      %6396 = vperm.xlu0 %6395, %v6070
      %v6397 = vpop.permute.xlu0 %6396
      %6400 = vset.pattern.permute.xlu0 0
      %6401 = vperm.xlu0 %6400, %v6071
      %v6402 = vpop.permute.xlu0 %6401
      %6405 = vset.pattern.permute.xlu0 0
      %6406 = vperm.xlu0 %6405, %v6072
      %v6407 = vpop.permute.xlu0 %6406
      %6410 = vset.pattern.permute.xlu0 0
      %6411 = vperm.xlu0 %6410, %v6073
      %v6412 = vpop.permute.xlu0 %6411
      %6415 = vset.pattern.permute.xlu0 0
      %6416 = vperm.xlu0 %6415, %v6074
      %v6417 = vpop.permute.xlu0 %6416
      %6420 = vset.pattern.permute.xlu0 0
      %6421 = vperm.xlu0 %6420, %v6075
      %v6422 = vpop.permute.xlu0 %6421
      %6425 = vset.pattern.permute.xlu0 0
      %6426 = vperm.xlu0 %6425, %v6076
      %v6427 = vpop.permute.xlu0 %6426
      %6430 = vset.pattern.permute.xlu0 0
      %6431 = vperm.xlu0 %6430, %v6077
      %v6432 = vpop.permute.xlu0 %6431
      %6435 = vset.pattern.permute.xlu0 0
      %6436 = vperm.xlu0 %6435, %v6078
      %v6437 = vpop.permute.xlu0 %6436
      %6440 = vset.pattern.permute.xlu0 0
      %6441 = vperm.xlu0 %6440, %v6079
      %v6442 = vpop.permute.xlu0 %6441
      %6445 = vset.pattern.permute.xlu0 0
      %6446 = vperm.xlu0 %6445, %v6080
      %v6447 = vpop.permute.xlu0 %6446
      %6450 = vset.pattern.permute.xlu0 0
      %6451 = vperm.xlu0 %6450, %v6081
      %v6452 = vpop.permute.xlu0 %6451
      %6455 = vset.pattern.permute.xlu0 0
      %6456 = vperm.xlu0 %6455, %v6082
      %v6457 = vpop.permute.xlu0 %6456
      %6460 = vset.pattern.permute.xlu0 0
      %6461 = vperm.xlu0 %6460, %v6083
      %v6462 = vpop.permute.xlu0 %6461
      %6465 = vset.pattern.permute.xlu0 0
      %6466 = vperm.xlu0 %6465, %v6084
      %v6467 = vpop.permute.xlu0 %6466
      %6470 = vset.pattern.permute.xlu0 0
      %6471 = vperm.xlu0 %6470, %v6085
      %v6472 = vpop.permute.xlu0 %6471
      %6475 = vset.pattern.permute.xlu0 0
      %6476 = vperm.xlu0 %6475, %v6086
      %v6477 = vpop.permute.xlu0 %6476
      %6480 = vset.pattern.permute.xlu0 0
      %6481 = vperm.xlu0 %6480, %v6087
      %v6482 = vpop.permute.xlu0 %6481
      %6485 = vset.pattern.permute.xlu0 0
      %6486 = vperm.xlu0 %6485, %v6088
      %v6487 = vpop.permute.xlu0 %6486
      %6490 = vset.pattern.permute.xlu0 0
      %6491 = vperm.xlu0 %6490, %v6089
      %v6492 = vpop.permute.xlu0 %6491
      %6495 = vset.pattern.permute.xlu0 0
      %6496 = vperm.xlu0 %6495, %v6090
      %v6497 = vpop.permute.xlu0 %6496
      %6500 = vset.pattern.permute.xlu0 0
      %6501 = vperm.xlu0 %6500, %v6091
      %v6502 = vpop.permute.xlu0 %6501
      %6505 = vset.pattern.permute.xlu0 0
      %6506 = vperm.xlu0 %6505, %v6092
      %v6507 = vpop.permute.xlu0 %6506
      %6510 = vset.pattern.permute.xlu0 0
      %6511 = vperm.xlu0 %6510, %v6093
      %v6512 = vpop.permute.xlu0 %6511
      %6515 = vset.pattern.permute.xlu0 0
      %6516 = vperm.xlu0 %6515, %v6094
      %v6517 = vpop.permute.xlu0 %6516
      %6520 = vset.pattern.permute.xlu0 0
      %6521 = vperm.xlu0 %6520, %v6095
      %v6522 = vpop.permute.xlu0 %6521
      %6525 = vset.pattern.permute.xlu0 0
      %6526 = vperm.xlu0 %6525, %v6096
      %v6527 = vpop.permute.xlu0 %6526
      %6530 = vset.pattern.permute.xlu0 0
      %6531 = vperm.xlu0 %6530, %v6097
      %v6532 = vpop.permute.xlu0 %6531
      %6535 = vset.pattern.permute.xlu0 0
      %6536 = vperm.xlu0 %6535, %v6098
      %v6537 = vpop.permute.xlu0 %6536
      %6540 = vset.pattern.permute.xlu0 0
      %6541 = vperm.xlu0 %6540, %v6099
      %v6542 = vpop.permute.xlu0 %6541
      %6545 = vset.pattern.permute.xlu0 0
      %6546 = vperm.xlu0 %6545, %v6100
      %v6547 = vpop.permute.xlu0 %6546
      %6550 = vset.pattern.permute.xlu0 0
      %6551 = vperm.xlu0 %6550, %v6101
      %v6552 = vpop.permute.xlu0 %6551
      %6555 = vset.pattern.permute.xlu0 0
      %6556 = vperm.xlu0 %6555, %v6102
      %v6557 = vpop.permute.xlu0 %6556
      %v6559 = vperm.slane %v6103, 0
      %v6560 = vmul.f32 %v6107, %v6559
      %v6561 = vmul.f32 %v6112, %v6559
      %v6562 = vmul.f32 %v6117, %v6559
      %v6563 = vmul.f32 %v6122, %v6559
      %v6564 = vmul.f32 %v6127, %v6559
      %v6565 = vmul.f32 %v6132, %v6559
      %v6566 = vmul.f32 %v6137, %v6559
      %v6567 = vmul.f32 %v6142, %v6559
      %v6568 = vmul.f32 %v6147, %v6559
      %v6569 = vmul.f32 %v6152, %v6559
      %v6570 = vmul.f32 %v6157, %v6559
      %v6571 = vmul.f32 %v6162, %v6559
      %v6572 = vmul.f32 %v6167, %v6559
      %v6573 = vmul.f32 %v6172, %v6559
      %v6574 = vmul.f32 %v6177, %v6559
      %v6575 = vmul.f32 %v6182, %v6559
      %v6576 = vmul.f32 %v6187, %v6559
      %v6577 = vmul.f32 %v6192, %v6559
      %v6578 = vmul.f32 %v6197, %v6559
      %v6579 = vmul.f32 %v6202, %v6559
      %v6580 = vmul.f32 %v6207, %v6559
      %v6581 = vmul.f32 %v6212, %v6559
      %v6582 = vmul.f32 %v6217, %v6559
      %v6583 = vmul.f32 %v6222, %v6559
      %v6584 = vmul.f32 %v6227, %v6559
      %v6585 = vmul.f32 %v6232, %v6559
      %v6586 = vmul.f32 %v6237, %v6559
      %v6587 = vmul.f32 %v6242, %v6559
      %v6588 = vmul.f32 %v6247, %v6559
      %v6589 = vmul.f32 %v6252, %v6559
      %v6590 = vmul.f32 %v6257, %v6559
      %v6591 = vmul.f32 %v6262, %v6559
      %v6592 = vmul.f32 %v6267, %v6559
      %v6593 = vmul.f32 %v6272, %v6559
      %v6594 = vmul.f32 %v6277, %v6559
      %v6595 = vmul.f32 %v6282, %v6559
      %v6596 = vmul.f32 %v6287, %v6559
      %v6597 = vmul.f32 %v6292, %v6559
      %v6598 = vmul.f32 %v6297, %v6559
      %v6599 = vmul.f32 %v6302, %v6559
      %v6600 = vmul.f32 %v6307, %v6559
      %v6601 = vmul.f32 %v6312, %v6559
      %v6602 = vmul.f32 %v6317, %v6559
      %v6603 = vmul.f32 %v6322, %v6559
      %v6604 = vmul.f32 %v6327, %v6559
      %v6605 = vmul.f32 %v6332, %v6559
      %v6606 = vmul.f32 %v6337, %v6559
      %v6607 = vmul.f32 %v6342, %v6559
      %v6608 = vmul.f32 %v6347, %v6559
      %v6609 = vmul.f32 %v6352, %v6559
      %v6610 = vmul.f32 %v6357, %v6559
      %v6611 = vmul.f32 %v6362, %v6559
      %v6612 = vmul.f32 %v6367, %v6559
      %v6613 = vmul.f32 %v6372, %v6559
      %v6614 = vmul.f32 %v6377, %v6559
      %v6615 = vmul.f32 %v6382, %v6559
      %v6616 = vmul.f32 %v6387, %v6559
      %v6617 = vmul.f32 %v6392, %v6559
      %v6618 = vmul.f32 %v6397, %v6559
      %v6619 = vmul.f32 %v6402, %v6559
      %v6620 = vmul.f32 %v6407, %v6559
      %v6621 = vmul.f32 %v6412, %v6559
      %v6622 = vmul.f32 %v6417, %v6559
      %v6623 = vmul.f32 %v6422, %v6559
      %v6624 = vmul.f32 %v6427, %v6559
      %v6625 = vmul.f32 %v6432, %v6559
      %v6626 = vmul.f32 %v6437, %v6559
      %v6627 = vmul.f32 %v6442, %v6559
      %v6628 = vmul.f32 %v6447, %v6559
      %v6629 = vmul.f32 %v6452, %v6559
      %v6630 = vmul.f32 %v6457, %v6559
      %v6631 = vmul.f32 %v6462, %v6559
      %v6632 = vmul.f32 %v6467, %v6559
      %v6633 = vmul.f32 %v6472, %v6559
      %v6634 = vmul.f32 %v6477, %v6559
      %v6635 = vmul.f32 %v6482, %v6559
      %v6636 = vmul.f32 %v6487, %v6559
      %v6637 = vmul.f32 %v6492, %v6559
      %v6638 = vmul.f32 %v6497, %v6559
      %v6639 = vmul.f32 %v6502, %v6559
      %v6640 = vmul.f32 %v6507, %v6559
      %v6641 = vmul.f32 %v6512, %v6559
      %v6642 = vmul.f32 %v6517, %v6559
      %v6643 = vmul.f32 %v6522, %v6559
      %v6644 = vmul.f32 %v6527, %v6559
      %v6645 = vmul.f32 %v6532, %v6559
      %v6646 = vmul.f32 %v6537, %v6559
      %v6647 = vmul.f32 %v6542, %v6559
      %v6648 = vmul.f32 %v6547, %v6559
      %v6649 = vmul.f32 %v6552, %v6559
      %v6650 = vmul.f32 %v6557, %v6559
      %v6651 = vadd.f32 %v5921, %v6560
      %v6652 = vadd.f32 %v5922, %v6561
      %v6653 = vadd.f32 %v5923, %v6562
      %v6654 = vadd.f32 %v5924, %v6563
      %v6655 = vadd.f32 %v5925, %v6564
      %v6656 = vadd.f32 %v5926, %v6565
      %v6657 = vadd.f32 %v5927, %v6566
      %v6658 = vadd.f32 %v5928, %v6567
      %v6659 = vadd.f32 %v5929, %v6568
      %v6660 = vadd.f32 %v5930, %v6569
      %v6661 = vadd.f32 %v5931, %v6570
      %v6662 = vadd.f32 %v5932, %v6571
      %v6663 = vadd.f32 %v5933, %v6572
      %v6664 = vadd.f32 %v5934, %v6573
      %v6665 = vadd.f32 %v5935, %v6574
      %v6666 = vadd.f32 %v5936, %v6575
      %v6667 = vadd.f32 %v5937, %v6576
      %v6668 = vadd.f32 %v5938, %v6577
      %v6669 = vadd.f32 %v5939, %v6578
      %v6670 = vadd.f32 %v5940, %v6579
      %v6671 = vadd.f32 %v5941, %v6580
      %v6672 = vadd.f32 %v5942, %v6581
      %v6673 = vadd.f32 %v5943, %v6582
      %v6674 = vadd.f32 %v5944, %v6583
      %v6675 = vadd.f32 %v5945, %v6584
      %v6676 = vadd.f32 %v5946, %v6585
      %v6677 = vadd.f32 %v5947, %v6586
      %v6678 = vadd.f32 %v5948, %v6587
      %v6679 = vadd.f32 %v5949, %v6588
      %v6680 = vadd.f32 %v5950, %v6589
      %v6681 = vadd.f32 %v5951, %v6590
      %v6682 = vadd.f32 %v5952, %v6591
      %v6683 = vadd.f32 %v5953, %v6592
      %v6684 = vadd.f32 %v5954, %v6593
      %v6685 = vadd.f32 %v5955, %v6594
      %v6686 = vadd.f32 %v5956, %v6595
      %v6687 = vadd.f32 %v5957, %v6596
      %v6688 = vadd.f32 %v5958, %v6597
      %v6689 = vadd.f32 %v5959, %v6598
      %v6690 = vadd.f32 %v5960, %v6599
      %v6691 = vadd.f32 %v5961, %v6600
      %v6692 = vadd.f32 %v5962, %v6601
      %v6693 = vadd.f32 %v5963, %v6602
      %v6694 = vadd.f32 %v5964, %v6603
      %v6695 = vadd.f32 %v5965, %v6604
      %v6696 = vadd.f32 %v5966, %v6605
      %v6697 = vadd.f32 %v5967, %v6606
      %v6698 = vadd.f32 %v5968, %v6607
      %v6699 = vadd.f32 %v5969, %v6608
      %v6700 = vadd.f32 %v5970, %v6609
      %v6701 = vadd.f32 %v5971, %v6610
      %v6702 = vadd.f32 %v5972, %v6611
      %v6703 = vadd.f32 %v5973, %v6612
      %v6704 = vadd.f32 %v5974, %v6613
      %v6705 = vadd.f32 %v5975, %v6614
      %v6706 = vadd.f32 %v5976, %v6615
      %v6707 = vadd.f32 %v5977, %v6616
      %v6708 = vadd.f32 %v5978, %v6617
      %v6709 = vadd.f32 %v5979, %v6618
      %v6710 = vadd.f32 %v5980, %v6619
      %v6711 = vadd.f32 %v5981, %v6620
      %v6712 = vadd.f32 %v5982, %v6621
      %v6713 = vadd.f32 %v5983, %v6622
      %v6714 = vadd.f32 %v5984, %v6623
      %v6715 = vadd.f32 %v5985, %v6624
      %v6716 = vadd.f32 %v5986, %v6625
      %v6717 = vadd.f32 %v5987, %v6626
      %v6718 = vadd.f32 %v5988, %v6627
      %v6719 = vadd.f32 %v5989, %v6628
      %v6720 = vadd.f32 %v5990, %v6629
      %v6721 = vadd.f32 %v5991, %v6630
      %v6722 = vadd.f32 %v5992, %v6631
      %v6723 = vadd.f32 %v5993, %v6632
      %v6724 = vadd.f32 %v5994, %v6633
      %v6725 = vadd.f32 %v5995, %v6634
      %v6726 = vadd.f32 %v5996, %v6635
      %v6727 = vadd.f32 %v5997, %v6636
      %v6728 = vadd.f32 %v5998, %v6637
      %v6729 = vadd.f32 %v5999, %v6638
      %v6730 = vadd.f32 %v6000, %v6639
      %v6731 = vadd.f32 %v6001, %v6640
      %v6732 = vadd.f32 %v6002, %v6641
      %v6733 = vadd.f32 %v6003, %v6642
      %v6734 = vadd.f32 %v6004, %v6643
      %v6735 = vadd.f32 %v6005, %v6644
      %v6736 = vadd.f32 %v6006, %v6645
      %v6737 = vadd.f32 %v6007, %v6646
      %v6738 = vadd.f32 %v6008, %v6647
      %v6739 = vadd.f32 %v6009, %v6648
      %v6740 = vadd.f32 %v6010, %v6649
      %v6741 = vadd.f32 %v6011, %v6650
      %v6742 = vld [vmem:[%s2] sm:$0x1]
      %v6744 = vperm.slane %v6742, 0
      %v6746 = vadd.f32 %v6651, %v6744
      %v6747 = vadd.f32 %v6652, %v6744
      %v6748 = vadd.f32 %v6653, %v6744
      %v6749 = vadd.f32 %v6654, %v6744
      %v6750 = vadd.f32 %v6655, %v6744
      %v6751 = vadd.f32 %v6656, %v6744
      %v6752 = vadd.f32 %v6657, %v6744
      %v6753 = vadd.f32 %v6658, %v6744
      %v6754 = vadd.f32 %v6659, %v6744
      %v6755 = vadd.f32 %v6660, %v6744
      %v6756 = vadd.f32 %v6661, %v6744
      %v6757 = vadd.f32 %v6662, %v6744
      %v6758 = vadd.f32 %v6663, %v6744
      %v6759 = vadd.f32 %v6664, %v6744
      %v6760 = vadd.f32 %v6665, %v6744
      %v6761 = vadd.f32 %v6666, %v6744
      %v6762 = vadd.f32 %v6667, %v6744
      %v6763 = vadd.f32 %v6668, %v6744
      %v6764 = vadd.f32 %v6669, %v6744
      %v6765 = vadd.f32 %v6670, %v6744
      %v6766 = vadd.f32 %v6671, %v6744
      %v6767 = vadd.f32 %v6672, %v6744
      %v6768 = vadd.f32 %v6673, %v6744
      %v6769 = vadd.f32 %v6674, %v6744
      %v6770 = vadd.f32 %v6675, %v6744
      %v6771 = vadd.f32 %v6676, %v6744
      %v6772 = vadd.f32 %v6677, %v6744
      %v6773 = vadd.f32 %v6678, %v6744
      %v6774 = vadd.f32 %v6679, %v6744
      %v6775 = vadd.f32 %v6680, %v6744
      %v6776 = vadd.f32 %v6681, %v6744
      %v6777 = vadd.f32 %v6682, %v6744
      %v6778 = vadd.f32 %v6683, %v6744
      %v6779 = vadd.f32 %v6684, %v6744
      %v6780 = vadd.f32 %v6685, %v6744
      %v6781 = vadd.f32 %v6686, %v6744
      %v6782 = vadd.f32 %v6687, %v6744
      %v6783 = vadd.f32 %v6688, %v6744
      %v6784 = vadd.f32 %v6689, %v6744
      %v6785 = vadd.f32 %v6690, %v6744
      %v6786 = vadd.f32 %v6691, %v6744
      %v6787 = vadd.f32 %v6692, %v6744
      %v6788 = vadd.f32 %v6693, %v6744
      %v6789 = vadd.f32 %v6694, %v6744
      %v6790 = vadd.f32 %v6695, %v6744
      %v6791 = vadd.f32 %v6696, %v6744
      %v6792 = vadd.f32 %v6697, %v6744
      %v6793 = vadd.f32 %v6698, %v6744
      %v6794 = vadd.f32 %v6699, %v6744
      %v6795 = vadd.f32 %v6700, %v6744
      %v6796 = vadd.f32 %v6701, %v6744
      %v6797 = vadd.f32 %v6702, %v6744
      %v6798 = vadd.f32 %v6703, %v6744
      %v6799 = vadd.f32 %v6704, %v6744
      %v6800 = vadd.f32 %v6705, %v6744
      %v6801 = vadd.f32 %v6706, %v6744
      %v6802 = vadd.f32 %v6707, %v6744
      %v6803 = vadd.f32 %v6708, %v6744
      %v6804 = vadd.f32 %v6709, %v6744
      %v6805 = vadd.f32 %v6710, %v6744
      %v6806 = vadd.f32 %v6711, %v6744
      %v6807 = vadd.f32 %v6712, %v6744
      %v6808 = vadd.f32 %v6713, %v6744
      %v6809 = vadd.f32 %v6714, %v6744
      %v6810 = vadd.f32 %v6715, %v6744
      %v6811 = vadd.f32 %v6716, %v6744
      %v6812 = vadd.f32 %v6717, %v6744
      %v6813 = vadd.f32 %v6718, %v6744
      %v6814 = vadd.f32 %v6719, %v6744
      %v6815 = vadd.f32 %v6720, %v6744
      %v6816 = vadd.f32 %v6721, %v6744
      %v6817 = vadd.f32 %v6722, %v6744
      %v6818 = vadd.f32 %v6723, %v6744
      %v6819 = vadd.f32 %v6724, %v6744
      %v6820 = vadd.f32 %v6725, %v6744
      %v6821 = vadd.f32 %v6726, %v6744
      %v6822 = vadd.f32 %v6727, %v6744
      %v6823 = vadd.f32 %v6728, %v6744
      %v6824 = vadd.f32 %v6729, %v6744
      %v6825 = vadd.f32 %v6730, %v6744
      %v6826 = vadd.f32 %v6731, %v6744
      %v6827 = vadd.f32 %v6732, %v6744
      %v6828 = vadd.f32 %v6733, %v6744
      %v6829 = vadd.f32 %v6734, %v6744
      %v6830 = vadd.f32 %v6735, %v6744
      %v6831 = vadd.f32 %v6736, %v6744
      %v6832 = vadd.f32 %v6737, %v6744
      %v6833 = vadd.f32 %v6738, %v6744
      %v6834 = vadd.f32 %v6739, %v6744
      %v6835 = vadd.f32 %v6740, %v6744
      %v6836 = vadd.f32 %v6741, %v6744
      %v6837 = vmax.f32 %v6746, 0.0
      %v6838 = vmax.f32 %v6747, 0.0
      %v6839 = vmax.f32 %v6748, 0.0
      %v6840 = vmax.f32 %v6749, 0.0
      %v6841 = vmax.f32 %v6750, 0.0
      %v6842 = vmax.f32 %v6751, 0.0
      %v6843 = vmax.f32 %v6752, 0.0
      %v6844 = vmax.f32 %v6753, 0.0
      %v6845 = vmax.f32 %v6754, 0.0
      %v6846 = vmax.f32 %v6755, 0.0
      %v6847 = vmax.f32 %v6756, 0.0
      %v6848 = vmax.f32 %v6757, 0.0
      %v6849 = vmax.f32 %v6758, 0.0
      %v6850 = vmax.f32 %v6759, 0.0
      %v6851 = vmax.f32 %v6760, 0.0
      %v6852 = vmax.f32 %v6761, 0.0
      %v6853 = vmax.f32 %v6762, 0.0
      %v6854 = vmax.f32 %v6763, 0.0
      %v6855 = vmax.f32 %v6764, 0.0
      %v6856 = vmax.f32 %v6765, 0.0
      %v6857 = vmax.f32 %v6766, 0.0
      %v6858 = vmax.f32 %v6767, 0.0
      %v6859 = vmax.f32 %v6768, 0.0
      %v6860 = vmax.f32 %v6769, 0.0
      %v6861 = vmax.f32 %v6770, 0.0
      %v6862 = vmax.f32 %v6771, 0.0
      %v6863 = vmax.f32 %v6772, 0.0
      %v6864 = vmax.f32 %v6773, 0.0
      %v6865 = vmax.f32 %v6774, 0.0
      %v6866 = vmax.f32 %v6775, 0.0
      %v6867 = vmax.f32 %v6776, 0.0
      %v6868 = vmax.f32 %v6777, 0.0
      %v6869 = vmax.f32 %v6778, 0.0
      %v6870 = vmax.f32 %v6779, 0.0
      %v6871 = vmax.f32 %v6780, 0.0
      %v6872 = vmax.f32 %v6781, 0.0
      %v6873 = vmax.f32 %v6782, 0.0
      %v6874 = vmax.f32 %v6783, 0.0
      %v6875 = vmax.f32 %v6784, 0.0
      %v6876 = vmax.f32 %v6785, 0.0
      %v6877 = vmax.f32 %v6786, 0.0
      %v6878 = vmax.f32 %v6787, 0.0
      %v6879 = vmax.f32 %v6788, 0.0
      %v6880 = vmax.f32 %v6789, 0.0
      %v6881 = vmax.f32 %v6790, 0.0
      %v6882 = vmax.f32 %v6791, 0.0
      %v6883 = vmax.f32 %v6792, 0.0
      %v6884 = vmax.f32 %v6793, 0.0
      %v6885 = vmax.f32 %v6794, 0.0
      %v6886 = vmax.f32 %v6795, 0.0
      %v6887 = vmax.f32 %v6796, 0.0
      %v6888 = vmax.f32 %v6797, 0.0
      %v6889 = vmax.f32 %v6798, 0.0
      %v6890 = vmax.f32 %v6799, 0.0
      %v6891 = vmax.f32 %v6800, 0.0
      %v6892 = vmax.f32 %v6801, 0.0
      %v6893 = vmax.f32 %v6802, 0.0
      %v6894 = vmax.f32 %v6803, 0.0
      %v6895 = vmax.f32 %v6804, 0.0
      %v6896 = vmax.f32 %v6805, 0.0
      %v6897 = vmax.f32 %v6806, 0.0
      %v6898 = vmax.f32 %v6807, 0.0
      %v6899 = vmax.f32 %v6808, 0.0
      %v6900 = vmax.f32 %v6809, 0.0
      %v6901 = vmax.f32 %v6810, 0.0
      %v6902 = vmax.f32 %v6811, 0.0
      %v6903 = vmax.f32 %v6812, 0.0
      %v6904 = vmax.f32 %v6813, 0.0
      %v6905 = vmax.f32 %v6814, 0.0
      %v6906 = vmax.f32 %v6815, 0.0
      %v6907 = vmax.f32 %v6816, 0.0
      %v6908 = vmax.f32 %v6817, 0.0
      %v6909 = vmax.f32 %v6818, 0.0
      %v6910 = vmax.f32 %v6819, 0.0
      %v6911 = vmax.f32 %v6820, 0.0
      %v6912 = vmax.f32 %v6821, 0.0
      %v6913 = vmax.f32 %v6822, 0.0
      %v6914 = vmax.f32 %v6823, 0.0
      %v6915 = vmax.f32 %v6824, 0.0
      %v6916 = vmax.f32 %v6825, 0.0
      %v6917 = vmax.f32 %v6826, 0.0
      %v6918 = vmax.f32 %v6827, 0.0
      %v6919 = vmax.f32 %v6828, 0.0
      %v6920 = vmax.f32 %v6829, 0.0
      %v6921 = vmax.f32 %v6830, 0.0
      %v6922 = vmax.f32 %v6831, 0.0
      %v6923 = vmax.f32 %v6832, 0.0
      %v6924 = vmax.f32 %v6833, 0.0
      %v6925 = vmax.f32 %v6834, 0.0
      %v6926 = vmax.f32 %v6835, 0.0
      %v6927 = vmax.f32 %v6836, 0.0
      %6928 = vst [vmem:[#allocation2] sm:$0xff] %v6837
      %6929 = vst [vmem:[#allocation2 + $0x8] sm:$0xff] %v6838
      %6930 = vst [vmem:[#allocation2 + $0x10] sm:$0xff] %v6839
      %6931 = vst [vmem:[#allocation2 + $0x18] sm:$0xff] %v6840
      %6932 = vst [vmem:[#allocation2 + $0x20] sm:$0xff] %v6841
      %6933 = vst [vmem:[#allocation2 + $0x28] sm:$0xff] %v6842
      %6934 = vst [vmem:[#allocation2 + $0x30] sm:$0xff] %v6843
      %6935 = vst [vmem:[#allocation2 + $0x38] sm:$0xff] %v6844
      %6936 = vst [vmem:[#allocation2 + $0x40] sm:$0xff] %v6845
      %6937 = vst [vmem:[#allocation2 + $0x48] sm:$0xff] %v6846
      %6938 = vst [vmem:[#allocation2 + $0x50] sm:$0xff] %v6847
      %6939 = vst [vmem:[#allocation2 + $0x58] sm:$0xff] %v6848
      %6940 = vst [vmem:[#allocation2 + $0x60] sm:$0xff] %v6849
      %6941 = vst [vmem:[#allocation2 + $0x68] sm:$0xff] %v6850
      %6942 = vst [vmem:[#allocation2 + $0x70] sm:$0xff] %v6851
      %6943 = vst [vmem:[#allocation2 + $0x78] sm:$0xff] %v6852
      %6944 = vst [vmem:[#allocation2 + $0x80] sm:$0xff] %v6853
      %6945 = vst [vmem:[#allocation2 + $0x88] sm:$0xff] %v6854
      %6946 = vst [vmem:[#allocation2 + $0x90] sm:$0xff] %v6855
      %6947 = vst [vmem:[#allocation2 + $0x98] sm:$0xff] %v6856
      %6948 = vst [vmem:[#allocation2 + $0xa0] sm:$0xff] %v6857
      %6949 = vst [vmem:[#allocation2 + $0xa8] sm:$0xff] %v6858
      %6950 = vst [vmem:[#allocation2 + $0xb0] sm:$0xff] %v6859
      %6951 = vst [vmem:[#allocation2 + $0xb8] sm:$0xff] %v6860
      %6952 = vst [vmem:[#allocation2 + $0xc0] sm:$0xff] %v6861
      %6953 = vst [vmem:[#allocation2 + $0xc8] sm:$0xff] %v6862
      %6954 = vst [vmem:[#allocation2 + $0xd0] sm:$0xff] %v6863
      %6955 = vst [vmem:[#allocation2 + $0xd8] sm:$0xff] %v6864
      %6956 = vst [vmem:[#allocation2 + $0xe0] sm:$0xff] %v6865
      %6957 = vst [vmem:[#allocation2 + $0xe8] sm:$0xff] %v6866
      %6958 = vst [vmem:[#allocation2 + $0xf0] sm:$0xff] %v6867
      %6959 = vst [vmem:[#allocation2 + $0xf8] sm:$0xff] %v6868
      %6960 = vst [vmem:[#allocation2 + $0x100] sm:$0xff] %v6869
      %6961 = vst [vmem:[#allocation2 + $0x108] sm:$0xff] %v6870
      %6962 = vst [vmem:[#allocation2 + $0x110] sm:$0xff] %v6871
      %6963 = vst [vmem:[#allocation2 + $0x118] sm:$0xff] %v6872
      %6964 = vst [vmem:[#allocation2 + $0x120] sm:$0xff] %v6873
      %6965 = vst [vmem:[#allocation2 + $0x128] sm:$0xff] %v6874
      %6966 = vst [vmem:[#allocation2 + $0x130] sm:$0xff] %v6875
      %6967 = vst [vmem:[#allocation2 + $0x138] sm:$0xff] %v6876
      %6968 = vst [vmem:[#allocation2 + $0x140] sm:$0xff] %v6877
      %6969 = vst [vmem:[#allocation2 + $0x148] sm:$0xff] %v6878
      %6970 = vst [vmem:[#allocation2 + $0x150] sm:$0xff] %v6879
      %6971 = vst [vmem:[#allocation2 + $0x158] sm:$0xff] %v6880
      %6972 = vst [vmem:[#allocation2 + $0x160] sm:$0xff] %v6881
      %6973 = vst [vmem:[#allocation2 + $0x168] sm:$0xff] %v6882
      %6974 = vst [vmem:[#allocation2 + $0x170] sm:$0xff] %v6883
      %6975 = vst [vmem:[#allocation2 + $0x178] sm:$0xff] %v6884
      %6976 = vst [vmem:[#allocation2 + $0x180] sm:$0xff] %v6885
      %6977 = vst [vmem:[#allocation2 + $0x188] sm:$0xff] %v6886
      %6978 = vst [vmem:[#allocation2 + $0x190] sm:$0xff] %v6887
      %6979 = vst [vmem:[#allocation2 + $0x198] sm:$0xff] %v6888
      %6980 = vst [vmem:[#allocation2 + $0x1a0] sm:$0xff] %v6889
      %6981 = vst [vmem:[#allocation2 + $0x1a8] sm:$0xff] %v6890
      %6982 = vst [vmem:[#allocation2 + $0x1b0] sm:$0xff] %v6891
      %6983 = vst [vmem:[#allocation2 + $0x1b8] sm:$0xff] %v6892
      %6984 = vst [vmem:[#allocation2 + $0x1c0] sm:$0xff] %v6893
      %6985 = vst [vmem:[#allocation2 + $0x1c8] sm:$0xff] %v6894
      %6986 = vst [vmem:[#allocation2 + $0x1d0] sm:$0xff] %v6895
      %6987 = vst [vmem:[#allocation2 + $0x1d8] sm:$0xff] %v6896
      %6988 = vst [vmem:[#allocation2 + $0x1e0] sm:$0xff] %v6897
      %6989 = vst [vmem:[#allocation2 + $0x1e8] sm:$0xff] %v6898
      %6990 = vst [vmem:[#allocation2 + $0x1f0] sm:$0xff] %v6899
      %6991 = vst [vmem:[#allocation2 + $0x1f8] sm:$0xff] %v6900
      %6992 = vst [vmem:[#allocation2 + $0x200] sm:$0xff] %v6901
      %6993 = vst [vmem:[#allocation2 + $0x208] sm:$0xff] %v6902
      %6994 = vst [vmem:[#allocation2 + $0x210] sm:$0xff] %v6903
      %6995 = vst [vmem:[#allocation2 + $0x218] sm:$0xff] %v6904
      %6996 = vst [vmem:[#allocation2 + $0x220] sm:$0xff] %v6905
      %6997 = vst [vmem:[#allocation2 + $0x228] sm:$0xff] %v6906
      %6998 = vst [vmem:[#allocation2 + $0x230] sm:$0xff] %v6907
      %6999 = vst [vmem:[#allocation2 + $0x238] sm:$0xff] %v6908
      %7000 = vst [vmem:[#allocation2 + $0x240] sm:$0xff] %v6909
      %7001 = vst [vmem:[#allocation2 + $0x248] sm:$0xff] %v6910
      %7002 = vst [vmem:[#allocation2 + $0x250] sm:$0xff] %v6911
      %7003 = vst [vmem:[#allocation2 + $0x258] sm:$0xff] %v6912
      %7004 = vst [vmem:[#allocation2 + $0x260] sm:$0xff] %v6913
      %7005 = vst [vmem:[#allocation2 + $0x268] sm:$0xff] %v6914
      %7006 = vst [vmem:[#allocation2 + $0x270] sm:$0xff] %v6915
      %7007 = vst [vmem:[#allocation2 + $0x278] sm:$0xff] %v6916
      %7008 = vst [vmem:[#allocation2 + $0x280] sm:$0xff] %v6917
      %7009 = vst [vmem:[#allocation2 + $0x288] sm:$0xff] %v6918
      %7010 = vst [vmem:[#allocation2 + $0x290] sm:$0xff] %v6919
      %7011 = vst [vmem:[#allocation2 + $0x298] sm:$0xff] %v6920
      %7012 = vst [vmem:[#allocation2 + $0x2a0] sm:$0xff] %v6921
      %7013 = vst [vmem:[#allocation2 + $0x2a8] sm:$0xff] %v6922
      %7014 = vst [vmem:[#allocation2 + $0x2b0] sm:$0xff] %v6923
      %7015 = vst [vmem:[#allocation2 + $0x2b8] sm:$0xff] %v6924
      %7016 = vst [vmem:[#allocation2 + $0x2c0] sm:$0xff] %v6925
      %7017 = vst [vmem:[#allocation2 + $0x2c8] sm:$0xff] %v6926
      %7018 = vst [vmem:[#allocation2 + $0x2d0] sm:$0xff] %v6927
      %7019 = vst [vmem:[#allocation2 + $0x2d8] sm:$0xff] 0.0
      %7020 = vst [vmem:[#allocation2 + $0x2e0] sm:$0xff] 0.0
      %7021 = vst [vmem:[#allocation2 + $0x2e8] sm:$0xff] 0.0
      %7022 = vst [vmem:[#allocation2 + $0x2f0] sm:$0xf] 0.0
      %v7023 = vld [vmem:[#allocation2] ss:$2 sm:$0xff]
      %s7024 = scalar_lea.vmem [#allocation2], 16
      %v7025 = vld [vmem:[%s7024] ss:$2 sm:$0xff]
      %s7026 = scalar_lea.vmem [#allocation2], 48
      %v7027 = vld [vmem:[%s7026] ss:$2 sm:$0xff]
      %s7028 = scalar_lea.vmem [#allocation2], 64
      %v7029 = vld [vmem:[%s7028] ss:$2 sm:$0xff]
      %s7030 = scalar_lea.vmem [#allocation2], 80
      %v7031 = vld [vmem:[%s7030] ss:$2 sm:$0xff]
      %s7032 = scalar_lea.vmem [#allocation2], 112
      %v7033 = vld [vmem:[%s7032] ss:$2 sm:$0xff]
      %s7034 = scalar_lea.vmem [#allocation2], 128
      %v7035 = vld [vmem:[%s7034] ss:$2 sm:$0xff]
      %s7036 = scalar_lea.vmem [#allocation2], 160
      %v7037 = vld [vmem:[%s7036] ss:$2 sm:$0xff]
      %s7038 = scalar_lea.vmem [#allocation2], 176
      %v7039 = vld [vmem:[%s7038] ss:$2 sm:$0xff]
      %s7040 = scalar_lea.vmem [#allocation2], 192
      %v7041 = vld [vmem:[%s7040] ss:$2 sm:$0xff]
      %s7042 = scalar_lea.vmem [#allocation2], 224
      %v7043 = vld [vmem:[%s7042] ss:$2 sm:$0xff]
      %s7044 = scalar_lea.vmem [#allocation2], 240
      %v7045 = vld [vmem:[%s7044] ss:$2 sm:$0xff]
      %s7046 = scalar_lea.vmem [#allocation2], 272
      %v7047 = vld [vmem:[%s7046] ss:$2 sm:$0xff]
      %s7048 = scalar_lea.vmem [#allocation2], 288
      %v7049 = vld [vmem:[%s7048] ss:$2 sm:$0xff]
      %s7050 = scalar_lea.vmem [#allocation2], 304
      %v7051 = vld [vmem:[%s7050] ss:$2 sm:$0xff]
      %s7052 = scalar_lea.vmem [#allocation2], 336
      %v7053 = vld [vmem:[%s7052] ss:$2 sm:$0xff]
      %s7054 = scalar_lea.vmem [#allocation2], 352
      %v7055 = vld [vmem:[%s7054] ss:$2 sm:$0xff]
      %s7056 = scalar_lea.vmem [#allocation2], 384
      %v7057 = vld [vmem:[%s7056] ss:$2 sm:$0xff]
      %s7058 = scalar_lea.vmem [#allocation2], 400
      %v7059 = vld [vmem:[%s7058] ss:$2 sm:$0xff]
      %s7060 = scalar_lea.vmem [#allocation2], 416
      %v7061 = vld [vmem:[%s7060] ss:$2 sm:$0xff]
      %s7062 = scalar_lea.vmem [#allocation2], 448
      %v7063 = vld [vmem:[%s7062] ss:$2 sm:$0xff]
      %s7064 = scalar_lea.vmem [#allocation2], 464
      %v7065 = vld [vmem:[%s7064] ss:$2 sm:$0xff]
      %s7066 = scalar_lea.vmem [#allocation2], 496
      %v7067 = vld [vmem:[%s7066] ss:$2 sm:$0xff]
      %s7068 = scalar_lea.vmem [#allocation2], 512
      %v7069 = vld [vmem:[%s7068] ss:$2 sm:$0xff]
      %s7070 = scalar_lea.vmem [#allocation2], 528
      %v7071 = vld [vmem:[%s7070] ss:$2 sm:$0xff]
      %s7072 = scalar_lea.vmem [#allocation2], 560
      %v7073 = vld [vmem:[%s7072] ss:$2 sm:$0xff]
      %s7074 = scalar_lea.vmem [#allocation2], 576
      %v7075 = vld [vmem:[%s7074] ss:$2 sm:$0xff]
      %s7076 = scalar_lea.vmem [#allocation2], 608
      %v7077 = vld [vmem:[%s7076] ss:$2 sm:$0xff]
      %s7078 = scalar_lea.vmem [#allocation2], 624
      %v7079 = vld [vmem:[%s7078] ss:$2 sm:$0xff]
      %s7080 = scalar_lea.vmem [#allocation2], 640
      %v7081 = vld [vmem:[%s7080] ss:$2 sm:$0xff]
      %s7082 = scalar_lea.vmem [#allocation2], 672
      %v7083 = vld [vmem:[%s7082] ss:$2 sm:$0xff]
      %s7084 = scalar_lea.vmem [#allocation2], 688
      %v7085 = vld [vmem:[%s7084] ss:$2 sm:$0xff]
      %s7086 = scalar_lea.vmem [#allocation2], 1
      %v7087 = vld [vmem:[%s7086] ss:$2 sm:$0xff]
      %s7088 = scalar_lea.vmem [#allocation2], 17
      %v7089 = vld [vmem:[%s7088] ss:$2 sm:$0xff]
      %s7090 = scalar_lea.vmem [#allocation2], 49
      %v7091 = vld [vmem:[%s7090] ss:$2 sm:$0xff]
      %s7092 = scalar_lea.vmem [#allocation2], 65
      %v7093 = vld [vmem:[%s7092] ss:$2 sm:$0xff]
      %s7094 = scalar_lea.vmem [#allocation2], 81
      %v7095 = vld [vmem:[%s7094] ss:$2 sm:$0xff]
      %s7096 = scalar_lea.vmem [#allocation2], 113
      %v7097 = vld [vmem:[%s7096] ss:$2 sm:$0xff]
      %s7098 = scalar_lea.vmem [#allocation2], 129
      %v7099 = vld [vmem:[%s7098] ss:$2 sm:$0xff]
      %s7100 = scalar_lea.vmem [#allocation2], 161
      %v7101 = vld [vmem:[%s7100] ss:$2 sm:$0xff]
      %s7102 = scalar_lea.vmem [#allocation2], 177
      %v7103 = vld [vmem:[%s7102] ss:$2 sm:$0xff]
      %s7104 = scalar_lea.vmem [#allocation2], 193
      %v7105 = vld [vmem:[%s7104] ss:$2 sm:$0xff]
      %s7106 = scalar_lea.vmem [#allocation2], 225
      %v7107 = vld [vmem:[%s7106] ss:$2 sm:$0xff]
      %s7108 = scalar_lea.vmem [#allocation2], 241
      %v7109 = vld [vmem:[%s7108] ss:$2 sm:$0xff]
      %s7110 = scalar_lea.vmem [#allocation2], 273
      %v7111 = vld [vmem:[%s7110] ss:$2 sm:$0xff]
      %s7112 = scalar_lea.vmem [#allocation2], 289
      %v7113 = vld [vmem:[%s7112] ss:$2 sm:$0xff]
      %s7114 = scalar_lea.vmem [#allocation2], 305
      %v7115 = vld [vmem:[%s7114] ss:$2 sm:$0xff]
      %s7116 = scalar_lea.vmem [#allocation2], 337
      %v7117 = vld [vmem:[%s7116] ss:$2 sm:$0xff]
      %s7118 = scalar_lea.vmem [#allocation2], 353
      %v7119 = vld [vmem:[%s7118] ss:$2 sm:$0xff]
      %s7120 = scalar_lea.vmem [#allocation2], 385
      %v7121 = vld [vmem:[%s7120] ss:$2 sm:$0xff]
      %s7122 = scalar_lea.vmem [#allocation2], 401
      %v7123 = vld [vmem:[%s7122] ss:$2 sm:$0xff]
      %s7124 = scalar_lea.vmem [#allocation2], 417
      %v7125 = vld [vmem:[%s7124] ss:$2 sm:$0xff]
      %s7126 = scalar_lea.vmem [#allocation2], 449
      %v7127 = vld [vmem:[%s7126] ss:$2 sm:$0xff]
      %s7128 = scalar_lea.vmem [#allocation2], 465
      %v7129 = vld [vmem:[%s7128] ss:$2 sm:$0xff]
      %s7130 = scalar_lea.vmem [#allocation2], 497
      %v7131 = vld [vmem:[%s7130] ss:$2 sm:$0xff]
      %s7132 = scalar_lea.vmem [#allocation2], 513
      %v7133 = vld [vmem:[%s7132] ss:$2 sm:$0xff]
      %s7134 = scalar_lea.vmem [#allocation2], 529
      %v7135 = vld [vmem:[%s7134] ss:$2 sm:$0xff]
      %s7136 = scalar_lea.vmem [#allocation2], 561
      %v7137 = vld [vmem:[%s7136] ss:$2 sm:$0xff]
      %s7138 = scalar_lea.vmem [#allocation2], 577
      %v7139 = vld [vmem:[%s7138] ss:$2 sm:$0xff]
      %s7140 = scalar_lea.vmem [#allocation2], 609
      %v7141 = vld [vmem:[%s7140] ss:$2 sm:$0xff]
      %s7142 = scalar_lea.vmem [#allocation2], 625
      %v7143 = vld [vmem:[%s7142] ss:$2 sm:$0xff]
      %s7144 = scalar_lea.vmem [#allocation2], 641
      %v7145 = vld [vmem:[%s7144] ss:$2 sm:$0xff]
      %s7146 = scalar_lea.vmem [#allocation2], 673
      %v7147 = vld [vmem:[%s7146] ss:$2 sm:$0xff]
      %s7148 = scalar_lea.vmem [#allocation2], 689
      %v7149 = vld [vmem:[%s7148] ss:$2 sm:$0xff]
      %s7150 = scalar_lea.vmem [#allocation2], 28
      %v7151 = vld [vmem:[%s7150] ss:$2 sm:$0xff]
      %s7152 = scalar_lea.vmem [#allocation2], 44
      %v7153 = vld [vmem:[%s7152] ss:$2 sm:$0xff]
      %s7154 = scalar_lea.vmem [#allocation2], 76
      %v7155 = vld [vmem:[%s7154] ss:$2 sm:$0xff]
      %s7156 = scalar_lea.vmem [#allocation2], 92
      %v7157 = vld [vmem:[%s7156] ss:$2 sm:$0xff]
      %s7158 = scalar_lea.vmem [#allocation2], 108
      %v7159 = vld [vmem:[%s7158] ss:$2 sm:$0xff]
      %s7160 = scalar_lea.vmem [#allocation2], 140
      %v7161 = vld [vmem:[%s7160] ss:$2 sm:$0xff]
      %s7162 = scalar_lea.vmem [#allocation2], 156
      %v7163 = vld [vmem:[%s7162] ss:$2 sm:$0xff]
      %s7164 = scalar_lea.vmem [#allocation2], 188
      %v7165 = vld [vmem:[%s7164] ss:$2 sm:$0xff]
      %s7166 = scalar_lea.vmem [#allocation2], 204
      %v7167 = vld [vmem:[%s7166] ss:$2 sm:$0xff]
      %s7168 = scalar_lea.vmem [#allocation2], 220
      %v7169 = vld [vmem:[%s7168] ss:$2 sm:$0xff]
      %s7170 = scalar_lea.vmem [#allocation2], 252
      %v7171 = vld [vmem:[%s7170] ss:$2 sm:$0xff]
      %s7172 = scalar_lea.vmem [#allocation2], 268
      %v7173 = vld [vmem:[%s7172] ss:$2 sm:$0xff]
      %s7174 = scalar_lea.vmem [#allocation2], 300
      %v7175 = vld [vmem:[%s7174] ss:$2 sm:$0xff]
      %s7176 = scalar_lea.vmem [#allocation2], 316
      %v7177 = vld [vmem:[%s7176] ss:$2 sm:$0xff]
      %s7178 = scalar_lea.vmem [#allocation2], 332
      %v7179 = vld [vmem:[%s7178] ss:$2 sm:$0xff]
      %s7180 = scalar_lea.vmem [#allocation2], 364
      %v7181 = vld [vmem:[%s7180] ss:$2 sm:$0xff]
      %s7182 = scalar_lea.vmem [#allocation2], 380
      %v7183 = vld [vmem:[%s7182] ss:$2 sm:$0xff]
      %s7184 = scalar_lea.vmem [#allocation2], 412
      %v7185 = vld [vmem:[%s7184] ss:$2 sm:$0xff]
      %s7186 = scalar_lea.vmem [#allocation2], 428
      %v7187 = vld [vmem:[%s7186] ss:$2 sm:$0xff]
      %s7188 = scalar_lea.vmem [#allocation2], 444
      %v7189 = vld [vmem:[%s7188] ss:$2 sm:$0xff]
      %s7190 = scalar_lea.vmem [#allocation2], 476
      %v7191 = vld [vmem:[%s7190] ss:$2 sm:$0xff]
      %s7192 = scalar_lea.vmem [#allocation2], 492
      %v7193 = vld [vmem:[%s7192] ss:$2 sm:$0xff]
      %s7194 = scalar_lea.vmem [#allocation2], 524
      %v7195 = vld [vmem:[%s7194] ss:$2 sm:$0xff]
      %s7196 = scalar_lea.vmem [#allocation2], 540
      %v7197 = vld [vmem:[%s7196] ss:$2 sm:$0xff]
      %s7198 = scalar_lea.vmem [#allocation2], 556
      %v7199 = vld [vmem:[%s7198] ss:$2 sm:$0xff]
      %s7200 = scalar_lea.vmem [#allocation2], 588
      %v7201 = vld [vmem:[%s7200] ss:$2 sm:$0xff]
      %s7202 = scalar_lea.vmem [#allocation2], 604
      %v7203 = vld [vmem:[%s7202] ss:$2 sm:$0xff]
      %s7204 = scalar_lea.vmem [#allocation2], 636
      %v7205 = vld [vmem:[%s7204] ss:$2 sm:$0xff]
      %s7206 = scalar_lea.vmem [#allocation2], 652
      %v7207 = vld [vmem:[%s7206] ss:$2 sm:$0xff]
      %s7208 = scalar_lea.vmem [#allocation2], 668
      %v7209 = vld [vmem:[%s7208] ss:$2 sm:$0xff]
      %s7210 = scalar_lea.vmem [#allocation2], 700
      %v7211 = vld [vmem:[%s7210] ss:$2 sm:$0xff]
      %s7212 = scalar_lea.vmem [#allocation2], 716
      %v7213 = vld [vmem:[%s7212] ss:$2 sm:$0xff]
      %s7214 = scalar_lea.vmem [#allocation2], 29
      %v7215 = vld [vmem:[%s7214] ss:$2 sm:$0xff]
      %s7216 = scalar_lea.vmem [#allocation2], 45
      %v7217 = vld [vmem:[%s7216] ss:$2 sm:$0xff]
      %s7218 = scalar_lea.vmem [#allocation2], 77
      %v7219 = vld [vmem:[%s7218] ss:$2 sm:$0xff]
      %s7220 = scalar_lea.vmem [#allocation2], 93
      %v7221 = vld [vmem:[%s7220] ss:$2 sm:$0xff]
      %s7222 = scalar_lea.vmem [#allocation2], 109
      %v7223 = vld [vmem:[%s7222] ss:$2 sm:$0xff]
      %s7224 = scalar_lea.vmem [#allocation2], 141
      %v7225 = vld [vmem:[%s7224] ss:$2 sm:$0xff]
      %s7226 = scalar_lea.vmem [#allocation2], 157
      %v7227 = vld [vmem:[%s7226] ss:$2 sm:$0xff]
      %s7228 = scalar_lea.vmem [#allocation2], 189
      %v7229 = vld [vmem:[%s7228] ss:$2 sm:$0xff]
      %s7230 = scalar_lea.vmem [#allocation2], 205
      %v7231 = vld [vmem:[%s7230] ss:$2 sm:$0xff]
      %s7232 = scalar_lea.vmem [#allocation2], 221
      %v7233 = vld [vmem:[%s7232] ss:$2 sm:$0xff]
      %s7234 = scalar_lea.vmem [#allocation2], 253
      %v7235 = vld [vmem:[%s7234] ss:$2 sm:$0xff]
      %s7236 = scalar_lea.vmem [#allocation2], 269
      %v7237 = vld [vmem:[%s7236] ss:$2 sm:$0xff]
      %s7238 = scalar_lea.vmem [#allocation2], 301
      %v7239 = vld [vmem:[%s7238] ss:$2 sm:$0xff]
      %s7240 = scalar_lea.vmem [#allocation2], 317
      %v7241 = vld [vmem:[%s7240] ss:$2 sm:$0xff]
      %s7242 = scalar_lea.vmem [#allocation2], 333
      %v7243 = vld [vmem:[%s7242] ss:$2 sm:$0xff]
      %s7244 = scalar_lea.vmem [#allocation2], 365
      %v7245 = vld [vmem:[%s7244] ss:$2 sm:$0xff]
      %s7246 = scalar_lea.vmem [#allocation2], 381
      %v7247 = vld [vmem:[%s7246] ss:$2 sm:$0xff]
      %s7248 = scalar_lea.vmem [#allocation2], 413
      %v7249 = vld [vmem:[%s7248] ss:$2 sm:$0xff]
      %s7250 = scalar_lea.vmem [#allocation2], 429
      %v7251 = vld [vmem:[%s7250] ss:$2 sm:$0xff]
      %s7252 = scalar_lea.vmem [#allocation2], 445
      %v7253 = vld [vmem:[%s7252] ss:$2 sm:$0xff]
      %s7254 = scalar_lea.vmem [#allocation2], 477
      %v7255 = vld [vmem:[%s7254] ss:$2 sm:$0xff]
      %s7256 = scalar_lea.vmem [#allocation2], 493
      %v7257 = vld [vmem:[%s7256] ss:$2 sm:$0xff]
      %s7258 = scalar_lea.vmem [#allocation2], 525
      %v7259 = vld [vmem:[%s7258] ss:$2 sm:$0xff]
      %s7260 = scalar_lea.vmem [#allocation2], 541
      %v7261 = vld [vmem:[%s7260] ss:$2 sm:$0xff]
      %s7262 = scalar_lea.vmem [#allocation2], 557
      %v7263 = vld [vmem:[%s7262] ss:$2 sm:$0xff]
      %s7264 = scalar_lea.vmem [#allocation2], 589
      %v7265 = vld [vmem:[%s7264] ss:$2 sm:$0xff]
      %s7266 = scalar_lea.vmem [#allocation2], 605
      %v7267 = vld [vmem:[%s7266] ss:$2 sm:$0xff]
      %s7268 = scalar_lea.vmem [#allocation2], 637
      %v7269 = vld [vmem:[%s7268] ss:$2 sm:$0xff]
      %s7270 = scalar_lea.vmem [#allocation2], 653
      %v7271 = vld [vmem:[%s7270] ss:$2 sm:$0xff]
      %s7272 = scalar_lea.vmem [#allocation2], 669
      %v7273 = vld [vmem:[%s7272] ss:$2 sm:$0xff]
      %s7274 = scalar_lea.vmem [#allocation2], 701
      %v7275 = vld [vmem:[%s7274] ss:$2 sm:$0xff]
      %s7276 = scalar_lea.vmem [#allocation2], 717
      %v7277 = vld [vmem:[%s7276] ss:$2 sm:$0xff]
      %v7278 = vmax.f32 %v7023, %v7087
      %v7279 = vmax.f32 %v7025, %v7089
      %v7280 = vmax.f32 %v7027, %v7091
      %v7281 = vmax.f32 %v7029, %v7093
      %v7282 = vmax.f32 %v7031, %v7095
      %v7283 = vmax.f32 %v7033, %v7097
      %v7284 = vmax.f32 %v7035, %v7099
      %v7285 = vmax.f32 %v7037, %v7101
      %v7286 = vmax.f32 %v7039, %v7103
      %v7287 = vmax.f32 %v7041, %v7105
      %v7288 = vmax.f32 %v7043, %v7107
      %v7289 = vmax.f32 %v7045, %v7109
      %v7290 = vmax.f32 %v7047, %v7111
      %v7291 = vmax.f32 %v7049, %v7113
      %v7292 = vmax.f32 %v7051, %v7115
      %v7293 = vmax.f32 %v7053, %v7117
      %v7294 = vmax.f32 %v7055, %v7119
      %v7295 = vmax.f32 %v7057, %v7121
      %v7296 = vmax.f32 %v7059, %v7123
      %v7297 = vmax.f32 %v7061, %v7125
      %v7298 = vmax.f32 %v7063, %v7127
      %v7299 = vmax.f32 %v7065, %v7129
      %v7300 = vmax.f32 %v7067, %v7131
      %v7301 = vmax.f32 %v7069, %v7133
      %v7302 = vmax.f32 %v7071, %v7135
      %v7303 = vmax.f32 %v7073, %v7137
      %v7304 = vmax.f32 %v7075, %v7139
      %v7305 = vmax.f32 %v7077, %v7141
      %v7306 = vmax.f32 %v7079, %v7143
      %v7307 = vmax.f32 %v7081, %v7145
      %v7308 = vmax.f32 %v7083, %v7147
      %v7309 = vmax.f32 %v7085, %v7149
      %v7310 = vmax.f32 %v7151, %v7215
      %v7311 = vmax.f32 %v7153, %v7217
      %v7312 = vmax.f32 %v7155, %v7219
      %v7313 = vmax.f32 %v7157, %v7221
      %v7314 = vmax.f32 %v7159, %v7223
      %v7315 = vmax.f32 %v7161, %v7225
      %v7316 = vmax.f32 %v7163, %v7227
      %v7317 = vmax.f32 %v7165, %v7229
      %v7318 = vmax.f32 %v7167, %v7231
      %v7319 = vmax.f32 %v7169, %v7233
      %v7320 = vmax.f32 %v7171, %v7235
      %v7321 = vmax.f32 %v7173, %v7237
      %v7322 = vmax.f32 %v7175, %v7239
      %v7323 = vmax.f32 %v7177, %v7241
      %v7324 = vmax.f32 %v7179, %v7243
      %v7325 = vmax.f32 %v7181, %v7245
      %v7326 = vmax.f32 %v7183, %v7247
      %v7327 = vmax.f32 %v7185, %v7249
      %v7328 = vmax.f32 %v7187, %v7251
      %v7329 = vmax.f32 %v7189, %v7253
      %v7330 = vmax.f32 %v7191, %v7255
      %v7331 = vmax.f32 %v7193, %v7257
      %v7332 = vmax.f32 %v7195, %v7259
      %v7333 = vmax.f32 %v7197, %v7261
      %v7334 = vmax.f32 %v7199, %v7263
      %v7335 = vmax.f32 %v7201, %v7265
      %v7336 = vmax.f32 %v7203, %v7267
      %v7337 = vmax.f32 %v7205, %v7269
      %v7338 = vmax.f32 %v7207, %v7271
      %v7339 = vmax.f32 %v7209, %v7273
      %v7340 = vmax.f32 %v7211, %v7275
      %v7341 = vmax.f32 %v7213, %v7277
      %v7342 = vmax.f32 %v7278, %v7310
      %v7343 = vmax.f32 %v7279, %v7311
      %v7344 = vmax.f32 %v7280, %v7312
      %v7345 = vmax.f32 %v7281, %v7313
      %v7346 = vmax.f32 %v7282, %v7314
      %v7347 = vmax.f32 %v7283, %v7315
      %v7348 = vmax.f32 %v7284, %v7316
      %v7349 = vmax.f32 %v7285, %v7317
      %v7350 = vmax.f32 %v7286, %v7318
      %v7351 = vmax.f32 %v7287, %v7319
      %v7352 = vmax.f32 %v7288, %v7320
      %v7353 = vmax.f32 %v7289, %v7321
      %v7354 = vmax.f32 %v7290, %v7322
      %v7355 = vmax.f32 %v7291, %v7323
      %v7356 = vmax.f32 %v7292, %v7324
      %v7357 = vmax.f32 %v7293, %v7325
      %v7358 = vmax.f32 %v7294, %v7326
      %v7359 = vmax.f32 %v7295, %v7327
      %v7360 = vmax.f32 %v7296, %v7328
      %v7361 = vmax.f32 %v7297, %v7329
      %v7362 = vmax.f32 %v7298, %v7330
      %v7363 = vmax.f32 %v7299, %v7331
      %v7364 = vmax.f32 %v7300, %v7332
      %v7365 = vmax.f32 %v7301, %v7333
      %v7366 = vmax.f32 %v7302, %v7334
      %v7367 = vmax.f32 %v7303, %v7335
      %v7368 = vmax.f32 %v7304, %v7336
      %v7369 = vmax.f32 %v7305, %v7337
      %v7370 = vmax.f32 %v7306, %v7338
      %v7371 = vmax.f32 %v7307, %v7339
      %v7372 = vmax.f32 %v7308, %v7340
      %v7373 = vmax.f32 %v7309, %v7341
      %v7374 = vpack.c.bf16 %v7342, %v7342
      %v7375 = vpack.c.bf16 %v7343, %v7343
      %7376 = vst [vmem:[%s170] sm:$0xf] %v7374
      %vm7377 = vcmask 1042432
      %vm7378 = vsmask.f32 2304
      %vm7379 = vmand %vm7377, %vm7378
      %v7380 = vld [vmem:[%s170 + $0x4] sm:$0x7]
      %v7381 = vsel %vm7379, %v7375, %v7380
      %7382 = vst [vmem:[%s170 + $0x4] sm:$0x7] %v7381
      %v7383 = vpack.c.bf16 %v7344, %v7344
      %v7384 = vpack.c.bf16 %v7345, %v7345
      %v7385 = vpack.c.bf16 %v7346, %v7346
      %vm7386 = vsmask.f32 256
      %vm7387 = vsmask.f32 4368
      %vm7388 = vmor %vm7386, %vm7387
      %v7390 = vshrl.u32 %v7383, 16
      %v7392 = vrot.slane %v7390, 7
      %v7393 = vshll.u32 %v7383, 16
      %v7395 = vor.u32 %v7392, %v7393
      %v7396 = vrot.slane %v7392, 4
      %v7398 = vshrl.u32 %v7384, 16
      %v7400 = vrot.slane %v7398, 7
      %v7401 = vshll.u32 %v7384, 16
      %v7403 = vor.u32 %v7400, %v7401
      %v7404 = vsel %vm7388, %v7396, %v7403
      %v7405 = vrot.slane %v7400, 4
      %v7407 = vshll.u32 %v7385, 16
      %v7409 = vsel %vm7388, %v7405, %v7407
      %vm7413 = vcmask 1043458
      %vm7414 = vsmask.f32 7946
      %vm7415 = vmand %vm7413, %vm7414
      %v7416 = vld [vmem:[%s170 + $0x4] sm:$0xc]
      %v7417 = vsel %vm7415, %v7395, %v7416
      %7418 = vst [vmem:[%s170 + $0x4] sm:$0xc] %v7417
      %7419 = vst [vmem:[%s170 + $0x8] sm:$0xf] %v7404
      %7420 = vst [vmem:[%s170 + $0xc] sm:$0x1] %v7409
      %v7421 = vpack.c.bf16 %v7347, %v7347
      %v7422 = vpack.c.bf16 %v7348, %v7348
      %vm7425 = vcmask 1040384
      %vm7426 = vcmask 1044484
      %vm7427 = vmor %vm7425, %vm7426
      %v7428 = vrot.slane %v7421, 7
      %v7429 = vrot.slane %v7428, 4
      %v7430 = vrot.slane %v7422, 7
      %v7431 = vsel %vm7427, %v7429, %v7430
      %7434 = vst [vmem:[%s170 + $0xc] sm:$0xe] %v7428
      %vm7435 = vcmask 1043456
      %vm7436 = vsmask.f32 3328
      %vm7437 = vmand %vm7435, %vm7436
      %v7438 = vld [vmem:[%s170 + $0x10] sm:$0xf]
      %v7439 = vsel %vm7437, %v7431, %v7438
      %7440 = vst [vmem:[%s170 + $0x10] sm:$0xf] %v7439
      %v7441 = vpack.c.bf16 %v7349, %v7349
      %v7442 = vpack.c.bf16 %v7350, %v7350
      %v7443 = vpack.c.bf16 %v7351, %v7351
      %vm7444 = vsmask.f32 1280
      %vm7445 = vsmask.f32 5392
      %vm7446 = vmor %vm7444, %vm7445
      %v7448 = vshll.u32 %v7441, 16
      %v7450 = vrot.slane %v7448, 7
      %v7451 = vshrl.u32 %v7441, 16
      %v7453 = vrot.slane %v7451, 6
      %v7454 = vor.u32 %v7453, %v7450
      %v7455 = vrot.slane %v7454, 4
      %v7457 = vshrl.u32 %v7442, 16
      %v7459 = vrot.slane %v7457, 6
      %v7460 = vshll.u32 %v7442, 16
      %v7462 = vrot.slane %v7460, 7
      %v7463 = vor.u32 %v7459, %v7462
      %v7464 = vsel %vm7446, %v7455, %v7463
      %v7465 = vrot.slane %v7463, 4
      %v7467 = vshll.u32 %v7443, 16
      %v7469 = vrot.slane %v7467, 7
      %v7470 = vsel %vm7446, %v7465, %v7469
      %vm7474 = vcmask 1043459
      %vm7475 = vsmask.f32 7950
      %vm7476 = vmand %vm7474, %vm7475
      %v7477 = vld [vmem:[%s170 + $0x10] sm:$0x8]
      %v7478 = vsel %vm7476, %v7450, %v7477
      %7479 = vst [vmem:[%s170 + $0x10] sm:$0x8] %v7478
      %7480 = vst [vmem:[%s170 + $0x14] sm:$0xf] %v7464
      %7481 = vst [vmem:[%s170 + $0x18] sm:$0x3] %v7470
      %v7482 = vpack.c.bf16 %v7352, %v7352
      %v7483 = vpack.c.bf16 %v7353, %v7353
      %vm7486 = vcmask 1041408
      %vm7487 = vcmask 1045508
      %vm7488 = vmor %vm7486, %vm7487
      %v7489 = vrot.slane %v7482, 6
      %v7490 = vrot.slane %v7489, 4
      %v7491 = vrot.slane %v7483, 6
      %v7492 = vsel %vm7488, %v7490, %v7491
      %v7493 = vrot.slane %v7491, 4
      %7497 = vst [vmem:[%s170 + $0x18] sm:$0xc] %v7489
      %7498 = vst [vmem:[%s170 + $0x1c] sm:$0xf] %v7492
      %vm7499 = vmand %vm7425, %vm7386
      %v7500 = vld [vmem:[%s170 + $0x20] sm:$0x1]
      %v7501 = vsel %vm7499, %v7493, %v7500
      %7502 = vst [vmem:[%s170 + $0x20] sm:$0x1] %v7501
      %v7503 = vpack.c.bf16 %v7354, %v7354
      %v7504 = vpack.c.bf16 %v7355, %v7355
      %v7505 = vpack.c.bf16 %v7356, %v7356
      %vm7506 = vsmask.f32 6416
      %vm7507 = vmor %vm7378, %vm7506
      %v7509 = vshrl.u32 %v7503, 16
      %v7511 = vrot.slane %v7509, 5
      %v7512 = vshll.u32 %v7503, 16
      %v7514 = vrot.slane %v7512, 6
      %v7515 = vor.u32 %v7511, %v7514
      %v7516 = vrot.slane %v7515, 4
      %v7518 = vshrl.u32 %v7504, 16
      %v7520 = vrot.slane %v7518, 5
      %v7521 = vshll.u32 %v7504, 16
      %v7523 = vrot.slane %v7521, 6
      %v7524 = vor.u32 %v7520, %v7523
      %v7525 = vsel %vm7507, %v7516, %v7524
      %v7526 = vrot.slane %v7524, 4
      %v7528 = vshll.u32 %v7505, 16
      %v7530 = vrot.slane %v7528, 6
      %v7531 = vsel %vm7507, %v7526, %v7530
      %vm7534 = vsmask.f32 7938
      %vm7535 = vmand %vm7435, %vm7534
      %v7536 = vld [vmem:[%s170 + $0x20] sm:$0xf]
      %v7537 = vsel %vm7535, %v7525, %v7536
      %7538 = vst [vmem:[%s170 + $0x20] sm:$0xf] %v7537
      %7539 = vst [vmem:[%s170 + $0x24] sm:$0x7] %v7531
      %v7540 = vpack.c.bf16 %v7357, %v7357
      %v7541 = vpack.c.bf16 %v7358, %v7358
      %vm7544 = vcmask 1046532
      %vm7545 = vmor %vm7377, %vm7544
      %v7546 = vrot.slane %v7540, 5
      %v7547 = vrot.slane %v7546, 4
      %v7548 = vrot.slane %v7541, 5
      %v7549 = vsel %vm7545, %v7547, %v7548
      %v7550 = vrot.slane %v7548, 4
      %7554 = vst [vmem:[%s170 + $0x24] sm:$0x8] %v7546
      %7555 = vst [vmem:[%s170 + $0x28] sm:$0xf] %v7549
      %vm7556 = vmand %vm7486, %vm7444
      %v7557 = vld [vmem:[%s170 + $0x2c] sm:$0x3]
      %v7558 = vsel %vm7556, %v7550, %v7557
      %7559 = vst [vmem:[%s170 + $0x2c] sm:$0x3] %v7558
      %v7560 = vpack.c.bf16 %v7359, %v7359
      %v7561 = vpack.c.bf16 %v7360, %v7360
      %v7562 = vpack.c.bf16 %v7361, %v7361
      %vm7563 = vsmask.f32 7440
      %vm7564 = vmor %vm7436, %vm7563
      %v7566 = vshrl.u32 %v7560, 16
      %v7568 = vrot.slane %v7566, 4
      %v7569 = vshll.u32 %v7560, 16
      %v7571 = vrot.slane %v7569, 5
      %v7572 = vor.u32 %v7568, %v7571
      %v7573 = vrot.slane %v7572, 4
      %v7575 = vshll.u32 %v7561, 16
      %v7577 = vrot.slane %v7575, 5
      %v7578 = vsel %vm7564, %v7573, %v7577
      %v7579 = vshrl.u32 %v7561, 16
      %v7581 = vrot.slane %v7579, 4
      %v7582 = vor.u32 %v7581, %v7577
      %v7583 = vrot.slane %v7582, 4
      %v7585 = vshll.u32 %v7562, 16
      %v7587 = vrot.slane %v7585, 5
      %v7588 = vsel %vm7564, %v7583, %v7587
      %vm7591 = vcmask 1043457
      %vm7592 = vsmask.f32 7942
      %vm7593 = vmand %vm7591, %vm7592
      %v7594 = vld [vmem:[%s170 + $0x2c] sm:$0xe]
      %v7595 = vsel %vm7593, %v7578, %v7594
      %7596 = vst [vmem:[%s170 + $0x2c] sm:$0xe] %v7595
      %7597 = vst [vmem:[%s170 + $0x30] sm:$0xf] %v7588
      %v7598 = vpack.c.bf16 %v7362, %v7362
      %v7599 = vpack.c.bf16 %v7363, %v7363
      %7600 = vst [vmem:[%s170 + $0x34] sm:$0xf] %v7598
      %v7601 = vld [vmem:[%s170 + $0x38] sm:$0x7]
      %v7602 = vsel %vm7379, %v7599, %v7601
      %7603 = vst [vmem:[%s170 + $0x38] sm:$0x7] %v7602
      %v7604 = vpack.c.bf16 %v7364, %v7364
      %v7605 = vpack.c.bf16 %v7365, %v7365
      %v7606 = vpack.c.bf16 %v7366, %v7366
      %v7608 = vshrl.u32 %v7604, 16
      %v7610 = vrot.slane %v7608, 7
      %v7611 = vshll.u32 %v7604, 16
      %v7613 = vor.u32 %v7610, %v7611
      %v7614 = vrot.slane %v7610, 4
      %v7616 = vshrl.u32 %v7605, 16
      %v7618 = vrot.slane %v7616, 7
      %v7619 = vshll.u32 %v7605, 16
      %v7621 = vor.u32 %v7618, %v7619
      %v7622 = vsel %vm7388, %v7614, %v7621
      %v7623 = vrot.slane %v7618, 4
      %v7625 = vshll.u32 %v7606, 16
      %v7627 = vsel %vm7388, %v7623, %v7625
      %v7631 = vld [vmem:[%s170 + $0x38] sm:$0xc]
      %v7632 = vsel %vm7415, %v7613, %v7631
      %7633 = vst [vmem:[%s170 + $0x38] sm:$0xc] %v7632
      %7634 = vst [vmem:[%s170 + $0x3c] sm:$0xf] %v7622
      %7635 = vst [vmem:[%s170 + $0x40] sm:$0x1] %v7627
      %v7636 = vpack.c.bf16 %v7367, %v7367
      %v7637 = vpack.c.bf16 %v7368, %v7368
      %v7640 = vrot.slane %v7636, 7
      %v7641 = vrot.slane %v7640, 4
      %v7642 = vrot.slane %v7637, 7
      %v7643 = vsel %vm7427, %v7641, %v7642
      %7646 = vst [vmem:[%s170 + $0x40] sm:$0xe] %v7640
      %v7647 = vld [vmem:[%s170 + $0x44] sm:$0xf]
      %v7648 = vsel %vm7437, %v7643, %v7647
      %7649 = vst [vmem:[%s170 + $0x44] sm:$0xf] %v7648
      %v7650 = vpack.c.bf16 %v7369, %v7369
      %v7651 = vpack.c.bf16 %v7370, %v7370
      %v7652 = vpack.c.bf16 %v7371, %v7371
      %v7654 = vshll.u32 %v7650, 16
      %v7656 = vrot.slane %v7654, 7
      %v7657 = vshrl.u32 %v7650, 16
      %v7659 = vrot.slane %v7657, 6
      %v7660 = vor.u32 %v7659, %v7656
      %v7661 = vrot.slane %v7660, 4
      %v7663 = vshrl.u32 %v7651, 16
      %v7665 = vrot.slane %v7663, 6
      %v7666 = vshll.u32 %v7651, 16
      %v7668 = vrot.slane %v7666, 7
      %v7669 = vor.u32 %v7665, %v7668
      %v7670 = vsel %vm7446, %v7661, %v7669
      %v7671 = vrot.slane %v7669, 4
      %v7673 = vshll.u32 %v7652, 16
      %v7675 = vrot.slane %v7673, 7
      %v7676 = vsel %vm7446, %v7671, %v7675
      %v7680 = vld [vmem:[%s170 + $0x44] sm:$0x8]
      %v7681 = vsel %vm7476, %v7656, %v7680
      %7682 = vst [vmem:[%s170 + $0x44] sm:$0x8] %v7681
      %7683 = vst [vmem:[%s170 + $0x48] sm:$0xf] %v7670
      %7684 = vst [vmem:[%s170 + $0x4c] sm:$0x3] %v7676
      %v7685 = vpack.c.bf16 %v7372, %v7372
      %v7686 = vpack.c.bf16 %v7373, %v7373
      %v7689 = vrot.slane %v7685, 6
      %v7690 = vrot.slane %v7689, 4
      %v7691 = vrot.slane %v7686, 6
      %v7692 = vsel %vm7488, %v7690, %v7691
      %v7693 = vrot.slane %v7691, 4
      %7697 = vst [vmem:[%s170 + $0x4c] sm:$0xc] %v7689
      %7698 = vst [vmem:[%s170 + $0x50] sm:$0xf] %v7692
      %v7699 = vld [vmem:[%s170 + $0x54] sm:$0x1]
      %v7700 = vsel %vm7499, %v7693, %v7699
      %7701 = vst [vmem:[%s170 + $0x54] sm:$0x1] %v7700
      %v7702 = vld [vmem:[%s170 + $0x54] sm:$0xf]
      %v7703 = vsel %vm7535, 0, %v7702
      %7704 = vst [vmem:[%s170 + $0x54] sm:$0xf] %v7703
      %p7705 = scmp.lt.s32.totalorder %s14, 1
      %s7706 = scalar_select %p7705, %s14, 1
      %s7707 = smul.addr %s7706, 22
      %s7708 = smul.addr %s7707, 4
      %s7709 = scalar_lea.vmem %s3, %s7708
      // Predicated region
      $region33: #{cnn_classifier_forward.3} parent=31 // pred_check
        %p7710 = pneg %p100
      $region34: #{cnn_classifier_forward.3} parent=31 // pred_check_branch
        %7712 = sbr.rel (%p7710) target = $region36
      $region35: #{cnn_classifier_forward.3} parent=31 // pred_region
        _
      $region36: #{cnn_classifier_forward.3} parent=31 // pred_fallthru
        _
    $region32: #{cnn_classifier_forward.3} parent=5 // pred_fallthru
      _
    %p7713 = scmp.le.s32.totalorder 2, %s9
    // Predicated region
    $region37: #{cnn_classifier_forward.3} parent=5 // pred_check
      %p7714 = pneg %p7713
    $region38: #{cnn_classifier_forward.3} parent=5 // pred_check_branch
      %7716 = sbr.rel (%p7714) target = $region40
    $region39: #{cnn_classifier_forward.3} parent=5 // pred_region
      %s7717 = ssub.s32 %s9, 2
      // Predicated region
      $region41: #{cnn_classifier_forward.3} parent=39 // pred_check
        %p7718 = pneg %p106
      $region42: #{cnn_classifier_forward.3} parent=39 // pred_check_branch
        %7720 = sbr.rel (%p7718) target = $region44
      $region43: #{cnn_classifier_forward.3} parent=39 // pred_region
        %p7721 = scmp.lt.s32.totalorder %s15, 1
        %s7722 = scalar_select %p7721, %s15, 1
        %s7723 = smul.addr %s7722, 22
        %s7724 = smul.addr %s7723, 4
        %s7725 = scalar_lea.vmem %s3, %s7724
      $region44: #{cnn_classifier_forward.3} parent=39 // pred_fallthru
        _
    $region40: #{cnn_classifier_forward.3} parent=5 // pred_fallthru
      _
  $region6: #{cnn_classifier_forward.3} parent=0 // loop_footer
    %s13 = sadd.s32 1, %s9
  $region7: #{cnn_classifier_forward.3} parent=0 // loop_footer_branch
    %8 = sbr.rel target = $region3
  $region8: #{cnn_classifier_forward.3} parent=0 // loop_exit
    _

</llo_original>
